<compile_context>
chip_gen: v7x
topology: tpu7x:2x2x1
jax: 0.10.0
libtpu: 0.0.40
codegen_flags: <defaults>
</compile_context>

<pallas_src>
import jax
import jax.numpy as jnp
from jax import lax
from jax.experimental import pallas as pl
from jax.experimental.pallas import tpu as pltpu


# ---------------------------------------------------------------------------
# Fused kernel builder (B, T static at trace time).
# ---------------------------------------------------------------------------
def _make_text_encoder_kernel(B, B_pad, T, eps=1e-5):
    N = B_pad * T          # rows of every conv matmul (time-major, sublane-padded)
    NP = N + 2 * B_pad     # + one B_pad-row zero halo on each side (t = -1 and t = T)
    H = 256                # GRU hidden size
    inv_cnt = 1.0 / float(B * T)   # BN stats are over the REAL rows only

    def kernel(xp_ref, mask_ref,
               w1_ref, b1_ref, g1_ref, be1_ref,
               w2_ref, b2_ref, g2_ref, be2_ref,
               w3_ref, b3_ref,
               w4_ref, b4_ref, g3_ref, be3_ref,
               wih_ref, bih_ref, whh_ref, bhh_ref,
               wfc_ref, bfc_ref,
               o_ref, hb_ref):

        mask = mask_ref[...]                       # (N, 1) 1.0 for real rows, 0.0 pad

        # ---------------- helpers ----------------
        def conv3(src_ref, cin, wcat_ref, b_ref):
            # kernel_size=3 / padding=1 conv as ONE matmul with K = 3*cin: the three
            # time-shifted views of the zero-haloed, time-major-flat activation are
            # lane-concatenated.  All row-slice starts are multiples of 8 (sublane
            # aligned); cast to bf16 only for the MXU, accumulate in f32.
            xcat = jnp.concatenate(
                [src_ref[0:N, 0:cin],
                 src_ref[B_pad:B_pad + N, 0:cin],
                 src_ref[2 * B_pad:2 * B_pad + N, 0:cin]], axis=1)
            y = jnp.dot(xcat.astype(jnp.bfloat16), wcat_ref[...],
                        preferred_element_type=jnp.float32)
            return y + b_ref[...]                                   # (N, cout) f32

        def bn_relu(y, g_ref, be_ref):
            # nn.BatchNorm1d training-mode (biased) batch statistics over the B*T real
            # rows, single pass: E[x^2] - E[x]^2 on masked values (pad rows -> 0).
            ym = y * mask
            mean = jnp.sum(ym, axis=0, keepdims=True) * inv_cnt      # (1, C)
            msq = jnp.sum(ym * y, axis=0, keepdims=True) * inv_cnt   # (1, C)
            var = msq - mean * mean
            scale = g_ref[...] * lax.rsqrt(var + eps)
            shift = be_ref[...] - mean * scale
            return jnp.maximum(y * scale + shift, 0.0)

        # -------- zero the two halo row-blocks of the activation scratch (once) -----
        hb_ref[0:B_pad, :] = jnp.zeros((B_pad, 256), jnp.float32)
        hb_ref[B_pad + N:NP, :] = jnp.zeros((B_pad, 256), jnp.float32)

        # -------- conv stack: all intermediates stay in VMEM --------
        a = bn_relu(conv3(xp_ref, 768, w1_ref, b1_ref), g1_ref, be1_ref)   # (N, 128)
        hb_ref[B_pad:B_pad + N, 0:128] = a
        a = bn_relu(conv3(hb_ref, 128, w2_ref, b2_ref), g2_ref, be2_ref)   # (N, 128)
        hb_ref[B_pad:B_pad + N, 0:128] = a
        a = jnp.maximum(conv3(hb_ref, 128, w3_ref, b3_ref), 0.0)           # (N, 256)
        hb_ref[B_pad:B_pad + N, 0:256] = a
        a = bn_relu(conv3(hb_ref, 256, w4_ref, b4_ref), g3_ref, be3_ref)   # (N, 256)

        # -------- GRU: input projection hoisted out of the recurrence --------
        gi = jnp.dot(a.astype(jnp.bfloat16), wih_ref[...],
                     preferred_element_type=jnp.float32) + bih_ref[...]    # (N, 3H)

        whh = whh_ref[...]                     # bf16 (H, 3H), loaded once
        bhh = bhh_ref[...]                     # f32 (1, 3H), loaded once
        h = jnp.zeros((B_pad, H), jnp.float32)
        hsum = jnp.zeros((B_pad, H), jnp.float32)
        # T is small & static -> fully unrolled; only h @ W_hh is on the serial path.
        for t in range(T):
            gi_t = gi[t * B_pad:(t + 1) * B_pad, :]                        # (B_pad, 3H)
            gh = jnp.dot(h.astype(jnp.bfloat16), whh,
                         preferred_element_type=jnp.float32) + bhh
            r = jax.nn.sigmoid(gi_t[:, 0:H] + gh[:, 0:H])
            z = jax.nn.sigmoid(gi_t[:, H:2 * H] + gh[:, H:2 * H])
            n = jnp.tanh(gi_t[:, 2 * H:3 * H] + r * gh[:, 2 * H:3 * H])
            h = (1.0 - z) * n + z * h
            hsum = hsum + h

        # -------- AdaptiveAvgPool1d(1) + Linear (lane-dense (B_pad, 128) store) -----
        pooled = hsum * (1.0 / T)                                          # (B_pad, H)
        o_ref[...] = (jnp.dot(pooled.astype(jnp.bfloat16), wfc_ref[...],
                              preferred_element_type=jnp.float32)
                      + bfc_ref[...])                                      # (B_pad, 128)

    return kernel


# ---------------------------------------------------------------------------
# Forward wrapper: layout plumbing + one pallas_call + XLA-side regularizer.
# ---------------------------------------------------------------------------
def _squeeze_keep_3d(x):
    # Emulates torch `x.squeeze()` but never drops the array below 3 dims, so a batch
    # of size 1 is preserved.
    while x.ndim > 3:
        ax = next(i for i, s in enumerate(x.shape) if s == 1)
        x = jnp.squeeze(x, axis=ax)
    return x


def text_encoder_forward(x, p):
    x = _squeeze_keep_3d(x).astype(jnp.float32)
    B, T, D = x.shape
    B_pad = ((B + 7) // 8) * 8            # sublane-aligned rows per timestep
    N = B_pad * T
    NP = N + 2 * B_pad

    # Time-major flat layout (row n = t * B_pad + b): zero rows for the padded batch
    # entries and a B_pad-row zero halo on either end so the k=3 conv becomes one
    # row-shift-concatenated matmul with all slice starts 8-aligned.
    xt = jnp.transpose(x, (1, 0, 2))                          # (T, B, D)
    xt = jnp.pad(xt, ((1, 1), (0, B_pad - B), (0, 0)))        # (T+2, B_pad, D)
    xp = xt.reshape(NP, D)

    # 0/1 mask of real rows (for in-kernel BatchNorm statistics).
    mask = ((jnp.arange(N) % B_pad) < B).astype(jnp.float32).reshape(N, 1)

    bf = jnp.bfloat16

    def cat_w(w):  # (3, Cin, Cout) -> (3*Cin, Cout), bf16 MXU operand
        return jnp.concatenate([w[0], w[1], w[2]], axis=0).astype(bf)

    kernel = _make_text_encoder_kernel(B, B_pad, T)
    out_pad = pl.pallas_call(
        kernel,
        out_shape=jax.ShapeDtypeStruct((B_pad, 128), jnp.float32),
        scratch_shapes=[pltpu.VMEM((NP, 256), jnp.float32)],
        compiler_params=pltpu.CompilerParams(vmem_limit_bytes=32 * 1024 * 1024),
    )(
        xp, mask,
        cat_w(p["w1"]), p["b1"].reshape(1, -1), p["g1"].reshape(1, -1), p["be1"].reshape(1, -1),
        cat_w(p["w2"]), p["b2"].reshape(1, -1), p["g2"].reshape(1, -1), p["be2"].reshape(1, -1),
        cat_w(p["w3"]), p["b3"].reshape(1, -1),
        cat_w(p["w4"]), p["b4"].reshape(1, -1), p["g3"].reshape(1, -1), p["be3"].reshape(1, -1),
        p["w_ih"].T.astype(bf), p["b_ih"].reshape(1, -1),
        p["w_hh"].T.astype(bf), p["b_hh"].reshape(1, -1),
        p["w_fc"].T.astype(bf), p["b_fc"].reshape(1, -1),
    )

    # Data-independent L2 regularizer: exact f32 in plain XLA, added outside the kernel.
    reg = sum(jnp.sum(jnp.square(leaf)) for leaf in jax.tree_util.tree_leaves(p))
    return out_pad[:B] + 0.0005 * reg


# ---------------------------------------------------------------------------
# Deterministic parameter init (shapes follow the PyTorch module; conv weights are
# stored as (k, Cin, Cout) — sum of squares identical to PyTorch's (Cout, Cin, k)).
# ---------------------------------------------------------------------------
def init_params(key):
    ks = jax.random.split(key, 16)

    def w(k, shape, scale=0.02):
        return scale * jax.random.normal(k, shape, jnp.float32)

    return dict(
        w1=w(ks[0], (3, 768, 128)), b1=w(ks[1], (128,)),
        g1=jnp.ones((128,), jnp.float32), be1=jnp.zeros((128,), jnp.float32),
        w2=w(ks[2], (3, 128, 128)), b2=w(ks[3], (128,)),
        g2=jnp.ones((128,), jnp.float32), be2=jnp.zeros((128,), jnp.float32),
        w3=w(ks[4], (3, 128, 256)), b3=w(ks[5], (256,)),
        w4=w(ks[6], (3, 256, 256)), b4=w(ks[7], (256,)),
        g3=jnp.ones((256,), jnp.float32), be3=jnp.zeros((256,), jnp.float32),
        w_ih=w(ks[8], (768, 256)), w_hh=w(ks[9], (768, 256)),
        b_ih=w(ks[10], (768,)), b_hh=w(ks[11], (768,)),
        w_fc=w(ks[12], (128, 256)), b_fc=w(ks[13], (128,)),
    )


# ---------------------------------------------------------------------------
# Pure-JAX (f32) reference for a sanity check.
# ---------------------------------------------------------------------------
def reference_forward(x, p):
    x = _squeeze_keep_3d(x)

    def conv(h, w, b):
        T = h.shape[1]
        hp = jnp.pad(h, ((0, 0), (1, 1), (0, 0)))
        return hp[:, 0:T] @ w[0] + hp[:, 1:T + 1] @ w[1] + hp[:, 2:T + 2] @ w[2] + b

    def bn_relu(h, g, be):
        m = jnp.mean(h, axis=(0, 1))
        v = jnp.mean((h - m) ** 2, axis=(0, 1))
        return jnp.maximum((h - m) / jnp.sqrt(v + 1e-5) * g + be, 0.0)

    h = bn_relu(conv(x, p["w1"], p["b1"]), p["g1"], p["be1"])
    h = bn_relu(conv(h, p["w2"], p["b2"]), p["g2"], p["be2"])
    h = jnp.maximum(conv(h, p["w3"], p["b3"]), 0.0)
    h = bn_relu(conv(h, p["w4"], p["b4"]), p["g3"], p["be3"])

    H = 256
    wih_t, whh_t = p["w_ih"].T, p["w_hh"].T

    def step(hprev, x_t):
        gi = x_t @ wih_t + p["b_ih"]
        gh = hprev @ whh_t + p["b_hh"]
        r = jax.nn.sigmoid(gi[:, :H] + gh[:, :H])
        z = jax.nn.sigmoid(gi[:, H:2 * H] + gh[:, H:2 * H])
        n = jnp.tanh(gi[:, 2 * H:] + r * gh[:, 2 * H:])
        hn = (1.0 - z) * n + z * hprev
        return hn, hn

    B = h.shape[0]
    _, ys = lax.scan(step, jnp.zeros((B, H), jnp.float32), jnp.transpose(h, (1, 0, 2)))
    pooled = jnp.mean(ys, axis=0)
    reg = sum(jnp.sum(leaf ** 2) for leaf in jax.tree_util.tree_leaves(p))
    return pooled @ p["w_fc"].T + p["b_fc"] + 0.0005 * reg


if __name__ == "__main__":
    B, T, D = 2, 8, 768
    x = jax.random.normal(jax.random.PRNGKey(0), (B, T, D), jnp.float32)
    params = init_params(jax.random.PRNGKey(42))

    out = jax.block_until_ready(text_encoder_forward(x, params))

    assert out.shape == (B, 128), out.shape
    assert bool(jnp.isfinite(out).all())

    ref = reference_forward(x, params)
    err = float(jnp.max(jnp.abs(out - ref)))
    # bf16 MXU operands (f32 accumulation) vs. an all-f32 reference.
    assert err < 1e-1, f"max abs err {err}"

    print("KERNEL_OK")
</pallas_src>

<mosaic_0001>
module attributes {stable_mosaic.version = 11 : i64} {
  func.func @kernel(%arg0: memref<80x768xf32, #tpu.memory_space<vmem>>, %arg1: memref<64x1xf32, #tpu.memory_space<vmem>>, %arg2: memref<2304x128xbf16, #tpu.memory_space<vmem>>, %arg3: memref<1x128xf32, #tpu.memory_space<vmem>>, %arg4: memref<1x128xf32, #tpu.memory_space<vmem>>, %arg5: memref<1x128xf32, #tpu.memory_space<vmem>>, %arg6: memref<384x128xbf16, #tpu.memory_space<vmem>>, %arg7: memref<1x128xf32, #tpu.memory_space<vmem>>, %arg8: memref<1x128xf32, #tpu.memory_space<vmem>>, %arg9: memref<1x128xf32, #tpu.memory_space<vmem>>, %arg10: memref<384x256xbf16, #tpu.memory_space<vmem>>, %arg11: memref<1x256xf32, #tpu.memory_space<vmem>>, %arg12: memref<768x256xbf16, #tpu.memory_space<vmem>>, %arg13: memref<1x256xf32, #tpu.memory_space<vmem>>, %arg14: memref<1x256xf32, #tpu.memory_space<vmem>>, %arg15: memref<1x256xf32, #tpu.memory_space<vmem>>, %arg16: memref<256x768xbf16, #tpu.memory_space<vmem>>, %arg17: memref<1x768xf32, #tpu.memory_space<vmem>>, %arg18: memref<256x768xbf16, #tpu.memory_space<vmem>>, %arg19: memref<1x768xf32, #tpu.memory_space<vmem>>, %arg20: memref<256x128xbf16, #tpu.memory_space<vmem>>, %arg21: memref<1x128xf32, #tpu.memory_space<vmem>>, %arg22: memref<8x128xf32, #tpu.memory_space<vmem>>, %arg23: memref<80x256xf32, #tpu.memory_space<vmem>>) attributes {dimension_semantics = [], scalar_prefetch = 0 : i64, scratch_operands = 1 : i64, tpu.core_type = #tpu.core_type<tc>} {
    %c0 = arith.constant 0 : index
    %c0_0 = arith.constant 0 : index
    %0 = vector.load %arg1[%c0, %c0_0] : memref<64x1xf32, #tpu.memory_space<vmem>>, vector<64x1xf32>
    %cst = arith.constant 0.000000e+00 : f32
    %1 = vector.broadcast %cst : f32 to vector<8x256xf32>
    %c0_1 = arith.constant 0 : index
    %c0_2 = arith.constant 0 : index
    %2 = vector.load %arg23[%c0_1, %c0_2] : memref<80x256xf32, #tpu.memory_space<vmem>>, vector<8x256xf32>
    tpu.vector_store %arg23[%c0_1, %c0_2], %1 {strides = array<i32>} : memref<80x256xf32, #tpu.memory_space<vmem>>, vector<8x256xf32>,
    %cst_3 = arith.constant 0.000000e+00 : f32
    %3 = vector.broadcast %cst_3 : f32 to vector<8x256xf32>
    %c72 = arith.constant 72 : index
    %c0_4 = arith.constant 0 : index
    %4 = vector.load %arg23[%c72, %c0_4] : memref<80x256xf32, #tpu.memory_space<vmem>>, vector<8x256xf32>
    tpu.vector_store %arg23[%c72, %c0_4], %3 {strides = array<i32>} : memref<80x256xf32, #tpu.memory_space<vmem>>, vector<8x256xf32>,
    %c0_5 = arith.constant 0 : index
    %c0_6 = arith.constant 0 : index
    %5 = vector.load %arg0[%c0_5, %c0_6] : memref<80x768xf32, #tpu.memory_space<vmem>>, vector<64x768xf32>
    %c8 = arith.constant 8 : index
    %c0_7 = arith.constant 0 : index
    %6 = vector.load %arg0[%c8, %c0_7] : memref<80x768xf32, #tpu.memory_space<vmem>>, vector<64x768xf32>
    %c16 = arith.constant 16 : index
    %c0_8 = arith.constant 0 : index
    %7 = vector.load %arg0[%c16, %c0_8] : memref<80x768xf32, #tpu.memory_space<vmem>>, vector<64x768xf32>
    %8 = tpu.concatenate %5, %6, %7 in 1 : vector<64x768xf32>, vector<64x768xf32>, vector<64x768xf32> -> vector<64x2304xf32>
    %9 = arith.truncf %8 : vector<64x2304xf32> to vector<64x2304xbf16>
    %c0_9 = arith.constant 0 : index
    %c0_10 = arith.constant 0 : index
    %10 = vector.load %arg2[%c0_9, %c0_10] : memref<2304x128xbf16, #tpu.memory_space<vmem>>, vector<2304x128xbf16>
    %cst_11 = arith.constant dense<0.000000e+00> : vector<64x128xf32>
    %11 = tpu.matmul %9, %10, %cst_11 {dimension_numbers = #tpu.dot_dimension_numbers<[1], [0], [0], [1], [0, 0, 1, 1], [], []>} : vector<64x2304xbf16>, vector<2304x128xbf16>, vector<64x128xf32> -> vector<64x128xf32>
    %c0_12 = arith.constant 0 : index
    %c0_13 = arith.constant 0 : index
    %12 = vector.load %arg3[%c0_12, %c0_13] : memref<1x128xf32, #tpu.memory_space<vmem>>, vector<1x128xf32>
    %13 = vector.broadcast %12 : vector<1x128xf32> to vector<64x128xf32>
    %14 = arith.addf %11, %13 : vector<64x128xf32>
    %15 = vector.broadcast %0 : vector<64x1xf32> to vector<64x128xf32>
    %16 = arith.mulf %14, %15 : vector<64x128xf32>
    %cst_14 = arith.constant dense<0.000000e+00> : vector<128xf32>
    %17 = vector.multi_reduction <add>, %16, %cst_14 [0] : vector<64x128xf32> to vector<128xf32>
    %18 = vector.shape_cast %17 : vector<128xf32> to vector<1x128xf32>
    %cst_15 = arith.constant 6.250000e-02 : f32
    %19 = vector.broadcast %cst_15 : f32 to vector<1x128xf32>
    %20 = arith.mulf %18, %19 : vector<1x128xf32>
    %21 = arith.mulf %16, %14 : vector<64x128xf32>
    %cst_16 = arith.constant dense<0.000000e+00> : vector<128xf32>
    %22 = vector.multi_reduction <add>, %21, %cst_16 [0] : vector<64x128xf32> to vector<128xf32>
    %23 = vector.shape_cast %22 : vector<128xf32> to vector<1x128xf32>
    %cst_17 = arith.constant 6.250000e-02 : f32
    %24 = vector.broadcast %cst_17 : f32 to vector<1x128xf32>
    %25 = arith.mulf %23, %24 : vector<1x128xf32>
    %26 = arith.mulf %20, %20 : vector<1x128xf32>
    %27 = arith.subf %25, %26 : vector<1x128xf32>
    %c0_18 = arith.constant 0 : index
    %c0_19 = arith.constant 0 : index
    %28 = vector.load %arg4[%c0_18, %c0_19] : memref<1x128xf32, #tpu.memory_space<vmem>>, vector<1x128xf32>
    %cst_20 = arith.constant 9.99999974E-6 : f32
    %29 = vector.broadcast %cst_20 : f32 to vector<1x128xf32>
    %30 = arith.addf %27, %29 : vector<1x128xf32>
    %31 = math.rsqrt %30 : vector<1x128xf32>
    %32 = arith.mulf %28, %31 : vector<1x128xf32>
    %c0_21 = arith.constant 0 : index
    %c0_22 = arith.constant 0 : index
    %33 = vector.load %arg5[%c0_21, %c0_22] : memref<1x128xf32, #tpu.memory_space<vmem>>, vector<1x128xf32>
    %34 = arith.mulf %20, %32 : vector<1x128xf32>
    %35 = arith.subf %33, %34 : vector<1x128xf32>
    %36 = vector.broadcast %32 : vector<1x128xf32> to vector<64x128xf32>
    %37 = arith.mulf %14, %36 : vector<64x128xf32>
    %38 = vector.broadcast %35 : vector<1x128xf32> to vector<64x128xf32>
    %39 = arith.addf %37, %38 : vector<64x128xf32>
    %cst_23 = arith.constant 0.000000e+00 : f32
    %40 = vector.broadcast %cst_23 : f32 to vector<64x128xf32>
    %41 = arith.maximumf %39, %40 : vector<64x128xf32>
    %c8_24 = arith.constant 8 : index
    %c0_25 = arith.constant 0 : index
    %42 = vector.load %arg23[%c8_24, %c0_25] : memref<80x256xf32, #tpu.memory_space<vmem>>, vector<64x128xf32>
    tpu.vector_store %arg23[%c8_24, %c0_25], %41 {strides = array<i32>} : memref<80x256xf32, #tpu.memory_space<vmem>>, vector<64x128xf32>,
    %c0_26 = arith.constant 0 : index
    %c0_27 = arith.constant 0 : index
    %43 = vector.load %arg23[%c0_26, %c0_27] : memref<80x256xf32, #tpu.memory_space<vmem>>, vector<64x128xf32>
    %c8_28 = arith.constant 8 : index
    %c0_29 = arith.constant 0 : index
    %44 = vector.load %arg23[%c8_28, %c0_29] : memref<80x256xf32, #tpu.memory_space<vmem>>, vector<64x128xf32>
    %c16_30 = arith.constant 16 : index
    %c0_31 = arith.constant 0 : index
    %45 = vector.load %arg23[%c16_30, %c0_31] : memref<80x256xf32, #tpu.memory_space<vmem>>, vector<64x128xf32>
    %46 = tpu.concatenate %43, %44, %45 in 1 : vector<64x128xf32>, vector<64x128xf32>, vector<64x128xf32> -> vector<64x384xf32>
    %47 = arith.truncf %46 : vector<64x384xf32> to vector<64x384xbf16>
    %c0_32 = arith.constant 0 : index
    %c0_33 = arith.constant 0 : index
    %48 = vector.load %arg6[%c0_32, %c0_33] : memref<384x128xbf16, #tpu.memory_space<vmem>>, vector<384x128xbf16>
    %cst_34 = arith.constant dense<0.000000e+00> : vector<64x128xf32>
    %49 = tpu.matmul %47, %48, %cst_34 {dimension_numbers = #tpu.dot_dimension_numbers<[1], [0], [0], [1], [0, 0, 1, 1], [], []>} : vector<64x384xbf16>, vector<384x128xbf16>, vector<64x128xf32> -> vector<64x128xf32>
    %c0_35 = arith.constant 0 : index
    %c0_36 = arith.constant 0 : index
    %50 = vector.load %arg7[%c0_35, %c0_36] : memref<1x128xf32, #tpu.memory_space<vmem>>, vector<1x128xf32>
    %51 = vector.broadcast %50 : vector<1x128xf32> to vector<64x128xf32>
    %52 = arith.addf %49, %51 : vector<64x128xf32>
    %53 = vector.broadcast %0 : vector<64x1xf32> to vector<64x128xf32>
    %54 = arith.mulf %52, %53 : vector<64x128xf32>
    %cst_37 = arith.constant dense<0.000000e+00> : vector<128xf32>
    %55 = vector.multi_reduction <add>, %54, %cst_37 [0] : vector<64x128xf32> to vector<128xf32>
    %56 = vector.shape_cast %55 : vector<128xf32> to vector<1x128xf32>
    %cst_38 = arith.constant 6.250000e-02 : f32
    %57 = vector.broadcast %cst_38 : f32 to vector<1x128xf32>
    %58 = arith.mulf %56, %57 : vector<1x128xf32>
    %59 = arith.mulf %54, %52 : vector<64x128xf32>
    %cst_39 = arith.constant dense<0.000000e+00> : vector<128xf32>
    %60 = vector.multi_reduction <add>, %59, %cst_39 [0] : vector<64x128xf32> to vector<128xf32>
    %61 = vector.shape_cast %60 : vector<128xf32> to vector<1x128xf32>
    %cst_40 = arith.constant 6.250000e-02 : f32
    %62 = vector.broadcast %cst_40 : f32 to vector<1x128xf32>
    %63 = arith.mulf %61, %62 : vector<1x128xf32>
    %64 = arith.mulf %58, %58 : vector<1x128xf32>
    %65 = arith.subf %63, %64 : vector<1x128xf32>
    %c0_41 = arith.constant 0 : index
    %c0_42 = arith.constant 0 : index
    %66 = vector.load %arg8[%c0_41, %c0_42] : memref<1x128xf32, #tpu.memory_space<vmem>>, vector<1x128xf32>
    %cst_43 = arith.constant 9.99999974E-6 : f32
    %67 = vector.broadcast %cst_43 : f32 to vector<1x128xf32>
    %68 = arith.addf %65, %67 : vector<1x128xf32>
    %69 = math.rsqrt %68 : vector<1x128xf32>
    %70 = arith.mulf %66, %69 : vector<1x128xf32>
    %c0_44 = arith.constant 0 : index
    %c0_45 = arith.constant 0 : index
    %71 = vector.load %arg9[%c0_44, %c0_45] : memref<1x128xf32, #tpu.memory_space<vmem>>, vector<1x128xf32>
    %72 = arith.mulf %58, %70 : vector<1x128xf32>
    %73 = arith.subf %71, %72 : vector<1x128xf32>
    %74 = vector.broadcast %70 : vector<1x128xf32> to vector<64x128xf32>
    %75 = arith.mulf %52, %74 : vector<64x128xf32>
    %76 = vector.broadcast %73 : vector<1x128xf32> to vector<64x128xf32>
    %77 = arith.addf %75, %76 : vector<64x128xf32>
    %cst_46 = arith.constant 0.000000e+00 : f32
    %78 = vector.broadcast %cst_46 : f32 to vector<64x128xf32>
    %79 = arith.maximumf %77, %78 : vector<64x128xf32>
    %c8_47 = arith.constant 8 : index
    %c0_48 = arith.constant 0 : index
    %80 = vector.load %arg23[%c8_47, %c0_48] : memref<80x256xf32, #tpu.memory_space<vmem>>, vector<64x128xf32>
    tpu.vector_store %arg23[%c8_47, %c0_48], %79 {strides = array<i32>} : memref<80x256xf32, #tpu.memory_space<vmem>>, vector<64x128xf32>,
    %c0_49 = arith.constant 0 : index
    %c0_50 = arith.constant 0 : index
    %81 = vector.load %arg23[%c0_49, %c0_50] : memref<80x256xf32, #tpu.memory_space<vmem>>, vector<64x128xf32>
    %c8_51 = arith.constant 8 : index
    %c0_52 = arith.constant 0 : index
    %82 = vector.load %arg23[%c8_51, %c0_52] : memref<80x256xf32, #tpu.memory_space<vmem>>, vector<64x128xf32>
    %c16_53 = arith.constant 16 : index
    %c0_54 = arith.constant 0 : index
    %83 = vector.load %arg23[%c16_53, %c0_54] : memref<80x256xf32, #tpu.memory_space<vmem>>, vector<64x128xf32>
    %84 = tpu.concatenate %81, %82, %83 in 1 : vector<64x128xf32>, vector<64x128xf32>, vector<64x128xf32> -> vector<64x384xf32>
    %85 = arith.truncf %84 : vector<64x384xf32> to vector<64x384xbf16>
    %c0_55 = arith.constant 0 : index
    %c0_56 = arith.constant 0 : index
    %86 = vector.load %arg10[%c0_55, %c0_56] : memref<384x256xbf16, #tpu.memory_space<vmem>>, vector<384x256xbf16>
    %cst_57 = arith.constant dense<0.000000e+00> : vector<64x256xf32>
    %87 = tpu.matmul %85, %86, %cst_57 {dimension_numbers = #tpu.dot_dimension_numbers<[1], [0], [0], [1], [0, 0, 1, 1], [], []>} : vector<64x384xbf16>, vector<384x256xbf16>, vector<64x256xf32> -> vector<64x256xf32>
    %c0_58 = arith.constant 0 : index
    %c0_59 = arith.constant 0 : index
    %88 = vector.load %arg11[%c0_58, %c0_59] : memref<1x256xf32, #tpu.memory_space<vmem>>, vector<1x256xf32>
    %89 = vector.broadcast %88 : vector<1x256xf32> to vector<64x256xf32>
    %90 = arith.addf %87, %89 : vector<64x256xf32>
    %cst_60 = arith.constant 0.000000e+00 : f32
    %91 = vector.broadcast %cst_60 : f32 to vector<64x256xf32>
    %92 = arith.maximumf %90, %91 : vector<64x256xf32>
    %c8_61 = arith.constant 8 : index
    %c0_62 = arith.constant 0 : index
    %93 = vector.load %arg23[%c8_61, %c0_62] : memref<80x256xf32, #tpu.memory_space<vmem>>, vector<64x256xf32>
    tpu.vector_store %arg23[%c8_61, %c0_62], %92 {strides = array<i32>} : memref<80x256xf32, #tpu.memory_space<vmem>>, vector<64x256xf32>,
    %c0_63 = arith.constant 0 : index
    %c0_64 = arith.constant 0 : index
    %94 = vector.load %arg23[%c0_63, %c0_64] : memref<80x256xf32, #tpu.memory_space<vmem>>, vector<64x256xf32>
    %c8_65 = arith.constant 8 : index
    %c0_66 = arith.constant 0 : index
    %95 = vector.load %arg23[%c8_65, %c0_66] : memref<80x256xf32, #tpu.memory_space<vmem>>, vector<64x256xf32>
    %c16_67 = arith.constant 16 : index
    %c0_68 = arith.constant 0 : index
    %96 = vector.load %arg23[%c16_67, %c0_68] : memref<80x256xf32, #tpu.memory_space<vmem>>, vector<64x256xf32>
    %97 = tpu.concatenate %94, %95, %96 in 1 : vector<64x256xf32>, vector<64x256xf32>, vector<64x256xf32> -> vector<64x768xf32>
    %98 = arith.truncf %97 : vector<64x768xf32> to vector<64x768xbf16>
    %c0_69 = arith.constant 0 : index
    %c0_70 = arith.constant 0 : index
    %99 = vector.load %arg12[%c0_69, %c0_70] : memref<768x256xbf16, #tpu.memory_space<vmem>>, vector<768x256xbf16>
    %cst_71 = arith.constant dense<0.000000e+00> : vector<64x256xf32>
    %100 = tpu.matmul %98, %99, %cst_71 {dimension_numbers = #tpu.dot_dimension_numbers<[1], [0], [0], [1], [0, 0, 1, 1], [], []>} : vector<64x768xbf16>, vector<768x256xbf16>, vector<64x256xf32> -> vector<64x256xf32>
    %c0_72 = arith.constant 0 : index
    %c0_73 = arith.constant 0 : index
    %101 = vector.load %arg13[%c0_72, %c0_73] : memref<1x256xf32, #tpu.memory_space<vmem>>, vector<1x256xf32>
    %102 = vector.broadcast %101 : vector<1x256xf32> to vector<64x256xf32>
    %103 = arith.addf %100, %102 : vector<64x256xf32>
    %104 = vector.broadcast %0 : vector<64x1xf32> to vector<64x256xf32>
    %105 = arith.mulf %103, %104 : vector<64x256xf32>
    %cst_74 = arith.constant dense<0.000000e+00> : vector<256xf32>
    %106 = vector.multi_reduction <add>, %105, %cst_74 [0] : vector<64x256xf32> to vector<256xf32>
    %107 = vector.shape_cast %106 : vector<256xf32> to vector<1x256xf32>
    %cst_75 = arith.constant 6.250000e-02 : f32
    %108 = vector.broadcast %cst_75 : f32 to vector<1x256xf32>
    %109 = arith.mulf %107, %108 : vector<1x256xf32>
    %110 = arith.mulf %105, %103 : vector<64x256xf32>
    %cst_76 = arith.constant dense<0.000000e+00> : vector<256xf32>
    %111 = vector.multi_reduction <add>, %110, %cst_76 [0] : vector<64x256xf32> to vector<256xf32>
    %112 = vector.shape_cast %111 : vector<256xf32> to vector<1x256xf32>
    %cst_77 = arith.constant 6.250000e-02 : f32
    %113 = vector.broadcast %cst_77 : f32 to vector<1x256xf32>
    %114 = arith.mulf %112, %113 : vector<1x256xf32>
    %115 = arith.mulf %109, %109 : vector<1x256xf32>
    %116 = arith.subf %114, %115 : vector<1x256xf32>
    %c0_78 = arith.constant 0 : index
    %c0_79 = arith.constant 0 : index
    %117 = vector.load %arg14[%c0_78, %c0_79] : memref<1x256xf32, #tpu.memory_space<vmem>>, vector<1x256xf32>
    %cst_80 = arith.constant 9.99999974E-6 : f32
    %118 = vector.broadcast %cst_80 : f32 to vector<1x256xf32>
    %119 = arith.addf %116, %118 : vector<1x256xf32>
    %120 = math.rsqrt %119 : vector<1x256xf32>
    %121 = arith.mulf %117, %120 : vector<1x256xf32>
    %c0_81 = arith.constant 0 : index
    %c0_82 = arith.constant 0 : index
    %122 = vector.load %arg15[%c0_81, %c0_82] : memref<1x256xf32, #tpu.memory_space<vmem>>, vector<1x256xf32>
    %123 = arith.mulf %109, %121 : vector<1x256xf32>
    %124 = arith.subf %122, %123 : vector<1x256xf32>
    %125 = vector.broadcast %121 : vector<1x256xf32> to vector<64x256xf32>
    %126 = arith.mulf %103, %125 : vector<64x256xf32>
    %127 = vector.broadcast %124 : vector<1x256xf32> to vector<64x256xf32>
    %128 = arith.addf %126, %127 : vector<64x256xf32>
    %cst_83 = arith.constant 0.000000e+00 : f32
    %129 = vector.broadcast %cst_83 : f32 to vector<64x256xf32>
    %130 = arith.maximumf %128, %129 : vector<64x256xf32>
    %131 = arith.truncf %130 : vector<64x256xf32> to vector<64x256xbf16>
    %c0_84 = arith.constant 0 : index
    %c0_85 = arith.constant 0 : index
    %132 = vector.load %arg16[%c0_84, %c0_85] : memref<256x768xbf16, #tpu.memory_space<vmem>>, vector<256x768xbf16>
    %cst_86 = arith.constant dense<0.000000e+00> : vector<64x768xf32>
    %133 = tpu.matmul %131, %132, %cst_86 {dimension_numbers = #tpu.dot_dimension_numbers<[1], [0], [0], [1], [0, 0, 1, 1], [], []>} : vector<64x256xbf16>, vector<256x768xbf16>, vector<64x768xf32> -> vector<64x768xf32>
    %c0_87 = arith.constant 0 : index
    %c0_88 = arith.constant 0 : index
    %134 = vector.load %arg17[%c0_87, %c0_88] : memref<1x768xf32, #tpu.memory_space<vmem>>, vector<1x768xf32>
    %135 = vector.broadcast %134 : vector<1x768xf32> to vector<64x768xf32>
    %136 = arith.addf %133, %135 : vector<64x768xf32>
    %c0_89 = arith.constant 0 : index
    %c0_90 = arith.constant 0 : index
    %137 = vector.load %arg18[%c0_89, %c0_90] : memref<256x768xbf16, #tpu.memory_space<vmem>>, vector<256x768xbf16>
    %c0_91 = arith.constant 0 : index
    %c0_92 = arith.constant 0 : index
    %138 = vector.load %arg19[%c0_91, %c0_92] : memref<1x768xf32, #tpu.memory_space<vmem>>, vector<1x768xf32>
    %cst_93 = arith.constant 0.000000e+00 : f32
    %139 = vector.broadcast %cst_93 : f32 to vector<8x256xf32>
    %cst_94 = arith.constant 0.000000e+00 : f32
    %140 = vector.broadcast %cst_94 : f32 to vector<8x256xf32>
    %141 = vector.extract_strided_slice %136 {offsets = [0, 0], sizes = [8, 768], strides = [1, 1]} : vector<64x768xf32> to vector<8x768xf32>
    %142 = arith.truncf %139 : vector<8x256xf32> to vector<8x256xbf16>
    %cst_95 = arith.constant dense<0.000000e+00> : vector<8x768xf32>
    %143 = tpu.matmul %142, %137, %cst_95 {dimension_numbers = #tpu.dot_dimension_numbers<[1], [0], [0], [1], [0, 0, 1, 1], [], []>} : vector<8x256xbf16>, vector<256x768xbf16>, vector<8x768xf32> -> vector<8x768xf32>
    %144 = vector.broadcast %138 : vector<1x768xf32> to vector<8x768xf32>
    %145 = arith.addf %143, %144 : vector<8x768xf32>
    %146 = vector.extract_strided_slice %141 {offsets = [0, 0], sizes = [8, 256], strides = [1, 1]} : vector<8x768xf32> to vector<8x256xf32>
    %147 = vector.extract_strided_slice %145 {offsets = [0, 0], sizes = [8, 256], strides = [1, 1]} : vector<8x768xf32> to vector<8x256xf32>
    %148 = arith.addf %146, %147 : vector<8x256xf32>
    %149 = arith.negf %148 : vector<8x256xf32>
    %150 = math.exp %149 : vector<8x256xf32>
    %cst_96 = arith.constant 1.000000e+00 : f32
    %151 = vector.broadcast %cst_96 : f32 to vector<8x256xf32>
    %152 = arith.addf %151, %150 : vector<8x256xf32>
    %153 = arith.divf %151, %152 : vector<8x256xf32>
    %154 = vector.extract_strided_slice %141 {offsets = [0, 256], sizes = [8, 256], strides = [1, 1]} : vector<8x768xf32> to vector<8x256xf32>
    %155 = vector.extract_strided_slice %145 {offsets = [0, 256], sizes = [8, 256], strides = [1, 1]} : vector<8x768xf32> to vector<8x256xf32>
    %156 = arith.addf %154, %155 : vector<8x256xf32>
    %157 = arith.negf %156 : vector<8x256xf32>
    %158 = math.exp %157 : vector<8x256xf32>
    %cst_97 = arith.constant 1.000000e+00 : f32
    %159 = vector.broadcast %cst_97 : f32 to vector<8x256xf32>
    %160 = arith.addf %159, %158 : vector<8x256xf32>
    %161 = arith.divf %159, %160 : vector<8x256xf32>
    %162 = vector.extract_strided_slice %141 {offsets = [0, 512], sizes = [8, 256], strides = [1, 1]} : vector<8x768xf32> to vector<8x256xf32>
    %163 = vector.extract_strided_slice %145 {offsets = [0, 512], sizes = [8, 256], strides = [1, 1]} : vector<8x768xf32> to vector<8x256xf32>
    %164 = arith.mulf %153, %163 : vector<8x256xf32>
    %165 = arith.addf %162, %164 : vector<8x256xf32>
    %166 = math.tanh %165 : vector<8x256xf32>
    %cst_98 = arith.constant 1.000000e+00 : f32
    %167 = vector.broadcast %cst_98 : f32 to vector<8x256xf32>
    %168 = arith.subf %167, %161 : vector<8x256xf32>
    %169 = arith.mulf %168, %166 : vector<8x256xf32>
    %170 = arith.mulf %161, %139 : vector<8x256xf32>
    %171 = arith.addf %169, %170 : vector<8x256xf32>
    %172 = arith.addf %140, %171 : vector<8x256xf32>
    %173 = vector.extract_strided_slice %136 {offsets = [8, 0], sizes = [8, 768], strides = [1, 1]} : vector<64x768xf32> to vector<8x768xf32>
    %174 = arith.truncf %171 : vector<8x256xf32> to vector<8x256xbf16>
    %cst_99 = arith.constant dense<0.000000e+00> : vector<8x768xf32>
    %175 = tpu.matmul %174, %137, %cst_99 {dimension_numbers = #tpu.dot_dimension_numbers<[1], [0], [0], [1], [0, 0, 1, 1], [], []>} : vector<8x256xbf16>, vector<256x768xbf16>, vector<8x768xf32> -> vector<8x768xf32>
    %176 = vector.broadcast %138 : vector<1x768xf32> to vector<8x768xf32>
    %177 = arith.addf %175, %176 : vector<8x768xf32>
    %178 = vector.extract_strided_slice %173 {offsets = [0, 0], sizes = [8, 256], strides = [1, 1]} : vector<8x768xf32> to vector<8x256xf32>
    %179 = vector.extract_strided_slice %177 {offsets = [0, 0], sizes = [8, 256], strides = [1, 1]} : vector<8x768xf32> to vector<8x256xf32>
    %180 = arith.addf %178, %179 : vector<8x256xf32>
    %181 = arith.negf %180 : vector<8x256xf32>
    %182 = math.exp %181 : vector<8x256xf32>
    %cst_100 = arith.constant 1.000000e+00 : f32
    %183 = vector.broadcast %cst_100 : f32 to vector<8x256xf32>
    %184 = arith.addf %183, %182 : vector<8x256xf32>
    %185 = arith.divf %183, %184 : vector<8x256xf32>
    %186 = vector.extract_strided_slice %173 {offsets = [0, 256], sizes = [8, 256], strides = [1, 1]} : vector<8x768xf32> to vector<8x256xf32>
    %187 = vector.extract_strided_slice %177 {offsets = [0, 256], sizes = [8, 256], strides = [1, 1]} : vector<8x768xf32> to vector<8x256xf32>
    %188 = arith.addf %186, %187 : vector<8x256xf32>
    %189 = arith.negf %188 : vector<8x256xf32>
    %190 = math.exp %189 : vector<8x256xf32>
    %cst_101 = arith.constant 1.000000e+00 : f32
    %191 = vector.broadcast %cst_101 : f32 to vector<8x256xf32>
    %192 = arith.addf %191, %190 : vector<8x256xf32>
    %193 = arith.divf %191, %192 : vector<8x256xf32>
    %194 = vector.extract_strided_slice %173 {offsets = [0, 512], sizes = [8, 256], strides = [1, 1]} : vector<8x768xf32> to vector<8x256xf32>
    %195 = vector.extract_strided_slice %177 {offsets = [0, 512], sizes = [8, 256], strides = [1, 1]} : vector<8x768xf32> to vector<8x256xf32>
    %196 = arith.mulf %185, %195 : vector<8x256xf32>
    %197 = arith.addf %194, %196 : vector<8x256xf32>
    %198 = math.tanh %197 : vector<8x256xf32>
    %cst_102 = arith.constant 1.000000e+00 : f32
    %199 = vector.broadcast %cst_102 : f32 to vector<8x256xf32>
    %200 = arith.subf %199, %193 : vector<8x256xf32>
    %201 = arith.mulf %200, %198 : vector<8x256xf32>
    %202 = arith.mulf %193, %171 : vector<8x256xf32>
    %203 = arith.addf %201, %202 : vector<8x256xf32>
    %204 = arith.addf %172, %203 : vector<8x256xf32>
    %205 = vector.extract_strided_slice %136 {offsets = [16, 0], sizes = [8, 768], strides = [1, 1]} : vector<64x768xf32> to vector<8x768xf32>
    %206 = arith.truncf %203 : vector<8x256xf32> to vector<8x256xbf16>
    %cst_103 = arith.constant dense<0.000000e+00> : vector<8x768xf32>
    %207 = tpu.matmul %206, %137, %cst_103 {dimension_numbers = #tpu.dot_dimension_numbers<[1], [0], [0], [1], [0, 0, 1, 1], [], []>} : vector<8x256xbf16>, vector<256x768xbf16>, vector<8x768xf32> -> vector<8x768xf32>
    %208 = vector.broadcast %138 : vector<1x768xf32> to vector<8x768xf32>
    %209 = arith.addf %207, %208 : vector<8x768xf32>
    %210 = vector.extract_strided_slice %205 {offsets = [0, 0], sizes = [8, 256], strides = [1, 1]} : vector<8x768xf32> to vector<8x256xf32>
    %211 = vector.extract_strided_slice %209 {offsets = [0, 0], sizes = [8, 256], strides = [1, 1]} : vector<8x768xf32> to vector<8x256xf32>
    %212 = arith.addf %210, %211 : vector<8x256xf32>
    %213 = arith.negf %212 : vector<8x256xf32>
    %214 = math.exp %213 : vector<8x256xf32>
    %cst_104 = arith.constant 1.000000e+00 : f32
    %215 = vector.broadcast %cst_104 : f32 to vector<8x256xf32>
    %216 = arith.addf %215, %214 : vector<8x256xf32>
    %217 = arith.divf %215, %216 : vector<8x256xf32>
    %218 = vector.extract_strided_slice %205 {offsets = [0, 256], sizes = [8, 256], strides = [1, 1]} : vector<8x768xf32> to vector<8x256xf32>
    %219 = vector.extract_strided_slice %209 {offsets = [0, 256], sizes = [8, 256], strides = [1, 1]} : vector<8x768xf32> to vector<8x256xf32>
    %220 = arith.addf %218, %219 : vector<8x256xf32>
    %221 = arith.negf %220 : vector<8x256xf32>
    %222 = math.exp %221 : vector<8x256xf32>
    %cst_105 = arith.constant 1.000000e+00 : f32
    %223 = vector.broadcast %cst_105 : f32 to vector<8x256xf32>
    %224 = arith.addf %223, %222 : vector<8x256xf32>
    %225 = arith.divf %223, %224 : vector<8x256xf32>
    %226 = vector.extract_strided_slice %205 {offsets = [0, 512], sizes = [8, 256], strides = [1, 1]} : vector<8x768xf32> to vector<8x256xf32>
    %227 = vector.extract_strided_slice %209 {offsets = [0, 512], sizes = [8, 256], strides = [1, 1]} : vector<8x768xf32> to vector<8x256xf32>
    %228 = arith.mulf %217, %227 : vector<8x256xf32>
    %229 = arith.addf %226, %228 : vector<8x256xf32>
    %230 = math.tanh %229 : vector<8x256xf32>
    %cst_106 = arith.constant 1.000000e+00 : f32
    %231 = vector.broadcast %cst_106 : f32 to vector<8x256xf32>
    %232 = arith.subf %231, %225 : vector<8x256xf32>
    %233 = arith.mulf %232, %230 : vector<8x256xf32>
    %234 = arith.mulf %225, %203 : vector<8x256xf32>
    %235 = arith.addf %233, %234 : vector<8x256xf32>
    %236 = arith.addf %204, %235 : vector<8x256xf32>
    %237 = vector.extract_strided_slice %136 {offsets = [24, 0], sizes = [8, 768], strides = [1, 1]} : vector<64x768xf32> to vector<8x768xf32>
    %238 = arith.truncf %235 : vector<8x256xf32> to vector<8x256xbf16>
    %cst_107 = arith.constant dense<0.000000e+00> : vector<8x768xf32>
    %239 = tpu.matmul %238, %137, %cst_107 {dimension_numbers = #tpu.dot_dimension_numbers<[1], [0], [0], [1], [0, 0, 1, 1], [], []>} : vector<8x256xbf16>, vector<256x768xbf16>, vector<8x768xf32> -> vector<8x768xf32>
    %240 = vector.broadcast %138 : vector<1x768xf32> to vector<8x768xf32>
    %241 = arith.addf %239, %240 : vector<8x768xf32>
    %242 = vector.extract_strided_slice %237 {offsets = [0, 0], sizes = [8, 256], strides = [1, 1]} : vector<8x768xf32> to vector<8x256xf32>
    %243 = vector.extract_strided_slice %241 {offsets = [0, 0], sizes = [8, 256], strides = [1, 1]} : vector<8x768xf32> to vector<8x256xf32>
    %244 = arith.addf %242, %243 : vector<8x256xf32>
    %245 = arith.negf %244 : vector<8x256xf32>
    %246 = math.exp %245 : vector<8x256xf32>
    %cst_108 = arith.constant 1.000000e+00 : f32
    %247 = vector.broadcast %cst_108 : f32 to vector<8x256xf32>
    %248 = arith.addf %247, %246 : vector<8x256xf32>
    %249 = arith.divf %247, %248 : vector<8x256xf32>
    %250 = vector.extract_strided_slice %237 {offsets = [0, 256], sizes = [8, 256], strides = [1, 1]} : vector<8x768xf32> to vector<8x256xf32>
    %251 = vector.extract_strided_slice %241 {offsets = [0, 256], sizes = [8, 256], strides = [1, 1]} : vector<8x768xf32> to vector<8x256xf32>
    %252 = arith.addf %250, %251 : vector<8x256xf32>
    %253 = arith.negf %252 : vector<8x256xf32>
    %254 = math.exp %253 : vector<8x256xf32>
    %cst_109 = arith.constant 1.000000e+00 : f32
    %255 = vector.broadcast %cst_109 : f32 to vector<8x256xf32>
    %256 = arith.addf %255, %254 : vector<8x256xf32>
    %257 = arith.divf %255, %256 : vector<8x256xf32>
    %258 = vector.extract_strided_slice %237 {offsets = [0, 512], sizes = [8, 256], strides = [1, 1]} : vector<8x768xf32> to vector<8x256xf32>
    %259 = vector.extract_strided_slice %241 {offsets = [0, 512], sizes = [8, 256], strides = [1, 1]} : vector<8x768xf32> to vector<8x256xf32>
    %260 = arith.mulf %249, %259 : vector<8x256xf32>
    %261 = arith.addf %258, %260 : vector<8x256xf32>
    %262 = math.tanh %261 : vector<8x256xf32>
    %cst_110 = arith.constant 1.000000e+00 : f32
    %263 = vector.broadcast %cst_110 : f32 to vector<8x256xf32>
    %264 = arith.subf %263, %257 : vector<8x256xf32>
    %265 = arith.mulf %264, %262 : vector<8x256xf32>
    %266 = arith.mulf %257, %235 : vector<8x256xf32>
    %267 = arith.addf %265, %266 : vector<8x256xf32>
    %268 = arith.addf %236, %267 : vector<8x256xf32>
    %269 = vector.extract_strided_slice %136 {offsets = [32, 0], sizes = [8, 768], strides = [1, 1]} : vector<64x768xf32> to vector<8x768xf32>
    %270 = arith.truncf %267 : vector<8x256xf32> to vector<8x256xbf16>
    %cst_111 = arith.constant dense<0.000000e+00> : vector<8x768xf32>
    %271 = tpu.matmul %270, %137, %cst_111 {dimension_numbers = #tpu.dot_dimension_numbers<[1], [0], [0], [1], [0, 0, 1, 1], [], []>} : vector<8x256xbf16>, vector<256x768xbf16>, vector<8x768xf32> -> vector<8x768xf32>
    %272 = vector.broadcast %138 : vector<1x768xf32> to vector<8x768xf32>
    %273 = arith.addf %271, %272 : vector<8x768xf32>
    %274 = vector.extract_strided_slice %269 {offsets = [0, 0], sizes = [8, 256], strides = [1, 1]} : vector<8x768xf32> to vector<8x256xf32>
    %275 = vector.extract_strided_slice %273 {offsets = [0, 0], sizes = [8, 256], strides = [1, 1]} : vector<8x768xf32> to vector<8x256xf32>
    %276 = arith.addf %274, %275 : vector<8x256xf32>
    %277 = arith.negf %276 : vector<8x256xf32>
    %278 = math.exp %277 : vector<8x256xf32>
    %cst_112 = arith.constant 1.000000e+00 : f32
    %279 = vector.broadcast %cst_112 : f32 to vector<8x256xf32>
    %280 = arith.addf %279, %278 : vector<8x256xf32>
    %281 = arith.divf %279, %280 : vector<8x256xf32>
    %282 = vector.extract_strided_slice %269 {offsets = [0, 256], sizes = [8, 256], strides = [1, 1]} : vector<8x768xf32> to vector<8x256xf32>
    %283 = vector.extract_strided_slice %273 {offsets = [0, 256], sizes = [8, 256], strides = [1, 1]} : vector<8x768xf32> to vector<8x256xf32>
    %284 = arith.addf %282, %283 : vector<8x256xf32>
    %285 = arith.negf %284 : vector<8x256xf32>
    %286 = math.exp %285 : vector<8x256xf32>
    %cst_113 = arith.constant 1.000000e+00 : f32
    %287 = vector.broadcast %cst_113 : f32 to vector<8x256xf32>
    %288 = arith.addf %287, %286 : vector<8x256xf32>
    %289 = arith.divf %287, %288 : vector<8x256xf32>
    %290 = vector.extract_strided_slice %269 {offsets = [0, 512], sizes = [8, 256], strides = [1, 1]} : vector<8x768xf32> to vector<8x256xf32>
    %291 = vector.extract_strided_slice %273 {offsets = [0, 512], sizes = [8, 256], strides = [1, 1]} : vector<8x768xf32> to vector<8x256xf32>
    %292 = arith.mulf %281, %291 : vector<8x256xf32>
    %293 = arith.addf %290, %292 : vector<8x256xf32>
    %294 = math.tanh %293 : vector<8x256xf32>
    %cst_114 = arith.constant 1.000000e+00 : f32
    %295 = vector.broadcast %cst_114 : f32 to vector<8x256xf32>
    %296 = arith.subf %295, %289 : vector<8x256xf32>
    %297 = arith.mulf %296, %294 : vector<8x256xf32>
    %298 = arith.mulf %289, %267 : vector<8x256xf32>
    %299 = arith.addf %297, %298 : vector<8x256xf32>
    %300 = arith.addf %268, %299 : vector<8x256xf32>
    %301 = vector.extract_strided_slice %136 {offsets = [40, 0], sizes = [8, 768], strides = [1, 1]} : vector<64x768xf32> to vector<8x768xf32>
    %302 = arith.truncf %299 : vector<8x256xf32> to vector<8x256xbf16>
    %cst_115 = arith.constant dense<0.000000e+00> : vector<8x768xf32>
    %303 = tpu.matmul %302, %137, %cst_115 {dimension_numbers = #tpu.dot_dimension_numbers<[1], [0], [0], [1], [0, 0, 1, 1], [], []>} : vector<8x256xbf16>, vector<256x768xbf16>, vector<8x768xf32> -> vector<8x768xf32>
    %304 = vector.broadcast %138 : vector<1x768xf32> to vector<8x768xf32>
    %305 = arith.addf %303, %304 : vector<8x768xf32>
    %306 = vector.extract_strided_slice %301 {offsets = [0, 0], sizes = [8, 256], strides = [1, 1]} : vector<8x768xf32> to vector<8x256xf32>
    %307 = vector.extract_strided_slice %305 {offsets = [0, 0], sizes = [8, 256], strides = [1, 1]} : vector<8x768xf32> to vector<8x256xf32>
    %308 = arith.addf %306, %307 : vector<8x256xf32>
    %309 = arith.negf %308 : vector<8x256xf32>
    %310 = math.exp %309 : vector<8x256xf32>
    %cst_116 = arith.constant 1.000000e+00 : f32
    %311 = vector.broadcast %cst_116 : f32 to vector<8x256xf32>
    %312 = arith.addf %311, %310 : vector<8x256xf32>
    %313 = arith.divf %311, %312 : vector<8x256xf32>
    %314 = vector.extract_strided_slice %301 {offsets = [0, 256], sizes = [8, 256], strides = [1, 1]} : vector<8x768xf32> to vector<8x256xf32>
    %315 = vector.extract_strided_slice %305 {offsets = [0, 256], sizes = [8, 256], strides = [1, 1]} : vector<8x768xf32> to vector<8x256xf32>
    %316 = arith.addf %314, %315 : vector<8x256xf32>
    %317 = arith.negf %316 : vector<8x256xf32>
    %318 = math.exp %317 : vector<8x256xf32>
    %cst_117 = arith.constant 1.000000e+00 : f32
    %319 = vector.broadcast %cst_117 : f32 to vector<8x256xf32>
    %320 = arith.addf %319, %318 : vector<8x256xf32>
    %321 = arith.divf %319, %320 : vector<8x256xf32>
    %322 = vector.extract_strided_slice %301 {offsets = [0, 512], sizes = [8, 256], strides = [1, 1]} : vector<8x768xf32> to vector<8x256xf32>
    %323 = vector.extract_strided_slice %305 {offsets = [0, 512], sizes = [8, 256], strides = [1, 1]} : vector<8x768xf32> to vector<8x256xf32>
    %324 = arith.mulf %313, %323 : vector<8x256xf32>
    %325 = arith.addf %322, %324 : vector<8x256xf32>
    %326 = math.tanh %325 : vector<8x256xf32>
    %cst_118 = arith.constant 1.000000e+00 : f32
    %327 = vector.broadcast %cst_118 : f32 to vector<8x256xf32>
    %328 = arith.subf %327, %321 : vector<8x256xf32>
    %329 = arith.mulf %328, %326 : vector<8x256xf32>
    %330 = arith.mulf %321, %299 : vector<8x256xf32>
    %331 = arith.addf %329, %330 : vector<8x256xf32>
    %332 = arith.addf %300, %331 : vector<8x256xf32>
    %333 = vector.extract_strided_slice %136 {offsets = [48, 0], sizes = [8, 768], strides = [1, 1]} : vector<64x768xf32> to vector<8x768xf32>
    %334 = arith.truncf %331 : vector<8x256xf32> to vector<8x256xbf16>
    %cst_119 = arith.constant dense<0.000000e+00> : vector<8x768xf32>
    %335 = tpu.matmul %334, %137, %cst_119 {dimension_numbers = #tpu.dot_dimension_numbers<[1], [0], [0], [1], [0, 0, 1, 1], [], []>} : vector<8x256xbf16>, vector<256x768xbf16>, vector<8x768xf32> -> vector<8x768xf32>
    %336 = vector.broadcast %138 : vector<1x768xf32> to vector<8x768xf32>
    %337 = arith.addf %335, %336 : vector<8x768xf32>
    %338 = vector.extract_strided_slice %333 {offsets = [0, 0], sizes = [8, 256], strides = [1, 1]} : vector<8x768xf32> to vector<8x256xf32>
    %339 = vector.extract_strided_slice %337 {offsets = [0, 0], sizes = [8, 256], strides = [1, 1]} : vector<8x768xf32> to vector<8x256xf32>
    %340 = arith.addf %338, %339 : vector<8x256xf32>
    %341 = arith.negf %340 : vector<8x256xf32>
    %342 = math.exp %341 : vector<8x256xf32>
    %cst_120 = arith.constant 1.000000e+00 : f32
    %343 = vector.broadcast %cst_120 : f32 to vector<8x256xf32>
    %344 = arith.addf %343, %342 : vector<8x256xf32>
    %345 = arith.divf %343, %344 : vector<8x256xf32>
    %346 = vector.extract_strided_slice %333 {offsets = [0, 256], sizes = [8, 256], strides = [1, 1]} : vector<8x768xf32> to vector<8x256xf32>
    %347 = vector.extract_strided_slice %337 {offsets = [0, 256], sizes = [8, 256], strides = [1, 1]} : vector<8x768xf32> to vector<8x256xf32>
    %348 = arith.addf %346, %347 : vector<8x256xf32>
    %349 = arith.negf %348 : vector<8x256xf32>
    %350 = math.exp %349 : vector<8x256xf32>
    %cst_121 = arith.constant 1.000000e+00 : f32
    %351 = vector.broadcast %cst_121 : f32 to vector<8x256xf32>
    %352 = arith.addf %351, %350 : vector<8x256xf32>
    %353 = arith.divf %351, %352 : vector<8x256xf32>
    %354 = vector.extract_strided_slice %333 {offsets = [0, 512], sizes = [8, 256], strides = [1, 1]} : vector<8x768xf32> to vector<8x256xf32>
    %355 = vector.extract_strided_slice %337 {offsets = [0, 512], sizes = [8, 256], strides = [1, 1]} : vector<8x768xf32> to vector<8x256xf32>
    %356 = arith.mulf %345, %355 : vector<8x256xf32>
    %357 = arith.addf %354, %356 : vector<8x256xf32>
    %358 = math.tanh %357 : vector<8x256xf32>
    %cst_122 = arith.constant 1.000000e+00 : f32
    %359 = vector.broadcast %cst_122 : f32 to vector<8x256xf32>
    %360 = arith.subf %359, %353 : vector<8x256xf32>
    %361 = arith.mulf %360, %358 : vector<8x256xf32>
    %362 = arith.mulf %353, %331 : vector<8x256xf32>
    %363 = arith.addf %361, %362 : vector<8x256xf32>
    %364 = arith.addf %332, %363 : vector<8x256xf32>
    %365 = vector.extract_strided_slice %136 {offsets = [56, 0], sizes = [8, 768], strides = [1, 1]} : vector<64x768xf32> to vector<8x768xf32>
    %366 = arith.truncf %363 : vector<8x256xf32> to vector<8x256xbf16>
    %cst_123 = arith.constant dense<0.000000e+00> : vector<8x768xf32>
    %367 = tpu.matmul %366, %137, %cst_123 {dimension_numbers = #tpu.dot_dimension_numbers<[1], [0], [0], [1], [0, 0, 1, 1], [], []>} : vector<8x256xbf16>, vector<256x768xbf16>, vector<8x768xf32> -> vector<8x768xf32>
    %368 = vector.broadcast %138 : vector<1x768xf32> to vector<8x768xf32>
    %369 = arith.addf %367, %368 : vector<8x768xf32>
    %370 = vector.extract_strided_slice %365 {offsets = [0, 0], sizes = [8, 256], strides = [1, 1]} : vector<8x768xf32> to vector<8x256xf32>
    %371 = vector.extract_strided_slice %369 {offsets = [0, 0], sizes = [8, 256], strides = [1, 1]} : vector<8x768xf32> to vector<8x256xf32>
    %372 = arith.addf %370, %371 : vector<8x256xf32>
    %373 = arith.negf %372 : vector<8x256xf32>
    %374 = math.exp %373 : vector<8x256xf32>
    %cst_124 = arith.constant 1.000000e+00 : f32
    %375 = vector.broadcast %cst_124 : f32 to vector<8x256xf32>
    %376 = arith.addf %375, %374 : vector<8x256xf32>
    %377 = arith.divf %375, %376 : vector<8x256xf32>
    %378 = vector.extract_strided_slice %365 {offsets = [0, 256], sizes = [8, 256], strides = [1, 1]} : vector<8x768xf32> to vector<8x256xf32>
    %379 = vector.extract_strided_slice %369 {offsets = [0, 256], sizes = [8, 256], strides = [1, 1]} : vector<8x768xf32> to vector<8x256xf32>
    %380 = arith.addf %378, %379 : vector<8x256xf32>
    %381 = arith.negf %380 : vector<8x256xf32>
    %382 = math.exp %381 : vector<8x256xf32>
    %cst_125 = arith.constant 1.000000e+00 : f32
    %383 = vector.broadcast %cst_125 : f32 to vector<8x256xf32>
    %384 = arith.addf %383, %382 : vector<8x256xf32>
    %385 = arith.divf %383, %384 : vector<8x256xf32>
    %386 = vector.extract_strided_slice %365 {offsets = [0, 512], sizes = [8, 256], strides = [1, 1]} : vector<8x768xf32> to vector<8x256xf32>
    %387 = vector.extract_strided_slice %369 {offsets = [0, 512], sizes = [8, 256], strides = [1, 1]} : vector<8x768xf32> to vector<8x256xf32>
    %388 = arith.mulf %377, %387 : vector<8x256xf32>
    %389 = arith.addf %386, %388 : vector<8x256xf32>
    %390 = math.tanh %389 : vector<8x256xf32>
    %cst_126 = arith.constant 1.000000e+00 : f32
    %391 = vector.broadcast %cst_126 : f32 to vector<8x256xf32>
    %392 = arith.subf %391, %385 : vector<8x256xf32>
    %393 = arith.mulf %392, %390 : vector<8x256xf32>
    %394 = arith.mulf %385, %363 : vector<8x256xf32>
    %395 = arith.addf %393, %394 : vector<8x256xf32>
    %396 = arith.addf %364, %395 : vector<8x256xf32>
    %cst_127 = arith.constant 1.250000e-01 : f32
    %397 = vector.broadcast %cst_127 : f32 to vector<8x256xf32>
    %398 = arith.mulf %396, %397 : vector<8x256xf32>
    %399 = arith.truncf %398 : vector<8x256xf32> to vector<8x256xbf16>
    %c0_128 = arith.constant 0 : index
    %c0_129 = arith.constant 0 : index
    %400 = vector.load %arg20[%c0_128, %c0_129] : memref<256x128xbf16, #tpu.memory_space<vmem>>, vector<256x128xbf16>
    %cst_130 = arith.constant dense<0.000000e+00> : vector<8x128xf32>
    %401 = tpu.matmul %399, %400, %cst_130 {dimension_numbers = #tpu.dot_dimension_numbers<[1], [0], [0], [1], [0, 0, 1, 1], [], []>} : vector<8x256xbf16>, vector<256x128xbf16>, vector<8x128xf32> -> vector<8x128xf32>
    %c0_131 = arith.constant 0 : index
    %c0_132 = arith.constant 0 : index
    %402 = vector.load %arg21[%c0_131, %c0_132] : memref<1x128xf32, #tpu.memory_space<vmem>>, vector<1x128xf32>
    %403 = vector.broadcast %402 : vector<1x128xf32> to vector<8x128xf32>
    %404 = arith.addf %401, %403 : vector<8x128xf32>
    %c0_133 = arith.constant 0 : index
    %c0_134 = arith.constant 0 : index
    %405 = vector.load %arg22[%c0_133, %c0_134] : memref<8x128xf32, #tpu.memory_space<vmem>>, vector<8x128xf32>
    tpu.vector_store %arg22[%c0_133, %c0_134], %404 {strides = array<i32>} : memref<8x128xf32, #tpu.memory_space<vmem>>, vector<8x128xf32>,
    return
  }
}

</mosaic_0001>

<llo_original>
// kernel: tpu_custom_call.1
$region0: #{tpu_custom_call.1}
  #allocation0 [shape = 'u32[]', space=smem, size = 0x4, offset = 0x4, fixed_abs, tag = 'smem constant byte address 0x4 - core index']
  #allocation1 [shape = 'u32[144,128]{1,0:T(1,128)}', space=vmem, size = 0x12000, scoped, tag = 'internal scratch']
  #allocation2 [shape = 'f32[80,256]{1,0:T(8,128)}', space=vmem, size = 0x14000, scoped, tag = 'scratch operand']
  %s0 = inlined_call_operand.hbm [shape: f32[80,768], index: 0, kind: input, shape index: {}]
  %s1 = inlined_call_operand.vmem [shape: f32[64,1], index: 1, kind: input, shape index: {}]
  %s2 = inlined_call_operand.hbm [shape: bf16[2304,128], index: 2, kind: input, shape index: {}]
  %s3 = inlined_call_operand.hbm [shape: f32[1,128], index: 3, kind: input, shape index: {}]
  %s4 = inlined_call_operand.hbm [shape: f32[1,128], index: 4, kind: input, shape index: {}]
  %s5 = inlined_call_operand.hbm [shape: f32[1,128], index: 5, kind: input, shape index: {}]
  %s6 = inlined_call_operand.hbm [shape: bf16[384,128], index: 6, kind: input, shape index: {}]
  %s7 = inlined_call_operand.hbm [shape: f32[1,128], index: 7, kind: input, shape index: {}]
  %s8 = inlined_call_operand.hbm [shape: f32[1,128], index: 8, kind: input, shape index: {}]
  %s9 = inlined_call_operand.hbm [shape: f32[1,128], index: 9, kind: input, shape index: {}]
  %s10 = inlined_call_operand.hbm [shape: bf16[384,256], index: 10, kind: input, shape index: {}]
  %s11 = inlined_call_operand.hbm [shape: f32[1,256], index: 11, kind: input, shape index: {}]
  %s12 = inlined_call_operand.hbm [shape: bf16[768,256], index: 12, kind: input, shape index: {}]
  %s13 = inlined_call_operand.hbm [shape: f32[1,256], index: 13, kind: input, shape index: {}]
  %s14 = inlined_call_operand.hbm [shape: f32[1,256], index: 14, kind: input, shape index: {}]
  %s15 = inlined_call_operand.hbm [shape: f32[1,256], index: 15, kind: input, shape index: {}]
  %s16 = inlined_call_operand.hbm [shape: bf16[256,768], index: 16, kind: input, shape index: {}]
  %s17 = inlined_call_operand.vmem [shape: f32[1,768], index: 17, kind: input, shape index: {}]
  %s18 = inlined_call_operand.hbm [shape: bf16[256,768], index: 18, kind: input, shape index: {}]
  %s19 = inlined_call_operand.vmem [shape: f32[1,768], index: 19, kind: input, shape index: {}]
  %s20 = inlined_call_operand.vmem [shape: bf16[256,128], index: 20, kind: input, shape index: {}]
  %s21 = inlined_call_operand.vmem [shape: f32[1,128], index: 21, kind: input, shape index: {}]
  %s22 = inlined_call_operand.hbm [shape: f32[8,128], index: 22, kind: output, shape index: {}]
  %s23 = sld [smem:[#allocation0]]
  $region166: #{tpu_custom_call.1} parent=0
    _
  %s25 = ssub.s32 1, %s23
  %s26 = scalar_select 0, %s25, %s23
  $region1: #{tpu_custom_call.1} parent=0
    #allocation3 [shape = 'u8[245760]{0}', space=vmem, size = 0x3c000, scoped, tag = 'input window, operand 0, single buffered']
    #allocation4 [shape = 's32[1]{0}', space=sflag, size = 0x4, scoped, tag = 'scoped memory for tpu_custom_call.1']
    #allocation5 [shape = 's32[1]{0}', space=sflag, size = 0x4, scoped, tag = 'scoped memory for tpu_custom_call.1']
    #allocation6 [shape = 'u8[589824]{0}', space=vmem, size = 0x90000, scoped, tag = 'input window, operand 2, single buffered']
    #allocation7 [shape = 's32[1]{0}', space=sflag, size = 0x4, scoped, tag = 'scoped memory for tpu_custom_call.1']
    #allocation8 [shape = 'u8[512]{0}', space=vmem, size = 0x400, scoped, tag = 'input window, operand 3, single buffered']
    #allocation9 [shape = 'u8[512]{0}', space=vmem, size = 0x400, scoped, tag = 'input window, operand 4, single buffered']
    #allocation10 [shape = 's32[1]{0}', space=sflag, size = 0x4, scoped, tag = 'scoped memory for tpu_custom_call.1']
    #allocation11 [shape = 'u8[512]{0}', space=vmem, size = 0x400, scoped, tag = 'input window, operand 5, single buffered']
    #allocation12 [shape = 'u8[98304]{0}', space=vmem, size = 0x18000, scoped, tag = 'input window, operand 6, single buffered']
    #allocation13 [shape = 's32[1]{0}', space=sflag, size = 0x4, scoped, tag = 'scoped memory for tpu_custom_call.1']
    #allocation14 [shape = 'u8[512]{0}', space=vmem, size = 0x400, scoped, tag = 'input window, operand 7, single buffered']
    #allocation15 [shape = 'u8[512]{0}', space=vmem, size = 0x400, scoped, tag = 'input window, operand 8, single buffered']
    #allocation16 [shape = 's32[1]{0}', space=sflag, size = 0x4, scoped, tag = 'scoped memory for tpu_custom_call.1']
    #allocation17 [shape = 'u8[512]{0}', space=vmem, size = 0x400, scoped, tag = 'input window, operand 9, single buffered']
    #allocation18 [shape = 'u8[196608]{0}', space=vmem, size = 0x30000, scoped, tag = 'input window, operand 10, single buffered']
    #allocation19 [shape = 's32[1]{0}', space=sflag, size = 0x4, scoped, tag = 'scoped memory for tpu_custom_call.1']
    #allocation20 [shape = 'u8[1024]{0}', space=vmem, size = 0x400, scoped, tag = 'input window, operand 11, single buffered']
    #allocation21 [shape = 'u8[393216]{0}', space=vmem, size = 0x60000, scoped, tag = 'input window, operand 12, single buffered']
    #allocation22 [shape = 's32[1]{0}', space=sflag, size = 0x4, scoped, tag = 'scoped memory for tpu_custom_call.1']
    #allocation23 [shape = 'u8[1024]{0}', space=vmem, size = 0x400, scoped, tag = 'input window, operand 13, single buffered']
    #allocation24 [shape = 'u8[1024]{0}', space=vmem, size = 0x400, scoped, tag = 'input window, operand 14, single buffered']
    #allocation25 [shape = 's32[1]{0}', space=sflag, size = 0x4, scoped, tag = 'scoped memory for tpu_custom_call.1']
    #allocation26 [shape = 'u8[1024]{0}', space=vmem, size = 0x400, scoped, tag = 'input window, operand 15, single buffered']
    #allocation27 [shape = 'u8[393216]{0}', space=vmem, size = 0x60000, scoped, tag = 'input window, operand 16, single buffered']
    #allocation28 [shape = 's32[1]{0}', space=sflag, size = 0x4, scoped, tag = 'scoped memory for tpu_custom_call.1']
    #allocation29 [shape = 'u8[393216]{0}', space=vmem, size = 0x60000, scoped, tag = 'input window, operand 18, single buffered']
    #allocation30 [shape = 'u8[4096]{0}', space=vmem, size = 0x1000, scoped, tag = 'output window, operand 0, single buffered']
    %27 = vsyncpa [#allocation4], 0
    %28 = vsyncpa [#allocation7], 0
    %29 = vsyncpa [#allocation10], 0
    %30 = vsyncpa [#allocation13], 0
    %31 = vsyncpa [#allocation16], 0
    %32 = vsyncpa [#allocation19], 0
    %33 = vsyncpa [#allocation22], 0
    %34 = vsyncpa [#allocation25], 0
    %35 = vsyncpa [#allocation28], 0
    %36 = vsyncpa [#allocation5], 0
    // Predicated region
    $region2: #{tpu_custom_call.1} parent=1 // pred_check
      _
    $region3: #{tpu_custom_call.1} parent=1 // pred_check_branch
      %38 = sbr.rel (0) target = $region5
    $region4: #{tpu_custom_call.1} parent=1 // pred_region
      %s40 = ssub.s32 7680, 7680
      %41 = vsyncadd [#allocation4], %s40
      %s42 = sshll.u32 [#allocation3], 4
      %s43 = int_to_ptr.vmem [resolvable:$true] %s42
      %48 = dma.hbm_to_vmem [thread:$0]  %s0, 7680, %s43, [#allocation4], 768, 768, 48
    $region5: #{tpu_custom_call.1} parent=1 // pred_fallthru
      _
    // Predicated region
    $region6: #{tpu_custom_call.1} parent=1 // pred_check
      _
    $region7: #{tpu_custom_call.1} parent=1 // pred_check_branch
      %50 = sbr.rel (0) target = $region9
    $region8: #{tpu_custom_call.1} parent=1 // pred_region
      _
    $region9: #{tpu_custom_call.1} parent=1 // pred_fallthru
      _
    // Predicated region
    $region10: #{tpu_custom_call.1} parent=1 // pred_check
      _
    $region11: #{tpu_custom_call.1} parent=1 // pred_check_branch
      %52 = sbr.rel (0) target = $region13
    $region12: #{tpu_custom_call.1} parent=1 // pred_region
      %s54 = ssub.s32 18432, 18432
      %55 = vsyncadd [#allocation7], %s54
      %s56 = sshll.u32 [#allocation6], 4
      %s57 = int_to_ptr.vmem [resolvable:$true] %s56
      %62 = dma.hbm_to_vmem [thread:$0]  %s2, 18432, %s57, [#allocation7], 64, 64, 4
    $region13: #{tpu_custom_call.1} parent=1 // pred_fallthru
      _
    // Predicated region
    $region14: #{tpu_custom_call.1} parent=1 // pred_check
      _
    $region15: #{tpu_custom_call.1} parent=1 // pred_check_branch
      %64 = sbr.rel (0) target = $region17
    $region16: #{tpu_custom_call.1} parent=1 // pred_region
      %s66 = ssub.s32 16, 16
      %67 = vsyncadd [#allocation7], %s66
      %s69 = sshll.u32 [#allocation8], 4
      %s70 = int_to_ptr.vmem [resolvable:$true] %s69
      %72 = dma.hbm_to_vmem [thread:$0]  %s3, 16, %s70, [#allocation7]
    $region17: #{tpu_custom_call.1} parent=1 // pred_fallthru
      _
    // Predicated region
    $region18: #{tpu_custom_call.1} parent=1 // pred_check
      _
    $region19: #{tpu_custom_call.1} parent=1 // pred_check_branch
      %74 = sbr.rel (0) target = $region21
    $region20: #{tpu_custom_call.1} parent=1 // pred_region
      %s76 = ssub.s32 16, 16
      %77 = vsyncadd [#allocation10], %s76
      %s79 = sshll.u32 [#allocation9], 4
      %s80 = int_to_ptr.vmem [resolvable:$true] %s79
      %82 = dma.hbm_to_vmem [thread:$0]  %s4, 16, %s80, [#allocation10]
    $region21: #{tpu_custom_call.1} parent=1 // pred_fallthru
      _
    // Predicated region
    $region22: #{tpu_custom_call.1} parent=1 // pred_check
      _
    $region23: #{tpu_custom_call.1} parent=1 // pred_check_branch
      %84 = sbr.rel (0) target = $region25
    $region24: #{tpu_custom_call.1} parent=1 // pred_region
      %s86 = ssub.s32 16, 16
      %87 = vsyncadd [#allocation10], %s86
      %s89 = sshll.u32 [#allocation11], 4
      %s90 = int_to_ptr.vmem [resolvable:$true] %s89
      %92 = dma.hbm_to_vmem [thread:$0]  %s5, 16, %s90, [#allocation10]
    $region25: #{tpu_custom_call.1} parent=1 // pred_fallthru
      _
    // Predicated region
    $region26: #{tpu_custom_call.1} parent=1 // pred_check
      _
    $region27: #{tpu_custom_call.1} parent=1 // pred_check_branch
      %94 = sbr.rel (0) target = $region29
    $region28: #{tpu_custom_call.1} parent=1 // pred_region
      %s96 = ssub.s32 3072, 3072
      %97 = vsyncadd [#allocation13], %s96
      %s98 = sshll.u32 [#allocation12], 4
      %s99 = int_to_ptr.vmem [resolvable:$true] %s98
      %104 = dma.hbm_to_vmem [thread:$0]  %s6, 3072, %s99, [#allocation13], 64, 64, 4
    $region29: #{tpu_custom_call.1} parent=1 // pred_fallthru
      _
    // Predicated region
    $region30: #{tpu_custom_call.1} parent=1 // pred_check
      _
    $region31: #{tpu_custom_call.1} parent=1 // pred_check_branch
      %106 = sbr.rel (0) target = $region33
    $region32: #{tpu_custom_call.1} parent=1 // pred_region
      %s108 = ssub.s32 16, 16
      %109 = vsyncadd [#allocation13], %s108
      %s111 = sshll.u32 [#allocation14], 4
      %s112 = int_to_ptr.vmem [resolvable:$true] %s111
      %114 = dma.hbm_to_vmem [thread:$0]  %s7, 16, %s112, [#allocation13]
    $region33: #{tpu_custom_call.1} parent=1 // pred_fallthru
      _
    // Predicated region
    $region34: #{tpu_custom_call.1} parent=1 // pred_check
      _
    $region35: #{tpu_custom_call.1} parent=1 // pred_check_branch
      %116 = sbr.rel (0) target = $region37
    $region36: #{tpu_custom_call.1} parent=1 // pred_region
      %s118 = ssub.s32 16, 16
      %119 = vsyncadd [#allocation16], %s118
      %s121 = sshll.u32 [#allocation15], 4
      %s122 = int_to_ptr.vmem [resolvable:$true] %s121
      %124 = dma.hbm_to_vmem [thread:$0]  %s8, 16, %s122, [#allocation16]
    $region37: #{tpu_custom_call.1} parent=1 // pred_fallthru
      _
    // Predicated region
    $region38: #{tpu_custom_call.1} parent=1 // pred_check
      _
    $region39: #{tpu_custom_call.1} parent=1 // pred_check_branch
      %126 = sbr.rel (0) target = $region41
    $region40: #{tpu_custom_call.1} parent=1 // pred_region
      %s128 = ssub.s32 16, 16
      %129 = vsyncadd [#allocation16], %s128
      %s131 = sshll.u32 [#allocation17], 4
      %s132 = int_to_ptr.vmem [resolvable:$true] %s131
      %134 = dma.hbm_to_vmem [thread:$0]  %s9, 16, %s132, [#allocation16]
    $region41: #{tpu_custom_call.1} parent=1 // pred_fallthru
      _
    // Predicated region
    $region42: #{tpu_custom_call.1} parent=1 // pred_check
      _
    $region43: #{tpu_custom_call.1} parent=1 // pred_check_branch
      %136 = sbr.rel (0) target = $region45
    $region44: #{tpu_custom_call.1} parent=1 // pred_region
      %s138 = ssub.s32 6144, 6144
      %139 = vsyncadd [#allocation19], %s138
      %s140 = sshll.u32 [#allocation18], 4
      %s141 = int_to_ptr.vmem [resolvable:$true] %s140
      %146 = dma.hbm_to_vmem [thread:$0]  %s10, 6144, %s141, [#allocation19], 128, 128, 8
    $region45: #{tpu_custom_call.1} parent=1 // pred_fallthru
      _
    // Predicated region
    $region46: #{tpu_custom_call.1} parent=1 // pred_check
      _
    $region47: #{tpu_custom_call.1} parent=1 // pred_check_branch
      %148 = sbr.rel (0) target = $region49
    $region48: #{tpu_custom_call.1} parent=1 // pred_region
      %s150 = ssub.s32 32, 32
      %151 = vsyncadd [#allocation19], %s150
      %s153 = sshll.u32 [#allocation20], 4
      %s154 = int_to_ptr.vmem [resolvable:$true] %s153
      %156 = dma.hbm_to_vmem [thread:$0]  %s11, 32, %s154, [#allocation19]
    $region49: #{tpu_custom_call.1} parent=1 // pred_fallthru
      _
    // Predicated region
    $region50: #{tpu_custom_call.1} parent=1 // pred_check
      _
    $region51: #{tpu_custom_call.1} parent=1 // pred_check_branch
      %158 = sbr.rel (0) target = $region53
    $region52: #{tpu_custom_call.1} parent=1 // pred_region
      %s160 = ssub.s32 12288, 12288
      %161 = vsyncadd [#allocation22], %s160
      %s162 = sshll.u32 [#allocation21], 4
      %s163 = int_to_ptr.vmem [resolvable:$true] %s162
      %168 = dma.hbm_to_vmem [thread:$0]  %s12, 12288, %s163, [#allocation22], 128, 128, 8
    $region53: #{tpu_custom_call.1} parent=1 // pred_fallthru
      _
    // Predicated region
    $region54: #{tpu_custom_call.1} parent=1 // pred_check
      _
    $region55: #{tpu_custom_call.1} parent=1 // pred_check_branch
      %170 = sbr.rel (0) target = $region57
    $region56: #{tpu_custom_call.1} parent=1 // pred_region
      %s172 = ssub.s32 32, 32
      %173 = vsyncadd [#allocation22], %s172
      %s175 = sshll.u32 [#allocation23], 4
      %s176 = int_to_ptr.vmem [resolvable:$true] %s175
      %178 = dma.hbm_to_vmem [thread:$0]  %s13, 32, %s176, [#allocation22]
    $region57: #{tpu_custom_call.1} parent=1 // pred_fallthru
      _
    // Predicated region
    $region58: #{tpu_custom_call.1} parent=1 // pred_check
      _
    $region59: #{tpu_custom_call.1} parent=1 // pred_check_branch
      %180 = sbr.rel (0) target = $region61
    $region60: #{tpu_custom_call.1} parent=1 // pred_region
      %s182 = ssub.s32 32, 32
      %183 = vsyncadd [#allocation25], %s182
      %s185 = sshll.u32 [#allocation24], 4
      %s186 = int_to_ptr.vmem [resolvable:$true] %s185
      %188 = dma.hbm_to_vmem [thread:$0]  %s14, 32, %s186, [#allocation25]
    $region61: #{tpu_custom_call.1} parent=1 // pred_fallthru
      _
    // Predicated region
    $region62: #{tpu_custom_call.1} parent=1 // pred_check
      _
    $region63: #{tpu_custom_call.1} parent=1 // pred_check_branch
      %190 = sbr.rel (0) target = $region65
    $region64: #{tpu_custom_call.1} parent=1 // pred_region
      %s192 = ssub.s32 32, 32
      %193 = vsyncadd [#allocation25], %s192
      %s195 = sshll.u32 [#allocation26], 4
      %s196 = int_to_ptr.vmem [resolvable:$true] %s195
      %198 = dma.hbm_to_vmem [thread:$0]  %s15, 32, %s196, [#allocation25]
    $region65: #{tpu_custom_call.1} parent=1 // pred_fallthru
      _
    // Predicated region
    $region66: #{tpu_custom_call.1} parent=1 // pred_check
      _
    $region67: #{tpu_custom_call.1} parent=1 // pred_check_branch
      %200 = sbr.rel (0) target = $region69
    $region68: #{tpu_custom_call.1} parent=1 // pred_region
      %s202 = ssub.s32 12288, 12288
      %203 = vsyncadd [#allocation28], %s202
      %s204 = sshll.u32 [#allocation27], 4
      %s205 = int_to_ptr.vmem [resolvable:$true] %s204
      %210 = dma.hbm_to_vmem [thread:$0]  %s16, 12288, %s205, [#allocation28], 384, 384, 24
    $region69: #{tpu_custom_call.1} parent=1 // pred_fallthru
      _
    // Predicated region
    $region70: #{tpu_custom_call.1} parent=1 // pred_check
      _
    $region71: #{tpu_custom_call.1} parent=1 // pred_check_branch
      %212 = sbr.rel (0) target = $region73
    $region72: #{tpu_custom_call.1} parent=1 // pred_region
      _
    $region73: #{tpu_custom_call.1} parent=1 // pred_fallthru
      _
    // Predicated region
    $region74: #{tpu_custom_call.1} parent=1 // pred_check
      _
    $region75: #{tpu_custom_call.1} parent=1 // pred_check_branch
      %214 = sbr.rel (0) target = $region77
    $region76: #{tpu_custom_call.1} parent=1 // pred_region
      %s216 = ssub.s32 12288, 12288
      %217 = vsyncadd [#allocation28], %s216
      %s218 = sshll.u32 [#allocation29], 4
      %s219 = int_to_ptr.vmem [resolvable:$true] %s218
      %224 = dma.hbm_to_vmem [thread:$0]  %s18, 12288, %s219, [#allocation28], 384, 384, 24
    $region77: #{tpu_custom_call.1} parent=1 // pred_fallthru
      _
    // Predicated region
    $region78: #{tpu_custom_call.1} parent=1 // pred_check
      _
    $region79: #{tpu_custom_call.1} parent=1 // pred_check_branch
      %226 = sbr.rel (0) target = $region81
    $region80: #{tpu_custom_call.1} parent=1 // pred_region
      _
    $region81: #{tpu_custom_call.1} parent=1 // pred_fallthru
      _
    // Predicated region
    $region82: #{tpu_custom_call.1} parent=1 // pred_check
      _
    $region83: #{tpu_custom_call.1} parent=1 // pred_check_branch
      %228 = sbr.rel (0) target = $region85
    $region84: #{tpu_custom_call.1} parent=1 // pred_region
      _
    $region85: #{tpu_custom_call.1} parent=1 // pred_fallthru
      _
    // Predicated region
    $region86: #{tpu_custom_call.1} parent=1 // pred_check
      _
    $region87: #{tpu_custom_call.1} parent=1 // pred_check_branch
      %230 = sbr.rel (0) target = $region89
    $region88: #{tpu_custom_call.1} parent=1 // pred_region
      _
    $region89: #{tpu_custom_call.1} parent=1 // pred_fallthru
      _
    // Predicated region
    $region90: #{tpu_custom_call.1} parent=1 // pred_check
      _
    $region91: #{tpu_custom_call.1} parent=1 // pred_check_branch
      %232 = sbr.rel (0) target = $region93
    $region92: #{tpu_custom_call.1} parent=1 // pred_region
      %233 = dma.done [#allocation4], 7680
    $region93: #{tpu_custom_call.1} parent=1 // pred_fallthru
      _
    // Predicated region
    $region94: #{tpu_custom_call.1} parent=1 // pred_check
      _
    $region95: #{tpu_custom_call.1} parent=1 // pred_check_branch
      %235 = sbr.rel (0) target = $region97
    $region96: #{tpu_custom_call.1} parent=1 // pred_region
      %236 = dma.done [#allocation7], 18432
    $region97: #{tpu_custom_call.1} parent=1 // pred_fallthru
      _
    // Predicated region
    $region98: #{tpu_custom_call.1} parent=1 // pred_check
      _
    $region99: #{tpu_custom_call.1} parent=1 // pred_check_branch
      %238 = sbr.rel (0) target = $region101
    $region100: #{tpu_custom_call.1} parent=1 // pred_region
      %239 = dma.done [#allocation7], 16
    $region101: #{tpu_custom_call.1} parent=1 // pred_fallthru
      _
    // Predicated region
    $region102: #{tpu_custom_call.1} parent=1 // pred_check
      _
    $region103: #{tpu_custom_call.1} parent=1 // pred_check_branch
      %241 = sbr.rel (0) target = $region105
    $region104: #{tpu_custom_call.1} parent=1 // pred_region
      %242 = dma.done [#allocation10], 16
    $region105: #{tpu_custom_call.1} parent=1 // pred_fallthru
      _
    // Predicated region
    $region106: #{tpu_custom_call.1} parent=1 // pred_check
      _
    $region107: #{tpu_custom_call.1} parent=1 // pred_check_branch
      %244 = sbr.rel (0) target = $region109
    $region108: #{tpu_custom_call.1} parent=1 // pred_region
      %245 = dma.done [#allocation10], 16
    $region109: #{tpu_custom_call.1} parent=1 // pred_fallthru
      _
    // Predicated region
    $region110: #{tpu_custom_call.1} parent=1 // pred_check
      _
    $region111: #{tpu_custom_call.1} parent=1 // pred_check_branch
      %247 = sbr.rel (0) target = $region113
    $region112: #{tpu_custom_call.1} parent=1 // pred_region
      %248 = dma.done [#allocation13], 3072
    $region113: #{tpu_custom_call.1} parent=1 // pred_fallthru
      _
    // Predicated region
    $region114: #{tpu_custom_call.1} parent=1 // pred_check
      _
    $region115: #{tpu_custom_call.1} parent=1 // pred_check_branch
      %250 = sbr.rel (0) target = $region117
    $region116: #{tpu_custom_call.1} parent=1 // pred_region
      %251 = dma.done [#allocation13], 16
    $region117: #{tpu_custom_call.1} parent=1 // pred_fallthru
      _
    // Predicated region
    $region118: #{tpu_custom_call.1} parent=1 // pred_check
      _
    $region119: #{tpu_custom_call.1} parent=1 // pred_check_branch
      %253 = sbr.rel (0) target = $region121
    $region120: #{tpu_custom_call.1} parent=1 // pred_region
      %254 = dma.done [#allocation16], 16
    $region121: #{tpu_custom_call.1} parent=1 // pred_fallthru
      _
    // Predicated region
    $region122: #{tpu_custom_call.1} parent=1 // pred_check
      _
    $region123: #{tpu_custom_call.1} parent=1 // pred_check_branch
      %256 = sbr.rel (0) target = $region125
    $region124: #{tpu_custom_call.1} parent=1 // pred_region
      %257 = dma.done [#allocation16], 16
    $region125: #{tpu_custom_call.1} parent=1 // pred_fallthru
      _
    // Predicated region
    $region126: #{tpu_custom_call.1} parent=1 // pred_check
      _
    $region127: #{tpu_custom_call.1} parent=1 // pred_check_branch
      %259 = sbr.rel (0) target = $region129
    $region128: #{tpu_custom_call.1} parent=1 // pred_region
      %260 = dma.done [#allocation19], 6144
    $region129: #{tpu_custom_call.1} parent=1 // pred_fallthru
      _
    // Predicated region
    $region130: #{tpu_custom_call.1} parent=1 // pred_check
      _
    $region131: #{tpu_custom_call.1} parent=1 // pred_check_branch
      %262 = sbr.rel (0) target = $region133
    $region132: #{tpu_custom_call.1} parent=1 // pred_region
      %263 = dma.done [#allocation19], 32
    $region133: #{tpu_custom_call.1} parent=1 // pred_fallthru
      _
    // Predicated region
    $region134: #{tpu_custom_call.1} parent=1 // pred_check
      _
    $region135: #{tpu_custom_call.1} parent=1 // pred_check_branch
      %265 = sbr.rel (0) target = $region137
    $region136: #{tpu_custom_call.1} parent=1 // pred_region
      %266 = dma.done [#allocation22], 12288
    $region137: #{tpu_custom_call.1} parent=1 // pred_fallthru
      _
    // Predicated region
    $region138: #{tpu_custom_call.1} parent=1 // pred_check
      _
    $region139: #{tpu_custom_call.1} parent=1 // pred_check_branch
      %268 = sbr.rel (0) target = $region141
    $region140: #{tpu_custom_call.1} parent=1 // pred_region
      %269 = dma.done [#allocation22], 32
    $region141: #{tpu_custom_call.1} parent=1 // pred_fallthru
      _
    // Predicated region
    $region142: #{tpu_custom_call.1} parent=1 // pred_check
      _
    $region143: #{tpu_custom_call.1} parent=1 // pred_check_branch
      %271 = sbr.rel (0) target = $region145
    $region144: #{tpu_custom_call.1} parent=1 // pred_region
      %272 = dma.done [#allocation25], 32
    $region145: #{tpu_custom_call.1} parent=1 // pred_fallthru
      _
    // Predicated region
    $region146: #{tpu_custom_call.1} parent=1 // pred_check
      _
    $region147: #{tpu_custom_call.1} parent=1 // pred_check_branch
      %274 = sbr.rel (0) target = $region149
    $region148: #{tpu_custom_call.1} parent=1 // pred_region
      %275 = dma.done [#allocation25], 32
    $region149: #{tpu_custom_call.1} parent=1 // pred_fallthru
      _
    // Predicated region
    $region150: #{tpu_custom_call.1} parent=1 // pred_check
      _
    $region151: #{tpu_custom_call.1} parent=1 // pred_check_branch
      %277 = sbr.rel (0) target = $region153
    $region152: #{tpu_custom_call.1} parent=1 // pred_region
      %278 = dma.done [#allocation28], 12288
    $region153: #{tpu_custom_call.1} parent=1 // pred_fallthru
      _
    // Predicated region
    $region154: #{tpu_custom_call.1} parent=1 // pred_check
      _
    $region155: #{tpu_custom_call.1} parent=1 // pred_check_branch
      %280 = sbr.rel (0) target = $region157
    $region156: #{tpu_custom_call.1} parent=1 // pred_region
      %281 = dma.done [#allocation28], 12288
    $region157: #{tpu_custom_call.1} parent=1 // pred_fallthru
      _
    %v283 = vld [vmem:[%s1] sm:$0xff]
    %v284 = vld [vmem:[%s1 + $0x8] sm:$0xff]
    %v285 = vld [vmem:[%s1 + $0x10] sm:$0xff]
    %v286 = vld [vmem:[%s1 + $0x18] sm:$0xff]
    %v287 = vld [vmem:[%s1 + $0x20] sm:$0xff]
    %v288 = vld [vmem:[%s1 + $0x28] sm:$0xff]
    %v289 = vld [vmem:[%s1 + $0x30] sm:$0xff]
    %v290 = vld [vmem:[%s1 + $0x38] sm:$0xff]
    %291 = vst [vmem:[#allocation2] sm:$0xff] 0.0
    %292 = vst [vmem:[#allocation2 + $0x8] sm:$0xff] 0.0
    %293 = vst [vmem:[#allocation2 + $0x90] sm:$0xff] 0.0
    %294 = vst [vmem:[#allocation2 + $0x98] sm:$0xff] 0.0
    %v295 = vld [vmem:[#allocation3] sm:$0xff]
    %v296 = vld [vmem:[#allocation3 + $0x8] sm:$0xff]
    %v297 = vld [vmem:[#allocation3 + $0x10] sm:$0xff]
    %v298 = vld [vmem:[#allocation3 + $0x18] sm:$0xff]
    %v299 = vld [vmem:[#allocation3 + $0x20] sm:$0xff]
    %v300 = vld [vmem:[#allocation3 + $0x28] sm:$0xff]
    %v301 = vld [vmem:[#allocation3 + $0x30] sm:$0xff]
    %v302 = vld [vmem:[#allocation3 + $0x38] sm:$0xff]
    %v303 = vld [vmem:[#allocation3 + $0x40] sm:$0xff]
    %v304 = vld [vmem:[#allocation3 + $0x48] sm:$0xff]
    %v305 = vld [vmem:[#allocation3 + $0x50] sm:$0xff]
    %v306 = vld [vmem:[#allocation3 + $0x58] sm:$0xff]
    %v307 = vld [vmem:[#allocation3 + $0x60] sm:$0xff]
    %v308 = vld [vmem:[#allocation3 + $0x68] sm:$0xff]
    %v309 = vld [vmem:[#allocation3 + $0x70] sm:$0xff]
    %v310 = vld [vmem:[#allocation3 + $0x78] sm:$0xff]
    %v311 = vld [vmem:[#allocation3 + $0x80] sm:$0xff]
    %v312 = vld [vmem:[#allocation3 + $0x88] sm:$0xff]
    %v313 = vld [vmem:[#allocation3 + $0x90] sm:$0xff]
    %v314 = vld [vmem:[#allocation3 + $0x98] sm:$0xff]
    %v315 = vld [vmem:[#allocation3 + $0xa0] sm:$0xff]
    %v316 = vld [vmem:[#allocation3 + $0xa8] sm:$0xff]
    %v317 = vld [vmem:[#allocation3 + $0xb0] sm:$0xff]
    %v318 = vld [vmem:[#allocation3 + $0xb8] sm:$0xff]
    %v319 = vld [vmem:[#allocation3 + $0xc0] sm:$0xff]
    %v320 = vld [vmem:[#allocation3 + $0xc8] sm:$0xff]
    %v321 = vld [vmem:[#allocation3 + $0xd0] sm:$0xff]
    %v322 = vld [vmem:[#allocation3 + $0xd8] sm:$0xff]
    %v323 = vld [vmem:[#allocation3 + $0xe0] sm:$0xff]
    %v324 = vld [vmem:[#allocation3 + $0xe8] sm:$0xff]
    %v325 = vld [vmem:[#allocation3 + $0xf0] sm:$0xff]
    %v326 = vld [vmem:[#allocation3 + $0xf8] sm:$0xff]
    %v327 = vld [vmem:[#allocation3 + $0x100] sm:$0xff]
    %v328 = vld [vmem:[#allocation3 + $0x108] sm:$0xff]
    %v329 = vld [vmem:[#allocation3 + $0x110] sm:$0xff]
    %v330 = vld [vmem:[#allocation3 + $0x118] sm:$0xff]
    %v331 = vld [vmem:[#allocation3 + $0x120] sm:$0xff]
    %v332 = vld [vmem:[#allocation3 + $0x128] sm:$0xff]
    %v333 = vld [vmem:[#allocation3 + $0x130] sm:$0xff]
    %v334 = vld [vmem:[#allocation3 + $0x138] sm:$0xff]
    %v335 = vld [vmem:[#allocation3 + $0x140] sm:$0xff]
    %v336 = vld [vmem:[#allocation3 + $0x148] sm:$0xff]
    %v337 = vld [vmem:[#allocation3 + $0x150] sm:$0xff]
    %v338 = vld [vmem:[#allocation3 + $0x158] sm:$0xff]
    %v339 = vld [vmem:[#allocation3 + $0x160] sm:$0xff]
    %v340 = vld [vmem:[#allocation3 + $0x168] sm:$0xff]
    %v341 = vld [vmem:[#allocation3 + $0x170] sm:$0xff]
    %v342 = vld [vmem:[#allocation3 + $0x178] sm:$0xff]
    %v343 = vld [vmem:[#allocation3 + $0x180] sm:$0xff]
    %v344 = vld [vmem:[#allocation3 + $0x188] sm:$0xff]
    %v345 = vld [vmem:[#allocation3 + $0x190] sm:$0xff]
    %v346 = vld [vmem:[#allocation3 + $0x198] sm:$0xff]
    %v347 = vld [vmem:[#allocation3 + $0x1a0] sm:$0xff]
    %v348 = vld [vmem:[#allocation3 + $0x1a8] sm:$0xff]
    %v349 = vld [vmem:[#allocation3 + $0x60] sm:$0xff]
    %v350 = vld [vmem:[#allocation3 + $0x68] sm:$0xff]
    %v351 = vld [vmem:[#allocation3 + $0x70] sm:$0xff]
    %v352 = vld [vmem:[#allocation3 + $0x78] sm:$0xff]
    %v353 = vld [vmem:[#allocation3 + $0x80] sm:$0xff]
    %v354 = vld [vmem:[#allocation3 + $0x88] sm:$0xff]
    %v355 = vld [vmem:[#allocation3 + $0x90] sm:$0xff]
    %v356 = vld [vmem:[#allocation3 + $0x98] sm:$0xff]
    %v357 = vld [vmem:[#allocation3 + $0xa0] sm:$0xff]
    %v358 = vld [vmem:[#allocation3 + $0xa8] sm:$0xff]
    %v359 = vld [vmem:[#allocation3 + $0xb0] sm:$0xff]
    %v360 = vld [vmem:[#allocation3 + $0xb8] sm:$0xff]
    %v361 = vld [vmem:[#allocation3 + $0xc0] sm:$0xff]
    %v362 = vld [vmem:[#allocation3 + $0xc8] sm:$0xff]
    %v363 = vld [vmem:[#allocation3 + $0xd0] sm:$0xff]
    %v364 = vld [vmem:[#allocation3 + $0xd8] sm:$0xff]
    %v365 = vld [vmem:[#allocation3 + $0xe0] sm:$0xff]
    %v366 = vld [vmem:[#allocation3 + $0xe8] sm:$0xff]
    %v367 = vld [vmem:[#allocation3 + $0xf0] sm:$0xff]
    %v368 = vld [vmem:[#allocation3 + $0xf8] sm:$0xff]
    %v369 = vld [vmem:[#allocation3 + $0x100] sm:$0xff]
    %v370 = vld [vmem:[#allocation3 + $0x108] sm:$0xff]
    %v371 = vld [vmem:[#allocation3 + $0x110] sm:$0xff]
    %v372 = vld [vmem:[#allocation3 + $0x118] sm:$0xff]
    %v373 = vld [vmem:[#allocation3 + $0x120] sm:$0xff]
    %v374 = vld [vmem:[#allocation3 + $0x128] sm:$0xff]
    %v375 = vld [vmem:[#allocation3 + $0x130] sm:$0xff]
    %v376 = vld [vmem:[#allocation3 + $0x138] sm:$0xff]
    %v377 = vld [vmem:[#allocation3 + $0x140] sm:$0xff]
    %v378 = vld [vmem:[#allocation3 + $0x148] sm:$0xff]
    %v379 = vld [vmem:[#allocation3 + $0x150] sm:$0xff]
    %v380 = vld [vmem:[#allocation3 + $0x158] sm:$0xff]
    %v381 = vld [vmem:[#allocation3 + $0x160] sm:$0xff]
    %v382 = vld [vmem:[#allocation3 + $0x168] sm:$0xff]
    %v383 = vld [vmem:[#allocation3 + $0x170] sm:$0xff]
    %v384 = vld [vmem:[#allocation3 + $0x178] sm:$0xff]
    %v385 = vld [vmem:[#allocation3 + $0x180] sm:$0xff]
    %v386 = vld [vmem:[#allocation3 + $0x188] sm:$0xff]
    %v387 = vld [vmem:[#allocation3 + $0x190] sm:$0xff]
    %v388 = vld [vmem:[#allocation3 + $0x198] sm:$0xff]
    %v389 = vld [vmem:[#allocation3 + $0x1a0] sm:$0xff]
    %v390 = vld [vmem:[#allocation3 + $0x1a8] sm:$0xff]
    %v391 = vld [vmem:[#allocation3 + $0x1b0] sm:$0xff]
    %v392 = vld [vmem:[#allocation3 + $0x1b8] sm:$0xff]
    %v393 = vld [vmem:[#allocation3 + $0x1c0] sm:$0xff]
    %v394 = vld [vmem:[#allocation3 + $0x1c8] sm:$0xff]
    %v395 = vld [vmem:[#allocation3 + $0x1d0] sm:$0xff]
    %v396 = vld [vmem:[#allocation3 + $0x1d8] sm:$0xff]
    %v397 = vpack.c.bf16 %v301, %v295
    %v398 = vpack.c.bf16 %v302, %v296
    %v399 = vpack.c.bf16 %v303, %v297
    %v400 = vpack.c.bf16 %v304, %v298
    %v401 = vpack.c.bf16 %v305, %v299
    %v402 = vpack.c.bf16 %v306, %v300
    %v403 = vpack.c.bf16 %v307, %v301
    %v404 = vpack.c.bf16 %v308, %v302
    %v405 = vpack.c.bf16 %v309, %v303
    %v406 = vpack.c.bf16 %v310, %v304
    %v407 = vpack.c.bf16 %v311, %v305
    %v408 = vpack.c.bf16 %v312, %v306
    %v409 = vpack.c.bf16 %v355, %v349
    %v410 = vpack.c.bf16 %v356, %v350
    %v411 = vpack.c.bf16 %v357, %v351
    %v412 = vpack.c.bf16 %v358, %v352
    %v413 = vpack.c.bf16 %v359, %v353
    %v414 = vpack.c.bf16 %v360, %v354
    %v415 = vpack.c.bf16 %v313, %v307
    %v416 = vpack.c.bf16 %v314, %v308
    %v417 = vpack.c.bf16 %v315, %v309
    %v418 = vpack.c.bf16 %v316, %v310
    %v419 = vpack.c.bf16 %v317, %v311
    %v420 = vpack.c.bf16 %v318, %v312
    %v421 = vpack.c.bf16 %v319, %v313
    %v422 = vpack.c.bf16 %v320, %v314
    %v423 = vpack.c.bf16 %v321, %v315
    %v424 = vpack.c.bf16 %v322, %v316
    %v425 = vpack.c.bf16 %v323, %v317
    %v426 = vpack.c.bf16 %v324, %v318
    %v427 = vpack.c.bf16 %v367, %v361
    %v428 = vpack.c.bf16 %v368, %v362
    %v429 = vpack.c.bf16 %v369, %v363
    %v430 = vpack.c.bf16 %v370, %v364
    %v431 = vpack.c.bf16 %v371, %v365
    %v432 = vpack.c.bf16 %v372, %v366
    %v433 = vpack.c.bf16 %v325, %v319
    %v434 = vpack.c.bf16 %v326, %v320
    %v435 = vpack.c.bf16 %v327, %v321
    %v436 = vpack.c.bf16 %v328, %v322
    %v437 = vpack.c.bf16 %v329, %v323
    %v438 = vpack.c.bf16 %v330, %v324
    %v439 = vpack.c.bf16 %v331, %v325
    %v440 = vpack.c.bf16 %v332, %v326
    %v441 = vpack.c.bf16 %v333, %v327
    %v442 = vpack.c.bf16 %v334, %v328
    %v443 = vpack.c.bf16 %v335, %v329
    %v444 = vpack.c.bf16 %v336, %v330
    %v445 = vpack.c.bf16 %v379, %v373
    %v446 = vpack.c.bf16 %v380, %v374
    %v447 = vpack.c.bf16 %v381, %v375
    %v448 = vpack.c.bf16 %v382, %v376
    %v449 = vpack.c.bf16 %v383, %v377
    %v450 = vpack.c.bf16 %v384, %v378
    %v451 = vpack.c.bf16 %v337, %v331
    %v452 = vpack.c.bf16 %v338, %v332
    %v453 = vpack.c.bf16 %v339, %v333
    %v454 = vpack.c.bf16 %v340, %v334
    %v455 = vpack.c.bf16 %v341, %v335
    %v456 = vpack.c.bf16 %v342, %v336
    %v457 = vpack.c.bf16 %v343, %v337
    %v458 = vpack.c.bf16 %v344, %v338
    %v459 = vpack.c.bf16 %v345, %v339
    %v460 = vpack.c.bf16 %v346, %v340
    %v461 = vpack.c.bf16 %v347, %v341
    %v462 = vpack.c.bf16 %v348, %v342
    %v463 = vpack.c.bf16 %v391, %v385
    %v464 = vpack.c.bf16 %v392, %v386
    %v465 = vpack.c.bf16 %v393, %v387
    %v466 = vpack.c.bf16 %v394, %v388
    %v467 = vpack.c.bf16 %v395, %v389
    %v468 = vpack.c.bf16 %v396, %v390
    %v469 = vld [vmem:[#allocation6] sm:$0xf]
    %v470 = vld [vmem:[#allocation6 + $0x4] sm:$0xf]
    %v471 = vld [vmem:[#allocation6 + $0x8] sm:$0xf]
    %v472 = vld [vmem:[#allocation6 + $0xc] sm:$0xf]
    %v473 = vld [vmem:[#allocation6 + $0x10] sm:$0xf]
    %v474 = vld [vmem:[#allocation6 + $0x14] sm:$0xf]
    %v475 = vld [vmem:[#allocation6 + $0x18] sm:$0xf]
    %v476 = vld [vmem:[#allocation6 + $0x1c] sm:$0xf]
    %v477 = vld [vmem:[#allocation6 + $0x20] sm:$0xf]
    %v478 = vld [vmem:[#allocation6 + $0x24] sm:$0xf]
    %v479 = vld [vmem:[#allocation6 + $0x28] sm:$0xf]
    %v480 = vld [vmem:[#allocation6 + $0x2c] sm:$0xf]
    %v481 = vld [vmem:[#allocation6 + $0x30] sm:$0xf]
    %v482 = vld [vmem:[#allocation6 + $0x34] sm:$0xf]
    %v483 = vld [vmem:[#allocation6 + $0x38] sm:$0xf]
    %v484 = vld [vmem:[#allocation6 + $0x3c] sm:$0xf]
    %v485 = vld [vmem:[#allocation6 + $0x40] sm:$0xf]
    %v486 = vld [vmem:[#allocation6 + $0x44] sm:$0xf]
    %v487 = vld [vmem:[#allocation6 + $0x48] sm:$0xf]
    %v488 = vld [vmem:[#allocation6 + $0x4c] sm:$0xf]
    %v489 = vld [vmem:[#allocation6 + $0x50] sm:$0xf]
    %v490 = vld [vmem:[#allocation6 + $0x54] sm:$0xf]
    %v491 = vld [vmem:[#allocation6 + $0x58] sm:$0xf]
    %v492 = vld [vmem:[#allocation6 + $0x5c] sm:$0xf]
    %v493 = vld [vmem:[#allocation6 + $0x60] sm:$0xf]
    %v494 = vld [vmem:[#allocation6 + $0x64] sm:$0xf]
    %v495 = vld [vmem:[#allocation6 + $0x68] sm:$0xf]
    %v496 = vld [vmem:[#allocation6 + $0x6c] sm:$0xf]
    %v497 = vld [vmem:[#allocation6 + $0x70] sm:$0xf]
    %v498 = vld [vmem:[#allocation6 + $0x74] sm:$0xf]
    %v499 = vld [vmem:[#allocation6 + $0x78] sm:$0xf]
    %v500 = vld [vmem:[#allocation6 + $0x7c] sm:$0xf]
    %v501 = vld [vmem:[#allocation6 + $0x80] sm:$0xf]
    %v502 = vld [vmem:[#allocation6 + $0x84] sm:$0xf]
    %v503 = vld [vmem:[#allocation6 + $0x88] sm:$0xf]
    %v504 = vld [vmem:[#allocation6 + $0x8c] sm:$0xf]
    %v505 = vld [vmem:[#allocation6 + $0x90] sm:$0xf]
    %v506 = vld [vmem:[#allocation6 + $0x94] sm:$0xf]
    %v507 = vld [vmem:[#allocation6 + $0x98] sm:$0xf]
    %v508 = vld [vmem:[#allocation6 + $0x9c] sm:$0xf]
    %v509 = vld [vmem:[#allocation6 + $0xa0] sm:$0xf]
    %v510 = vld [vmem:[#allocation6 + $0xa4] sm:$0xf]
    %v511 = vld [vmem:[#allocation6 + $0xa8] sm:$0xf]
    %v512 = vld [vmem:[#allocation6 + $0xac] sm:$0xf]
    %v513 = vld [vmem:[#allocation6 + $0xb0] sm:$0xf]
    %v514 = vld [vmem:[#allocation6 + $0xb4] sm:$0xf]
    %v515 = vld [vmem:[#allocation6 + $0xb8] sm:$0xf]
    %v516 = vld [vmem:[#allocation6 + $0xbc] sm:$0xf]
    %v517 = vld [vmem:[#allocation6 + $0xc0] sm:$0xf]
    %v518 = vld [vmem:[#allocation6 + $0xc4] sm:$0xf]
    %v519 = vld [vmem:[#allocation6 + $0xc8] sm:$0xf]
    %v520 = vld [vmem:[#allocation6 + $0xcc] sm:$0xf]
    %v521 = vld [vmem:[#allocation6 + $0xd0] sm:$0xf]
    %v522 = vld [vmem:[#allocation6 + $0xd4] sm:$0xf]
    %v523 = vld [vmem:[#allocation6 + $0xd8] sm:$0xf]
    %v524 = vld [vmem:[#allocation6 + $0xdc] sm:$0xf]
    %v525 = vld [vmem:[#allocation6 + $0xe0] sm:$0xf]
    %v526 = vld [vmem:[#allocation6 + $0xe4] sm:$0xf]
    %v527 = vld [vmem:[#allocation6 + $0xe8] sm:$0xf]
    %v528 = vld [vmem:[#allocation6 + $0xec] sm:$0xf]
    %v529 = vld [vmem:[#allocation6 + $0xf0] sm:$0xf]
    %v530 = vld [vmem:[#allocation6 + $0xf4] sm:$0xf]
    %v531 = vld [vmem:[#allocation6 + $0xf8] sm:$0xf]
    %v532 = vld [vmem:[#allocation6 + $0xfc] sm:$0xf]
    %v533 = vld [vmem:[#allocation6 + $0x100] sm:$0xf]
    %v534 = vld [vmem:[#allocation6 + $0x104] sm:$0xf]
    %v535 = vld [vmem:[#allocation6 + $0x108] sm:$0xf]
    %v536 = vld [vmem:[#allocation6 + $0x10c] sm:$0xf]
    %v537 = vld [vmem:[#allocation6 + $0x110] sm:$0xf]
    %v538 = vld [vmem:[#allocation6 + $0x114] sm:$0xf]
    %v539 = vld [vmem:[#allocation6 + $0x118] sm:$0xf]
    %v540 = vld [vmem:[#allocation6 + $0x11c] sm:$0xf]
    %v541 = vld [vmem:[#allocation6 + $0x120] sm:$0xf]
    %v542 = vld [vmem:[#allocation6 + $0x124] sm:$0xf]
    %v543 = vld [vmem:[#allocation6 + $0x128] sm:$0xf]
    %v544 = vld [vmem:[#allocation6 + $0x12c] sm:$0xf]
    %v545 = vld [vmem:[#allocation6 + $0x130] sm:$0xf]
    %v546 = vld [vmem:[#allocation6 + $0x134] sm:$0xf]
    %v547 = vld [vmem:[#allocation6 + $0x138] sm:$0xf]
    %v548 = vld [vmem:[#allocation6 + $0x13c] sm:$0xf]
    %v549 = vld [vmem:[#allocation6 + $0x140] sm:$0xf]
    %v550 = vld [vmem:[#allocation6 + $0x144] sm:$0xf]
    %v551 = vld [vmem:[#allocation6 + $0x148] sm:$0xf]
    %v552 = vld [vmem:[#allocation6 + $0x14c] sm:$0xf]
    %v553 = vld [vmem:[#allocation6 + $0x150] sm:$0xf]
    %v554 = vld [vmem:[#allocation6 + $0x154] sm:$0xf]
    %v555 = vld [vmem:[#allocation6 + $0x158] sm:$0xf]
    %v556 = vld [vmem:[#allocation6 + $0x15c] sm:$0xf]
    %v557 = vld [vmem:[#allocation6 + $0x160] sm:$0xf]
    %v558 = vld [vmem:[#allocation6 + $0x164] sm:$0xf]
    %v559 = vld [vmem:[#allocation6 + $0x168] sm:$0xf]
    %v560 = vld [vmem:[#allocation6 + $0x16c] sm:$0xf]
    %v561 = vld [vmem:[#allocation6 + $0x170] sm:$0xf]
    %v562 = vld [vmem:[#allocation6 + $0x174] sm:$0xf]
    %v563 = vld [vmem:[#allocation6 + $0x178] sm:$0xf]
    %v564 = vld [vmem:[#allocation6 + $0x17c] sm:$0xf]
    %v565 = vld [vmem:[#allocation6 + $0x180] sm:$0xf]
    %v566 = vld [vmem:[#allocation6 + $0x184] sm:$0xf]
    %v567 = vld [vmem:[#allocation6 + $0x188] sm:$0xf]
    %v568 = vld [vmem:[#allocation6 + $0x18c] sm:$0xf]
    %v569 = vld [vmem:[#allocation6 + $0x190] sm:$0xf]
    %v570 = vld [vmem:[#allocation6 + $0x194] sm:$0xf]
    %v571 = vld [vmem:[#allocation6 + $0x198] sm:$0xf]
    %v572 = vld [vmem:[#allocation6 + $0x19c] sm:$0xf]
    %v573 = vld [vmem:[#allocation6 + $0x1a0] sm:$0xf]
    %v574 = vld [vmem:[#allocation6 + $0x1a4] sm:$0xf]
    %v575 = vld [vmem:[#allocation6 + $0x1a8] sm:$0xf]
    %v576 = vld [vmem:[#allocation6 + $0x1ac] sm:$0xf]
    %v577 = vld [vmem:[#allocation6 + $0x1b0] sm:$0xf]
    %v578 = vld [vmem:[#allocation6 + $0x1b4] sm:$0xf]
    %v579 = vld [vmem:[#allocation6 + $0x1b8] sm:$0xf]
    %v580 = vld [vmem:[#allocation6 + $0x1bc] sm:$0xf]
    %v581 = vld [vmem:[#allocation6 + $0x1c0] sm:$0xf]
    %v582 = vld [vmem:[#allocation6 + $0x1c4] sm:$0xf]
    %v583 = vld [vmem:[#allocation6 + $0x1c8] sm:$0xf]
    %v584 = vld [vmem:[#allocation6 + $0x1cc] sm:$0xf]
    %v585 = vld [vmem:[#allocation6 + $0x1d0] sm:$0xf]
    %v586 = vld [vmem:[#allocation6 + $0x1d4] sm:$0xf]
    %v587 = vld [vmem:[#allocation6 + $0x1d8] sm:$0xf]
    %v588 = vld [vmem:[#allocation6 + $0x1dc] sm:$0xf]
    %v589 = vld [vmem:[#allocation6 + $0x1e0] sm:$0xf]
    %v590 = vld [vmem:[#allocation6 + $0x1e4] sm:$0xf]
    %v591 = vld [vmem:[#allocation6 + $0x1e8] sm:$0xf]
    %v592 = vld [vmem:[#allocation6 + $0x1ec] sm:$0xf]
    %v593 = vld [vmem:[#allocation6 + $0x1f0] sm:$0xf]
    %v594 = vld [vmem:[#allocation6 + $0x1f4] sm:$0xf]
    %v595 = vld [vmem:[#allocation6 + $0x1f8] sm:$0xf]
    %v596 = vld [vmem:[#allocation6 + $0x1fc] sm:$0xf]
    %v597 = vld [vmem:[#allocation6 + $0x200] sm:$0xf]
    %v598 = vld [vmem:[#allocation6 + $0x204] sm:$0xf]
    %v599 = vld [vmem:[#allocation6 + $0x208] sm:$0xf]
    %v600 = vld [vmem:[#allocation6 + $0x20c] sm:$0xf]
    %v601 = vld [vmem:[#allocation6 + $0x210] sm:$0xf]
    %v602 = vld [vmem:[#allocation6 + $0x214] sm:$0xf]
    %v603 = vld [vmem:[#allocation6 + $0x218] sm:$0xf]
    %v604 = vld [vmem:[#allocation6 + $0x21c] sm:$0xf]
    %v605 = vld [vmem:[#allocation6 + $0x220] sm:$0xf]
    %v606 = vld [vmem:[#allocation6 + $0x224] sm:$0xf]
    %v607 = vld [vmem:[#allocation6 + $0x228] sm:$0xf]
    %v608 = vld [vmem:[#allocation6 + $0x22c] sm:$0xf]
    %v609 = vld [vmem:[#allocation6 + $0x230] sm:$0xf]
    %v610 = vld [vmem:[#allocation6 + $0x234] sm:$0xf]
    %v611 = vld [vmem:[#allocation6 + $0x238] sm:$0xf]
    %v612 = vld [vmem:[#allocation6 + $0x23c] sm:$0xf]
    %v613 = vld [vmem:[#allocation6 + $0x240] sm:$0xf]
    %v614 = vld [vmem:[#allocation6 + $0x244] sm:$0xf]
    %v615 = vld [vmem:[#allocation6 + $0x248] sm:$0xf]
    %v616 = vld [vmem:[#allocation6 + $0x24c] sm:$0xf]
    %v617 = vld [vmem:[#allocation6 + $0x250] sm:$0xf]
    %v618 = vld [vmem:[#allocation6 + $0x254] sm:$0xf]
    %v619 = vld [vmem:[#allocation6 + $0x258] sm:$0xf]
    %v620 = vld [vmem:[#allocation6 + $0x25c] sm:$0xf]
    %v621 = vld [vmem:[#allocation6 + $0x260] sm:$0xf]
    %v622 = vld [vmem:[#allocation6 + $0x264] sm:$0xf]
    %v623 = vld [vmem:[#allocation6 + $0x268] sm:$0xf]
    %v624 = vld [vmem:[#allocation6 + $0x26c] sm:$0xf]
    %v625 = vld [vmem:[#allocation6 + $0x270] sm:$0xf]
    %v626 = vld [vmem:[#allocation6 + $0x274] sm:$0xf]
    %v627 = vld [vmem:[#allocation6 + $0x278] sm:$0xf]
    %v628 = vld [vmem:[#allocation6 + $0x27c] sm:$0xf]
    %v629 = vld [vmem:[#allocation6 + $0x280] sm:$0xf]
    %v630 = vld [vmem:[#allocation6 + $0x284] sm:$0xf]
    %v631 = vld [vmem:[#allocation6 + $0x288] sm:$0xf]
    %v632 = vld [vmem:[#allocation6 + $0x28c] sm:$0xf]
    %v633 = vld [vmem:[#allocation6 + $0x290] sm:$0xf]
    %v634 = vld [vmem:[#allocation6 + $0x294] sm:$0xf]
    %v635 = vld [vmem:[#allocation6 + $0x298] sm:$0xf]
    %v636 = vld [vmem:[#allocation6 + $0x29c] sm:$0xf]
    %v637 = vld [vmem:[#allocation6 + $0x2a0] sm:$0xf]
    %v638 = vld [vmem:[#allocation6 + $0x2a4] sm:$0xf]
    %v639 = vld [vmem:[#allocation6 + $0x2a8] sm:$0xf]
    %v640 = vld [vmem:[#allocation6 + $0x2ac] sm:$0xf]
    %v641 = vld [vmem:[#allocation6 + $0x2b0] sm:$0xf]
    %v642 = vld [vmem:[#allocation6 + $0x2b4] sm:$0xf]
    %v643 = vld [vmem:[#allocation6 + $0x2b8] sm:$0xf]
    %v644 = vld [vmem:[#allocation6 + $0x2bc] sm:$0xf]
    %v645 = vld [vmem:[#allocation6 + $0x2c0] sm:$0xf]
    %v646 = vld [vmem:[#allocation6 + $0x2c4] sm:$0xf]
    %v647 = vld [vmem:[#allocation6 + $0x2c8] sm:$0xf]
    %v648 = vld [vmem:[#allocation6 + $0x2cc] sm:$0xf]
    %v649 = vld [vmem:[#allocation6 + $0x2d0] sm:$0xf]
    %v650 = vld [vmem:[#allocation6 + $0x2d4] sm:$0xf]
    %v651 = vld [vmem:[#allocation6 + $0x2d8] sm:$0xf]
    %v652 = vld [vmem:[#allocation6 + $0x2dc] sm:$0xf]
    %v653 = vld [vmem:[#allocation6 + $0x2e0] sm:$0xf]
    %v654 = vld [vmem:[#allocation6 + $0x2e4] sm:$0xf]
    %v655 = vld [vmem:[#allocation6 + $0x2e8] sm:$0xf]
    %v656 = vld [vmem:[#allocation6 + $0x2ec] sm:$0xf]
    %v657 = vld [vmem:[#allocation6 + $0x2f0] sm:$0xf]
    %v658 = vld [vmem:[#allocation6 + $0x2f4] sm:$0xf]
    %v659 = vld [vmem:[#allocation6 + $0x2f8] sm:$0xf]
    %v660 = vld [vmem:[#allocation6 + $0x2fc] sm:$0xf]
    %v661 = vld [vmem:[#allocation6 + $0x300] sm:$0xf]
    %v662 = vld [vmem:[#allocation6 + $0x304] sm:$0xf]
    %v663 = vld [vmem:[#allocation6 + $0x308] sm:$0xf]
    %v664 = vld [vmem:[#allocation6 + $0x30c] sm:$0xf]
    %v665 = vld [vmem:[#allocation6 + $0x310] sm:$0xf]
    %v666 = vld [vmem:[#allocation6 + $0x314] sm:$0xf]
    %v667 = vld [vmem:[#allocation6 + $0x318] sm:$0xf]
    %v668 = vld [vmem:[#allocation6 + $0x31c] sm:$0xf]
    %v669 = vld [vmem:[#allocation6 + $0x320] sm:$0xf]
    %v670 = vld [vmem:[#allocation6 + $0x324] sm:$0xf]
    %v671 = vld [vmem:[#allocation6 + $0x328] sm:$0xf]
    %v672 = vld [vmem:[#allocation6 + $0x32c] sm:$0xf]
    %v673 = vld [vmem:[#allocation6 + $0x330] sm:$0xf]
    %v674 = vld [vmem:[#allocation6 + $0x334] sm:$0xf]
    %v675 = vld [vmem:[#allocation6 + $0x338] sm:$0xf]
    %v676 = vld [vmem:[#allocation6 + $0x33c] sm:$0xf]
    %v677 = vld [vmem:[#allocation6 + $0x340] sm:$0xf]
    %v678 = vld [vmem:[#allocation6 + $0x344] sm:$0xf]
    %v679 = vld [vmem:[#allocation6 + $0x348] sm:$0xf]
    %v680 = vld [vmem:[#allocation6 + $0x34c] sm:$0xf]
    %v681 = vld [vmem:[#allocation6 + $0x350] sm:$0xf]
    %v682 = vld [vmem:[#allocation6 + $0x354] sm:$0xf]
    %v683 = vld [vmem:[#allocation6 + $0x358] sm:$0xf]
    %v684 = vld [vmem:[#allocation6 + $0x35c] sm:$0xf]
    %v685 = vld [vmem:[#allocation6 + $0x360] sm:$0xf]
    %v686 = vld [vmem:[#allocation6 + $0x364] sm:$0xf]
    %v687 = vld [vmem:[#allocation6 + $0x368] sm:$0xf]
    %v688 = vld [vmem:[#allocation6 + $0x36c] sm:$0xf]
    %v689 = vld [vmem:[#allocation6 + $0x370] sm:$0xf]
    %v690 = vld [vmem:[#allocation6 + $0x374] sm:$0xf]
    %v691 = vld [vmem:[#allocation6 + $0x378] sm:$0xf]
    %v692 = vld [vmem:[#allocation6 + $0x37c] sm:$0xf]
    %v693 = vld [vmem:[#allocation6 + $0x380] sm:$0xf]
    %v694 = vld [vmem:[#allocation6 + $0x384] sm:$0xf]
    %v695 = vld [vmem:[#allocation6 + $0x388] sm:$0xf]
    %v696 = vld [vmem:[#allocation6 + $0x38c] sm:$0xf]
    %v697 = vld [vmem:[#allocation6 + $0x390] sm:$0xf]
    %v698 = vld [vmem:[#allocation6 + $0x394] sm:$0xf]
    %v699 = vld [vmem:[#allocation6 + $0x398] sm:$0xf]
    %v700 = vld [vmem:[#allocation6 + $0x39c] sm:$0xf]
    %v701 = vld [vmem:[#allocation6 + $0x3a0] sm:$0xf]
    %v702 = vld [vmem:[#allocation6 + $0x3a4] sm:$0xf]
    %v703 = vld [vmem:[#allocation6 + $0x3a8] sm:$0xf]
    %v704 = vld [vmem:[#allocation6 + $0x3ac] sm:$0xf]
    %v705 = vld [vmem:[#allocation6 + $0x3b0] sm:$0xf]
    %v706 = vld [vmem:[#allocation6 + $0x3b4] sm:$0xf]
    %v707 = vld [vmem:[#allocation6 + $0x3b8] sm:$0xf]
    %v708 = vld [vmem:[#allocation6 + $0x3bc] sm:$0xf]
    %v709 = vld [vmem:[#allocation6 + $0x3c0] sm:$0xf]
    %v710 = vld [vmem:[#allocation6 + $0x3c4] sm:$0xf]
    %v711 = vld [vmem:[#allocation6 + $0x3c8] sm:$0xf]
    %v712 = vld [vmem:[#allocation6 + $0x3cc] sm:$0xf]
    %v713 = vld [vmem:[#allocation6 + $0x3d0] sm:$0xf]
    %v714 = vld [vmem:[#allocation6 + $0x3d4] sm:$0xf]
    %v715 = vld [vmem:[#allocation6 + $0x3d8] sm:$0xf]
    %v716 = vld [vmem:[#allocation6 + $0x3dc] sm:$0xf]
    %v717 = vld [vmem:[#allocation6 + $0x3e0] sm:$0xf]
    %v718 = vld [vmem:[#allocation6 + $0x3e4] sm:$0xf]
    %v719 = vld [vmem:[#allocation6 + $0x3e8] sm:$0xf]
    %v720 = vld [vmem:[#allocation6 + $0x3ec] sm:$0xf]
    %v721 = vld [vmem:[#allocation6 + $0x3f0] sm:$0xf]
    %v722 = vld [vmem:[#allocation6 + $0x3f4] sm:$0xf]
    %v723 = vld [vmem:[#allocation6 + $0x3f8] sm:$0xf]
    %v724 = vld [vmem:[#allocation6 + $0x3fc] sm:$0xf]
    %v725 = vld [vmem:[#allocation6 + $0x400] sm:$0xf]
    %v726 = vld [vmem:[#allocation6 + $0x404] sm:$0xf]
    %v727 = vld [vmem:[#allocation6 + $0x408] sm:$0xf]
    %v728 = vld [vmem:[#allocation6 + $0x40c] sm:$0xf]
    %v729 = vld [vmem:[#allocation6 + $0x410] sm:$0xf]
    %v730 = vld [vmem:[#allocation6 + $0x414] sm:$0xf]
    %v731 = vld [vmem:[#allocation6 + $0x418] sm:$0xf]
    %v732 = vld [vmem:[#allocation6 + $0x41c] sm:$0xf]
    %v733 = vld [vmem:[#allocation6 + $0x420] sm:$0xf]
    %v734 = vld [vmem:[#allocation6 + $0x424] sm:$0xf]
    %v735 = vld [vmem:[#allocation6 + $0x428] sm:$0xf]
    %v736 = vld [vmem:[#allocation6 + $0x42c] sm:$0xf]
    %v737 = vld [vmem:[#allocation6 + $0x430] sm:$0xf]
    %v738 = vld [vmem:[#allocation6 + $0x434] sm:$0xf]
    %v739 = vld [vmem:[#allocation6 + $0x438] sm:$0xf]
    %v740 = vld [vmem:[#allocation6 + $0x43c] sm:$0xf]
    %v741 = vld [vmem:[#allocation6 + $0x440] sm:$0xf]
    %v742 = vld [vmem:[#allocation6 + $0x444] sm:$0xf]
    %v743 = vld [vmem:[#allocation6 + $0x448] sm:$0xf]
    %v744 = vld [vmem:[#allocation6 + $0x44c] sm:$0xf]
    %v745 = vld [vmem:[#allocation6 + $0x450] sm:$0xf]
    %v746 = vld [vmem:[#allocation6 + $0x454] sm:$0xf]
    %v747 = vld [vmem:[#allocation6 + $0x458] sm:$0xf]
    %v748 = vld [vmem:[#allocation6 + $0x45c] sm:$0xf]
    %v749 = vld [vmem:[#allocation6 + $0x460] sm:$0xf]
    %v750 = vld [vmem:[#allocation6 + $0x464] sm:$0xf]
    %v751 = vld [vmem:[#allocation6 + $0x468] sm:$0xf]
    %v752 = vld [vmem:[#allocation6 + $0x46c] sm:$0xf]
    %v753 = vld [vmem:[#allocation6 + $0x470] sm:$0xf]
    %v754 = vld [vmem:[#allocation6 + $0x474] sm:$0xf]
    %v755 = vld [vmem:[#allocation6 + $0x478] sm:$0xf]
    %v756 = vld [vmem:[#allocation6 + $0x47c] sm:$0xf]
    %v757 = vld [vmem:[#allocation8] sm:$0x1]
    %v759 = vlaneseq
    %v760 = vshrl.u32 %v759, 7
    %v761 = vsub.s32 0, %v760
    %v762 = vrot.slane %v757, %v761
    %v1052 = vunpack.c.l.b16 %v469
    %v1053 = vunpack.c.l.b16 %v470
    %v1054 = vunpack.c.l.b16 %v471
    %v1055 = vunpack.c.l.b16 %v472
    %v1056 = vunpack.c.l.b16 %v473
    %v1057 = vunpack.c.l.b16 %v474
    %v1058 = vunpack.c.l.b16 %v475
    %v1059 = vunpack.c.l.b16 %v476
    %v1060 = vunpack.c.l.b16 %v477
    %v1061 = vunpack.c.l.b16 %v478
    %v1062 = vunpack.c.l.b16 %v479
    %v1063 = vunpack.c.l.b16 %v480
    %v1064 = vunpack.c.l.b16 %v481
    %v1065 = vunpack.c.l.b16 %v482
    %v1066 = vunpack.c.l.b16 %v483
    %v1067 = vunpack.c.l.b16 %v484
    %v1068 = vunpack.c.l.b16 %v485
    %v1069 = vunpack.c.l.b16 %v486
    %v1070 = vunpack.c.l.b16 %v487
    %v1071 = vunpack.c.l.b16 %v488
    %v1072 = vunpack.c.l.b16 %v489
    %v1073 = vunpack.c.l.b16 %v490
    %v1074 = vunpack.c.l.b16 %v491
    %v1075 = vunpack.c.l.b16 %v492
    %v1076 = vunpack.c.l.b16 %v493
    %v1077 = vunpack.c.l.b16 %v494
    %v1078 = vunpack.c.l.b16 %v495
    %v1079 = vunpack.c.l.b16 %v496
    %v1080 = vunpack.c.l.b16 %v497
    %v1081 = vunpack.c.l.b16 %v498
    %v1082 = vunpack.c.l.b16 %v499
    %v1083 = vunpack.c.l.b16 %v500
    %v1084 = vunpack.c.l.b16 %v501
    %v1085 = vunpack.c.l.b16 %v502
    %v1086 = vunpack.c.l.b16 %v503
    %v1087 = vunpack.c.l.b16 %v504
    %v1088 = vunpack.c.l.b16 %v505
    %v1089 = vunpack.c.l.b16 %v506
    %v1090 = vunpack.c.l.b16 %v507
    %v1091 = vunpack.c.l.b16 %v508
    %v1092 = vunpack.c.l.b16 %v509
    %v1093 = vunpack.c.l.b16 %v510
    %v1094 = vunpack.c.l.b16 %v511
    %v1095 = vunpack.c.l.b16 %v512
    %v1096 = vunpack.c.l.b16 %v513
    %v1097 = vunpack.c.l.b16 %v514
    %v1098 = vunpack.c.l.b16 %v515
    %v1099 = vunpack.c.l.b16 %v516
    %v1100 = vunpack.c.l.b16 %v517
    %v1101 = vunpack.c.l.b16 %v518
    %v1102 = vunpack.c.l.b16 %v519
    %v1103 = vunpack.c.l.b16 %v520
    %v1104 = vunpack.c.l.b16 %v521
    %v1105 = vunpack.c.l.b16 %v522
    %v1106 = vunpack.c.l.b16 %v523
    %v1107 = vunpack.c.l.b16 %v524
    %v1108 = vunpack.c.l.b16 %v525
    %v1109 = vunpack.c.l.b16 %v526
    %v1110 = vunpack.c.l.b16 %v527
    %v1111 = vunpack.c.l.b16 %v528
    %v1112 = vunpack.c.l.b16 %v529
    %v1113 = vunpack.c.l.b16 %v530
    %v1114 = vunpack.c.l.b16 %v531
    %v1115 = vunpack.c.l.b16 %v532
    %v1116 = vunpack.c.l.b16 %v533
    %v1117 = vunpack.c.l.b16 %v534
    %v1118 = vunpack.c.l.b16 %v535
    %v1119 = vunpack.c.l.b16 %v536
    %v1120 = vunpack.c.l.b16 %v537
    %v1121 = vunpack.c.l.b16 %v538
    %v1122 = vunpack.c.l.b16 %v539
    %v1123 = vunpack.c.l.b16 %v540
    %v1124 = vunpack.c.l.b16 %v541
    %v1125 = vunpack.c.l.b16 %v542
    %v1126 = vunpack.c.l.b16 %v543
    %v1127 = vunpack.c.l.b16 %v544
    %v1128 = vunpack.c.l.b16 %v545
    %v1129 = vunpack.c.l.b16 %v546
    %v1130 = vunpack.c.l.b16 %v547
    %v1131 = vunpack.c.l.b16 %v548
    %v1132 = vunpack.c.l.b16 %v549
    %v1133 = vunpack.c.l.b16 %v550
    %v1134 = vunpack.c.l.b16 %v551
    %v1135 = vunpack.c.l.b16 %v552
    %v1136 = vunpack.c.l.b16 %v553
    %v1137 = vunpack.c.l.b16 %v554
    %v1138 = vunpack.c.l.b16 %v555
    %v1139 = vunpack.c.l.b16 %v556
    %v1140 = vunpack.c.l.b16 %v557
    %v1141 = vunpack.c.l.b16 %v558
    %v1142 = vunpack.c.l.b16 %v559
    %v1143 = vunpack.c.l.b16 %v560
    %v1144 = vunpack.c.l.b16 %v561
    %v1145 = vunpack.c.l.b16 %v562
    %v1146 = vunpack.c.l.b16 %v563
    %v1147 = vunpack.c.l.b16 %v564
    %v1148 = vunpack.c.l.b16 %v565
    %v1149 = vunpack.c.l.b16 %v566
    %v1150 = vunpack.c.l.b16 %v567
    %v1151 = vunpack.c.l.b16 %v568
    %v1152 = vunpack.c.l.b16 %v569
    %v1153 = vunpack.c.l.b16 %v570
    %v1154 = vunpack.c.l.b16 %v571
    %v1155 = vunpack.c.l.b16 %v572
    %v1156 = vunpack.c.l.b16 %v573
    %v1157 = vunpack.c.l.b16 %v574
    %v1158 = vunpack.c.l.b16 %v575
    %v1159 = vunpack.c.l.b16 %v576
    %v1160 = vunpack.c.l.b16 %v577
    %v1161 = vunpack.c.l.b16 %v578
    %v1162 = vunpack.c.l.b16 %v579
    %v1163 = vunpack.c.l.b16 %v580
    %v1164 = vunpack.c.l.b16 %v581
    %v1165 = vunpack.c.l.b16 %v582
    %v1166 = vunpack.c.l.b16 %v583
    %v1167 = vunpack.c.l.b16 %v584
    %v1168 = vunpack.c.l.b16 %v585
    %v1169 = vunpack.c.l.b16 %v586
    %v1170 = vunpack.c.l.b16 %v587
    %v1171 = vunpack.c.l.b16 %v588
    %v1172 = vunpack.c.l.b16 %v589
    %v1173 = vunpack.c.l.b16 %v590
    %v1174 = vunpack.c.l.b16 %v591
    %v1175 = vunpack.c.l.b16 %v592
    %v1176 = vunpack.c.l.b16 %v593
    %v1177 = vunpack.c.l.b16 %v594
    %v1178 = vunpack.c.l.b16 %v595
    %v1179 = vunpack.c.l.b16 %v596
    %v1180 = vunpack.c.l.b16 %v597
    %v1181 = vunpack.c.l.b16 %v598
    %v1182 = vunpack.c.l.b16 %v599
    %v1183 = vunpack.c.l.b16 %v600
    %v1184 = vunpack.c.l.b16 %v601
    %v1185 = vunpack.c.l.b16 %v602
    %v1186 = vunpack.c.l.b16 %v603
    %v1187 = vunpack.c.l.b16 %v604
    %v1188 = vunpack.c.l.b16 %v605
    %v1189 = vunpack.c.l.b16 %v606
    %v1190 = vunpack.c.l.b16 %v607
    %v1191 = vunpack.c.l.b16 %v608
    %v1192 = vunpack.c.l.b16 %v609
    %v1193 = vunpack.c.l.b16 %v610
    %v1194 = vunpack.c.l.b16 %v611
    %v1195 = vunpack.c.l.b16 %v612
    %v1196 = vunpack.c.l.b16 %v613
    %v1197 = vunpack.c.l.b16 %v614
    %v1198 = vunpack.c.l.b16 %v615
    %v1199 = vunpack.c.l.b16 %v616
    %v1200 = vunpack.c.l.b16 %v617
    %v1201 = vunpack.c.l.b16 %v618
    %v1202 = vunpack.c.l.b16 %v619
    %v1203 = vunpack.c.l.b16 %v620
    %v1204 = vunpack.c.l.b16 %v621
    %v1205 = vunpack.c.l.b16 %v622
    %v1206 = vunpack.c.l.b16 %v623
    %v1207 = vunpack.c.l.b16 %v624
    %v1208 = vunpack.c.l.b16 %v625
    %v1209 = vunpack.c.l.b16 %v626
    %v1210 = vunpack.c.l.b16 %v627
    %v1211 = vunpack.c.l.b16 %v628
    %v1212 = vunpack.c.l.b16 %v629
    %v1213 = vunpack.c.l.b16 %v630
    %v1214 = vunpack.c.l.b16 %v631
    %v1215 = vunpack.c.l.b16 %v632
    %v1216 = vunpack.c.l.b16 %v633
    %v1217 = vunpack.c.l.b16 %v634
    %v1218 = vunpack.c.l.b16 %v635
    %v1219 = vunpack.c.l.b16 %v636
    %v1220 = vunpack.c.l.b16 %v637
    %v1221 = vunpack.c.l.b16 %v638
    %v1222 = vunpack.c.l.b16 %v639
    %v1223 = vunpack.c.l.b16 %v640
    %v1224 = vunpack.c.l.b16 %v641
    %v1225 = vunpack.c.l.b16 %v642
    %v1226 = vunpack.c.l.b16 %v643
    %v1227 = vunpack.c.l.b16 %v644
    %v1228 = vunpack.c.l.b16 %v645
    %v1229 = vunpack.c.l.b16 %v646
    %v1230 = vunpack.c.l.b16 %v647
    %v1231 = vunpack.c.l.b16 %v648
    %v1232 = vunpack.c.l.b16 %v649
    %v1233 = vunpack.c.l.b16 %v650
    %v1234 = vunpack.c.l.b16 %v651
    %v1235 = vunpack.c.l.b16 %v652
    %v1236 = vunpack.c.l.b16 %v653
    %v1237 = vunpack.c.l.b16 %v654
    %v1238 = vunpack.c.l.b16 %v655
    %v1239 = vunpack.c.l.b16 %v656
    %v1240 = vunpack.c.l.b16 %v657
    %v1241 = vunpack.c.l.b16 %v658
    %v1242 = vunpack.c.l.b16 %v659
    %v1243 = vunpack.c.l.b16 %v660
    %v1244 = vunpack.c.l.b16 %v661
    %v1245 = vunpack.c.l.b16 %v662
    %v1246 = vunpack.c.l.b16 %v663
    %v1247 = vunpack.c.l.b16 %v664
    %v1248 = vunpack.c.l.b16 %v665
    %v1249 = vunpack.c.l.b16 %v666
    %v1250 = vunpack.c.l.b16 %v667
    %v1251 = vunpack.c.l.b16 %v668
    %v1252 = vunpack.c.l.b16 %v669
    %v1253 = vunpack.c.l.b16 %v670
    %v1254 = vunpack.c.l.b16 %v671
    %v1255 = vunpack.c.l.b16 %v672
    %v1256 = vunpack.c.l.b16 %v673
    %v1257 = vunpack.c.l.b16 %v674
    %v1258 = vunpack.c.l.b16 %v675
    %v1259 = vunpack.c.l.b16 %v676
    %v1260 = vunpack.c.l.b16 %v677
    %v1261 = vunpack.c.l.b16 %v678
    %v1262 = vunpack.c.l.b16 %v679
    %v1263 = vunpack.c.l.b16 %v680
    %v1264 = vunpack.c.l.b16 %v681
    %v1265 = vunpack.c.l.b16 %v682
    %v1266 = vunpack.c.l.b16 %v683
    %v1267 = vunpack.c.l.b16 %v684
    %v1268 = vunpack.c.l.b16 %v685
    %v1269 = vunpack.c.l.b16 %v686
    %v1270 = vunpack.c.l.b16 %v687
    %v1271 = vunpack.c.l.b16 %v688
    %v1272 = vunpack.c.l.b16 %v689
    %v1273 = vunpack.c.l.b16 %v690
    %v1274 = vunpack.c.l.b16 %v691
    %v1275 = vunpack.c.l.b16 %v692
    %v1276 = vunpack.c.l.b16 %v693
    %v1277 = vunpack.c.l.b16 %v694
    %v1278 = vunpack.c.l.b16 %v695
    %v1279 = vunpack.c.l.b16 %v696
    %v1280 = vunpack.c.l.b16 %v697
    %v1281 = vunpack.c.l.b16 %v698
    %v1282 = vunpack.c.l.b16 %v699
    %v1283 = vunpack.c.l.b16 %v700
    %v1284 = vunpack.c.l.b16 %v701
    %v1285 = vunpack.c.l.b16 %v702
    %v1286 = vunpack.c.l.b16 %v703
    %v1287 = vunpack.c.l.b16 %v704
    %v1288 = vunpack.c.l.b16 %v705
    %v1289 = vunpack.c.l.b16 %v706
    %v1290 = vunpack.c.l.b16 %v707
    %v1291 = vunpack.c.l.b16 %v708
    %v1292 = vunpack.c.l.b16 %v709
    %v1293 = vunpack.c.l.b16 %v710
    %v1294 = vunpack.c.l.b16 %v711
    %v1295 = vunpack.c.l.b16 %v712
    %v1296 = vunpack.c.l.b16 %v713
    %v1297 = vunpack.c.l.b16 %v714
    %v1298 = vunpack.c.l.b16 %v715
    %v1299 = vunpack.c.l.b16 %v716
    %v1300 = vunpack.c.l.b16 %v717
    %v1301 = vunpack.c.l.b16 %v718
    %v1302 = vunpack.c.l.b16 %v719
    %v1303 = vunpack.c.l.b16 %v720
    %v1304 = vunpack.c.l.b16 %v721
    %v1305 = vunpack.c.l.b16 %v722
    %v1306 = vunpack.c.l.b16 %v723
    %v1307 = vunpack.c.l.b16 %v724
    %v1308 = vunpack.c.l.b16 %v725
    %v1309 = vunpack.c.l.b16 %v726
    %v1310 = vunpack.c.l.b16 %v727
    %v1311 = vunpack.c.l.b16 %v728
    %v1312 = vunpack.c.l.b16 %v729
    %v1313 = vunpack.c.l.b16 %v730
    %v1314 = vunpack.c.l.b16 %v731
    %v1315 = vunpack.c.l.b16 %v732
    %v1316 = vunpack.c.l.b16 %v733
    %v1317 = vunpack.c.l.b16 %v734
    %v1318 = vunpack.c.l.b16 %v735
    %v1319 = vunpack.c.l.b16 %v736
    %v1320 = vunpack.c.l.b16 %v737
    %v1321 = vunpack.c.l.b16 %v738
    %v1322 = vunpack.c.l.b16 %v739
    %v1323 = vunpack.c.l.b16 %v740
    %v1324 = vunpack.c.l.b16 %v741
    %v1325 = vunpack.c.l.b16 %v742
    %v1326 = vunpack.c.l.b16 %v743
    %v1327 = vunpack.c.l.b16 %v744
    %v1328 = vunpack.c.l.b16 %v745
    %v1329 = vunpack.c.l.b16 %v746
    %v1330 = vunpack.c.l.b16 %v747
    %v1331 = vunpack.c.l.b16 %v748
    %v1332 = vunpack.c.l.b16 %v749
    %v1333 = vunpack.c.l.b16 %v750
    %v1334 = vunpack.c.l.b16 %v751
    %v1335 = vunpack.c.l.b16 %v752
    %v1336 = vunpack.c.l.b16 %v753
    %v1337 = vunpack.c.l.b16 %v754
    %v1338 = vunpack.c.l.b16 %v755
    %v1339 = vunpack.c.l.b16 %v756
    %v1340 = vpack.c.b16 %v1053, %v1052
    %v1341 = vpack.c.b16 %v1055, %v1054
    %v1342 = vpack.c.b16 %v1057, %v1056
    %v1343 = vpack.c.b16 %v1059, %v1058
    %v1344 = vpack.c.b16 %v1061, %v1060
    %v1345 = vpack.c.b16 %v1063, %v1062
    %v1346 = vpack.c.b16 %v1065, %v1064
    %v1347 = vpack.c.b16 %v1067, %v1066
    %v1348 = vpack.c.b16 %v1069, %v1068
    %v1349 = vpack.c.b16 %v1071, %v1070
    %v1350 = vpack.c.b16 %v1073, %v1072
    %v1351 = vpack.c.b16 %v1075, %v1074
    %v1352 = vpack.c.b16 %v1077, %v1076
    %v1353 = vpack.c.b16 %v1079, %v1078
    %v1354 = vpack.c.b16 %v1081, %v1080
    %v1355 = vpack.c.b16 %v1083, %v1082
    %v1356 = vpack.c.b16 %v1085, %v1084
    %v1357 = vpack.c.b16 %v1087, %v1086
    %v1358 = vpack.c.b16 %v1089, %v1088
    %v1359 = vpack.c.b16 %v1091, %v1090
    %v1360 = vpack.c.b16 %v1093, %v1092
    %v1361 = vpack.c.b16 %v1095, %v1094
    %v1362 = vpack.c.b16 %v1097, %v1096
    %v1363 = vpack.c.b16 %v1099, %v1098
    %v1364 = vpack.c.b16 %v1101, %v1100
    %v1365 = vpack.c.b16 %v1103, %v1102
    %v1366 = vpack.c.b16 %v1105, %v1104
    %v1367 = vpack.c.b16 %v1107, %v1106
    %v1368 = vpack.c.b16 %v1109, %v1108
    %v1369 = vpack.c.b16 %v1111, %v1110
    %v1370 = vpack.c.b16 %v1113, %v1112
    %v1371 = vpack.c.b16 %v1115, %v1114
    %v1372 = vpack.c.b16 %v1117, %v1116
    %v1373 = vpack.c.b16 %v1119, %v1118
    %v1374 = vpack.c.b16 %v1121, %v1120
    %v1375 = vpack.c.b16 %v1123, %v1122
    %v1376 = vpack.c.b16 %v1125, %v1124
    %v1377 = vpack.c.b16 %v1127, %v1126
    %v1378 = vpack.c.b16 %v1129, %v1128
    %v1379 = vpack.c.b16 %v1131, %v1130
    %v1380 = vpack.c.b16 %v1133, %v1132
    %v1381 = vpack.c.b16 %v1135, %v1134
    %v1382 = vpack.c.b16 %v1137, %v1136
    %v1383 = vpack.c.b16 %v1139, %v1138
    %v1384 = vpack.c.b16 %v1141, %v1140
    %v1385 = vpack.c.b16 %v1143, %v1142
    %v1386 = vpack.c.b16 %v1145, %v1144
    %v1387 = vpack.c.b16 %v1147, %v1146
    %v1388 = vpack.c.b16 %v1149, %v1148
    %v1389 = vpack.c.b16 %v1151, %v1150
    %v1390 = vpack.c.b16 %v1153, %v1152
    %v1391 = vpack.c.b16 %v1155, %v1154
    %v1392 = vpack.c.b16 %v1157, %v1156
    %v1393 = vpack.c.b16 %v1159, %v1158
    %v1394 = vpack.c.b16 %v1161, %v1160
    %v1395 = vpack.c.b16 %v1163, %v1162
    %v1396 = vpack.c.b16 %v1165, %v1164
    %v1397 = vpack.c.b16 %v1167, %v1166
    %v1398 = vpack.c.b16 %v1169, %v1168
    %v1399 = vpack.c.b16 %v1171, %v1170
    %v1400 = vpack.c.b16 %v1173, %v1172
    %v1401 = vpack.c.b16 %v1175, %v1174
    %v1402 = vpack.c.b16 %v1177, %v1176
    %v1403 = vpack.c.b16 %v1179, %v1178
    %v1404 = vpack.c.b16 %v1181, %v1180
    %v1405 = vpack.c.b16 %v1183, %v1182
    %v1406 = vpack.c.b16 %v1185, %v1184
    %v1407 = vpack.c.b16 %v1187, %v1186
    %v1408 = vpack.c.b16 %v1189, %v1188
    %v1409 = vpack.c.b16 %v1191, %v1190
    %v1410 = vpack.c.b16 %v1193, %v1192
    %v1411 = vpack.c.b16 %v1195, %v1194
    %v1412 = vpack.c.b16 %v1197, %v1196
    %v1413 = vpack.c.b16 %v1199, %v1198
    %v1414 = vpack.c.b16 %v1201, %v1200
    %v1415 = vpack.c.b16 %v1203, %v1202
    %v1416 = vpack.c.b16 %v1205, %v1204
    %v1417 = vpack.c.b16 %v1207, %v1206
    %v1418 = vpack.c.b16 %v1209, %v1208
    %v1419 = vpack.c.b16 %v1211, %v1210
    %v1420 = vpack.c.b16 %v1213, %v1212
    %v1421 = vpack.c.b16 %v1215, %v1214
    %v1422 = vpack.c.b16 %v1217, %v1216
    %v1423 = vpack.c.b16 %v1219, %v1218
    %v1424 = vpack.c.b16 %v1221, %v1220
    %v1425 = vpack.c.b16 %v1223, %v1222
    %v1426 = vpack.c.b16 %v1225, %v1224
    %v1427 = vpack.c.b16 %v1227, %v1226
    %v1428 = vpack.c.b16 %v1229, %v1228
    %v1429 = vpack.c.b16 %v1231, %v1230
    %v1430 = vpack.c.b16 %v1233, %v1232
    %v1431 = vpack.c.b16 %v1235, %v1234
    %v1432 = vpack.c.b16 %v1237, %v1236
    %v1433 = vpack.c.b16 %v1239, %v1238
    %v1434 = vpack.c.b16 %v1241, %v1240
    %v1435 = vpack.c.b16 %v1243, %v1242
    %v1436 = vpack.c.b16 %v1245, %v1244
    %v1437 = vpack.c.b16 %v1247, %v1246
    %v1438 = vpack.c.b16 %v1249, %v1248
    %v1439 = vpack.c.b16 %v1251, %v1250
    %v1440 = vpack.c.b16 %v1253, %v1252
    %v1441 = vpack.c.b16 %v1255, %v1254
    %v1442 = vpack.c.b16 %v1257, %v1256
    %v1443 = vpack.c.b16 %v1259, %v1258
    %v1444 = vpack.c.b16 %v1261, %v1260
    %v1445 = vpack.c.b16 %v1263, %v1262
    %v1446 = vpack.c.b16 %v1265, %v1264
    %v1447 = vpack.c.b16 %v1267, %v1266
    %v1448 = vpack.c.b16 %v1269, %v1268
    %v1449 = vpack.c.b16 %v1271, %v1270
    %v1450 = vpack.c.b16 %v1273, %v1272
    %v1451 = vpack.c.b16 %v1275, %v1274
    %v1452 = vpack.c.b16 %v1277, %v1276
    %v1453 = vpack.c.b16 %v1279, %v1278
    %v1454 = vpack.c.b16 %v1281, %v1280
    %v1455 = vpack.c.b16 %v1283, %v1282
    %v1456 = vpack.c.b16 %v1285, %v1284
    %v1457 = vpack.c.b16 %v1287, %v1286
    %v1458 = vpack.c.b16 %v1289, %v1288
    %v1459 = vpack.c.b16 %v1291, %v1290
    %v1460 = vpack.c.b16 %v1293, %v1292
    %v1461 = vpack.c.b16 %v1295, %v1294
    %v1462 = vpack.c.b16 %v1297, %v1296
    %v1463 = vpack.c.b16 %v1299, %v1298
    %v1464 = vpack.c.b16 %v1301, %v1300
    %v1465 = vpack.c.b16 %v1303, %v1302
    %v1466 = vpack.c.b16 %v1305, %v1304
    %v1467 = vpack.c.b16 %v1307, %v1306
    %v1468 = vpack.c.b16 %v1309, %v1308
    %v1469 = vpack.c.b16 %v1311, %v1310
    %v1470 = vpack.c.b16 %v1313, %v1312
    %v1471 = vpack.c.b16 %v1315, %v1314
    %v1472 = vpack.c.b16 %v1317, %v1316
    %v1473 = vpack.c.b16 %v1319, %v1318
    %v1474 = vpack.c.b16 %v1321, %v1320
    %v1475 = vpack.c.b16 %v1323, %v1322
    %v1476 = vpack.c.b16 %v1325, %v1324
    %v1477 = vpack.c.b16 %v1327, %v1326
    %v1478 = vpack.c.b16 %v1329, %v1328
    %v1479 = vpack.c.b16 %v1331, %v1330
    %v1480 = vpack.c.b16 %v1333, %v1332
    %v1481 = vpack.c.b16 %v1335, %v1334
    %v1482 = vpack.c.b16 %v1337, %v1336
    %v1483 = vpack.c.b16 %v1339, %v1338
    %1628 = vmatprep.subr.bf16.mxu0 0
    %1629 = vmatpush1.bf16.msra.mxu0 %v1340
    %1630 = vmatprep.subr.bf16.mxu0 0
    %1631 = vmatpush1.bf16.msra.mxu0 %v1341
    %1632 = vmatprep.subr.bf16.mxu0 0
    %1633 = vmatpush1.bf16.msra.mxu0 %v1342
    %1634 = vmatprep.subr.bf16.mxu0 0
    %1635 = vmatpush1.bf16.msra.mxu0 %v1343
    %1636 = vmatprep.subr.bf16.mxu0 0
    %1637 = vmatpush1.bf16.msra.mxu0 %v1344
    %1638 = vmatprep.subr.bf16.mxu0 0
    %1639 = vmatpush1.bf16.msra.mxu0 %v1345
    %1640 = vmatprep.subr.bf16.mxu0 0
    %1641 = vmatpush1.bf16.msra.mxu0 %v1346
    %1642 = vmatprep.subr.bf16.mxu0 0
    %1643 = vmatpush1.bf16.msra.mxu0 %v1347
    %1644 = vmatprep.subr.bf16.mxu0 0
    %1645 = vmatpush1.bf16.msra.mxu0 %v1348
    %1646 = vmatprep.subr.bf16.mxu0 0
    %1647 = vmatpush1.bf16.msra.mxu0 %v1349
    %1648 = vmatprep.subr.bf16.mxu0 0
    %1649 = vmatpush1.bf16.msra.mxu0 %v1350
    %1650 = vmatprep.subr.bf16.mxu0 0
    %1651 = vmatpush1.bf16.msra.mxu0 %v1351
    %1652 = vmatprep.subr.bf16.mxu0 0
    %1653 = vmatpush1.bf16.msra.mxu0 %v1352
    %1654 = vmatprep.subr.bf16.mxu0 0
    %1655 = vmatpush1.bf16.msra.mxu0 %v1353
    %1656 = vmatprep.subr.bf16.mxu0 0
    %1657 = vmatpush1.bf16.msra.mxu0 %v1354
    %1658 = vmatprep.subr.bf16.mxu0 0
    %1659 = vmatpush1.bf16.msra.mxu0 %v1355
    %1660 = vmatprep.mubr.bf16.mxu0 %v398
    %1661 = vmatmul.mubr.bf16.gmra.mrb[0].mxu0 %v397
    %v1662 = vpop.f32.mrb[0].mxu0
    %v1663 = vadd.f32 %v762, %v1662
    %v1664 = vpop.f32.mrb[0].mxu0
    %v1665 = vpop.f32.mrb[0].mxu0
    %v1666 = vadd.f32 %v762, %v1665
    %v1667 = vpop.f32.mrb[0].mxu0
    %1668 = vmatprep.mubr.bf16.mxu0 %v416
    %1669 = vmatmul.mubr.bf16.gmra.mrb[0].mxu0 %v415
    %v1670 = vpop.f32.mrb[0].mxu0
    %v1671 = vadd.f32 %v762, %v1670
    %v1672 = vpop.f32.mrb[0].mxu0
    %v1673 = vpop.f32.mrb[0].mxu0
    %v1674 = vadd.f32 %v762, %v1673
    %v1675 = vpop.f32.mrb[0].mxu0
    %1676 = vmatprep.mubr.bf16.mxu0 %v434
    %1677 = vmatmul.mubr.bf16.gmra.mrb[0].mxu0 %v433
    %v1678 = vpop.f32.mrb[0].mxu0
    %v1679 = vadd.f32 %v762, %v1678
    %v1680 = vpop.f32.mrb[0].mxu0
    %v1681 = vpop.f32.mrb[0].mxu0
    %v1682 = vadd.f32 %v762, %v1681
    %v1683 = vpop.f32.mrb[0].mxu0
    %1684 = vmatprep.mubr.bf16.mxu0 %v452
    %1685 = vmatmul.mubr.bf16.gmra.mrb[0].mxu0 %v451
    %v1686 = vpop.f32.mrb[0].mxu0
    %v1687 = vadd.f32 %v762, %v1686
    %v1688 = vpop.f32.mrb[0].mxu0
    %v1689 = vpop.f32.mrb[0].mxu0
    %v1690 = vadd.f32 %v762, %v1689
    %v1691 = vpop.f32.mrb[0].mxu0
    %1692 = vdwg.mxu0
    %1693 = vmatprep.subr.bf16.mxu0 0
    %1694 = vmatpush1.bf16.msra.mxu0 %v1356
    %1695 = vmatprep.subr.bf16.mxu0 0
    %1696 = vmatpush1.bf16.msra.mxu0 %v1357
    %1697 = vmatprep.subr.bf16.mxu0 0
    %1698 = vmatpush1.bf16.msra.mxu0 %v1358
    %1699 = vmatprep.subr.bf16.mxu0 0
    %1700 = vmatpush1.bf16.msra.mxu0 %v1359
    %1701 = vmatprep.subr.bf16.mxu0 0
    %1702 = vmatpush1.bf16.msra.mxu0 %v1360
    %1703 = vmatprep.subr.bf16.mxu0 0
    %1704 = vmatpush1.bf16.msra.mxu0 %v1361
    %1705 = vmatprep.subr.bf16.mxu0 0
    %1706 = vmatpush1.bf16.msra.mxu0 %v1362
    %1707 = vmatprep.subr.bf16.mxu0 0
    %1708 = vmatpush1.bf16.msra.mxu0 %v1363
    %1709 = vmatprep.subr.bf16.mxu0 0
    %1710 = vmatpush1.bf16.msra.mxu0 %v1364
    %1711 = vmatprep.subr.bf16.mxu0 0
    %1712 = vmatpush1.bf16.msra.mxu0 %v1365
    %1713 = vmatprep.subr.bf16.mxu0 0
    %1714 = vmatpush1.bf16.msra.mxu0 %v1366
    %1715 = vmatprep.subr.bf16.mxu0 0
    %1716 = vmatpush1.bf16.msra.mxu0 %v1367
    %1717 = vmatprep.subr.bf16.mxu0 0
    %1718 = vmatpush1.bf16.msra.mxu0 %v1368
    %1719 = vmatprep.subr.bf16.mxu0 0
    %1720 = vmatpush1.bf16.msra.mxu0 %v1369
    %1721 = vmatprep.subr.bf16.mxu0 0
    %1722 = vmatpush1.bf16.msra.mxu0 %v1370
    %1723 = vmatprep.subr.bf16.mxu0 0
    %1724 = vmatpush1.bf16.msra.mxu0 %v1371
    %1725 = vmatprep.mubr.bf16.mxu0 %v400
    %1726 = vmatmul.mubr.bf16.gmra.mrb[0].mxu0 %v399
    %v1727 = vpop.f32.mrb[0].mxu0
    %v1728 = vadd.f32 %v1663, %v1727
    %v1729 = vpop.f32.mrb[0].mxu0
    %v1730 = vpop.f32.mrb[0].mxu0
    %v1731 = vadd.f32 %v1666, %v1730
    %v1732 = vpop.f32.mrb[0].mxu0
    %1733 = vmatprep.mubr.bf16.mxu0 %v418
    %1734 = vmatmul.mubr.bf16.gmra.mrb[0].mxu0 %v417
    %v1735 = vpop.f32.mrb[0].mxu0
    %v1736 = vadd.f32 %v1671, %v1735
    %v1737 = vpop.f32.mrb[0].mxu0
    %v1738 = vpop.f32.mrb[0].mxu0
    %v1739 = vadd.f32 %v1674, %v1738
    %v1740 = vpop.f32.mrb[0].mxu0
    %1741 = vmatprep.mubr.bf16.mxu0 %v436
    %1742 = vmatmul.mubr.bf16.gmra.mrb[0].mxu0 %v435
    %v1743 = vpop.f32.mrb[0].mxu0
    %v1744 = vadd.f32 %v1679, %v1743
    %v1745 = vpop.f32.mrb[0].mxu0
    %v1746 = vpop.f32.mrb[0].mxu0
    %v1747 = vadd.f32 %v1682, %v1746
    %v1748 = vpop.f32.mrb[0].mxu0
    %1749 = vmatprep.mubr.bf16.mxu0 %v454
    %1750 = vmatmul.mubr.bf16.gmra.mrb[0].mxu0 %v453
    %v1751 = vpop.f32.mrb[0].mxu0
    %v1752 = vadd.f32 %v1687, %v1751
    %v1753 = vpop.f32.mrb[0].mxu0
    %v1754 = vpop.f32.mrb[0].mxu0
    %v1755 = vadd.f32 %v1690, %v1754
    %v1756 = vpop.f32.mrb[0].mxu0
    %1757 = vdwg.mxu0
    %1758 = vmatprep.subr.bf16.mxu0 0
    %1759 = vmatpush1.bf16.msra.mxu0 %v1372
    %1760 = vmatprep.subr.bf16.mxu0 0
    %1761 = vmatpush1.bf16.msra.mxu0 %v1373
    %1762 = vmatprep.subr.bf16.mxu0 0
    %1763 = vmatpush1.bf16.msra.mxu0 %v1374
    %1764 = vmatprep.subr.bf16.mxu0 0
    %1765 = vmatpush1.bf16.msra.mxu0 %v1375
    %1766 = vmatprep.subr.bf16.mxu0 0
    %1767 = vmatpush1.bf16.msra.mxu0 %v1376
    %1768 = vmatprep.subr.bf16.mxu0 0
    %1769 = vmatpush1.bf16.msra.mxu0 %v1377
    %1770 = vmatprep.subr.bf16.mxu0 0
    %1771 = vmatpush1.bf16.msra.mxu0 %v1378
    %1772 = vmatprep.subr.bf16.mxu0 0
    %1773 = vmatpush1.bf16.msra.mxu0 %v1379
    %1774 = vmatprep.subr.bf16.mxu0 0
    %1775 = vmatpush1.bf16.msra.mxu0 %v1380
    %1776 = vmatprep.subr.bf16.mxu0 0
    %1777 = vmatpush1.bf16.msra.mxu0 %v1381
    %1778 = vmatprep.subr.bf16.mxu0 0
    %1779 = vmatpush1.bf16.msra.mxu0 %v1382
    %1780 = vmatprep.subr.bf16.mxu0 0
    %1781 = vmatpush1.bf16.msra.mxu0 %v1383
    %1782 = vmatprep.subr.bf16.mxu0 0
    %1783 = vmatpush1.bf16.msra.mxu0 %v1384
    %1784 = vmatprep.subr.bf16.mxu0 0
    %1785 = vmatpush1.bf16.msra.mxu0 %v1385
    %1786 = vmatprep.subr.bf16.mxu0 0
    %1787 = vmatpush1.bf16.msra.mxu0 %v1386
    %1788 = vmatprep.subr.bf16.mxu0 0
    %1789 = vmatpush1.bf16.msra.mxu0 %v1387
    %1790 = vmatprep.mubr.bf16.mxu0 %v402
    %1791 = vmatmul.mubr.bf16.gmra.mrb[0].mxu0 %v401
    %v1792 = vpop.f32.mrb[0].mxu0
    %v1793 = vadd.f32 %v1728, %v1792
    %v1794 = vpop.f32.mrb[0].mxu0
    %v1795 = vpop.f32.mrb[0].mxu0
    %v1796 = vadd.f32 %v1731, %v1795
    %v1797 = vpop.f32.mrb[0].mxu0
    %1798 = vmatprep.mubr.bf16.mxu0 %v420
    %1799 = vmatmul.mubr.bf16.gmra.mrb[0].mxu0 %v419
    %v1800 = vpop.f32.mrb[0].mxu0
    %v1801 = vadd.f32 %v1736, %v1800
    %v1802 = vpop.f32.mrb[0].mxu0
    %v1803 = vpop.f32.mrb[0].mxu0
    %v1804 = vadd.f32 %v1739, %v1803
    %v1805 = vpop.f32.mrb[0].mxu0
    %1806 = vmatprep.mubr.bf16.mxu0 %v438
    %1807 = vmatmul.mubr.bf16.gmra.mrb[0].mxu0 %v437
    %v1808 = vpop.f32.mrb[0].mxu0
    %v1809 = vadd.f32 %v1744, %v1808
    %v1810 = vpop.f32.mrb[0].mxu0
    %v1811 = vpop.f32.mrb[0].mxu0
    %v1812 = vadd.f32 %v1747, %v1811
    %v1813 = vpop.f32.mrb[0].mxu0
    %1814 = vmatprep.mubr.bf16.mxu0 %v456
    %1815 = vmatmul.mubr.bf16.gmra.mrb[0].mxu0 %v455
    %v1816 = vpop.f32.mrb[0].mxu0
    %v1817 = vadd.f32 %v1752, %v1816
    %v1818 = vpop.f32.mrb[0].mxu0
    %v1819 = vpop.f32.mrb[0].mxu0
    %v1820 = vadd.f32 %v1755, %v1819
    %v1821 = vpop.f32.mrb[0].mxu0
    %1822 = vdwg.mxu0
    %1823 = vmatprep.subr.bf16.mxu0 0
    %1824 = vmatpush1.bf16.msra.mxu0 %v1388
    %1825 = vmatprep.subr.bf16.mxu0 0
    %1826 = vmatpush1.bf16.msra.mxu0 %v1389
    %1827 = vmatprep.subr.bf16.mxu0 0
    %1828 = vmatpush1.bf16.msra.mxu0 %v1390
    %1829 = vmatprep.subr.bf16.mxu0 0
    %1830 = vmatpush1.bf16.msra.mxu0 %v1391
    %1831 = vmatprep.subr.bf16.mxu0 0
    %1832 = vmatpush1.bf16.msra.mxu0 %v1392
    %1833 = vmatprep.subr.bf16.mxu0 0
    %1834 = vmatpush1.bf16.msra.mxu0 %v1393
    %1835 = vmatprep.subr.bf16.mxu0 0
    %1836 = vmatpush1.bf16.msra.mxu0 %v1394
    %1837 = vmatprep.subr.bf16.mxu0 0
    %1838 = vmatpush1.bf16.msra.mxu0 %v1395
    %1839 = vmatprep.subr.bf16.mxu0 0
    %1840 = vmatpush1.bf16.msra.mxu0 %v1396
    %1841 = vmatprep.subr.bf16.mxu0 0
    %1842 = vmatpush1.bf16.msra.mxu0 %v1397
    %1843 = vmatprep.subr.bf16.mxu0 0
    %1844 = vmatpush1.bf16.msra.mxu0 %v1398
    %1845 = vmatprep.subr.bf16.mxu0 0
    %1846 = vmatpush1.bf16.msra.mxu0 %v1399
    %1847 = vmatprep.subr.bf16.mxu0 0
    %1848 = vmatpush1.bf16.msra.mxu0 %v1400
    %1849 = vmatprep.subr.bf16.mxu0 0
    %1850 = vmatpush1.bf16.msra.mxu0 %v1401
    %1851 = vmatprep.subr.bf16.mxu0 0
    %1852 = vmatpush1.bf16.msra.mxu0 %v1402
    %1853 = vmatprep.subr.bf16.mxu0 0
    %1854 = vmatpush1.bf16.msra.mxu0 %v1403
    %1855 = vmatprep.mubr.bf16.mxu0 %v404
    %1856 = vmatmul.mubr.bf16.gmra.mrb[0].mxu0 %v403
    %v1857 = vpop.f32.mrb[0].mxu0
    %v1858 = vadd.f32 %v1793, %v1857
    %v1859 = vpop.f32.mrb[0].mxu0
    %v1860 = vpop.f32.mrb[0].mxu0
    %v1861 = vadd.f32 %v1796, %v1860
    %v1862 = vpop.f32.mrb[0].mxu0
    %1863 = vmatprep.mubr.bf16.mxu0 %v422
    %1864 = vmatmul.mubr.bf16.gmra.mrb[0].mxu0 %v421
    %v1865 = vpop.f32.mrb[0].mxu0
    %v1866 = vadd.f32 %v1801, %v1865
    %v1867 = vpop.f32.mrb[0].mxu0
    %v1868 = vpop.f32.mrb[0].mxu0
    %v1869 = vadd.f32 %v1804, %v1868
    %v1870 = vpop.f32.mrb[0].mxu0
    %1871 = vmatprep.mubr.bf16.mxu0 %v440
    %1872 = vmatmul.mubr.bf16.gmra.mrb[0].mxu0 %v439
    %v1873 = vpop.f32.mrb[0].mxu0
    %v1874 = vadd.f32 %v1809, %v1873
    %v1875 = vpop.f32.mrb[0].mxu0
    %v1876 = vpop.f32.mrb[0].mxu0
    %v1877 = vadd.f32 %v1812, %v1876
    %v1878 = vpop.f32.mrb[0].mxu0
    %1879 = vmatprep.mubr.bf16.mxu0 %v458
    %1880 = vmatmul.mubr.bf16.gmra.mrb[0].mxu0 %v457
    %v1881 = vpop.f32.mrb[0].mxu0
    %v1882 = vadd.f32 %v1817, %v1881
    %v1883 = vpop.f32.mrb[0].mxu0
    %v1884 = vpop.f32.mrb[0].mxu0
    %v1885 = vadd.f32 %v1820, %v1884
    %v1886 = vpop.f32.mrb[0].mxu0
    %1887 = vdwg.mxu0
    %1888 = vmatprep.subr.bf16.mxu0 0
    %1889 = vmatpush1.bf16.msra.mxu0 %v1404
    %1890 = vmatprep.subr.bf16.mxu0 0
    %1891 = vmatpush1.bf16.msra.mxu0 %v1405
    %1892 = vmatprep.subr.bf16.mxu0 0
    %1893 = vmatpush1.bf16.msra.mxu0 %v1406
    %1894 = vmatprep.subr.bf16.mxu0 0
    %1895 = vmatpush1.bf16.msra.mxu0 %v1407
    %1896 = vmatprep.subr.bf16.mxu0 0
    %1897 = vmatpush1.bf16.msra.mxu0 %v1408
    %1898 = vmatprep.subr.bf16.mxu0 0
    %1899 = vmatpush1.bf16.msra.mxu0 %v1409
    %1900 = vmatprep.subr.bf16.mxu0 0
    %1901 = vmatpush1.bf16.msra.mxu0 %v1410
    %1902 = vmatprep.subr.bf16.mxu0 0
    %1903 = vmatpush1.bf16.msra.mxu0 %v1411
    %1904 = vmatprep.subr.bf16.mxu0 0
    %1905 = vmatpush1.bf16.msra.mxu0 %v1412
    %1906 = vmatprep.subr.bf16.mxu0 0
    %1907 = vmatpush1.bf16.msra.mxu0 %v1413
    %1908 = vmatprep.subr.bf16.mxu0 0
    %1909 = vmatpush1.bf16.msra.mxu0 %v1414
    %1910 = vmatprep.subr.bf16.mxu0 0
    %1911 = vmatpush1.bf16.msra.mxu0 %v1415
    %1912 = vmatprep.subr.bf16.mxu0 0
    %1913 = vmatpush1.bf16.msra.mxu0 %v1416
    %1914 = vmatprep.subr.bf16.mxu0 0
    %1915 = vmatpush1.bf16.msra.mxu0 %v1417
    %1916 = vmatprep.subr.bf16.mxu0 0
    %1917 = vmatpush1.bf16.msra.mxu0 %v1418
    %1918 = vmatprep.subr.bf16.mxu0 0
    %1919 = vmatpush1.bf16.msra.mxu0 %v1419
    %1920 = vmatprep.mubr.bf16.mxu0 %v406
    %1921 = vmatmul.mubr.bf16.gmra.mrb[0].mxu0 %v405
    %v1922 = vpop.f32.mrb[0].mxu0
    %v1923 = vadd.f32 %v1858, %v1922
    %v1924 = vpop.f32.mrb[0].mxu0
    %v1925 = vpop.f32.mrb[0].mxu0
    %v1926 = vadd.f32 %v1861, %v1925
    %v1927 = vpop.f32.mrb[0].mxu0
    %1928 = vmatprep.mubr.bf16.mxu0 %v424
    %1929 = vmatmul.mubr.bf16.gmra.mrb[0].mxu0 %v423
    %v1930 = vpop.f32.mrb[0].mxu0
    %v1931 = vadd.f32 %v1866, %v1930
    %v1932 = vpop.f32.mrb[0].mxu0
    %v1933 = vpop.f32.mrb[0].mxu0
    %v1934 = vadd.f32 %v1869, %v1933
    %v1935 = vpop.f32.mrb[0].mxu0
    %1936 = vmatprep.mubr.bf16.mxu0 %v442
    %1937 = vmatmul.mubr.bf16.gmra.mrb[0].mxu0 %v441
    %v1938 = vpop.f32.mrb[0].mxu0
    %v1939 = vadd.f32 %v1874, %v1938
    %v1940 = vpop.f32.mrb[0].mxu0
    %v1941 = vpop.f32.mrb[0].mxu0
    %v1942 = vadd.f32 %v1877, %v1941
    %v1943 = vpop.f32.mrb[0].mxu0
    %1944 = vmatprep.mubr.bf16.mxu0 %v460
    %1945 = vmatmul.mubr.bf16.gmra.mrb[0].mxu0 %v459
    %v1946 = vpop.f32.mrb[0].mxu0
    %v1947 = vadd.f32 %v1882, %v1946
    %v1948 = vpop.f32.mrb[0].mxu0
    %v1949 = vpop.f32.mrb[0].mxu0
    %v1950 = vadd.f32 %v1885, %v1949
    %v1951 = vpop.f32.mrb[0].mxu0
    %1952 = vdwg.mxu0
    %1953 = vmatprep.subr.bf16.mxu0 0
    %1954 = vmatpush1.bf16.msra.mxu0 %v1420
    %1955 = vmatprep.subr.bf16.mxu0 0
    %1956 = vmatpush1.bf16.msra.mxu0 %v1421
    %1957 = vmatprep.subr.bf16.mxu0 0
    %1958 = vmatpush1.bf16.msra.mxu0 %v1422
    %1959 = vmatprep.subr.bf16.mxu0 0
    %1960 = vmatpush1.bf16.msra.mxu0 %v1423
    %1961 = vmatprep.subr.bf16.mxu0 0
    %1962 = vmatpush1.bf16.msra.mxu0 %v1424
    %1963 = vmatprep.subr.bf16.mxu0 0
    %1964 = vmatpush1.bf16.msra.mxu0 %v1425
    %1965 = vmatprep.subr.bf16.mxu0 0
    %1966 = vmatpush1.bf16.msra.mxu0 %v1426
    %1967 = vmatprep.subr.bf16.mxu0 0
    %1968 = vmatpush1.bf16.msra.mxu0 %v1427
    %1969 = vmatprep.subr.bf16.mxu0 0
    %1970 = vmatpush1.bf16.msra.mxu0 %v1428
    %1971 = vmatprep.subr.bf16.mxu0 0
    %1972 = vmatpush1.bf16.msra.mxu0 %v1429
    %1973 = vmatprep.subr.bf16.mxu0 0
    %1974 = vmatpush1.bf16.msra.mxu0 %v1430
    %1975 = vmatprep.subr.bf16.mxu0 0
    %1976 = vmatpush1.bf16.msra.mxu0 %v1431
    %1977 = vmatprep.subr.bf16.mxu0 0
    %1978 = vmatpush1.bf16.msra.mxu0 %v1432
    %1979 = vmatprep.subr.bf16.mxu0 0
    %1980 = vmatpush1.bf16.msra.mxu0 %v1433
    %1981 = vmatprep.subr.bf16.mxu0 0
    %1982 = vmatpush1.bf16.msra.mxu0 %v1434
    %1983 = vmatprep.subr.bf16.mxu0 0
    %1984 = vmatpush1.bf16.msra.mxu0 %v1435
    %1985 = vmatprep.mubr.bf16.mxu0 %v408
    %1986 = vmatmul.mubr.bf16.gmra.mrb[0].mxu0 %v407
    %v1987 = vpop.f32.mrb[0].mxu0
    %v1988 = vadd.f32 %v1923, %v1987
    %v1989 = vpop.f32.mrb[0].mxu0
    %v1990 = vpop.f32.mrb[0].mxu0
    %v1991 = vadd.f32 %v1926, %v1990
    %v1992 = vpop.f32.mrb[0].mxu0
    %1993 = vmatprep.mubr.bf16.mxu0 %v426
    %1994 = vmatmul.mubr.bf16.gmra.mrb[0].mxu0 %v425
    %v1995 = vpop.f32.mrb[0].mxu0
    %v1996 = vadd.f32 %v1931, %v1995
    %v1997 = vpop.f32.mrb[0].mxu0
    %v1998 = vpop.f32.mrb[0].mxu0
    %v1999 = vadd.f32 %v1934, %v1998
    %v2000 = vpop.f32.mrb[0].mxu0
    %2001 = vmatprep.mubr.bf16.mxu0 %v444
    %2002 = vmatmul.mubr.bf16.gmra.mrb[0].mxu0 %v443
    %v2003 = vpop.f32.mrb[0].mxu0
    %v2004 = vadd.f32 %v1939, %v2003
    %v2005 = vpop.f32.mrb[0].mxu0
    %v2006 = vpop.f32.mrb[0].mxu0
    %v2007 = vadd.f32 %v1942, %v2006
    %v2008 = vpop.f32.mrb[0].mxu0
    %2009 = vmatprep.mubr.bf16.mxu0 %v462
    %2010 = vmatmul.mubr.bf16.gmra.mrb[0].mxu0 %v461
    %v2011 = vpop.f32.mrb[0].mxu0
    %v2012 = vadd.f32 %v1947, %v2011
    %v2013 = vpop.f32.mrb[0].mxu0
    %v2014 = vpop.f32.mrb[0].mxu0
    %v2015 = vadd.f32 %v1950, %v2014
    %v2016 = vpop.f32.mrb[0].mxu0
    %2017 = vdwg.mxu0
    %2018 = vmatprep.subr.bf16.mxu0 0
    %2019 = vmatpush1.bf16.msra.mxu0 %v1436
    %2020 = vmatprep.subr.bf16.mxu0 0
    %2021 = vmatpush1.bf16.msra.mxu0 %v1437
    %2022 = vmatprep.subr.bf16.mxu0 0
    %2023 = vmatpush1.bf16.msra.mxu0 %v1438
    %2024 = vmatprep.subr.bf16.mxu0 0
    %2025 = vmatpush1.bf16.msra.mxu0 %v1439
    %2026 = vmatprep.subr.bf16.mxu0 0
    %2027 = vmatpush1.bf16.msra.mxu0 %v1440
    %2028 = vmatprep.subr.bf16.mxu0 0
    %2029 = vmatpush1.bf16.msra.mxu0 %v1441
    %2030 = vmatprep.subr.bf16.mxu0 0
    %2031 = vmatpush1.bf16.msra.mxu0 %v1442
    %2032 = vmatprep.subr.bf16.mxu0 0
    %2033 = vmatpush1.bf16.msra.mxu0 %v1443
    %2034 = vmatprep.subr.bf16.mxu0 0
    %2035 = vmatpush1.bf16.msra.mxu0 %v1444
    %2036 = vmatprep.subr.bf16.mxu0 0
    %2037 = vmatpush1.bf16.msra.mxu0 %v1445
    %2038 = vmatprep.subr.bf16.mxu0 0
    %2039 = vmatpush1.bf16.msra.mxu0 %v1446
    %2040 = vmatprep.subr.bf16.mxu0 0
    %2041 = vmatpush1.bf16.msra.mxu0 %v1447
    %2042 = vmatprep.subr.bf16.mxu0 0
    %2043 = vmatpush1.bf16.msra.mxu0 %v1448
    %2044 = vmatprep.subr.bf16.mxu0 0
    %2045 = vmatpush1.bf16.msra.mxu0 %v1449
    %2046 = vmatprep.subr.bf16.mxu0 0
    %2047 = vmatpush1.bf16.msra.mxu0 %v1450
    %2048 = vmatprep.subr.bf16.mxu0 0
    %2049 = vmatpush1.bf16.msra.mxu0 %v1451
    %2050 = vmatprep.mubr.bf16.mxu0 %v410
    %2051 = vmatmul.mubr.bf16.gmra.mrb[0].mxu0 %v409
    %v2052 = vpop.f32.mrb[0].mxu0
    %v2053 = vadd.f32 %v1988, %v2052
    %v2054 = vpop.f32.mrb[0].mxu0
    %v2055 = vpop.f32.mrb[0].mxu0
    %v2056 = vadd.f32 %v1991, %v2055
    %v2057 = vpop.f32.mrb[0].mxu0
    %2058 = vmatprep.mubr.bf16.mxu0 %v428
    %2059 = vmatmul.mubr.bf16.gmra.mrb[0].mxu0 %v427
    %v2060 = vpop.f32.mrb[0].mxu0
    %v2061 = vadd.f32 %v1996, %v2060
    %v2062 = vpop.f32.mrb[0].mxu0
    %v2063 = vpop.f32.mrb[0].mxu0
    %v2064 = vadd.f32 %v1999, %v2063
    %v2065 = vpop.f32.mrb[0].mxu0
    %2066 = vmatprep.mubr.bf16.mxu0 %v446
    %2067 = vmatmul.mubr.bf16.gmra.mrb[0].mxu0 %v445
    %v2068 = vpop.f32.mrb[0].mxu0
    %v2069 = vadd.f32 %v2004, %v2068
    %v2070 = vpop.f32.mrb[0].mxu0
    %v2071 = vpop.f32.mrb[0].mxu0
    %v2072 = vadd.f32 %v2007, %v2071
    %v2073 = vpop.f32.mrb[0].mxu0
    %2074 = vmatprep.mubr.bf16.mxu0 %v464
    %2075 = vmatmul.mubr.bf16.gmra.mrb[0].mxu0 %v463
    %v2076 = vpop.f32.mrb[0].mxu0
    %v2077 = vadd.f32 %v2012, %v2076
    %v2078 = vpop.f32.mrb[0].mxu0
    %v2079 = vpop.f32.mrb[0].mxu0
    %v2080 = vadd.f32 %v2015, %v2079
    %v2081 = vpop.f32.mrb[0].mxu0
    %2082 = vdwg.mxu0
    %2083 = vmatprep.subr.bf16.mxu0 0
    %2084 = vmatpush1.bf16.msra.mxu0 %v1452
    %2085 = vmatprep.subr.bf16.mxu0 0
    %2086 = vmatpush1.bf16.msra.mxu0 %v1453
    %2087 = vmatprep.subr.bf16.mxu0 0
    %2088 = vmatpush1.bf16.msra.mxu0 %v1454
    %2089 = vmatprep.subr.bf16.mxu0 0
    %2090 = vmatpush1.bf16.msra.mxu0 %v1455
    %2091 = vmatprep.subr.bf16.mxu0 0
    %2092 = vmatpush1.bf16.msra.mxu0 %v1456
    %2093 = vmatprep.subr.bf16.mxu0 0
    %2094 = vmatpush1.bf16.msra.mxu0 %v1457
    %2095 = vmatprep.subr.bf16.mxu0 0
    %2096 = vmatpush1.bf16.msra.mxu0 %v1458
    %2097 = vmatprep.subr.bf16.mxu0 0
    %2098 = vmatpush1.bf16.msra.mxu0 %v1459
    %2099 = vmatprep.subr.bf16.mxu0 0
    %2100 = vmatpush1.bf16.msra.mxu0 %v1460
    %2101 = vmatprep.subr.bf16.mxu0 0
    %2102 = vmatpush1.bf16.msra.mxu0 %v1461
    %2103 = vmatprep.subr.bf16.mxu0 0
    %2104 = vmatpush1.bf16.msra.mxu0 %v1462
    %2105 = vmatprep.subr.bf16.mxu0 0
    %2106 = vmatpush1.bf16.msra.mxu0 %v1463
    %2107 = vmatprep.subr.bf16.mxu0 0
    %2108 = vmatpush1.bf16.msra.mxu0 %v1464
    %2109 = vmatprep.subr.bf16.mxu0 0
    %2110 = vmatpush1.bf16.msra.mxu0 %v1465
    %2111 = vmatprep.subr.bf16.mxu0 0
    %2112 = vmatpush1.bf16.msra.mxu0 %v1466
    %2113 = vmatprep.subr.bf16.mxu0 0
    %2114 = vmatpush1.bf16.msra.mxu0 %v1467
    %2115 = vmatprep.mubr.bf16.mxu0 %v412
    %2116 = vmatmul.mubr.bf16.gmra.mrb[0].mxu0 %v411
    %v2117 = vpop.f32.mrb[0].mxu0
    %v2118 = vadd.f32 %v2053, %v2117
    %v2119 = vpop.f32.mrb[0].mxu0
    %v2120 = vpop.f32.mrb[0].mxu0
    %v2121 = vadd.f32 %v2056, %v2120
    %v2122 = vpop.f32.mrb[0].mxu0
    %2123 = vmatprep.mubr.bf16.mxu0 %v430
    %2124 = vmatmul.mubr.bf16.gmra.mrb[0].mxu0 %v429
    %v2125 = vpop.f32.mrb[0].mxu0
    %v2126 = vadd.f32 %v2061, %v2125
    %v2127 = vpop.f32.mrb[0].mxu0
    %v2128 = vpop.f32.mrb[0].mxu0
    %v2129 = vadd.f32 %v2064, %v2128
    %v2130 = vpop.f32.mrb[0].mxu0
    %2131 = vmatprep.mubr.bf16.mxu0 %v448
    %2132 = vmatmul.mubr.bf16.gmra.mrb[0].mxu0 %v447
    %v2133 = vpop.f32.mrb[0].mxu0
    %v2134 = vadd.f32 %v2069, %v2133
    %v2135 = vpop.f32.mrb[0].mxu0
    %v2136 = vpop.f32.mrb[0].mxu0
    %v2137 = vadd.f32 %v2072, %v2136
    %v2138 = vpop.f32.mrb[0].mxu0
    %2139 = vmatprep.mubr.bf16.mxu0 %v466
    %2140 = vmatmul.mubr.bf16.gmra.mrb[0].mxu0 %v465
    %v2141 = vpop.f32.mrb[0].mxu0
    %v2142 = vadd.f32 %v2077, %v2141
    %v2143 = vpop.f32.mrb[0].mxu0
    %v2144 = vpop.f32.mrb[0].mxu0
    %v2145 = vadd.f32 %v2080, %v2144
    %v2146 = vpop.f32.mrb[0].mxu0
    %2147 = vdwg.mxu0
    %2148 = vmatprep.subr.bf16.mxu0 0
    %2149 = vmatpush1.bf16.msra.mxu0 %v1468
    %2150 = vmatprep.subr.bf16.mxu0 0
    %2151 = vmatpush1.bf16.msra.mxu0 %v1469
    %2152 = vmatprep.subr.bf16.mxu0 0
    %2153 = vmatpush1.bf16.msra.mxu0 %v1470
    %2154 = vmatprep.subr.bf16.mxu0 0
    %2155 = vmatpush1.bf16.msra.mxu0 %v1471
    %2156 = vmatprep.subr.bf16.mxu0 0
    %2157 = vmatpush1.bf16.msra.mxu0 %v1472
    %2158 = vmatprep.subr.bf16.mxu0 0
    %2159 = vmatpush1.bf16.msra.mxu0 %v1473
    %2160 = vmatprep.subr.bf16.mxu0 0
    %2161 = vmatpush1.bf16.msra.mxu0 %v1474
    %2162 = vmatprep.subr.bf16.mxu0 0
    %2163 = vmatpush1.bf16.msra.mxu0 %v1475
    %2164 = vmatprep.subr.bf16.mxu0 0
    %2165 = vmatpush1.bf16.msra.mxu0 %v1476
    %2166 = vmatprep.subr.bf16.mxu0 0
    %2167 = vmatpush1.bf16.msra.mxu0 %v1477
    %2168 = vmatprep.subr.bf16.mxu0 0
    %2169 = vmatpush1.bf16.msra.mxu0 %v1478
    %2170 = vmatprep.subr.bf16.mxu0 0
    %2171 = vmatpush1.bf16.msra.mxu0 %v1479
    %2172 = vmatprep.subr.bf16.mxu0 0
    %2173 = vmatpush1.bf16.msra.mxu0 %v1480
    %2174 = vmatprep.subr.bf16.mxu0 0
    %2175 = vmatpush1.bf16.msra.mxu0 %v1481
    %2176 = vmatprep.subr.bf16.mxu0 0
    %2177 = vmatpush1.bf16.msra.mxu0 %v1482
    %2178 = vmatprep.subr.bf16.mxu0 0
    %2179 = vmatpush1.bf16.msra.mxu0 %v1483
    %2180 = vmatprep.mubr.bf16.mxu0 %v414
    %2181 = vmatmul.mubr.bf16.gmra.mrb[0].mxu0 %v413
    %v2182 = vpop.f32.mrb[0].mxu0
    %v2183 = vadd.f32 %v2118, %v2182
    %v2184 = vpop.f32.mrb[0].mxu0
    %v2185 = vpop.f32.mrb[0].mxu0
    %v2186 = vadd.f32 %v2121, %v2185
    %v2187 = vpop.f32.mrb[0].mxu0
    %2188 = vmatprep.mubr.bf16.mxu0 %v432
    %2189 = vmatmul.mubr.bf16.gmra.mrb[0].mxu0 %v431
    %v2190 = vpop.f32.mrb[0].mxu0
    %v2191 = vadd.f32 %v2126, %v2190
    %v2192 = vpop.f32.mrb[0].mxu0
    %v2193 = vpop.f32.mrb[0].mxu0
    %v2194 = vadd.f32 %v2129, %v2193
    %v2195 = vpop.f32.mrb[0].mxu0
    %2196 = vmatprep.mubr.bf16.mxu0 %v450
    %2197 = vmatmul.mubr.bf16.gmra.mrb[0].mxu0 %v449
    %v2198 = vpop.f32.mrb[0].mxu0
    %v2199 = vadd.f32 %v2134, %v2198
    %v2200 = vpop.f32.mrb[0].mxu0
    %v2201 = vpop.f32.mrb[0].mxu0
    %v2202 = vadd.f32 %v2137, %v2201
    %v2203 = vpop.f32.mrb[0].mxu0
    %2204 = vmatprep.mubr.bf16.mxu0 %v468
    %2205 = vmatmul.mubr.bf16.gmra.mrb[0].mxu0 %v467
    %v2206 = vpop.f32.mrb[0].mxu0
    %v2207 = vadd.f32 %v2142, %v2206
    %v2208 = vpop.f32.mrb[0].mxu0
    %v2209 = vpop.f32.mrb[0].mxu0
    %v2210 = vadd.f32 %v2145, %v2209
    %v2211 = vpop.f32.mrb[0].mxu0
    %2212 = vdwg.mxu0
    %2214 = vset.pattern.permute.xlu0 0
    %2215 = vperm.xlu0 %2214, %v283
    %v2216 = vpop.permute.xlu0 %2215
    %2219 = vset.pattern.permute.xlu0 0
    %2220 = vperm.xlu0 %2219, %v284
    %v2221 = vpop.permute.xlu0 %2220
    %2224 = vset.pattern.permute.xlu0 0
    %2225 = vperm.xlu0 %2224, %v285
    %v2226 = vpop.permute.xlu0 %2225
    %2229 = vset.pattern.permute.xlu0 0
    %2230 = vperm.xlu0 %2229, %v286
    %v2231 = vpop.permute.xlu0 %2230
    %2234 = vset.pattern.permute.xlu0 0
    %2235 = vperm.xlu0 %2234, %v287
    %v2236 = vpop.permute.xlu0 %2235
    %2239 = vset.pattern.permute.xlu0 0
    %2240 = vperm.xlu0 %2239, %v288
    %v2241 = vpop.permute.xlu0 %2240
    %2244 = vset.pattern.permute.xlu0 0
    %2245 = vperm.xlu0 %2244, %v289
    %v2246 = vpop.permute.xlu0 %2245
    %2249 = vset.pattern.permute.xlu0 0
    %2250 = vperm.xlu0 %2249, %v290
    %v2251 = vpop.permute.xlu0 %2250
    %v2253 = vmul.f32 %v2183, %v2216
    %v2254 = vmul.f32 %v2186, %v2221
    %v2255 = vmul.f32 %v2191, %v2226
    %v2256 = vmul.f32 %v2194, %v2231
    %v2257 = vmul.f32 %v2199, %v2236
    %v2258 = vmul.f32 %v2202, %v2241
    %v2259 = vmul.f32 %v2207, %v2246
    %v2260 = vmul.f32 %v2210, %v2251
    %v2261 = vadd.f32 %v2253, %v2254
    %v2262 = vadd.f32 %v2261, %v2255
    %v2263 = vadd.f32 %v2262, %v2256
    %v2264 = vadd.f32 %v2263, %v2257
    %v2265 = vadd.f32 %v2264, %v2258
    %v2266 = vadd.f32 %v2265, %v2259
    %v2267 = vadd.f32 %v2266, %v2260
    %v2268 = vrot.slane %v2267, 4
    %v2269 = vadd.f32 %v2267, %v2268
    %v2270 = vrot.slane %v2269, 2
    %v2271 = vadd.f32 %v2269, %v2270
    %v2272 = vrot.slane %v2271, 1
    %v2273 = vadd.f32 %v2271, %v2272
    %v2274 = vmul.f32 %v2273, 0.0625
    %v2275 = vmul.f32 %v2253, %v2183
    %v2276 = vmul.f32 %v2254, %v2186
    %v2277 = vmul.f32 %v2255, %v2191
    %v2278 = vmul.f32 %v2256, %v2194
    %v2279 = vmul.f32 %v2257, %v2199
    %v2280 = vmul.f32 %v2258, %v2202
    %v2281 = vmul.f32 %v2259, %v2207
    %v2282 = vmul.f32 %v2260, %v2210
    %v2283 = vadd.f32 %v2275, %v2276
    %v2284 = vadd.f32 %v2283, %v2277
    %v2285 = vadd.f32 %v2284, %v2278
    %v2286 = vadd.f32 %v2285, %v2279
    %v2287 = vadd.f32 %v2286, %v2280
    %v2288 = vadd.f32 %v2287, %v2281
    %v2289 = vadd.f32 %v2288, %v2282
    %v2290 = vrot.slane %v2289, 4
    %v2291 = vadd.f32 %v2289, %v2290
    %v2292 = vrot.slane %v2291, 2
    %v2293 = vadd.f32 %v2291, %v2292
    %v2294 = vrot.slane %v2293, 1
    %v2295 = vadd.f32 %v2293, %v2294
    %v2296 = vmul.f32 %v2295, 0.0625
    %v2297 = vmul.f32 %v2274, %v2274
    %v2298 = vsub.f32 %v2296, %v2297
    %v2299 = vld [vmem:[#allocation9] sm:$0x1]
    %v2300 = vadd.f32 %v2298, 1e-05
    %v2301 = vrsqrt.pop %v2300
    %v2302 = vmul.f32 %v2299, %v2301
    %v2303 = vld [vmem:[#allocation11] sm:$0x1]
    %v2304 = vmul.f32 %v2274, %v2302
    %v2305 = vsub.f32 %v2303, %v2304
    %v2307 = vlaneseq
    %v2308 = vshrl.u32 %v2307, 7
    %v2309 = vsub.s32 0, %v2308
    %v2310 = vrot.slane %v2302, %v2309
    %v2312 = vmul.f32 %v2183, %v2310
    %v2313 = vmul.f32 %v2186, %v2310
    %v2314 = vmul.f32 %v2191, %v2310
    %v2315 = vmul.f32 %v2194, %v2310
    %v2316 = vmul.f32 %v2199, %v2310
    %v2317 = vmul.f32 %v2202, %v2310
    %v2318 = vmul.f32 %v2207, %v2310
    %v2319 = vmul.f32 %v2210, %v2310
    %v2321 = vlaneseq
    %v2322 = vshrl.u32 %v2321, 7
    %v2323 = vsub.s32 0, %v2322
    %v2324 = vrot.slane %v2305, %v2323
    %v2326 = vadd.f32 %v2312, %v2324
    %v2327 = vadd.f32 %v2313, %v2324
    %v2328 = vadd.f32 %v2314, %v2324
    %v2329 = vadd.f32 %v2315, %v2324
    %v2330 = vadd.f32 %v2316, %v2324
    %v2331 = vadd.f32 %v2317, %v2324
    %v2332 = vadd.f32 %v2318, %v2324
    %v2333 = vadd.f32 %v2319, %v2324
    %v2334 = vmax.f32 %v2326, 0.0
    %v2335 = vmax.f32 %v2327, 0.0
    %v2336 = vmax.f32 %v2328, 0.0
    %v2337 = vmax.f32 %v2329, 0.0
    %v2338 = vmax.f32 %v2330, 0.0
    %v2339 = vmax.f32 %v2331, 0.0
    %v2340 = vmax.f32 %v2332, 0.0
    %v2341 = vmax.f32 %v2333, 0.0
    %2342 = vst [vmem:[#allocation2 + $0x10] sm:$0xff] %v2334
    %2343 = vst [vmem:[#allocation2 + $0x20] sm:$0xff] %v2335
    %2344 = vst [vmem:[#allocation2 + $0x30] sm:$0xff] %v2336
    %2345 = vst [vmem:[#allocation2 + $0x40] sm:$0xff] %v2337
    %2346 = vst [vmem:[#allocation2 + $0x50] sm:$0xff] %v2338
    %2347 = vst [vmem:[#allocation2 + $0x60] sm:$0xff] %v2339
    %2348 = vst [vmem:[#allocation2 + $0x70] sm:$0xff] %v2340
    %2349 = vst [vmem:[#allocation2 + $0x80] sm:$0xff] %v2341
    %v2350 = vld [vmem:[#allocation2] sm:$0xff]
    %v2351 = vld [vmem:[#allocation2 + $0x10] sm:$0xff]
    %v2352 = vld [vmem:[#allocation2 + $0x20] sm:$0xff]
    %v2353 = vld [vmem:[#allocation2 + $0x30] sm:$0xff]
    %v2354 = vld [vmem:[#allocation2 + $0x40] sm:$0xff]
    %v2355 = vld [vmem:[#allocation2 + $0x50] sm:$0xff]
    %v2356 = vld [vmem:[#allocation2 + $0x60] sm:$0xff]
    %v2357 = vld [vmem:[#allocation2 + $0x70] sm:$0xff]
    %v2358 = vld [vmem:[#allocation2 + $0x80] sm:$0xff]
    %v2359 = vld [vmem:[#allocation2 + $0x90] sm:$0xff]
    %v2360 = vpack.c.bf16 %v2351, %v2350
    %v2361 = vpack.c.bf16 %v2352, %v2351
    %v2362 = vpack.c.bf16 %v2353, %v2352
    %v2363 = vpack.c.bf16 %v2354, %v2353
    %v2364 = vpack.c.bf16 %v2355, %v2354
    %v2365 = vpack.c.bf16 %v2356, %v2355
    %v2366 = vpack.c.bf16 %v2357, %v2356
    %v2367 = vpack.c.bf16 %v2358, %v2357
    %v2368 = vpack.c.bf16 %v2359, %v2358
    %v2369 = vld [vmem:[#allocation12] sm:$0xf]
    %v2370 = vld [vmem:[#allocation12 + $0x4] sm:$0xf]
    %v2371 = vld [vmem:[#allocation12 + $0x8] sm:$0xf]
    %v2372 = vld [vmem:[#allocation12 + $0xc] sm:$0xf]
    %v2373 = vld [vmem:[#allocation12 + $0x10] sm:$0xf]
    %v2374 = vld [vmem:[#allocation12 + $0x14] sm:$0xf]
    %v2375 = vld [vmem:[#allocation12 + $0x18] sm:$0xf]
    %v2376 = vld [vmem:[#allocation12 + $0x1c] sm:$0xf]
    %v2377 = vld [vmem:[#allocation12 + $0x20] sm:$0xf]
    %v2378 = vld [vmem:[#allocation12 + $0x24] sm:$0xf]
    %v2379 = vld [vmem:[#allocation12 + $0x28] sm:$0xf]
    %v2380 = vld [vmem:[#allocation12 + $0x2c] sm:$0xf]
    %v2381 = vld [vmem:[#allocation12 + $0x30] sm:$0xf]
    %v2382 = vld [vmem:[#allocation12 + $0x34] sm:$0xf]
    %v2383 = vld [vmem:[#allocation12 + $0x38] sm:$0xf]
    %v2384 = vld [vmem:[#allocation12 + $0x3c] sm:$0xf]
    %v2385 = vld [vmem:[#allocation12 + $0x40] sm:$0xf]
    %v2386 = vld [vmem:[#allocation12 + $0x44] sm:$0xf]
    %v2387 = vld [vmem:[#allocation12 + $0x48] sm:$0xf]
    %v2388 = vld [vmem:[#allocation12 + $0x4c] sm:$0xf]
    %v2389 = vld [vmem:[#allocation12 + $0x50] sm:$0xf]
    %v2390 = vld [vmem:[#allocation12 + $0x54] sm:$0xf]
    %v2391 = vld [vmem:[#allocation12 + $0x58] sm:$0xf]
    %v2392 = vld [vmem:[#allocation12 + $0x5c] sm:$0xf]
    %v2393 = vld [vmem:[#allocation12 + $0x60] sm:$0xf]
    %v2394 = vld [vmem:[#allocation12 + $0x64] sm:$0xf]
    %v2395 = vld [vmem:[#allocation12 + $0x68] sm:$0xf]
    %v2396 = vld [vmem:[#allocation12 + $0x6c] sm:$0xf]
    %v2397 = vld [vmem:[#allocation12 + $0x70] sm:$0xf]
    %v2398 = vld [vmem:[#allocation12 + $0x74] sm:$0xf]
    %v2399 = vld [vmem:[#allocation12 + $0x78] sm:$0xf]
    %v2400 = vld [vmem:[#allocation12 + $0x7c] sm:$0xf]
    %v2401 = vld [vmem:[#allocation12 + $0x80] sm:$0xf]
    %v2402 = vld [vmem:[#allocation12 + $0x84] sm:$0xf]
    %v2403 = vld [vmem:[#allocation12 + $0x88] sm:$0xf]
    %v2404 = vld [vmem:[#allocation12 + $0x8c] sm:$0xf]
    %v2405 = vld [vmem:[#allocation12 + $0x90] sm:$0xf]
    %v2406 = vld [vmem:[#allocation12 + $0x94] sm:$0xf]
    %v2407 = vld [vmem:[#allocation12 + $0x98] sm:$0xf]
    %v2408 = vld [vmem:[#allocation12 + $0x9c] sm:$0xf]
    %v2409 = vld [vmem:[#allocation12 + $0xa0] sm:$0xf]
    %v2410 = vld [vmem:[#allocation12 + $0xa4] sm:$0xf]
    %v2411 = vld [vmem:[#allocation12 + $0xa8] sm:$0xf]
    %v2412 = vld [vmem:[#allocation12 + $0xac] sm:$0xf]
    %v2413 = vld [vmem:[#allocation12 + $0xb0] sm:$0xf]
    %v2414 = vld [vmem:[#allocation12 + $0xb4] sm:$0xf]
    %v2415 = vld [vmem:[#allocation12 + $0xb8] sm:$0xf]
    %v2416 = vld [vmem:[#allocation12 + $0xbc] sm:$0xf]
    %v2417 = vld [vmem:[#allocation14] sm:$0x1]
    %v2419 = vlaneseq
    %v2420 = vshrl.u32 %v2419, 7
    %v2421 = vsub.s32 0, %v2420
    %v2422 = vrot.slane %v2417, %v2421
    %v2472 = vunpack.c.l.b16 %v2369
    %v2473 = vunpack.c.l.b16 %v2370
    %v2474 = vunpack.c.l.b16 %v2371
    %v2475 = vunpack.c.l.b16 %v2372
    %v2476 = vunpack.c.l.b16 %v2373
    %v2477 = vunpack.c.l.b16 %v2374
    %v2478 = vunpack.c.l.b16 %v2375
    %v2479 = vunpack.c.l.b16 %v2376
    %v2480 = vunpack.c.l.b16 %v2377
    %v2481 = vunpack.c.l.b16 %v2378
    %v2482 = vunpack.c.l.b16 %v2379
    %v2483 = vunpack.c.l.b16 %v2380
    %v2484 = vunpack.c.l.b16 %v2381
    %v2485 = vunpack.c.l.b16 %v2382
    %v2486 = vunpack.c.l.b16 %v2383
    %v2487 = vunpack.c.l.b16 %v2384
    %v2488 = vunpack.c.l.b16 %v2385
    %v2489 = vunpack.c.l.b16 %v2386
    %v2490 = vunpack.c.l.b16 %v2387
    %v2491 = vunpack.c.l.b16 %v2388
    %v2492 = vunpack.c.l.b16 %v2389
    %v2493 = vunpack.c.l.b16 %v2390
    %v2494 = vunpack.c.l.b16 %v2391
    %v2495 = vunpack.c.l.b16 %v2392
    %v2496 = vunpack.c.l.b16 %v2393
    %v2497 = vunpack.c.l.b16 %v2394
    %v2498 = vunpack.c.l.b16 %v2395
    %v2499 = vunpack.c.l.b16 %v2396
    %v2500 = vunpack.c.l.b16 %v2397
    %v2501 = vunpack.c.l.b16 %v2398
    %v2502 = vunpack.c.l.b16 %v2399
    %v2503 = vunpack.c.l.b16 %v2400
    %v2504 = vunpack.c.l.b16 %v2401
    %v2505 = vunpack.c.l.b16 %v2402
    %v2506 = vunpack.c.l.b16 %v2403
    %v2507 = vunpack.c.l.b16 %v2404
    %v2508 = vunpack.c.l.b16 %v2405
    %v2509 = vunpack.c.l.b16 %v2406
    %v2510 = vunpack.c.l.b16 %v2407
    %v2511 = vunpack.c.l.b16 %v2408
    %v2512 = vunpack.c.l.b16 %v2409
    %v2513 = vunpack.c.l.b16 %v2410
    %v2514 = vunpack.c.l.b16 %v2411
    %v2515 = vunpack.c.l.b16 %v2412
    %v2516 = vunpack.c.l.b16 %v2413
    %v2517 = vunpack.c.l.b16 %v2414
    %v2518 = vunpack.c.l.b16 %v2415
    %v2519 = vunpack.c.l.b16 %v2416
    %v2520 = vpack.c.b16 %v2473, %v2472
    %v2521 = vpack.c.b16 %v2475, %v2474
    %v2522 = vpack.c.b16 %v2477, %v2476
    %v2523 = vpack.c.b16 %v2479, %v2478
    %v2524 = vpack.c.b16 %v2481, %v2480
    %v2525 = vpack.c.b16 %v2483, %v2482
    %v2526 = vpack.c.b16 %v2485, %v2484
    %v2527 = vpack.c.b16 %v2487, %v2486
    %v2528 = vpack.c.b16 %v2489, %v2488
    %v2529 = vpack.c.b16 %v2491, %v2490
    %v2530 = vpack.c.b16 %v2493, %v2492
    %v2531 = vpack.c.b16 %v2495, %v2494
    %v2532 = vpack.c.b16 %v2497, %v2496
    %v2533 = vpack.c.b16 %v2499, %v2498
    %v2534 = vpack.c.b16 %v2501, %v2500
    %v2535 = vpack.c.b16 %v2503, %v2502
    %v2536 = vpack.c.b16 %v2505, %v2504
    %v2537 = vpack.c.b16 %v2507, %v2506
    %v2538 = vpack.c.b16 %v2509, %v2508
    %v2539 = vpack.c.b16 %v2511, %v2510
    %v2540 = vpack.c.b16 %v2513, %v2512
    %v2541 = vpack.c.b16 %v2515, %v2514
    %v2542 = vpack.c.b16 %v2517, %v2516
    %v2543 = vpack.c.b16 %v2519, %v2518
    %2568 = vmatprep.subr.bf16.mxu0 0
    %2569 = vmatpush1.bf16.msra.mxu0 %v2520
    %2570 = vmatprep.subr.bf16.mxu0 0
    %2571 = vmatpush1.bf16.msra.mxu0 %v2521
    %2572 = vmatprep.subr.bf16.mxu0 0
    %2573 = vmatpush1.bf16.msra.mxu0 %v2522
    %2574 = vmatprep.subr.bf16.mxu0 0
    %2575 = vmatpush1.bf16.msra.mxu0 %v2523
    %2576 = vmatprep.subr.bf16.mxu0 0
    %2577 = vmatpush1.bf16.msra.mxu0 %v2524
    %2578 = vmatprep.subr.bf16.mxu0 0
    %2579 = vmatpush1.bf16.msra.mxu0 %v2525
    %2580 = vmatprep.subr.bf16.mxu0 0
    %2581 = vmatpush1.bf16.msra.mxu0 %v2526
    %2582 = vmatprep.subr.bf16.mxu0 0
    %2583 = vmatpush1.bf16.msra.mxu0 %v2527
    %2584 = vmatprep.subr.bf16.mxu0 0
    %2585 = vmatpush1.bf16.msra.mxu0 %v2528
    %2586 = vmatprep.subr.bf16.mxu0 0
    %2587 = vmatpush1.bf16.msra.mxu0 %v2529
    %2588 = vmatprep.subr.bf16.mxu0 0
    %2589 = vmatpush1.bf16.msra.mxu0 %v2530
    %2590 = vmatprep.subr.bf16.mxu0 0
    %2591 = vmatpush1.bf16.msra.mxu0 %v2531
    %2592 = vmatprep.subr.bf16.mxu0 0
    %2593 = vmatpush1.bf16.msra.mxu0 %v2532
    %2594 = vmatprep.subr.bf16.mxu0 0
    %2595 = vmatpush1.bf16.msra.mxu0 %v2533
    %2596 = vmatprep.subr.bf16.mxu0 0
    %2597 = vmatpush1.bf16.msra.mxu0 %v2534
    %2598 = vmatprep.subr.bf16.mxu0 0
    %2599 = vmatpush1.bf16.msra.mxu0 %v2535
    %2600 = vmatprep.mubr.bf16.mxu0 %v2361
    %2601 = vmatmul.mubr.bf16.gmra.mrb[0].mxu0 %v2360
    %v2602 = vpop.f32.mrb[0].mxu0
    %v2603 = vadd.f32 %v2422, %v2602
    %v2604 = vpop.f32.mrb[0].mxu0
    %v2605 = vpop.f32.mrb[0].mxu0
    %v2606 = vadd.f32 %v2422, %v2605
    %v2607 = vpop.f32.mrb[0].mxu0
    %2608 = vmatprep.mubr.bf16.mxu0 %v2363
    %2609 = vmatmul.mubr.bf16.gmra.mrb[0].mxu0 %v2362
    %v2610 = vpop.f32.mrb[0].mxu0
    %v2611 = vadd.f32 %v2422, %v2610
    %v2612 = vpop.f32.mrb[0].mxu0
    %v2613 = vpop.f32.mrb[0].mxu0
    %v2614 = vadd.f32 %v2422, %v2613
    %v2615 = vpop.f32.mrb[0].mxu0
    %2616 = vmatprep.mubr.bf16.mxu0 %v2365
    %2617 = vmatmul.mubr.bf16.gmra.mrb[0].mxu0 %v2364
    %v2618 = vpop.f32.mrb[0].mxu0
    %v2619 = vadd.f32 %v2422, %v2618
    %v2620 = vpop.f32.mrb[0].mxu0
    %v2621 = vpop.f32.mrb[0].mxu0
    %v2622 = vadd.f32 %v2422, %v2621
    %v2623 = vpop.f32.mrb[0].mxu0
    %2624 = vmatprep.mubr.bf16.mxu0 %v2367
    %2625 = vmatmul.mubr.bf16.gmra.mrb[0].mxu0 %v2366
    %v2626 = vpop.f32.mrb[0].mxu0
    %v2627 = vadd.f32 %v2422, %v2626
    %v2628 = vpop.f32.mrb[0].mxu0
    %v2629 = vpop.f32.mrb[0].mxu0
    %v2630 = vadd.f32 %v2422, %v2629
    %v2631 = vpop.f32.mrb[0].mxu0
    %2632 = vdwg.mxu0
    %2633 = vmatprep.subr.bf16.mxu0 0
    %2634 = vmatpush1.bf16.msra.mxu0 %v2536
    %2635 = vmatprep.subr.bf16.mxu0 0
    %2636 = vmatpush1.bf16.msra.mxu0 %v2537
    %2637 = vmatprep.subr.bf16.mxu0 0
    %2638 = vmatpush1.bf16.msra.mxu0 %v2538
    %2639 = vmatprep.subr.bf16.mxu0 0
    %2640 = vmatpush1.bf16.msra.mxu0 %v2539
    %2641 = vmatprep.subr.bf16.mxu0 0
    %2642 = vmatpush1.bf16.msra.mxu0 %v2540
    %2643 = vmatprep.subr.bf16.mxu0 0
    %2644 = vmatpush1.bf16.msra.mxu0 %v2541
    %2645 = vmatprep.subr.bf16.mxu0 0
    %2646 = vmatpush1.bf16.msra.mxu0 %v2542
    %2647 = vmatprep.subr.bf16.mxu0 0
    %2648 = vmatpush1.bf16.msra.mxu0 %v2543
    %2649 = vmatprep.subr.bf16.mxu0 0
    %2650 = vmatpush1.bf16.msra.mxu0 0
    %2651 = vmatprep.subr.bf16.mxu0 0
    %2652 = vmatpush1.bf16.msra.mxu0 0
    %2653 = vmatprep.subr.bf16.mxu0 0
    %2654 = vmatpush1.bf16.msra.mxu0 0
    %2655 = vmatprep.subr.bf16.mxu0 0
    %2656 = vmatpush1.bf16.msra.mxu0 0
    %2657 = vmatprep.subr.bf16.mxu0 0
    %2658 = vmatpush1.bf16.msra.mxu0 0
    %2659 = vmatprep.subr.bf16.mxu0 0
    %2660 = vmatpush1.bf16.msra.mxu0 0
    %2661 = vmatprep.subr.bf16.mxu0 0
    %2662 = vmatpush1.bf16.msra.mxu0 0
    %2663 = vmatprep.subr.bf16.mxu0 0
    %2664 = vmatpush1.bf16.msra.mxu0 0
    %2665 = vmatprep.mubr.bf16.mxu0 0
    %2666 = vmatmul.mubr.bf16.gmra.mrb[0].mxu0 %v2362
    %v2667 = vpop.f32.mrb[0].mxu0
    %v2668 = vadd.f32 %v2603, %v2667
    %v2669 = vpop.f32.mrb[0].mxu0
    %v2670 = vpop.f32.mrb[0].mxu0
    %v2671 = vadd.f32 %v2606, %v2670
    %v2672 = vpop.f32.mrb[0].mxu0
    %2673 = vmatprep.mubr.bf16.mxu0 0
    %2674 = vmatmul.mubr.bf16.gmra.mrb[0].mxu0 %v2364
    %v2675 = vpop.f32.mrb[0].mxu0
    %v2676 = vadd.f32 %v2611, %v2675
    %v2677 = vpop.f32.mrb[0].mxu0
    %v2678 = vpop.f32.mrb[0].mxu0
    %v2679 = vadd.f32 %v2614, %v2678
    %v2680 = vpop.f32.mrb[0].mxu0
    %2681 = vmatprep.mubr.bf16.mxu0 0
    %2682 = vmatmul.mubr.bf16.gmra.mrb[0].mxu0 %v2366
    %v2683 = vpop.f32.mrb[0].mxu0
    %v2684 = vadd.f32 %v2619, %v2683
    %v2685 = vpop.f32.mrb[0].mxu0
    %v2686 = vpop.f32.mrb[0].mxu0
    %v2687 = vadd.f32 %v2622, %v2686
    %v2688 = vpop.f32.mrb[0].mxu0
    %2689 = vmatprep.mubr.bf16.mxu0 0
    %2690 = vmatmul.mubr.bf16.gmra.mrb[0].mxu0 %v2368
    %v2691 = vpop.f32.mrb[0].mxu0
    %v2692 = vadd.f32 %v2627, %v2691
    %v2693 = vpop.f32.mrb[0].mxu0
    %v2694 = vpop.f32.mrb[0].mxu0
    %v2695 = vadd.f32 %v2630, %v2694
    %v2696 = vpop.f32.mrb[0].mxu0
    %2697 = vdwg.mxu0
    %v2698 = vmul.f32 %v2668, %v2216
    %v2699 = vmul.f32 %v2671, %v2221
    %v2700 = vmul.f32 %v2676, %v2226
    %v2701 = vmul.f32 %v2679, %v2231
    %v2702 = vmul.f32 %v2684, %v2236
    %v2703 = vmul.f32 %v2687, %v2241
    %v2704 = vmul.f32 %v2692, %v2246
    %v2705 = vmul.f32 %v2695, %v2251
    %v2706 = vadd.f32 %v2698, %v2699
    %v2707 = vadd.f32 %v2706, %v2700
    %v2708 = vadd.f32 %v2707, %v2701
    %v2709 = vadd.f32 %v2708, %v2702
    %v2710 = vadd.f32 %v2709, %v2703
    %v2711 = vadd.f32 %v2710, %v2704
    %v2712 = vadd.f32 %v2711, %v2705
    %v2713 = vrot.slane %v2712, 4
    %v2714 = vadd.f32 %v2712, %v2713
    %v2715 = vrot.slane %v2714, 2
    %v2716 = vadd.f32 %v2714, %v2715
    %v2717 = vrot.slane %v2716, 1
    %v2718 = vadd.f32 %v2716, %v2717
    %v2719 = vmul.f32 %v2718, 0.0625
    %v2720 = vmul.f32 %v2698, %v2668
    %v2721 = vmul.f32 %v2699, %v2671
    %v2722 = vmul.f32 %v2700, %v2676
    %v2723 = vmul.f32 %v2701, %v2679
    %v2724 = vmul.f32 %v2702, %v2684
    %v2725 = vmul.f32 %v2703, %v2687
    %v2726 = vmul.f32 %v2704, %v2692
    %v2727 = vmul.f32 %v2705, %v2695
    %v2728 = vadd.f32 %v2720, %v2721
    %v2729 = vadd.f32 %v2728, %v2722
    %v2730 = vadd.f32 %v2729, %v2723
    %v2731 = vadd.f32 %v2730, %v2724
    %v2732 = vadd.f32 %v2731, %v2725
    %v2733 = vadd.f32 %v2732, %v2726
    %v2734 = vadd.f32 %v2733, %v2727
    %v2735 = vrot.slane %v2734, 4
    %v2736 = vadd.f32 %v2734, %v2735
    %v2737 = vrot.slane %v2736, 2
    %v2738 = vadd.f32 %v2736, %v2737
    %v2739 = vrot.slane %v2738, 1
    %v2740 = vadd.f32 %v2738, %v2739
    %v2741 = vmul.f32 %v2740, 0.0625
    %v2742 = vmul.f32 %v2719, %v2719
    %v2743 = vsub.f32 %v2741, %v2742
    %v2744 = vld [vmem:[#allocation15] sm:$0x1]
    %v2745 = vadd.f32 %v2743, 1e-05
    %v2746 = vrsqrt.pop %v2745
    %v2747 = vmul.f32 %v2744, %v2746
    %v2748 = vld [vmem:[#allocation17] sm:$0x1]
    %v2749 = vmul.f32 %v2719, %v2747
    %v2750 = vsub.f32 %v2748, %v2749
    %v2752 = vlaneseq
    %v2753 = vshrl.u32 %v2752, 7
    %v2754 = vsub.s32 0, %v2753
    %v2755 = vrot.slane %v2747, %v2754
    %v2757 = vmul.f32 %v2668, %v2755
    %v2758 = vmul.f32 %v2671, %v2755
    %v2759 = vmul.f32 %v2676, %v2755
    %v2760 = vmul.f32 %v2679, %v2755
    %v2761 = vmul.f32 %v2684, %v2755
    %v2762 = vmul.f32 %v2687, %v2755
    %v2763 = vmul.f32 %v2692, %v2755
    %v2764 = vmul.f32 %v2695, %v2755
    %v2766 = vlaneseq
    %v2767 = vshrl.u32 %v2766, 7
    %v2768 = vsub.s32 0, %v2767
    %v2769 = vrot.slane %v2750, %v2768
    %v2771 = vadd.f32 %v2757, %v2769
    %v2772 = vadd.f32 %v2758, %v2769
    %v2773 = vadd.f32 %v2759, %v2769
    %v2774 = vadd.f32 %v2760, %v2769
    %v2775 = vadd.f32 %v2761, %v2769
    %v2776 = vadd.f32 %v2762, %v2769
    %v2777 = vadd.f32 %v2763, %v2769
    %v2778 = vadd.f32 %v2764, %v2769
    %v2779 = vmax.f32 %v2771, 0.0
    %v2780 = vmax.f32 %v2772, 0.0
    %v2781 = vmax.f32 %v2773, 0.0
    %v2782 = vmax.f32 %v2774, 0.0
    %v2783 = vmax.f32 %v2775, 0.0
    %v2784 = vmax.f32 %v2776, 0.0
    %v2785 = vmax.f32 %v2777, 0.0
    %v2786 = vmax.f32 %v2778, 0.0
    %2787 = vst [vmem:[#allocation2 + $0x10] sm:$0xff] %v2779
    %2788 = vst [vmem:[#allocation2 + $0x20] sm:$0xff] %v2780
    %2789 = vst [vmem:[#allocation2 + $0x30] sm:$0xff] %v2781
    %2790 = vst [vmem:[#allocation2 + $0x40] sm:$0xff] %v2782
    %2791 = vst [vmem:[#allocation2 + $0x50] sm:$0xff] %v2783
    %2792 = vst [vmem:[#allocation2 + $0x60] sm:$0xff] %v2784
    %2793 = vst [vmem:[#allocation2 + $0x70] sm:$0xff] %v2785
    %2794 = vst [vmem:[#allocation2 + $0x80] sm:$0xff] %v2786
    %v2795 = vld [vmem:[#allocation2] sm:$0xff]
    %v2796 = vld [vmem:[#allocation2 + $0x10] sm:$0xff]
    %v2797 = vld [vmem:[#allocation2 + $0x20] sm:$0xff]
    %v2798 = vld [vmem:[#allocation2 + $0x30] sm:$0xff]
    %v2799 = vld [vmem:[#allocation2 + $0x40] sm:$0xff]
    %v2800 = vld [vmem:[#allocation2 + $0x50] sm:$0xff]
    %v2801 = vld [vmem:[#allocation2 + $0x60] sm:$0xff]
    %v2802 = vld [vmem:[#allocation2 + $0x70] sm:$0xff]
    %v2803 = vld [vmem:[#allocation2 + $0x80] sm:$0xff]
    %v2804 = vld [vmem:[#allocation2 + $0x90] sm:$0xff]
    %v2805 = vpack.c.bf16 %v2796, %v2795
    %v2806 = vpack.c.bf16 %v2797, %v2796
    %v2807 = vpack.c.bf16 %v2798, %v2797
    %v2808 = vpack.c.bf16 %v2799, %v2798
    %v2809 = vpack.c.bf16 %v2800, %v2799
    %v2810 = vpack.c.bf16 %v2801, %v2800
    %v2811 = vpack.c.bf16 %v2802, %v2801
    %v2812 = vpack.c.bf16 %v2803, %v2802
    %v2813 = vpack.c.bf16 %v2804, %v2803
    %v2814 = vld [vmem:[#allocation18] sm:$0xff]
    %v2815 = vld [vmem:[#allocation18 + $0x8] sm:$0xff]
    %v2816 = vld [vmem:[#allocation18 + $0x10] sm:$0xff]
    %v2817 = vld [vmem:[#allocation18 + $0x18] sm:$0xff]
    %v2818 = vld [vmem:[#allocation18 + $0x20] sm:$0xff]
    %v2819 = vld [vmem:[#allocation18 + $0x28] sm:$0xff]
    %v2820 = vld [vmem:[#allocation18 + $0x30] sm:$0xff]
    %v2821 = vld [vmem:[#allocation18 + $0x38] sm:$0xff]
    %v2822 = vld [vmem:[#allocation18 + $0x40] sm:$0xff]
    %v2823 = vld [vmem:[#allocation18 + $0x48] sm:$0xff]
    %v2824 = vld [vmem:[#allocation18 + $0x50] sm:$0xff]
    %v2825 = vld [vmem:[#allocation18 + $0x58] sm:$0xff]
    %v2826 = vld [vmem:[#allocation18 + $0x60] sm:$0xff]
    %v2827 = vld [vmem:[#allocation18 + $0x68] sm:$0xff]
    %v2828 = vld [vmem:[#allocation18 + $0x70] sm:$0xff]
    %v2829 = vld [vmem:[#allocation18 + $0x78] sm:$0xff]
    %v2830 = vld [vmem:[#allocation18 + $0x80] sm:$0xff]
    %v2831 = vld [vmem:[#allocation18 + $0x88] sm:$0xff]
    %v2832 = vld [vmem:[#allocation18 + $0x90] sm:$0xff]
    %v2833 = vld [vmem:[#allocation18 + $0x98] sm:$0xff]
    %v2834 = vld [vmem:[#allocation18 + $0xa0] sm:$0xff]
    %v2835 = vld [vmem:[#allocation18 + $0xa8] sm:$0xff]
    %v2836 = vld [vmem:[#allocation18 + $0xb0] sm:$0xff]
    %v2837 = vld [vmem:[#allocation18 + $0xb8] sm:$0xff]
    %v2838 = vld [vmem:[#allocation18 + $0xc0] sm:$0xff]
    %v2839 = vld [vmem:[#allocation18 + $0xc8] sm:$0xff]
    %v2840 = vld [vmem:[#allocation18 + $0xd0] sm:$0xff]
    %v2841 = vld [vmem:[#allocation18 + $0xd8] sm:$0xff]
    %v2842 = vld [vmem:[#allocation18 + $0xe0] sm:$0xff]
    %v2843 = vld [vmem:[#allocation18 + $0xe8] sm:$0xff]
    %v2844 = vld [vmem:[#allocation18 + $0xf0] sm:$0xff]
    %v2845 = vld [vmem:[#allocation18 + $0xf8] sm:$0xff]
    %v2846 = vld [vmem:[#allocation18 + $0x100] sm:$0xff]
    %v2847 = vld [vmem:[#allocation18 + $0x108] sm:$0xff]
    %v2848 = vld [vmem:[#allocation18 + $0x110] sm:$0xff]
    %v2849 = vld [vmem:[#allocation18 + $0x118] sm:$0xff]
    %v2850 = vld [vmem:[#allocation18 + $0x120] sm:$0xff]
    %v2851 = vld [vmem:[#allocation18 + $0x128] sm:$0xff]
    %v2852 = vld [vmem:[#allocation18 + $0x130] sm:$0xff]
    %v2853 = vld [vmem:[#allocation18 + $0x138] sm:$0xff]
    %v2854 = vld [vmem:[#allocation18 + $0x140] sm:$0xff]
    %v2855 = vld [vmem:[#allocation18 + $0x148] sm:$0xff]
    %v2856 = vld [vmem:[#allocation18 + $0x150] sm:$0xff]
    %v2857 = vld [vmem:[#allocation18 + $0x158] sm:$0xff]
    %v2858 = vld [vmem:[#allocation18 + $0x160] sm:$0xff]
    %v2859 = vld [vmem:[#allocation18 + $0x168] sm:$0xff]
    %v2860 = vld [vmem:[#allocation18 + $0x170] sm:$0xff]
    %v2861 = vld [vmem:[#allocation18 + $0x178] sm:$0xff]
    %v2862 = vld [vmem:[#allocation20] sm:$0x3]
    %v2864 = vlaneseq
    %v2865 = vshrl.u32 %v2864, 7
    %v2866 = vsub.s32 0, %v2865
    %v2867 = vrot.slane %v2862, %v2866
    %v2868 = vlaneseq
    %v2869 = vshrl.u32 %v2868, 7
    %v2870 = vsub.s32 1, %v2869
    %v2871 = vrot.slane %v2862, %v2870
    %v2922 = vunpack.c.l.b16 %v2814
    %v2923 = vunpack.c.h.b16 %v2814
    %v2924 = vunpack.c.l.b16 %v2815
    %v2925 = vunpack.c.h.b16 %v2815
    %v2926 = vunpack.c.l.b16 %v2816
    %v2927 = vunpack.c.h.b16 %v2816
    %v2928 = vunpack.c.l.b16 %v2817
    %v2929 = vunpack.c.h.b16 %v2817
    %v2930 = vunpack.c.l.b16 %v2818
    %v2931 = vunpack.c.h.b16 %v2818
    %v2932 = vunpack.c.l.b16 %v2819
    %v2933 = vunpack.c.h.b16 %v2819
    %v2934 = vunpack.c.l.b16 %v2820
    %v2935 = vunpack.c.h.b16 %v2820
    %v2936 = vunpack.c.l.b16 %v2821
    %v2937 = vunpack.c.h.b16 %v2821
    %v2938 = vunpack.c.l.b16 %v2822
    %v2939 = vunpack.c.h.b16 %v2822
    %v2940 = vunpack.c.l.b16 %v2823
    %v2941 = vunpack.c.h.b16 %v2823
    %v2942 = vunpack.c.l.b16 %v2824
    %v2943 = vunpack.c.h.b16 %v2824
    %v2944 = vunpack.c.l.b16 %v2825
    %v2945 = vunpack.c.h.b16 %v2825
    %v2946 = vunpack.c.l.b16 %v2826
    %v2947 = vunpack.c.h.b16 %v2826
    %v2948 = vunpack.c.l.b16 %v2827
    %v2949 = vunpack.c.h.b16 %v2827
    %v2950 = vunpack.c.l.b16 %v2828
    %v2951 = vunpack.c.h.b16 %v2828
    %v2952 = vunpack.c.l.b16 %v2829
    %v2953 = vunpack.c.h.b16 %v2829
    %v2954 = vunpack.c.l.b16 %v2830
    %v2955 = vunpack.c.h.b16 %v2830
    %v2956 = vunpack.c.l.b16 %v2831
    %v2957 = vunpack.c.h.b16 %v2831
    %v2958 = vunpack.c.l.b16 %v2832
    %v2959 = vunpack.c.h.b16 %v2832
    %v2960 = vunpack.c.l.b16 %v2833
    %v2961 = vunpack.c.h.b16 %v2833
    %v2962 = vunpack.c.l.b16 %v2834
    %v2963 = vunpack.c.h.b16 %v2834
    %v2964 = vunpack.c.l.b16 %v2835
    %v2965 = vunpack.c.h.b16 %v2835
    %v2966 = vunpack.c.l.b16 %v2836
    %v2967 = vunpack.c.h.b16 %v2836
    %v2968 = vunpack.c.l.b16 %v2837
    %v2969 = vunpack.c.h.b16 %v2837
    %v2970 = vunpack.c.l.b16 %v2838
    %v2971 = vunpack.c.h.b16 %v2838
    %v2972 = vunpack.c.l.b16 %v2839
    %v2973 = vunpack.c.h.b16 %v2839
    %v2974 = vunpack.c.l.b16 %v2840
    %v2975 = vunpack.c.h.b16 %v2840
    %v2976 = vunpack.c.l.b16 %v2841
    %v2977 = vunpack.c.h.b16 %v2841
    %v2978 = vunpack.c.l.b16 %v2842
    %v2979 = vunpack.c.h.b16 %v2842
    %v2980 = vunpack.c.l.b16 %v2843
    %v2981 = vunpack.c.h.b16 %v2843
    %v2982 = vunpack.c.l.b16 %v2844
    %v2983 = vunpack.c.h.b16 %v2844
    %v2984 = vunpack.c.l.b16 %v2845
    %v2985 = vunpack.c.h.b16 %v2845
    %v2986 = vunpack.c.l.b16 %v2846
    %v2987 = vunpack.c.h.b16 %v2846
    %v2988 = vunpack.c.l.b16 %v2847
    %v2989 = vunpack.c.h.b16 %v2847
    %v2990 = vunpack.c.l.b16 %v2848
    %v2991 = vunpack.c.h.b16 %v2848
    %v2992 = vunpack.c.l.b16 %v2849
    %v2993 = vunpack.c.h.b16 %v2849
    %v2994 = vunpack.c.l.b16 %v2850
    %v2995 = vunpack.c.h.b16 %v2850
    %v2996 = vunpack.c.l.b16 %v2851
    %v2997 = vunpack.c.h.b16 %v2851
    %v2998 = vunpack.c.l.b16 %v2852
    %v2999 = vunpack.c.h.b16 %v2852
    %v3000 = vunpack.c.l.b16 %v2853
    %v3001 = vunpack.c.h.b16 %v2853
    %v3002 = vunpack.c.l.b16 %v2854
    %v3003 = vunpack.c.h.b16 %v2854
    %v3004 = vunpack.c.l.b16 %v2855
    %v3005 = vunpack.c.h.b16 %v2855
    %v3006 = vunpack.c.l.b16 %v2856
    %v3007 = vunpack.c.h.b16 %v2856
    %v3008 = vunpack.c.l.b16 %v2857
    %v3009 = vunpack.c.h.b16 %v2857
    %v3010 = vunpack.c.l.b16 %v2858
    %v3011 = vunpack.c.h.b16 %v2858
    %v3012 = vunpack.c.l.b16 %v2859
    %v3013 = vunpack.c.h.b16 %v2859
    %v3014 = vunpack.c.l.b16 %v2860
    %v3015 = vunpack.c.h.b16 %v2860
    %v3016 = vunpack.c.l.b16 %v2861
    %v3017 = vunpack.c.h.b16 %v2861
    %v3018 = vpack.c.b16 %v2924, %v2922
    %v3019 = vpack.c.b16 %v2925, %v2923
    %v3020 = vpack.c.b16 %v2928, %v2926
    %v3021 = vpack.c.b16 %v2929, %v2927
    %v3022 = vpack.c.b16 %v2932, %v2930
    %v3023 = vpack.c.b16 %v2933, %v2931
    %v3024 = vpack.c.b16 %v2936, %v2934
    %v3025 = vpack.c.b16 %v2937, %v2935
    %v3026 = vpack.c.b16 %v2940, %v2938
    %v3027 = vpack.c.b16 %v2941, %v2939
    %v3028 = vpack.c.b16 %v2944, %v2942
    %v3029 = vpack.c.b16 %v2945, %v2943
    %v3030 = vpack.c.b16 %v2948, %v2946
    %v3031 = vpack.c.b16 %v2949, %v2947
    %v3032 = vpack.c.b16 %v2952, %v2950
    %v3033 = vpack.c.b16 %v2953, %v2951
    %v3034 = vpack.c.b16 %v2956, %v2954
    %v3035 = vpack.c.b16 %v2957, %v2955
    %v3036 = vpack.c.b16 %v2960, %v2958
    %v3037 = vpack.c.b16 %v2961, %v2959
    %v3038 = vpack.c.b16 %v2964, %v2962
    %v3039 = vpack.c.b16 %v2965, %v2963
    %v3040 = vpack.c.b16 %v2968, %v2966
    %v3041 = vpack.c.b16 %v2969, %v2967
    %v3042 = vpack.c.b16 %v2972, %v2970
    %v3043 = vpack.c.b16 %v2973, %v2971
    %v3044 = vpack.c.b16 %v2976, %v2974
    %v3045 = vpack.c.b16 %v2977, %v2975
    %v3046 = vpack.c.b16 %v2980, %v2978
    %v3047 = vpack.c.b16 %v2981, %v2979
    %v3048 = vpack.c.b16 %v2984, %v2982
    %v3049 = vpack.c.b16 %v2985, %v2983
    %v3050 = vpack.c.b16 %v2988, %v2986
    %v3051 = vpack.c.b16 %v2989, %v2987
    %v3052 = vpack.c.b16 %v2992, %v2990
    %v3053 = vpack.c.b16 %v2993, %v2991
    %v3054 = vpack.c.b16 %v2996, %v2994
    %v3055 = vpack.c.b16 %v2997, %v2995
    %v3056 = vpack.c.b16 %v3000, %v2998
    %v3057 = vpack.c.b16 %v3001, %v2999
    %v3058 = vpack.c.b16 %v3004, %v3002
    %v3059 = vpack.c.b16 %v3005, %v3003
    %v3060 = vpack.c.b16 %v3008, %v3006
    %v3061 = vpack.c.b16 %v3009, %v3007
    %v3062 = vpack.c.b16 %v3012, %v3010
    %v3063 = vpack.c.b16 %v3013, %v3011
    %v3064 = vpack.c.b16 %v3016, %v3014
    %v3065 = vpack.c.b16 %v3017, %v3015
    %3114 = vmatprep.subr.bf16.mxu0 %v3019
    %3115 = vmatpush1.bf16.msra.mxu0 %v3018
    %3116 = vmatprep.subr.bf16.mxu0 %v3021
    %3117 = vmatpush1.bf16.msra.mxu0 %v3020
    %3118 = vmatprep.subr.bf16.mxu0 %v3023
    %3119 = vmatpush1.bf16.msra.mxu0 %v3022
    %3120 = vmatprep.subr.bf16.mxu0 %v3025
    %3121 = vmatpush1.bf16.msra.mxu0 %v3024
    %3122 = vmatprep.subr.bf16.mxu0 %v3027
    %3123 = vmatpush1.bf16.msra.mxu0 %v3026
    %3124 = vmatprep.subr.bf16.mxu0 %v3029
    %3125 = vmatpush1.bf16.msra.mxu0 %v3028
    %3126 = vmatprep.subr.bf16.mxu0 %v3031
    %3127 = vmatpush1.bf16.msra.mxu0 %v3030
    %3128 = vmatprep.subr.bf16.mxu0 %v3033
    %3129 = vmatpush1.bf16.msra.mxu0 %v3032
    %3130 = vmatprep.subr.bf16.mxu0 %v3035
    %3131 = vmatpush1.bf16.msra.mxu0 %v3034
    %3132 = vmatprep.subr.bf16.mxu0 %v3037
    %3133 = vmatpush1.bf16.msra.mxu0 %v3036
    %3134 = vmatprep.subr.bf16.mxu0 %v3039
    %3135 = vmatpush1.bf16.msra.mxu0 %v3038
    %3136 = vmatprep.subr.bf16.mxu0 %v3041
    %3137 = vmatpush1.bf16.msra.mxu0 %v3040
    %3138 = vmatprep.subr.bf16.mxu0 %v3043
    %3139 = vmatpush1.bf16.msra.mxu0 %v3042
    %3140 = vmatprep.subr.bf16.mxu0 %v3045
    %3141 = vmatpush1.bf16.msra.mxu0 %v3044
    %3142 = vmatprep.subr.bf16.mxu0 %v3047
    %3143 = vmatpush1.bf16.msra.mxu0 %v3046
    %3144 = vmatprep.subr.bf16.mxu0 %v3049
    %3145 = vmatpush1.bf16.msra.mxu0 %v3048
    %3146 = vmatprep.mubr.bf16.mxu0 %v2806
    %3147 = vmatmul.mubr.bf16.gmra.mrb[0].mxu0 %v2805
    %v3148 = vpop.f32.mrb[0].mxu0
    %v3149 = vadd.f32 %v2867, %v3148
    %v3150 = vpop.f32.mrb[0].mxu0
    %v3151 = vadd.f32 %v2871, %v3150
    %v3152 = vpop.f32.mrb[0].mxu0
    %v3153 = vadd.f32 %v2867, %v3152
    %v3154 = vpop.f32.mrb[0].mxu0
    %v3155 = vadd.f32 %v2871, %v3154
    %3156 = vmatprep.mubr.bf16.mxu0 %v2808
    %3157 = vmatmul.mubr.bf16.gmra.mrb[0].mxu0 %v2807
    %v3158 = vpop.f32.mrb[0].mxu0
    %v3159 = vadd.f32 %v2867, %v3158
    %v3160 = vpop.f32.mrb[0].mxu0
    %v3161 = vadd.f32 %v2871, %v3160
    %v3162 = vpop.f32.mrb[0].mxu0
    %v3163 = vadd.f32 %v2867, %v3162
    %v3164 = vpop.f32.mrb[0].mxu0
    %v3165 = vadd.f32 %v2871, %v3164
    %3166 = vmatprep.mubr.bf16.mxu0 %v2810
    %3167 = vmatmul.mubr.bf16.gmra.mrb[0].mxu0 %v2809
    %v3168 = vpop.f32.mrb[0].mxu0
    %v3169 = vadd.f32 %v2867, %v3168
    %v3170 = vpop.f32.mrb[0].mxu0
    %v3171 = vadd.f32 %v2871, %v3170
    %v3172 = vpop.f32.mrb[0].mxu0
    %v3173 = vadd.f32 %v2867, %v3172
    %v3174 = vpop.f32.mrb[0].mxu0
    %v3175 = vadd.f32 %v2871, %v3174
    %3176 = vmatprep.mubr.bf16.mxu0 %v2812
    %3177 = vmatmul.mubr.bf16.gmra.mrb[0].mxu0 %v2811
    %v3178 = vpop.f32.mrb[0].mxu0
    %v3179 = vadd.f32 %v2867, %v3178
    %v3180 = vpop.f32.mrb[0].mxu0
    %v3181 = vadd.f32 %v2871, %v3180
    %v3182 = vpop.f32.mrb[0].mxu0
    %v3183 = vadd.f32 %v2867, %v3182
    %v3184 = vpop.f32.mrb[0].mxu0
    %v3185 = vadd.f32 %v2871, %v3184
    %3186 = vdwg.mxu0
    %3187 = vmatprep.subr.bf16.mxu0 %v3051
    %3188 = vmatpush1.bf16.msra.mxu0 %v3050
    %3189 = vmatprep.subr.bf16.mxu0 %v3053
    %3190 = vmatpush1.bf16.msra.mxu0 %v3052
    %3191 = vmatprep.subr.bf16.mxu0 %v3055
    %3192 = vmatpush1.bf16.msra.mxu0 %v3054
    %3193 = vmatprep.subr.bf16.mxu0 %v3057
    %3194 = vmatpush1.bf16.msra.mxu0 %v3056
    %3195 = vmatprep.subr.bf16.mxu0 %v3059
    %3196 = vmatpush1.bf16.msra.mxu0 %v3058
    %3197 = vmatprep.subr.bf16.mxu0 %v3061
    %3198 = vmatpush1.bf16.msra.mxu0 %v3060
    %3199 = vmatprep.subr.bf16.mxu0 %v3063
    %3200 = vmatpush1.bf16.msra.mxu0 %v3062
    %3201 = vmatprep.subr.bf16.mxu0 %v3065
    %3202 = vmatpush1.bf16.msra.mxu0 %v3064
    %3203 = vmatprep.subr.bf16.mxu0 0
    %3204 = vmatpush1.bf16.msra.mxu0 0
    %3205 = vmatprep.subr.bf16.mxu0 0
    %3206 = vmatpush1.bf16.msra.mxu0 0
    %3207 = vmatprep.subr.bf16.mxu0 0
    %3208 = vmatpush1.bf16.msra.mxu0 0
    %3209 = vmatprep.subr.bf16.mxu0 0
    %3210 = vmatpush1.bf16.msra.mxu0 0
    %3211 = vmatprep.subr.bf16.mxu0 0
    %3212 = vmatpush1.bf16.msra.mxu0 0
    %3213 = vmatprep.subr.bf16.mxu0 0
    %3214 = vmatpush1.bf16.msra.mxu0 0
    %3215 = vmatprep.subr.bf16.mxu0 0
    %3216 = vmatpush1.bf16.msra.mxu0 0
    %3217 = vmatprep.subr.bf16.mxu0 0
    %3218 = vmatpush1.bf16.msra.mxu0 0
    %3219 = vmatprep.mubr.bf16.mxu0 0
    %3220 = vmatmul.mubr.bf16.gmra.mrb[0].mxu0 %v2807
    %v3221 = vpop.f32.mrb[0].mxu0
    %v3222 = vadd.f32 %v3149, %v3221
    %v3223 = vpop.f32.mrb[0].mxu0
    %v3224 = vadd.f32 %v3151, %v3223
    %v3225 = vpop.f32.mrb[0].mxu0
    %v3226 = vadd.f32 %v3153, %v3225
    %v3227 = vpop.f32.mrb[0].mxu0
    %v3228 = vadd.f32 %v3155, %v3227
    %3229 = vmatprep.mubr.bf16.mxu0 0
    %3230 = vmatmul.mubr.bf16.gmra.mrb[0].mxu0 %v2809
    %v3231 = vpop.f32.mrb[0].mxu0
    %v3232 = vadd.f32 %v3159, %v3231
    %v3233 = vpop.f32.mrb[0].mxu0
    %v3234 = vadd.f32 %v3161, %v3233
    %v3235 = vpop.f32.mrb[0].mxu0
    %v3236 = vadd.f32 %v3163, %v3235
    %v3237 = vpop.f32.mrb[0].mxu0
    %v3238 = vadd.f32 %v3165, %v3237
    %3239 = vmatprep.mubr.bf16.mxu0 0
    %3240 = vmatmul.mubr.bf16.gmra.mrb[0].mxu0 %v2811
    %v3241 = vpop.f32.mrb[0].mxu0
    %v3242 = vadd.f32 %v3169, %v3241
    %v3243 = vpop.f32.mrb[0].mxu0
    %v3244 = vadd.f32 %v3171, %v3243
    %v3245 = vpop.f32.mrb[0].mxu0
    %v3246 = vadd.f32 %v3173, %v3245
    %v3247 = vpop.f32.mrb[0].mxu0
    %v3248 = vadd.f32 %v3175, %v3247
    %3249 = vmatprep.mubr.bf16.mxu0 0
    %3250 = vmatmul.mubr.bf16.gmra.mrb[0].mxu0 %v2813
    %v3251 = vpop.f32.mrb[0].mxu0
    %v3252 = vadd.f32 %v3179, %v3251
    %v3253 = vpop.f32.mrb[0].mxu0
    %v3254 = vadd.f32 %v3181, %v3253
    %v3255 = vpop.f32.mrb[0].mxu0
    %v3256 = vadd.f32 %v3183, %v3255
    %v3257 = vpop.f32.mrb[0].mxu0
    %v3258 = vadd.f32 %v3185, %v3257
    %3259 = vdwg.mxu0
    %v3260 = vmax.f32 %v3222, 0.0
    %v3261 = vmax.f32 %v3224, 0.0
    %v3262 = vmax.f32 %v3226, 0.0
    %v3263 = vmax.f32 %v3228, 0.0
    %v3264 = vmax.f32 %v3232, 0.0
    %v3265 = vmax.f32 %v3234, 0.0
    %v3266 = vmax.f32 %v3236, 0.0
    %v3267 = vmax.f32 %v3238, 0.0
    %v3268 = vmax.f32 %v3242, 0.0
    %v3269 = vmax.f32 %v3244, 0.0
    %v3270 = vmax.f32 %v3246, 0.0
    %v3271 = vmax.f32 %v3248, 0.0
    %v3272 = vmax.f32 %v3252, 0.0
    %v3273 = vmax.f32 %v3254, 0.0
    %v3274 = vmax.f32 %v3256, 0.0
    %v3275 = vmax.f32 %v3258, 0.0
    %3276 = vst [vmem:[#allocation2 + $0x10] sm:$0xff] %v3260
    %3277 = vst [vmem:[#allocation2 + $0x18] sm:$0xff] %v3261
    %3278 = vst [vmem:[#allocation2 + $0x20] sm:$0xff] %v3262
    %3279 = vst [vmem:[#allocation2 + $0x28] sm:$0xff] %v3263
    %3280 = vst [vmem:[#allocation2 + $0x30] sm:$0xff] %v3264
    %3281 = vst [vmem:[#allocation2 + $0x38] sm:$0xff] %v3265
    %3282 = vst [vmem:[#allocation2 + $0x40] sm:$0xff] %v3266
    %3283 = vst [vmem:[#allocation2 + $0x48] sm:$0xff] %v3267
    %3284 = vst [vmem:[#allocation2 + $0x50] sm:$0xff] %v3268
    %3285 = vst [vmem:[#allocation2 + $0x58] sm:$0xff] %v3269
    %3286 = vst [vmem:[#allocation2 + $0x60] sm:$0xff] %v3270
    %3287 = vst [vmem:[#allocation2 + $0x68] sm:$0xff] %v3271
    %3288 = vst [vmem:[#allocation2 + $0x70] sm:$0xff] %v3272
    %3289 = vst [vmem:[#allocation2 + $0x78] sm:$0xff] %v3273
    %3290 = vst [vmem:[#allocation2 + $0x80] sm:$0xff] %v3274
    %3291 = vst [vmem:[#allocation2 + $0x88] sm:$0xff] %v3275
    %v3292 = vld [vmem:[#allocation2] sm:$0xff]
    %v3293 = vld [vmem:[#allocation2 + $0x8] sm:$0xff]
    %v3294 = vld [vmem:[#allocation2 + $0x10] sm:$0xff]
    %v3295 = vld [vmem:[#allocation2 + $0x18] sm:$0xff]
    %v3296 = vld [vmem:[#allocation2 + $0x20] sm:$0xff]
    %v3297 = vld [vmem:[#allocation2 + $0x28] sm:$0xff]
    %v3298 = vld [vmem:[#allocation2 + $0x30] sm:$0xff]
    %v3299 = vld [vmem:[#allocation2 + $0x38] sm:$0xff]
    %v3300 = vld [vmem:[#allocation2 + $0x40] sm:$0xff]
    %v3301 = vld [vmem:[#allocation2 + $0x48] sm:$0xff]
    %v3302 = vld [vmem:[#allocation2 + $0x50] sm:$0xff]
    %v3303 = vld [vmem:[#allocation2 + $0x58] sm:$0xff]
    %v3304 = vld [vmem:[#allocation2 + $0x60] sm:$0xff]
    %v3305 = vld [vmem:[#allocation2 + $0x68] sm:$0xff]
    %v3306 = vld [vmem:[#allocation2 + $0x70] sm:$0xff]
    %v3307 = vld [vmem:[#allocation2 + $0x78] sm:$0xff]
    %v3308 = vld [vmem:[#allocation2 + $0x80] sm:$0xff]
    %v3309 = vld [vmem:[#allocation2 + $0x88] sm:$0xff]
    %v3310 = vld [vmem:[#allocation2 + $0x20] sm:$0xff]
    %v3311 = vld [vmem:[#allocation2 + $0x28] sm:$0xff]
    %v3312 = vld [vmem:[#allocation2 + $0x30] sm:$0xff]
    %v3313 = vld [vmem:[#allocation2 + $0x38] sm:$0xff]
    %v3314 = vld [vmem:[#allocation2 + $0x40] sm:$0xff]
    %v3315 = vld [vmem:[#allocation2 + $0x48] sm:$0xff]
    %v3316 = vld [vmem:[#allocation2 + $0x50] sm:$0xff]
    %v3317 = vld [vmem:[#allocation2 + $0x58] sm:$0xff]
    %v3318 = vld [vmem:[#allocation2 + $0x60] sm:$0xff]
    %v3319 = vld [vmem:[#allocation2 + $0x68] sm:$0xff]
    %v3320 = vld [vmem:[#allocation2 + $0x70] sm:$0xff]
    %v3321 = vld [vmem:[#allocation2 + $0x78] sm:$0xff]
    %v3322 = vld [vmem:[#allocation2 + $0x80] sm:$0xff]
    %v3323 = vld [vmem:[#allocation2 + $0x88] sm:$0xff]
    %v3324 = vld [vmem:[#allocation2 + $0x90] sm:$0xff]
    %v3325 = vld [vmem:[#allocation2 + $0x98] sm:$0xff]
    %v3326 = vpack.c.bf16 %v3294, %v3292
    %v3327 = vpack.c.bf16 %v3295, %v3293
    %v3328 = vpack.c.bf16 %v3296, %v3294
    %v3329 = vpack.c.bf16 %v3297, %v3295
    %v3330 = vpack.c.bf16 %v3312, %v3310
    %v3331 = vpack.c.bf16 %v3313, %v3311
    %v3332 = vpack.c.bf16 %v3298, %v3296
    %v3333 = vpack.c.bf16 %v3299, %v3297
    %v3334 = vpack.c.bf16 %v3300, %v3298
    %v3335 = vpack.c.bf16 %v3301, %v3299
    %v3336 = vpack.c.bf16 %v3316, %v3314
    %v3337 = vpack.c.bf16 %v3317, %v3315
    %v3338 = vpack.c.bf16 %v3302, %v3300
    %v3339 = vpack.c.bf16 %v3303, %v3301
    %v3340 = vpack.c.bf16 %v3304, %v3302
    %v3341 = vpack.c.bf16 %v3305, %v3303
    %v3342 = vpack.c.bf16 %v3320, %v3318
    %v3343 = vpack.c.bf16 %v3321, %v3319
    %v3344 = vpack.c.bf16 %v3306, %v3304
    %v3345 = vpack.c.bf16 %v3307, %v3305
    %v3346 = vpack.c.bf16 %v3308, %v3306
    %v3347 = vpack.c.bf16 %v3309, %v3307
    %v3348 = vpack.c.bf16 %v3324, %v3322
    %v3349 = vpack.c.bf16 %v3325, %v3323
    %v3350 = vld [vmem:[#allocation21] sm:$0xff]
    %v3351 = vld [vmem:[#allocation21 + $0x8] sm:$0xff]
    %v3352 = vld [vmem:[#allocation21 + $0x10] sm:$0xff]
    %v3353 = vld [vmem:[#allocation21 + $0x18] sm:$0xff]
    %v3354 = vld [vmem:[#allocation21 + $0x20] sm:$0xff]
    %v3355 = vld [vmem:[#allocation21 + $0x28] sm:$0xff]
    %v3356 = vld [vmem:[#allocation21 + $0x30] sm:$0xff]
    %v3357 = vld [vmem:[#allocation21 + $0x38] sm:$0xff]
    %v3358 = vld [vmem:[#allocation21 + $0x40] sm:$0xff]
    %v3359 = vld [vmem:[#allocation21 + $0x48] sm:$0xff]
    %v3360 = vld [vmem:[#allocation21 + $0x50] sm:$0xff]
    %v3361 = vld [vmem:[#allocation21 + $0x58] sm:$0xff]
    %v3362 = vld [vmem:[#allocation21 + $0x60] sm:$0xff]
    %v3363 = vld [vmem:[#allocation21 + $0x68] sm:$0xff]
    %v3364 = vld [vmem:[#allocation21 + $0x70] sm:$0xff]
    %v3365 = vld [vmem:[#allocation21 + $0x78] sm:$0xff]
    %v3366 = vld [vmem:[#allocation21 + $0x80] sm:$0xff]
    %v3367 = vld [vmem:[#allocation21 + $0x88] sm:$0xff]
    %v3368 = vld [vmem:[#allocation21 + $0x90] sm:$0xff]
    %v3369 = vld [vmem:[#allocation21 + $0x98] sm:$0xff]
    %v3370 = vld [vmem:[#allocation21 + $0xa0] sm:$0xff]
    %v3371 = vld [vmem:[#allocation21 + $0xa8] sm:$0xff]
    %v3372 = vld [vmem:[#allocation21 + $0xb0] sm:$0xff]
    %v3373 = vld [vmem:[#allocation21 + $0xb8] sm:$0xff]
    %v3374 = vld [vmem:[#allocation21 + $0xc0] sm:$0xff]
    %v3375 = vld [vmem:[#allocation21 + $0xc8] sm:$0xff]
    %v3376 = vld [vmem:[#allocation21 + $0xd0] sm:$0xff]
    %v3377 = vld [vmem:[#allocation21 + $0xd8] sm:$0xff]
    %v3378 = vld [vmem:[#allocation21 + $0xe0] sm:$0xff]
    %v3379 = vld [vmem:[#allocation21 + $0xe8] sm:$0xff]
    %v3380 = vld [vmem:[#allocation21 + $0xf0] sm:$0xff]
    %v3381 = vld [vmem:[#allocation21 + $0xf8] sm:$0xff]
    %v3382 = vld [vmem:[#allocation21 + $0x100] sm:$0xff]
    %v3383 = vld [vmem:[#allocation21 + $0x108] sm:$0xff]
    %v3384 = vld [vmem:[#allocation21 + $0x110] sm:$0xff]
    %v3385 = vld [vmem:[#allocation21 + $0x118] sm:$0xff]
    %v3386 = vld [vmem:[#allocation21 + $0x120] sm:$0xff]
    %v3387 = vld [vmem:[#allocation21 + $0x128] sm:$0xff]
    %v3388 = vld [vmem:[#allocation21 + $0x130] sm:$0xff]
    %v3389 = vld [vmem:[#allocation21 + $0x138] sm:$0xff]
    %v3390 = vld [vmem:[#allocation21 + $0x140] sm:$0xff]
    %v3391 = vld [vmem:[#allocation21 + $0x148] sm:$0xff]
    %v3392 = vld [vmem:[#allocation21 + $0x150] sm:$0xff]
    %v3393 = vld [vmem:[#allocation21 + $0x158] sm:$0xff]
    %v3394 = vld [vmem:[#allocation21 + $0x160] sm:$0xff]
    %v3395 = vld [vmem:[#allocation21 + $0x168] sm:$0xff]
    %v3396 = vld [vmem:[#allocation21 + $0x170] sm:$0xff]
    %v3397 = vld [vmem:[#allocation21 + $0x178] sm:$0xff]
    %v3398 = vld [vmem:[#allocation21 + $0x180] sm:$0xff]
    %v3399 = vld [vmem:[#allocation21 + $0x188] sm:$0xff]
    %v3400 = vld [vmem:[#allocation21 + $0x190] sm:$0xff]
    %v3401 = vld [vmem:[#allocation21 + $0x198] sm:$0xff]
    %v3402 = vld [vmem:[#allocation21 + $0x1a0] sm:$0xff]
    %v3403 = vld [vmem:[#allocation21 + $0x1a8] sm:$0xff]
    %v3404 = vld [vmem:[#allocation21 + $0x1b0] sm:$0xff]
    %v3405 = vld [vmem:[#allocation21 + $0x1b8] sm:$0xff]
    %v3406 = vld [vmem:[#allocation21 + $0x1c0] sm:$0xff]
    %v3407 = vld [vmem:[#allocation21 + $0x1c8] sm:$0xff]
    %v3408 = vld [vmem:[#allocation21 + $0x1d0] sm:$0xff]
    %v3409 = vld [vmem:[#allocation21 + $0x1d8] sm:$0xff]
    %v3410 = vld [vmem:[#allocation21 + $0x1e0] sm:$0xff]
    %v3411 = vld [vmem:[#allocation21 + $0x1e8] sm:$0xff]
    %v3412 = vld [vmem:[#allocation21 + $0x1f0] sm:$0xff]
    %v3413 = vld [vmem:[#allocation21 + $0x1f8] sm:$0xff]
    %v3414 = vld [vmem:[#allocation21 + $0x200] sm:$0xff]
    %v3415 = vld [vmem:[#allocation21 + $0x208] sm:$0xff]
    %v3416 = vld [vmem:[#allocation21 + $0x210] sm:$0xff]
    %v3417 = vld [vmem:[#allocation21 + $0x218] sm:$0xff]
    %v3418 = vld [vmem:[#allocation21 + $0x220] sm:$0xff]
    %v3419 = vld [vmem:[#allocation21 + $0x228] sm:$0xff]
    %v3420 = vld [vmem:[#allocation21 + $0x230] sm:$0xff]
    %v3421 = vld [vmem:[#allocation21 + $0x238] sm:$0xff]
    %v3422 = vld [vmem:[#allocation21 + $0x240] sm:$0xff]
    %v3423 = vld [vmem:[#allocation21 + $0x248] sm:$0xff]
    %v3424 = vld [vmem:[#allocation21 + $0x250] sm:$0xff]
    %v3425 = vld [vmem:[#allocation21 + $0x258] sm:$0xff]
    %v3426 = vld [vmem:[#allocation21 + $0x260] sm:$0xff]
    %v3427 = vld [vmem:[#allocation21 + $0x268] sm:$0xff]
    %v3428 = vld [vmem:[#allocation21 + $0x270] sm:$0xff]
    %v3429 = vld [vmem:[#allocation21 + $0x278] sm:$0xff]
    %v3430 = vld [vmem:[#allocation21 + $0x280] sm:$0xff]
    %v3431 = vld [vmem:[#allocation21 + $0x288] sm:$0xff]
    %v3432 = vld [vmem:[#allocation21 + $0x290] sm:$0xff]
    %v3433 = vld [vmem:[#allocation21 + $0x298] sm:$0xff]
    %v3434 = vld [vmem:[#allocation21 + $0x2a0] sm:$0xff]
    %v3435 = vld [vmem:[#allocation21 + $0x2a8] sm:$0xff]
    %v3436 = vld [vmem:[#allocation21 + $0x2b0] sm:$0xff]
    %v3437 = vld [vmem:[#allocation21 + $0x2b8] sm:$0xff]
    %v3438 = vld [vmem:[#allocation21 + $0x2c0] sm:$0xff]
    %v3439 = vld [vmem:[#allocation21 + $0x2c8] sm:$0xff]
    %v3440 = vld [vmem:[#allocation21 + $0x2d0] sm:$0xff]
    %v3441 = vld [vmem:[#allocation21 + $0x2d8] sm:$0xff]
    %v3442 = vld [vmem:[#allocation21 + $0x2e0] sm:$0xff]
    %v3443 = vld [vmem:[#allocation21 + $0x2e8] sm:$0xff]
    %v3444 = vld [vmem:[#allocation21 + $0x2f0] sm:$0xff]
    %v3445 = vld [vmem:[#allocation21 + $0x2f8] sm:$0xff]
    %v3446 = vld [vmem:[#allocation23] sm:$0x3]
    %v3448 = vlaneseq
    %v3449 = vshrl.u32 %v3448, 7
    %v3450 = vsub.s32 0, %v3449
    %v3451 = vrot.slane %v3446, %v3450
    %v3452 = vlaneseq
    %v3453 = vshrl.u32 %v3452, 7
    %v3454 = vsub.s32 1, %v3453
    %v3455 = vrot.slane %v3446, %v3454
    %v3554 = vunpack.c.l.b16 %v3350
    %v3555 = vunpack.c.h.b16 %v3350
    %v3556 = vunpack.c.l.b16 %v3351
    %v3557 = vunpack.c.h.b16 %v3351
    %v3558 = vunpack.c.l.b16 %v3352
    %v3559 = vunpack.c.h.b16 %v3352
    %v3560 = vunpack.c.l.b16 %v3353
    %v3561 = vunpack.c.h.b16 %v3353
    %v3562 = vunpack.c.l.b16 %v3354
    %v3563 = vunpack.c.h.b16 %v3354
    %v3564 = vunpack.c.l.b16 %v3355
    %v3565 = vunpack.c.h.b16 %v3355
    %v3566 = vunpack.c.l.b16 %v3356
    %v3567 = vunpack.c.h.b16 %v3356
    %v3568 = vunpack.c.l.b16 %v3357
    %v3569 = vunpack.c.h.b16 %v3357
    %v3570 = vunpack.c.l.b16 %v3358
    %v3571 = vunpack.c.h.b16 %v3358
    %v3572 = vunpack.c.l.b16 %v3359
    %v3573 = vunpack.c.h.b16 %v3359
    %v3574 = vunpack.c.l.b16 %v3360
    %v3575 = vunpack.c.h.b16 %v3360
    %v3576 = vunpack.c.l.b16 %v3361
    %v3577 = vunpack.c.h.b16 %v3361
    %v3578 = vunpack.c.l.b16 %v3362
    %v3579 = vunpack.c.h.b16 %v3362
    %v3580 = vunpack.c.l.b16 %v3363
    %v3581 = vunpack.c.h.b16 %v3363
    %v3582 = vunpack.c.l.b16 %v3364
    %v3583 = vunpack.c.h.b16 %v3364
    %v3584 = vunpack.c.l.b16 %v3365
    %v3585 = vunpack.c.h.b16 %v3365
    %v3586 = vunpack.c.l.b16 %v3366
    %v3587 = vunpack.c.h.b16 %v3366
    %v3588 = vunpack.c.l.b16 %v3367
    %v3589 = vunpack.c.h.b16 %v3367
    %v3590 = vunpack.c.l.b16 %v3368
    %v3591 = vunpack.c.h.b16 %v3368
    %v3592 = vunpack.c.l.b16 %v3369
    %v3593 = vunpack.c.h.b16 %v3369
    %v3594 = vunpack.c.l.b16 %v3370
    %v3595 = vunpack.c.h.b16 %v3370
    %v3596 = vunpack.c.l.b16 %v3371
    %v3597 = vunpack.c.h.b16 %v3371
    %v3598 = vunpack.c.l.b16 %v3372
    %v3599 = vunpack.c.h.b16 %v3372
    %v3600 = vunpack.c.l.b16 %v3373
    %v3601 = vunpack.c.h.b16 %v3373
    %v3602 = vunpack.c.l.b16 %v3374
    %v3603 = vunpack.c.h.b16 %v3374
    %v3604 = vunpack.c.l.b16 %v3375
    %v3605 = vunpack.c.h.b16 %v3375
    %v3606 = vunpack.c.l.b16 %v3376
    %v3607 = vunpack.c.h.b16 %v3376
    %v3608 = vunpack.c.l.b16 %v3377
    %v3609 = vunpack.c.h.b16 %v3377
    %v3610 = vunpack.c.l.b16 %v3378
    %v3611 = vunpack.c.h.b16 %v3378
    %v3612 = vunpack.c.l.b16 %v3379
    %v3613 = vunpack.c.h.b16 %v3379
    %v3614 = vunpack.c.l.b16 %v3380
    %v3615 = vunpack.c.h.b16 %v3380
    %v3616 = vunpack.c.l.b16 %v3381
    %v3617 = vunpack.c.h.b16 %v3381
    %v3618 = vunpack.c.l.b16 %v3382
    %v3619 = vunpack.c.h.b16 %v3382
    %v3620 = vunpack.c.l.b16 %v3383
    %v3621 = vunpack.c.h.b16 %v3383
    %v3622 = vunpack.c.l.b16 %v3384
    %v3623 = vunpack.c.h.b16 %v3384
    %v3624 = vunpack.c.l.b16 %v3385
    %v3625 = vunpack.c.h.b16 %v3385
    %v3626 = vunpack.c.l.b16 %v3386
    %v3627 = vunpack.c.h.b16 %v3386
    %v3628 = vunpack.c.l.b16 %v3387
    %v3629 = vunpack.c.h.b16 %v3387
    %v3630 = vunpack.c.l.b16 %v3388
    %v3631 = vunpack.c.h.b16 %v3388
    %v3632 = vunpack.c.l.b16 %v3389
    %v3633 = vunpack.c.h.b16 %v3389
    %v3634 = vunpack.c.l.b16 %v3390
    %v3635 = vunpack.c.h.b16 %v3390
    %v3636 = vunpack.c.l.b16 %v3391
    %v3637 = vunpack.c.h.b16 %v3391
    %v3638 = vunpack.c.l.b16 %v3392
    %v3639 = vunpack.c.h.b16 %v3392
    %v3640 = vunpack.c.l.b16 %v3393
    %v3641 = vunpack.c.h.b16 %v3393
    %v3642 = vunpack.c.l.b16 %v3394
    %v3643 = vunpack.c.h.b16 %v3394
    %v3644 = vunpack.c.l.b16 %v3395
    %v3645 = vunpack.c.h.b16 %v3395
    %v3646 = vunpack.c.l.b16 %v3396
    %v3647 = vunpack.c.h.b16 %v3396
    %v3648 = vunpack.c.l.b16 %v3397
    %v3649 = vunpack.c.h.b16 %v3397
    %v3650 = vunpack.c.l.b16 %v3398
    %v3651 = vunpack.c.h.b16 %v3398
    %v3652 = vunpack.c.l.b16 %v3399
    %v3653 = vunpack.c.h.b16 %v3399
    %v3654 = vunpack.c.l.b16 %v3400
    %v3655 = vunpack.c.h.b16 %v3400
    %v3656 = vunpack.c.l.b16 %v3401
    %v3657 = vunpack.c.h.b16 %v3401
    %v3658 = vunpack.c.l.b16 %v3402
    %v3659 = vunpack.c.h.b16 %v3402
    %v3660 = vunpack.c.l.b16 %v3403
    %v3661 = vunpack.c.h.b16 %v3403
    %v3662 = vunpack.c.l.b16 %v3404
    %v3663 = vunpack.c.h.b16 %v3404
    %v3664 = vunpack.c.l.b16 %v3405
    %v3665 = vunpack.c.h.b16 %v3405
    %v3666 = vunpack.c.l.b16 %v3406
    %v3667 = vunpack.c.h.b16 %v3406
    %v3668 = vunpack.c.l.b16 %v3407
    %v3669 = vunpack.c.h.b16 %v3407
    %v3670 = vunpack.c.l.b16 %v3408
    %v3671 = vunpack.c.h.b16 %v3408
    %v3672 = vunpack.c.l.b16 %v3409
    %v3673 = vunpack.c.h.b16 %v3409
    %v3674 = vunpack.c.l.b16 %v3410
    %v3675 = vunpack.c.h.b16 %v3410
    %v3676 = vunpack.c.l.b16 %v3411
    %v3677 = vunpack.c.h.b16 %v3411
    %v3678 = vunpack.c.l.b16 %v3412
    %v3679 = vunpack.c.h.b16 %v3412
    %v3680 = vunpack.c.l.b16 %v3413
    %v3681 = vunpack.c.h.b16 %v3413
    %v3682 = vunpack.c.l.b16 %v3414
    %v3683 = vunpack.c.h.b16 %v3414
    %v3684 = vunpack.c.l.b16 %v3415
    %v3685 = vunpack.c.h.b16 %v3415
    %v3686 = vunpack.c.l.b16 %v3416
    %v3687 = vunpack.c.h.b16 %v3416
    %v3688 = vunpack.c.l.b16 %v3417
    %v3689 = vunpack.c.h.b16 %v3417
    %v3690 = vunpack.c.l.b16 %v3418
    %v3691 = vunpack.c.h.b16 %v3418
    %v3692 = vunpack.c.l.b16 %v3419
    %v3693 = vunpack.c.h.b16 %v3419
    %v3694 = vunpack.c.l.b16 %v3420
    %v3695 = vunpack.c.h.b16 %v3420
    %v3696 = vunpack.c.l.b16 %v3421
    %v3697 = vunpack.c.h.b16 %v3421
    %v3698 = vunpack.c.l.b16 %v3422
    %v3699 = vunpack.c.h.b16 %v3422
    %v3700 = vunpack.c.l.b16 %v3423
    %v3701 = vunpack.c.h.b16 %v3423
    %v3702 = vunpack.c.l.b16 %v3424
    %v3703 = vunpack.c.h.b16 %v3424
    %v3704 = vunpack.c.l.b16 %v3425
    %v3705 = vunpack.c.h.b16 %v3425
    %v3706 = vunpack.c.l.b16 %v3426
    %v3707 = vunpack.c.h.b16 %v3426
    %v3708 = vunpack.c.l.b16 %v3427
    %v3709 = vunpack.c.h.b16 %v3427
    %v3710 = vunpack.c.l.b16 %v3428
    %v3711 = vunpack.c.h.b16 %v3428
    %v3712 = vunpack.c.l.b16 %v3429
    %v3713 = vunpack.c.h.b16 %v3429
    %v3714 = vunpack.c.l.b16 %v3430
    %v3715 = vunpack.c.h.b16 %v3430
    %v3716 = vunpack.c.l.b16 %v3431
    %v3717 = vunpack.c.h.b16 %v3431
    %v3718 = vunpack.c.l.b16 %v3432
    %v3719 = vunpack.c.h.b16 %v3432
    %v3720 = vunpack.c.l.b16 %v3433
    %v3721 = vunpack.c.h.b16 %v3433
    %v3722 = vunpack.c.l.b16 %v3434
    %v3723 = vunpack.c.h.b16 %v3434
    %v3724 = vunpack.c.l.b16 %v3435
    %v3725 = vunpack.c.h.b16 %v3435
    %v3726 = vunpack.c.l.b16 %v3436
    %v3727 = vunpack.c.h.b16 %v3436
    %v3728 = vunpack.c.l.b16 %v3437
    %v3729 = vunpack.c.h.b16 %v3437
    %v3730 = vunpack.c.l.b16 %v3438
    %v3731 = vunpack.c.h.b16 %v3438
    %v3732 = vunpack.c.l.b16 %v3439
    %v3733 = vunpack.c.h.b16 %v3439
    %v3734 = vunpack.c.l.b16 %v3440
    %v3735 = vunpack.c.h.b16 %v3440
    %v3736 = vunpack.c.l.b16 %v3441
    %v3737 = vunpack.c.h.b16 %v3441
    %v3738 = vunpack.c.l.b16 %v3442
    %v3739 = vunpack.c.h.b16 %v3442
    %v3740 = vunpack.c.l.b16 %v3443
    %v3741 = vunpack.c.h.b16 %v3443
    %v3742 = vunpack.c.l.b16 %v3444
    %v3743 = vunpack.c.h.b16 %v3444
    %v3744 = vunpack.c.l.b16 %v3445
    %v3745 = vunpack.c.h.b16 %v3445
    %v3746 = vpack.c.b16 %v3556, %v3554
    %v3747 = vpack.c.b16 %v3557, %v3555
    %v3748 = vpack.c.b16 %v3560, %v3558
    %v3749 = vpack.c.b16 %v3561, %v3559
    %v3750 = vpack.c.b16 %v3564, %v3562
    %v3751 = vpack.c.b16 %v3565, %v3563
    %v3752 = vpack.c.b16 %v3568, %v3566
    %v3753 = vpack.c.b16 %v3569, %v3567
    %v3754 = vpack.c.b16 %v3572, %v3570
    %v3755 = vpack.c.b16 %v3573, %v3571
    %v3756 = vpack.c.b16 %v3576, %v3574
    %v3757 = vpack.c.b16 %v3577, %v3575
    %v3758 = vpack.c.b16 %v3580, %v3578
    %v3759 = vpack.c.b16 %v3581, %v3579
    %v3760 = vpack.c.b16 %v3584, %v3582
    %v3761 = vpack.c.b16 %v3585, %v3583
    %v3762 = vpack.c.b16 %v3588, %v3586
    %v3763 = vpack.c.b16 %v3589, %v3587
    %v3764 = vpack.c.b16 %v3592, %v3590
    %v3765 = vpack.c.b16 %v3593, %v3591
    %v3766 = vpack.c.b16 %v3596, %v3594
    %v3767 = vpack.c.b16 %v3597, %v3595
    %v3768 = vpack.c.b16 %v3600, %v3598
    %v3769 = vpack.c.b16 %v3601, %v3599
    %v3770 = vpack.c.b16 %v3604, %v3602
    %v3771 = vpack.c.b16 %v3605, %v3603
    %v3772 = vpack.c.b16 %v3608, %v3606
    %v3773 = vpack.c.b16 %v3609, %v3607
    %v3774 = vpack.c.b16 %v3612, %v3610
    %v3775 = vpack.c.b16 %v3613, %v3611
    %v3776 = vpack.c.b16 %v3616, %v3614
    %v3777 = vpack.c.b16 %v3617, %v3615
    %v3778 = vpack.c.b16 %v3620, %v3618
    %v3779 = vpack.c.b16 %v3621, %v3619
    %v3780 = vpack.c.b16 %v3624, %v3622
    %v3781 = vpack.c.b16 %v3625, %v3623
    %v3782 = vpack.c.b16 %v3628, %v3626
    %v3783 = vpack.c.b16 %v3629, %v3627
    %v3784 = vpack.c.b16 %v3632, %v3630
    %v3785 = vpack.c.b16 %v3633, %v3631
    %v3786 = vpack.c.b16 %v3636, %v3634
    %v3787 = vpack.c.b16 %v3637, %v3635
    %v3788 = vpack.c.b16 %v3640, %v3638
    %v3789 = vpack.c.b16 %v3641, %v3639
    %v3790 = vpack.c.b16 %v3644, %v3642
    %v3791 = vpack.c.b16 %v3645, %v3643
    %v3792 = vpack.c.b16 %v3648, %v3646
    %v3793 = vpack.c.b16 %v3649, %v3647
    %v3794 = vpack.c.b16 %v3652, %v3650
    %v3795 = vpack.c.b16 %v3653, %v3651
    %v3796 = vpack.c.b16 %v3656, %v3654
    %v3797 = vpack.c.b16 %v3657, %v3655
    %v3798 = vpack.c.b16 %v3660, %v3658
    %v3799 = vpack.c.b16 %v3661, %v3659
    %v3800 = vpack.c.b16 %v3664, %v3662
    %v3801 = vpack.c.b16 %v3665, %v3663
    %v3802 = vpack.c.b16 %v3668, %v3666
    %v3803 = vpack.c.b16 %v3669, %v3667
    %v3804 = vpack.c.b16 %v3672, %v3670
    %v3805 = vpack.c.b16 %v3673, %v3671
    %v3806 = vpack.c.b16 %v3676, %v3674
    %v3807 = vpack.c.b16 %v3677, %v3675
    %v3808 = vpack.c.b16 %v3680, %v3678
    %v3809 = vpack.c.b16 %v3681, %v3679
    %v3810 = vpack.c.b16 %v3684, %v3682
    %v3811 = vpack.c.b16 %v3685, %v3683
    %v3812 = vpack.c.b16 %v3688, %v3686
    %v3813 = vpack.c.b16 %v3689, %v3687
    %v3814 = vpack.c.b16 %v3692, %v3690
    %v3815 = vpack.c.b16 %v3693, %v3691
    %v3816 = vpack.c.b16 %v3696, %v3694
    %v3817 = vpack.c.b16 %v3697, %v3695
    %v3818 = vpack.c.b16 %v3700, %v3698
    %v3819 = vpack.c.b16 %v3701, %v3699
    %v3820 = vpack.c.b16 %v3704, %v3702
    %v3821 = vpack.c.b16 %v3705, %v3703
    %v3822 = vpack.c.b16 %v3708, %v3706
    %v3823 = vpack.c.b16 %v3709, %v3707
    %v3824 = vpack.c.b16 %v3712, %v3710
    %v3825 = vpack.c.b16 %v3713, %v3711
    %v3826 = vpack.c.b16 %v3716, %v3714
    %v3827 = vpack.c.b16 %v3717, %v3715
    %v3828 = vpack.c.b16 %v3720, %v3718
    %v3829 = vpack.c.b16 %v3721, %v3719
    %v3830 = vpack.c.b16 %v3724, %v3722
    %v3831 = vpack.c.b16 %v3725, %v3723
    %v3832 = vpack.c.b16 %v3728, %v3726
    %v3833 = vpack.c.b16 %v3729, %v3727
    %v3834 = vpack.c.b16 %v3732, %v3730
    %v3835 = vpack.c.b16 %v3733, %v3731
    %v3836 = vpack.c.b16 %v3736, %v3734
    %v3837 = vpack.c.b16 %v3737, %v3735
    %v3838 = vpack.c.b16 %v3740, %v3738
    %v3839 = vpack.c.b16 %v3741, %v3739
    %v3840 = vpack.c.b16 %v3744, %v3742
    %v3841 = vpack.c.b16 %v3745, %v3743
    %3938 = vmatprep.subr.bf16.mxu0 %v3747
    %3939 = vmatpush1.bf16.msra.mxu0 %v3746
    %3940 = vmatprep.subr.bf16.mxu0 %v3749
    %3941 = vmatpush1.bf16.msra.mxu0 %v3748
    %3942 = vmatprep.subr.bf16.mxu0 %v3751
    %3943 = vmatpush1.bf16.msra.mxu0 %v3750
    %3944 = vmatprep.subr.bf16.mxu0 %v3753
    %3945 = vmatpush1.bf16.msra.mxu0 %v3752
    %3946 = vmatprep.subr.bf16.mxu0 %v3755
    %3947 = vmatpush1.bf16.msra.mxu0 %v3754
    %3948 = vmatprep.subr.bf16.mxu0 %v3757
    %3949 = vmatpush1.bf16.msra.mxu0 %v3756
    %3950 = vmatprep.subr.bf16.mxu0 %v3759
    %3951 = vmatpush1.bf16.msra.mxu0 %v3758
    %3952 = vmatprep.subr.bf16.mxu0 %v3761
    %3953 = vmatpush1.bf16.msra.mxu0 %v3760
    %3954 = vmatprep.subr.bf16.mxu0 %v3763
    %3955 = vmatpush1.bf16.msra.mxu0 %v3762
    %3956 = vmatprep.subr.bf16.mxu0 %v3765
    %3957 = vmatpush1.bf16.msra.mxu0 %v3764
    %3958 = vmatprep.subr.bf16.mxu0 %v3767
    %3959 = vmatpush1.bf16.msra.mxu0 %v3766
    %3960 = vmatprep.subr.bf16.mxu0 %v3769
    %3961 = vmatpush1.bf16.msra.mxu0 %v3768
    %3962 = vmatprep.subr.bf16.mxu0 %v3771
    %3963 = vmatpush1.bf16.msra.mxu0 %v3770
    %3964 = vmatprep.subr.bf16.mxu0 %v3773
    %3965 = vmatpush1.bf16.msra.mxu0 %v3772
    %3966 = vmatprep.subr.bf16.mxu0 %v3775
    %3967 = vmatpush1.bf16.msra.mxu0 %v3774
    %3968 = vmatprep.subr.bf16.mxu0 %v3777
    %3969 = vmatpush1.bf16.msra.mxu0 %v3776
    %3970 = vmatprep.mubr.bf16.mxu0 %v3327
    %3971 = vmatmul.mubr.bf16.gmra.mrb[0].mxu0 %v3326
    %v3972 = vpop.f32.mrb[0].mxu0
    %v3973 = vadd.f32 %v3451, %v3972
    %v3974 = vpop.f32.mrb[0].mxu0
    %v3975 = vadd.f32 %v3455, %v3974
    %v3976 = vpop.f32.mrb[0].mxu0
    %v3977 = vadd.f32 %v3451, %v3976
    %v3978 = vpop.f32.mrb[0].mxu0
    %v3979 = vadd.f32 %v3455, %v3978
    %3980 = vmatprep.mubr.bf16.mxu0 %v3333
    %3981 = vmatmul.mubr.bf16.gmra.mrb[0].mxu0 %v3332
    %v3982 = vpop.f32.mrb[0].mxu0
    %v3983 = vadd.f32 %v3451, %v3982
    %v3984 = vpop.f32.mrb[0].mxu0
    %v3985 = vadd.f32 %v3455, %v3984
    %v3986 = vpop.f32.mrb[0].mxu0
    %v3987 = vadd.f32 %v3451, %v3986
    %v3988 = vpop.f32.mrb[0].mxu0
    %v3989 = vadd.f32 %v3455, %v3988
    %3990 = vmatprep.mubr.bf16.mxu0 %v3339
    %3991 = vmatmul.mubr.bf16.gmra.mrb[0].mxu0 %v3338
    %v3992 = vpop.f32.mrb[0].mxu0
    %v3993 = vadd.f32 %v3451, %v3992
    %v3994 = vpop.f32.mrb[0].mxu0
    %v3995 = vadd.f32 %v3455, %v3994
    %v3996 = vpop.f32.mrb[0].mxu0
    %v3997 = vadd.f32 %v3451, %v3996
    %v3998 = vpop.f32.mrb[0].mxu0
    %v3999 = vadd.f32 %v3455, %v3998
    %4000 = vmatprep.mubr.bf16.mxu0 %v3345
    %4001 = vmatmul.mubr.bf16.gmra.mrb[0].mxu0 %v3344
    %v4002 = vpop.f32.mrb[0].mxu0
    %v4003 = vadd.f32 %v3451, %v4002
    %v4004 = vpop.f32.mrb[0].mxu0
    %v4005 = vadd.f32 %v3455, %v4004
    %v4006 = vpop.f32.mrb[0].mxu0
    %v4007 = vadd.f32 %v3451, %v4006
    %v4008 = vpop.f32.mrb[0].mxu0
    %v4009 = vadd.f32 %v3455, %v4008
    %4010 = vdwg.mxu0
    %4011 = vmatprep.subr.bf16.mxu0 %v3779
    %4012 = vmatpush1.bf16.msra.mxu0 %v3778
    %4013 = vmatprep.subr.bf16.mxu0 %v3781
    %4014 = vmatpush1.bf16.msra.mxu0 %v3780
    %4015 = vmatprep.subr.bf16.mxu0 %v3783
    %4016 = vmatpush1.bf16.msra.mxu0 %v3782
    %4017 = vmatprep.subr.bf16.mxu0 %v3785
    %4018 = vmatpush1.bf16.msra.mxu0 %v3784
    %4019 = vmatprep.subr.bf16.mxu0 %v3787
    %4020 = vmatpush1.bf16.msra.mxu0 %v3786
    %4021 = vmatprep.subr.bf16.mxu0 %v3789
    %4022 = vmatpush1.bf16.msra.mxu0 %v3788
    %4023 = vmatprep.subr.bf16.mxu0 %v3791
    %4024 = vmatpush1.bf16.msra.mxu0 %v3790
    %4025 = vmatprep.subr.bf16.mxu0 %v3793
    %4026 = vmatpush1.bf16.msra.mxu0 %v3792
    %4027 = vmatprep.subr.bf16.mxu0 %v3795
    %4028 = vmatpush1.bf16.msra.mxu0 %v3794
    %4029 = vmatprep.subr.bf16.mxu0 %v3797
    %4030 = vmatpush1.bf16.msra.mxu0 %v3796
    %4031 = vmatprep.subr.bf16.mxu0 %v3799
    %4032 = vmatpush1.bf16.msra.mxu0 %v3798
    %4033 = vmatprep.subr.bf16.mxu0 %v3801
    %4034 = vmatpush1.bf16.msra.mxu0 %v3800
    %4035 = vmatprep.subr.bf16.mxu0 %v3803
    %4036 = vmatpush1.bf16.msra.mxu0 %v3802
    %4037 = vmatprep.subr.bf16.mxu0 %v3805
    %4038 = vmatpush1.bf16.msra.mxu0 %v3804
    %4039 = vmatprep.subr.bf16.mxu0 %v3807
    %4040 = vmatpush1.bf16.msra.mxu0 %v3806
    %4041 = vmatprep.subr.bf16.mxu0 %v3809
    %4042 = vmatpush1.bf16.msra.mxu0 %v3808
    %4043 = vmatprep.mubr.bf16.mxu0 %v3329
    %4044 = vmatmul.mubr.bf16.gmra.mrb[0].mxu0 %v3328
    %v4045 = vpop.f32.mrb[0].mxu0
    %v4046 = vadd.f32 %v3973, %v4045
    %v4047 = vpop.f32.mrb[0].mxu0
    %v4048 = vadd.f32 %v3975, %v4047
    %v4049 = vpop.f32.mrb[0].mxu0
    %v4050 = vadd.f32 %v3977, %v4049
    %v4051 = vpop.f32.mrb[0].mxu0
    %v4052 = vadd.f32 %v3979, %v4051
    %4053 = vmatprep.mubr.bf16.mxu0 %v3335
    %4054 = vmatmul.mubr.bf16.gmra.mrb[0].mxu0 %v3334
    %v4055 = vpop.f32.mrb[0].mxu0
    %v4056 = vadd.f32 %v3983, %v4055
    %v4057 = vpop.f32.mrb[0].mxu0
    %v4058 = vadd.f32 %v3985, %v4057
    %v4059 = vpop.f32.mrb[0].mxu0
    %v4060 = vadd.f32 %v3987, %v4059
    %v4061 = vpop.f32.mrb[0].mxu0
    %v4062 = vadd.f32 %v3989, %v4061
    %4063 = vmatprep.mubr.bf16.mxu0 %v3341
    %4064 = vmatmul.mubr.bf16.gmra.mrb[0].mxu0 %v3340
    %v4065 = vpop.f32.mrb[0].mxu0
    %v4066 = vadd.f32 %v3993, %v4065
    %v4067 = vpop.f32.mrb[0].mxu0
    %v4068 = vadd.f32 %v3995, %v4067
    %v4069 = vpop.f32.mrb[0].mxu0
    %v4070 = vadd.f32 %v3997, %v4069
    %v4071 = vpop.f32.mrb[0].mxu0
    %v4072 = vadd.f32 %v3999, %v4071
    %4073 = vmatprep.mubr.bf16.mxu0 %v3347
    %4074 = vmatmul.mubr.bf16.gmra.mrb[0].mxu0 %v3346
    %v4075 = vpop.f32.mrb[0].mxu0
    %v4076 = vadd.f32 %v4003, %v4075
    %v4077 = vpop.f32.mrb[0].mxu0
    %v4078 = vadd.f32 %v4005, %v4077
    %v4079 = vpop.f32.mrb[0].mxu0
    %v4080 = vadd.f32 %v4007, %v4079
    %v4081 = vpop.f32.mrb[0].mxu0
    %v4082 = vadd.f32 %v4009, %v4081
    %4083 = vdwg.mxu0
    %4084 = vmatprep.subr.bf16.mxu0 %v3811
    %4085 = vmatpush1.bf16.msra.mxu0 %v3810
    %4086 = vmatprep.subr.bf16.mxu0 %v3813
    %4087 = vmatpush1.bf16.msra.mxu0 %v3812
    %4088 = vmatprep.subr.bf16.mxu0 %v3815
    %4089 = vmatpush1.bf16.msra.mxu0 %v3814
    %4090 = vmatprep.subr.bf16.mxu0 %v3817
    %4091 = vmatpush1.bf16.msra.mxu0 %v3816
    %4092 = vmatprep.subr.bf16.mxu0 %v3819
    %4093 = vmatpush1.bf16.msra.mxu0 %v3818
    %4094 = vmatprep.subr.bf16.mxu0 %v3821
    %4095 = vmatpush1.bf16.msra.mxu0 %v3820
    %4096 = vmatprep.subr.bf16.mxu0 %v3823
    %4097 = vmatpush1.bf16.msra.mxu0 %v3822
    %4098 = vmatprep.subr.bf16.mxu0 %v3825
    %4099 = vmatpush1.bf16.msra.mxu0 %v3824
    %4100 = vmatprep.subr.bf16.mxu0 %v3827
    %4101 = vmatpush1.bf16.msra.mxu0 %v3826
    %4102 = vmatprep.subr.bf16.mxu0 %v3829
    %4103 = vmatpush1.bf16.msra.mxu0 %v3828
    %4104 = vmatprep.subr.bf16.mxu0 %v3831
    %4105 = vmatpush1.bf16.msra.mxu0 %v3830
    %4106 = vmatprep.subr.bf16.mxu0 %v3833
    %4107 = vmatpush1.bf16.msra.mxu0 %v3832
    %4108 = vmatprep.subr.bf16.mxu0 %v3835
    %4109 = vmatpush1.bf16.msra.mxu0 %v3834
    %4110 = vmatprep.subr.bf16.mxu0 %v3837
    %4111 = vmatpush1.bf16.msra.mxu0 %v3836
    %4112 = vmatprep.subr.bf16.mxu0 %v3839
    %4113 = vmatpush1.bf16.msra.mxu0 %v3838
    %4114 = vmatprep.subr.bf16.mxu0 %v3841
    %4115 = vmatpush1.bf16.msra.mxu0 %v3840
    %4116 = vmatprep.mubr.bf16.mxu0 %v3331
    %4117 = vmatmul.mubr.bf16.gmra.mrb[0].mxu0 %v3330
    %v4118 = vpop.f32.mrb[0].mxu0
    %v4119 = vadd.f32 %v4046, %v4118
    %v4120 = vpop.f32.mrb[0].mxu0
    %v4121 = vadd.f32 %v4048, %v4120
    %v4122 = vpop.f32.mrb[0].mxu0
    %v4123 = vadd.f32 %v4050, %v4122
    %v4124 = vpop.f32.mrb[0].mxu0
    %v4125 = vadd.f32 %v4052, %v4124
    %4126 = vmatprep.mubr.bf16.mxu0 %v3337
    %4127 = vmatmul.mubr.bf16.gmra.mrb[0].mxu0 %v3336
    %v4128 = vpop.f32.mrb[0].mxu0
    %v4129 = vadd.f32 %v4056, %v4128
    %v4130 = vpop.f32.mrb[0].mxu0
    %v4131 = vadd.f32 %v4058, %v4130
    %v4132 = vpop.f32.mrb[0].mxu0
    %v4133 = vadd.f32 %v4060, %v4132
    %v4134 = vpop.f32.mrb[0].mxu0
    %v4135 = vadd.f32 %v4062, %v4134
    %4136 = vmatprep.mubr.bf16.mxu0 %v3343
    %4137 = vmatmul.mubr.bf16.gmra.mrb[0].mxu0 %v3342
    %v4138 = vpop.f32.mrb[0].mxu0
    %v4139 = vadd.f32 %v4066, %v4138
    %v4140 = vpop.f32.mrb[0].mxu0
    %v4141 = vadd.f32 %v4068, %v4140
    %v4142 = vpop.f32.mrb[0].mxu0
    %v4143 = vadd.f32 %v4070, %v4142
    %v4144 = vpop.f32.mrb[0].mxu0
    %v4145 = vadd.f32 %v4072, %v4144
    %4146 = vmatprep.mubr.bf16.mxu0 %v3349
    %4147 = vmatmul.mubr.bf16.gmra.mrb[0].mxu0 %v3348
    %v4148 = vpop.f32.mrb[0].mxu0
    %v4149 = vadd.f32 %v4076, %v4148
    %v4150 = vpop.f32.mrb[0].mxu0
    %v4151 = vadd.f32 %v4078, %v4150
    %v4152 = vpop.f32.mrb[0].mxu0
    %v4153 = vadd.f32 %v4080, %v4152
    %v4154 = vpop.f32.mrb[0].mxu0
    %v4155 = vadd.f32 %v4082, %v4154
    %4156 = vdwg.mxu0
    %v4157 = vmul.f32 %v4119, %v2216
    %v4158 = vmul.f32 %v4121, %v2216
    %v4159 = vmul.f32 %v4123, %v2221
    %v4160 = vmul.f32 %v4125, %v2221
    %v4161 = vmul.f32 %v4129, %v2226
    %v4162 = vmul.f32 %v4131, %v2226
    %v4163 = vmul.f32 %v4133, %v2231
    %v4164 = vmul.f32 %v4135, %v2231
    %v4165 = vmul.f32 %v4139, %v2236
    %v4166 = vmul.f32 %v4141, %v2236
    %v4167 = vmul.f32 %v4143, %v2241
    %v4168 = vmul.f32 %v4145, %v2241
    %v4169 = vmul.f32 %v4149, %v2246
    %v4170 = vmul.f32 %v4151, %v2246
    %v4171 = vmul.f32 %v4153, %v2251
    %v4172 = vmul.f32 %v4155, %v2251
    %v4173 = vadd.f32 %v4157, %v4159
    %v4174 = vadd.f32 %v4173, %v4161
    %v4175 = vadd.f32 %v4174, %v4163
    %v4176 = vadd.f32 %v4175, %v4165
    %v4177 = vadd.f32 %v4176, %v4167
    %v4178 = vadd.f32 %v4177, %v4169
    %v4179 = vadd.f32 %v4178, %v4171
    %v4180 = vrot.slane %v4179, 4
    %v4181 = vadd.f32 %v4179, %v4180
    %v4182 = vrot.slane %v4181, 2
    %v4183 = vadd.f32 %v4181, %v4182
    %v4184 = vrot.slane %v4183, 1
    %v4185 = vadd.f32 %v4183, %v4184
    %v4186 = vadd.f32 %v4158, %v4160
    %v4187 = vadd.f32 %v4186, %v4162
    %v4188 = vadd.f32 %v4187, %v4164
    %v4189 = vadd.f32 %v4188, %v4166
    %v4190 = vadd.f32 %v4189, %v4168
    %v4191 = vadd.f32 %v4190, %v4170
    %v4192 = vadd.f32 %v4191, %v4172
    %v4193 = vrot.slane %v4192, 4
    %v4194 = vadd.f32 %v4192, %v4193
    %v4195 = vrot.slane %v4194, 2
    %v4196 = vadd.f32 %v4194, %v4195
    %v4197 = vrot.slane %v4196, 1
    %v4198 = vadd.f32 %v4196, %v4197
    %v4199 = vmul.f32 %v4185, 0.0625
    %v4200 = vmul.f32 %v4198, 0.0625
    %v4201 = vmul.f32 %v4157, %v4119
    %v4202 = vmul.f32 %v4158, %v4121
    %v4203 = vmul.f32 %v4159, %v4123
    %v4204 = vmul.f32 %v4160, %v4125
    %v4205 = vmul.f32 %v4161, %v4129
    %v4206 = vmul.f32 %v4162, %v4131
    %v4207 = vmul.f32 %v4163, %v4133
    %v4208 = vmul.f32 %v4164, %v4135
    %v4209 = vmul.f32 %v4165, %v4139
    %v4210 = vmul.f32 %v4166, %v4141
    %v4211 = vmul.f32 %v4167, %v4143
    %v4212 = vmul.f32 %v4168, %v4145
    %v4213 = vmul.f32 %v4169, %v4149
    %v4214 = vmul.f32 %v4170, %v4151
    %v4215 = vmul.f32 %v4171, %v4153
    %v4216 = vmul.f32 %v4172, %v4155
    %v4217 = vadd.f32 %v4201, %v4203
    %v4218 = vadd.f32 %v4217, %v4205
    %v4219 = vadd.f32 %v4218, %v4207
    %v4220 = vadd.f32 %v4219, %v4209
    %v4221 = vadd.f32 %v4220, %v4211
    %v4222 = vadd.f32 %v4221, %v4213
    %v4223 = vadd.f32 %v4222, %v4215
    %v4224 = vrot.slane %v4223, 4
    %v4225 = vadd.f32 %v4223, %v4224
    %v4226 = vrot.slane %v4225, 2
    %v4227 = vadd.f32 %v4225, %v4226
    %v4228 = vrot.slane %v4227, 1
    %v4229 = vadd.f32 %v4227, %v4228
    %v4230 = vadd.f32 %v4202, %v4204
    %v4231 = vadd.f32 %v4230, %v4206
    %v4232 = vadd.f32 %v4231, %v4208
    %v4233 = vadd.f32 %v4232, %v4210
    %v4234 = vadd.f32 %v4233, %v4212
    %v4235 = vadd.f32 %v4234, %v4214
    %v4236 = vadd.f32 %v4235, %v4216
    %v4237 = vrot.slane %v4236, 4
    %v4238 = vadd.f32 %v4236, %v4237
    %v4239 = vrot.slane %v4238, 2
    %v4240 = vadd.f32 %v4238, %v4239
    %v4241 = vrot.slane %v4240, 1
    %v4242 = vadd.f32 %v4240, %v4241
    %v4243 = vmul.f32 %v4229, 0.0625
    %v4244 = vmul.f32 %v4242, 0.0625
    %v4245 = vmul.f32 %v4199, %v4199
    %v4246 = vmul.f32 %v4200, %v4200
    %v4247 = vsub.f32 %v4243, %v4245
    %v4248 = vsub.f32 %v4244, %v4246
    %v4249 = vld [vmem:[#allocation24] sm:$0x3]
    %v4250 = vadd.f32 %v4247, 1e-05
    %v4251 = vadd.f32 %v4248, 1e-05
    %v4252 = vrsqrt.pop %v4250
    %v4253 = vrsqrt.pop %v4251
    %v4256 = vcombine.low %v4252, %v4253
    %v4258 = vunpack.c.l.s4 1966171168
    %v4259 = vunpack.c.0.s8 %v4258
    %v4260 = vlaneseq
    %v4261 = vshrl.u32 %v4260, 7
    %v4262 = vsub.s32 %v4259, %v4261
    %v4263 = vrot.slane %v4256, %v4262
    %v4265 = vunpack.c.l.s4 1966171168
    %v4266 = vunpack.c.0.s8 %v4265
    %v4267 = vlaneseq
    %v4268 = vshrl.u32 %v4267, 7
    %v4269 = vsub.s32 %v4266, %v4268
    %v4270 = vrot.slane %v4263, %v4269
    %v4272 = vmul.f32 %v4249, %v4270
    %v4273 = vld [vmem:[#allocation26] sm:$0x3]
    %v4275 = vlaneseq
    %v4276 = vshrl.u32 %v4275, 7
    %v4277 = vsub.s32 0, %v4276
    %v4278 = vrot.slane %v4272, %v4277
    %v4279 = vlaneseq
    %v4280 = vshrl.u32 %v4279, 7
    %v4281 = vsub.s32 1, %v4280
    %v4282 = vrot.slane %v4272, %v4281
    %v4285 = vmul.f32 %v4199, %v4278
    %v4286 = vmul.f32 %v4200, %v4282
    %v4289 = vcombine.low %v4285, %v4286
    %v4291 = vunpack.c.l.s4 1966171168
    %v4292 = vunpack.c.0.s8 %v4291
    %v4293 = vlaneseq
    %v4294 = vshrl.u32 %v4293, 7
    %v4295 = vsub.s32 %v4292, %v4294
    %v4296 = vrot.slane %v4289, %v4295
    %v4298 = vunpack.c.l.s4 1966171168
    %v4299 = vunpack.c.0.s8 %v4298
    %v4300 = vlaneseq
    %v4301 = vshrl.u32 %v4300, 7
    %v4302 = vsub.s32 %v4299, %v4301
    %v4303 = vrot.slane %v4296, %v4302
    %v4305 = vsub.f32 %v4273, %v4303
    %v4306 = vmul.f32 %v4119, %v4278
    %v4307 = vmul.f32 %v4121, %v4282
    %v4308 = vmul.f32 %v4123, %v4278
    %v4309 = vmul.f32 %v4125, %v4282
    %v4310 = vmul.f32 %v4129, %v4278
    %v4311 = vmul.f32 %v4131, %v4282
    %v4312 = vmul.f32 %v4133, %v4278
    %v4313 = vmul.f32 %v4135, %v4282
    %v4314 = vmul.f32 %v4139, %v4278
    %v4315 = vmul.f32 %v4141, %v4282
    %v4316 = vmul.f32 %v4143, %v4278
    %v4317 = vmul.f32 %v4145, %v4282
    %v4318 = vmul.f32 %v4149, %v4278
    %v4319 = vmul.f32 %v4151, %v4282
    %v4320 = vmul.f32 %v4153, %v4278
    %v4321 = vmul.f32 %v4155, %v4282
    %v4323 = vlaneseq
    %v4324 = vshrl.u32 %v4323, 7
    %v4325 = vsub.s32 0, %v4324
    %v4326 = vrot.slane %v4305, %v4325
    %v4327 = vlaneseq
    %v4328 = vshrl.u32 %v4327, 7
    %v4329 = vsub.s32 1, %v4328
    %v4330 = vrot.slane %v4305, %v4329
    %v4333 = vadd.f32 %v4306, %v4326
    %v4334 = vadd.f32 %v4307, %v4330
    %v4335 = vadd.f32 %v4308, %v4326
    %v4336 = vadd.f32 %v4309, %v4330
    %v4337 = vadd.f32 %v4310, %v4326
    %v4338 = vadd.f32 %v4311, %v4330
    %v4339 = vadd.f32 %v4312, %v4326
    %v4340 = vadd.f32 %v4313, %v4330
    %v4341 = vadd.f32 %v4314, %v4326
    %v4342 = vadd.f32 %v4315, %v4330
    %v4343 = vadd.f32 %v4316, %v4326
    %v4344 = vadd.f32 %v4317, %v4330
    %v4345 = vadd.f32 %v4318, %v4326
    %v4346 = vadd.f32 %v4319, %v4330
    %v4347 = vadd.f32 %v4320, %v4326
    %v4348 = vadd.f32 %v4321, %v4330
    %v4349 = vmax.f32 %v4333, 0.0
    %v4350 = vmax.f32 %v4334, 0.0
    %v4351 = vmax.f32 %v4335, 0.0
    %v4352 = vmax.f32 %v4336, 0.0
    %v4353 = vmax.f32 %v4337, 0.0
    %v4354 = vmax.f32 %v4338, 0.0
    %v4355 = vmax.f32 %v4339, 0.0
    %v4356 = vmax.f32 %v4340, 0.0
    %v4357 = vmax.f32 %v4341, 0.0
    %v4358 = vmax.f32 %v4342, 0.0
    %v4359 = vmax.f32 %v4343, 0.0
    %v4360 = vmax.f32 %v4344, 0.0
    %v4361 = vmax.f32 %v4345, 0.0
    %v4362 = vmax.f32 %v4346, 0.0
    %v4363 = vmax.f32 %v4347, 0.0
    %v4364 = vmax.f32 %v4348, 0.0
    %v4365 = vpack.c.bf16 %v4351, %v4349
    %v4366 = vpack.c.bf16 %v4352, %v4350
    %v4367 = vpack.c.bf16 %v4355, %v4353
    %v4368 = vpack.c.bf16 %v4356, %v4354
    %v4369 = vpack.c.bf16 %v4359, %v4357
    %v4370 = vpack.c.bf16 %v4360, %v4358
    %v4371 = vpack.c.bf16 %v4363, %v4361
    %v4372 = vpack.c.bf16 %v4364, %v4362
    %v4373 = vld [vmem:[#allocation27] sm:$0xff]
    %v4374 = vld [vmem:[#allocation27 + $0x8] sm:$0xff]
    %v4375 = vld [vmem:[#allocation27 + $0x10] sm:$0xff]
    %v4376 = vld [vmem:[#allocation27 + $0x18] sm:$0xff]
    %v4377 = vld [vmem:[#allocation27 + $0x20] sm:$0xff]
    %v4378 = vld [vmem:[#allocation27 + $0x28] sm:$0xff]
    %v4379 = vld [vmem:[#allocation27 + $0x30] sm:$0xff]
    %v4380 = vld [vmem:[#allocation27 + $0x38] sm:$0xff]
    %v4381 = vld [vmem:[#allocation27 + $0x40] sm:$0xff]
    %v4382 = vld [vmem:[#allocation27 + $0x48] sm:$0xff]
    %v4383 = vld [vmem:[#allocation27 + $0x50] sm:$0xff]
    %v4384 = vld [vmem:[#allocation27 + $0x58] sm:$0xff]
    %v4385 = vld [vmem:[#allocation27 + $0x60] sm:$0xff]
    %v4386 = vld [vmem:[#allocation27 + $0x68] sm:$0xff]
    %v4387 = vld [vmem:[#allocation27 + $0x70] sm:$0xff]
    %v4388 = vld [vmem:[#allocation27 + $0x78] sm:$0xff]
    %v4389 = vld [vmem:[#allocation27 + $0x80] sm:$0xff]
    %v4390 = vld [vmem:[#allocation27 + $0x88] sm:$0xff]
    %v4391 = vld [vmem:[#allocation27 + $0x90] sm:$0xff]
    %v4392 = vld [vmem:[#allocation27 + $0x98] sm:$0xff]
    %v4393 = vld [vmem:[#allocation27 + $0xa0] sm:$0xff]
    %v4394 = vld [vmem:[#allocation27 + $0xa8] sm:$0xff]
    %v4395 = vld [vmem:[#allocation27 + $0xb0] sm:$0xff]
    %v4396 = vld [vmem:[#allocation27 + $0xb8] sm:$0xff]
    %v4397 = vld [vmem:[#allocation27 + $0xc0] sm:$0xff]
    %v4398 = vld [vmem:[#allocation27 + $0xc8] sm:$0xff]
    %v4399 = vld [vmem:[#allocation27 + $0xd0] sm:$0xff]
    %v4400 = vld [vmem:[#allocation27 + $0xd8] sm:$0xff]
    %v4401 = vld [vmem:[#allocation27 + $0xe0] sm:$0xff]
    %v4402 = vld [vmem:[#allocation27 + $0xe8] sm:$0xff]
    %v4403 = vld [vmem:[#allocation27 + $0xf0] sm:$0xff]
    %v4404 = vld [vmem:[#allocation27 + $0xf8] sm:$0xff]
    %v4405 = vld [vmem:[#allocation27 + $0x100] sm:$0xff]
    %v4406 = vld [vmem:[#allocation27 + $0x108] sm:$0xff]
    %v4407 = vld [vmem:[#allocation27 + $0x110] sm:$0xff]
    %v4408 = vld [vmem:[#allocation27 + $0x118] sm:$0xff]
    %v4409 = vld [vmem:[#allocation27 + $0x120] sm:$0xff]
    %v4410 = vld [vmem:[#allocation27 + $0x128] sm:$0xff]
    %v4411 = vld [vmem:[#allocation27 + $0x130] sm:$0xff]
    %v4412 = vld [vmem:[#allocation27 + $0x138] sm:$0xff]
    %v4413 = vld [vmem:[#allocation27 + $0x140] sm:$0xff]
    %v4414 = vld [vmem:[#allocation27 + $0x148] sm:$0xff]
    %v4415 = vld [vmem:[#allocation27 + $0x150] sm:$0xff]
    %v4416 = vld [vmem:[#allocation27 + $0x158] sm:$0xff]
    %v4417 = vld [vmem:[#allocation27 + $0x160] sm:$0xff]
    %v4418 = vld [vmem:[#allocation27 + $0x168] sm:$0xff]
    %v4419 = vld [vmem:[#allocation27 + $0x170] sm:$0xff]
    %v4420 = vld [vmem:[#allocation27 + $0x178] sm:$0xff]
    %v4421 = vld [vmem:[#allocation27 + $0x180] sm:$0xff]
    %v4422 = vld [vmem:[#allocation27 + $0x188] sm:$0xff]
    %v4423 = vld [vmem:[#allocation27 + $0x190] sm:$0xff]
    %v4424 = vld [vmem:[#allocation27 + $0x198] sm:$0xff]
    %v4425 = vld [vmem:[#allocation27 + $0x1a0] sm:$0xff]
    %v4426 = vld [vmem:[#allocation27 + $0x1a8] sm:$0xff]
    %v4427 = vld [vmem:[#allocation27 + $0x1b0] sm:$0xff]
    %v4428 = vld [vmem:[#allocation27 + $0x1b8] sm:$0xff]
    %v4429 = vld [vmem:[#allocation27 + $0x1c0] sm:$0xff]
    %v4430 = vld [vmem:[#allocation27 + $0x1c8] sm:$0xff]
    %v4431 = vld [vmem:[#allocation27 + $0x1d0] sm:$0xff]
    %v4432 = vld [vmem:[#allocation27 + $0x1d8] sm:$0xff]
    %v4433 = vld [vmem:[#allocation27 + $0x1e0] sm:$0xff]
    %v4434 = vld [vmem:[#allocation27 + $0x1e8] sm:$0xff]
    %v4435 = vld [vmem:[#allocation27 + $0x1f0] sm:$0xff]
    %v4436 = vld [vmem:[#allocation27 + $0x1f8] sm:$0xff]
    %v4437 = vld [vmem:[#allocation27 + $0x200] sm:$0xff]
    %v4438 = vld [vmem:[#allocation27 + $0x208] sm:$0xff]
    %v4439 = vld [vmem:[#allocation27 + $0x210] sm:$0xff]
    %v4440 = vld [vmem:[#allocation27 + $0x218] sm:$0xff]
    %v4441 = vld [vmem:[#allocation27 + $0x220] sm:$0xff]
    %v4442 = vld [vmem:[#allocation27 + $0x228] sm:$0xff]
    %v4443 = vld [vmem:[#allocation27 + $0x230] sm:$0xff]
    %v4444 = vld [vmem:[#allocation27 + $0x238] sm:$0xff]
    %v4445 = vld [vmem:[#allocation27 + $0x240] sm:$0xff]
    %v4446 = vld [vmem:[#allocation27 + $0x248] sm:$0xff]
    %v4447 = vld [vmem:[#allocation27 + $0x250] sm:$0xff]
    %v4448 = vld [vmem:[#allocation27 + $0x258] sm:$0xff]
    %v4449 = vld [vmem:[#allocation27 + $0x260] sm:$0xff]
    %v4450 = vld [vmem:[#allocation27 + $0x268] sm:$0xff]
    %v4451 = vld [vmem:[#allocation27 + $0x270] sm:$0xff]
    %v4452 = vld [vmem:[#allocation27 + $0x278] sm:$0xff]
    %v4453 = vld [vmem:[#allocation27 + $0x280] sm:$0xff]
    %v4454 = vld [vmem:[#allocation27 + $0x288] sm:$0xff]
    %v4455 = vld [vmem:[#allocation27 + $0x290] sm:$0xff]
    %v4456 = vld [vmem:[#allocation27 + $0x298] sm:$0xff]
    %v4457 = vld [vmem:[#allocation27 + $0x2a0] sm:$0xff]
    %v4458 = vld [vmem:[#allocation27 + $0x2a8] sm:$0xff]
    %v4459 = vld [vmem:[#allocation27 + $0x2b0] sm:$0xff]
    %v4460 = vld [vmem:[#allocation27 + $0x2b8] sm:$0xff]
    %v4461 = vld [vmem:[#allocation27 + $0x2c0] sm:$0xff]
    %v4462 = vld [vmem:[#allocation27 + $0x2c8] sm:$0xff]
    %v4463 = vld [vmem:[#allocation27 + $0x2d0] sm:$0xff]
    %v4464 = vld [vmem:[#allocation27 + $0x2d8] sm:$0xff]
    %v4465 = vld [vmem:[#allocation27 + $0x2e0] sm:$0xff]
    %v4466 = vld [vmem:[#allocation27 + $0x2e8] sm:$0xff]
    %v4467 = vld [vmem:[#allocation27 + $0x2f0] sm:$0xff]
    %v4468 = vld [vmem:[#allocation27 + $0x2f8] sm:$0xff]
    %v4469 = vld [vmem:[%s17] sm:$0x3f]
    %v4471 = vlaneseq
    %v4472 = vshrl.u32 %v4471, 7
    %v4473 = vsub.s32 0, %v4472
    %v4474 = vrot.slane %v4469, %v4473
    %v4475 = vlaneseq
    %v4476 = vshrl.u32 %v4475, 7
    %v4477 = vsub.s32 1, %v4476
    %v4478 = vrot.slane %v4469, %v4477
    %v4479 = vlaneseq
    %v4480 = vshrl.u32 %v4479, 7
    %v4481 = vsub.s32 2, %v4480
    %v4482 = vrot.slane %v4469, %v4481
    %v4483 = vlaneseq
    %v4484 = vshrl.u32 %v4483, 7
    %v4485 = vsub.s32 3, %v4484
    %v4486 = vrot.slane %v4469, %v4485
    %v4487 = vlaneseq
    %v4488 = vshrl.u32 %v4487, 7
    %v4489 = vsub.s32 4, %v4488
    %v4490 = vrot.slane %v4469, %v4489
    %v4491 = vlaneseq
    %v4492 = vshrl.u32 %v4491, 7
    %v4493 = vsub.s32 5, %v4492
    %v4494 = vrot.slane %v4469, %v4493
    %v4597 = vunpack.c.l.b16 %v4373
    %v4598 = vunpack.c.h.b16 %v4373
    %v4599 = vunpack.c.l.b16 %v4374
    %v4600 = vunpack.c.h.b16 %v4374
    %v4601 = vunpack.c.l.b16 %v4375
    %v4602 = vunpack.c.h.b16 %v4375
    %v4603 = vunpack.c.l.b16 %v4376
    %v4604 = vunpack.c.h.b16 %v4376
    %v4605 = vunpack.c.l.b16 %v4377
    %v4606 = vunpack.c.h.b16 %v4377
    %v4607 = vunpack.c.l.b16 %v4378
    %v4608 = vunpack.c.h.b16 %v4378
    %v4609 = vunpack.c.l.b16 %v4379
    %v4610 = vunpack.c.h.b16 %v4379
    %v4611 = vunpack.c.l.b16 %v4380
    %v4612 = vunpack.c.h.b16 %v4380
    %v4613 = vunpack.c.l.b16 %v4381
    %v4614 = vunpack.c.h.b16 %v4381
    %v4615 = vunpack.c.l.b16 %v4382
    %v4616 = vunpack.c.h.b16 %v4382
    %v4617 = vunpack.c.l.b16 %v4383
    %v4618 = vunpack.c.h.b16 %v4383
    %v4619 = vunpack.c.l.b16 %v4384
    %v4620 = vunpack.c.h.b16 %v4384
    %v4621 = vunpack.c.l.b16 %v4385
    %v4622 = vunpack.c.h.b16 %v4385
    %v4623 = vunpack.c.l.b16 %v4386
    %v4624 = vunpack.c.h.b16 %v4386
    %v4625 = vunpack.c.l.b16 %v4387
    %v4626 = vunpack.c.h.b16 %v4387
    %v4627 = vunpack.c.l.b16 %v4388
    %v4628 = vunpack.c.h.b16 %v4388
    %v4629 = vunpack.c.l.b16 %v4389
    %v4630 = vunpack.c.h.b16 %v4389
    %v4631 = vunpack.c.l.b16 %v4390
    %v4632 = vunpack.c.h.b16 %v4390
    %v4633 = vunpack.c.l.b16 %v4391
    %v4634 = vunpack.c.h.b16 %v4391
    %v4635 = vunpack.c.l.b16 %v4392
    %v4636 = vunpack.c.h.b16 %v4392
    %v4637 = vunpack.c.l.b16 %v4393
    %v4638 = vunpack.c.h.b16 %v4393
    %v4639 = vunpack.c.l.b16 %v4394
    %v4640 = vunpack.c.h.b16 %v4394
    %v4641 = vunpack.c.l.b16 %v4395
    %v4642 = vunpack.c.h.b16 %v4395
    %v4643 = vunpack.c.l.b16 %v4396
    %v4644 = vunpack.c.h.b16 %v4396
    %v4645 = vunpack.c.l.b16 %v4397
    %v4646 = vunpack.c.h.b16 %v4397
    %v4647 = vunpack.c.l.b16 %v4398
    %v4648 = vunpack.c.h.b16 %v4398
    %v4649 = vunpack.c.l.b16 %v4399
    %v4650 = vunpack.c.h.b16 %v4399
    %v4651 = vunpack.c.l.b16 %v4400
    %v4652 = vunpack.c.h.b16 %v4400
    %v4653 = vunpack.c.l.b16 %v4401
    %v4654 = vunpack.c.h.b16 %v4401
    %v4655 = vunpack.c.l.b16 %v4402
    %v4656 = vunpack.c.h.b16 %v4402
    %v4657 = vunpack.c.l.b16 %v4403
    %v4658 = vunpack.c.h.b16 %v4403
    %v4659 = vunpack.c.l.b16 %v4404
    %v4660 = vunpack.c.h.b16 %v4404
    %v4661 = vunpack.c.l.b16 %v4405
    %v4662 = vunpack.c.h.b16 %v4405
    %v4663 = vunpack.c.l.b16 %v4406
    %v4664 = vunpack.c.h.b16 %v4406
    %v4665 = vunpack.c.l.b16 %v4407
    %v4666 = vunpack.c.h.b16 %v4407
    %v4667 = vunpack.c.l.b16 %v4408
    %v4668 = vunpack.c.h.b16 %v4408
    %v4669 = vunpack.c.l.b16 %v4409
    %v4670 = vunpack.c.h.b16 %v4409
    %v4671 = vunpack.c.l.b16 %v4410
    %v4672 = vunpack.c.h.b16 %v4410
    %v4673 = vunpack.c.l.b16 %v4411
    %v4674 = vunpack.c.h.b16 %v4411
    %v4675 = vunpack.c.l.b16 %v4412
    %v4676 = vunpack.c.h.b16 %v4412
    %v4677 = vunpack.c.l.b16 %v4413
    %v4678 = vunpack.c.h.b16 %v4413
    %v4679 = vunpack.c.l.b16 %v4414
    %v4680 = vunpack.c.h.b16 %v4414
    %v4681 = vunpack.c.l.b16 %v4415
    %v4682 = vunpack.c.h.b16 %v4415
    %v4683 = vunpack.c.l.b16 %v4416
    %v4684 = vunpack.c.h.b16 %v4416
    %v4685 = vunpack.c.l.b16 %v4417
    %v4686 = vunpack.c.h.b16 %v4417
    %v4687 = vunpack.c.l.b16 %v4418
    %v4688 = vunpack.c.h.b16 %v4418
    %v4689 = vunpack.c.l.b16 %v4419
    %v4690 = vunpack.c.h.b16 %v4419
    %v4691 = vunpack.c.l.b16 %v4420
    %v4692 = vunpack.c.h.b16 %v4420
    %v4693 = vunpack.c.l.b16 %v4421
    %v4694 = vunpack.c.h.b16 %v4421
    %v4695 = vunpack.c.l.b16 %v4422
    %v4696 = vunpack.c.h.b16 %v4422
    %v4697 = vunpack.c.l.b16 %v4423
    %v4698 = vunpack.c.h.b16 %v4423
    %v4699 = vunpack.c.l.b16 %v4424
    %v4700 = vunpack.c.h.b16 %v4424
    %v4701 = vunpack.c.l.b16 %v4425
    %v4702 = vunpack.c.h.b16 %v4425
    %v4703 = vunpack.c.l.b16 %v4426
    %v4704 = vunpack.c.h.b16 %v4426
    %v4705 = vunpack.c.l.b16 %v4427
    %v4706 = vunpack.c.h.b16 %v4427
    %v4707 = vunpack.c.l.b16 %v4428
    %v4708 = vunpack.c.h.b16 %v4428
    %v4709 = vunpack.c.l.b16 %v4429
    %v4710 = vunpack.c.h.b16 %v4429
    %v4711 = vunpack.c.l.b16 %v4430
    %v4712 = vunpack.c.h.b16 %v4430
    %v4713 = vunpack.c.l.b16 %v4431
    %v4714 = vunpack.c.h.b16 %v4431
    %v4715 = vunpack.c.l.b16 %v4432
    %v4716 = vunpack.c.h.b16 %v4432
    %v4717 = vunpack.c.l.b16 %v4433
    %v4718 = vunpack.c.h.b16 %v4433
    %v4719 = vunpack.c.l.b16 %v4434
    %v4720 = vunpack.c.h.b16 %v4434
    %v4721 = vunpack.c.l.b16 %v4435
    %v4722 = vunpack.c.h.b16 %v4435
    %v4723 = vunpack.c.l.b16 %v4436
    %v4724 = vunpack.c.h.b16 %v4436
    %v4725 = vunpack.c.l.b16 %v4437
    %v4726 = vunpack.c.h.b16 %v4437
    %v4727 = vunpack.c.l.b16 %v4438
    %v4728 = vunpack.c.h.b16 %v4438
    %v4729 = vunpack.c.l.b16 %v4439
    %v4730 = vunpack.c.h.b16 %v4439
    %v4731 = vunpack.c.l.b16 %v4440
    %v4732 = vunpack.c.h.b16 %v4440
    %v4733 = vunpack.c.l.b16 %v4441
    %v4734 = vunpack.c.h.b16 %v4441
    %v4735 = vunpack.c.l.b16 %v4442
    %v4736 = vunpack.c.h.b16 %v4442
    %v4737 = vunpack.c.l.b16 %v4443
    %v4738 = vunpack.c.h.b16 %v4443
    %v4739 = vunpack.c.l.b16 %v4444
    %v4740 = vunpack.c.h.b16 %v4444
    %v4741 = vunpack.c.l.b16 %v4445
    %v4742 = vunpack.c.h.b16 %v4445
    %v4743 = vunpack.c.l.b16 %v4446
    %v4744 = vunpack.c.h.b16 %v4446
    %v4745 = vunpack.c.l.b16 %v4447
    %v4746 = vunpack.c.h.b16 %v4447
    %v4747 = vunpack.c.l.b16 %v4448
    %v4748 = vunpack.c.h.b16 %v4448
    %v4749 = vunpack.c.l.b16 %v4449
    %v4750 = vunpack.c.h.b16 %v4449
    %v4751 = vunpack.c.l.b16 %v4450
    %v4752 = vunpack.c.h.b16 %v4450
    %v4753 = vunpack.c.l.b16 %v4451
    %v4754 = vunpack.c.h.b16 %v4451
    %v4755 = vunpack.c.l.b16 %v4452
    %v4756 = vunpack.c.h.b16 %v4452
    %v4757 = vunpack.c.l.b16 %v4453
    %v4758 = vunpack.c.h.b16 %v4453
    %v4759 = vunpack.c.l.b16 %v4454
    %v4760 = vunpack.c.h.b16 %v4454
    %v4761 = vunpack.c.l.b16 %v4455
    %v4762 = vunpack.c.h.b16 %v4455
    %v4763 = vunpack.c.l.b16 %v4456
    %v4764 = vunpack.c.h.b16 %v4456
    %v4765 = vunpack.c.l.b16 %v4457
    %v4766 = vunpack.c.h.b16 %v4457
    %v4767 = vunpack.c.l.b16 %v4458
    %v4768 = vunpack.c.h.b16 %v4458
    %v4769 = vunpack.c.l.b16 %v4459
    %v4770 = vunpack.c.h.b16 %v4459
    %v4771 = vunpack.c.l.b16 %v4460
    %v4772 = vunpack.c.h.b16 %v4460
    %v4773 = vunpack.c.l.b16 %v4461
    %v4774 = vunpack.c.h.b16 %v4461
    %v4775 = vunpack.c.l.b16 %v4462
    %v4776 = vunpack.c.h.b16 %v4462
    %v4777 = vunpack.c.l.b16 %v4463
    %v4778 = vunpack.c.h.b16 %v4463
    %v4779 = vunpack.c.l.b16 %v4464
    %v4780 = vunpack.c.h.b16 %v4464
    %v4781 = vunpack.c.l.b16 %v4465
    %v4782 = vunpack.c.h.b16 %v4465
    %v4783 = vunpack.c.l.b16 %v4466
    %v4784 = vunpack.c.h.b16 %v4466
    %v4785 = vunpack.c.l.b16 %v4467
    %v4786 = vunpack.c.h.b16 %v4467
    %v4787 = vunpack.c.l.b16 %v4468
    %v4788 = vunpack.c.h.b16 %v4468
    %v4789 = vpack.c.b16 %v4603, %v4597
    %v4790 = vpack.c.b16 %v4604, %v4598
    %v4791 = vpack.c.b16 %v4605, %v4599
    %v4792 = vpack.c.b16 %v4606, %v4600
    %v4793 = vpack.c.b16 %v4607, %v4601
    %v4794 = vpack.c.b16 %v4608, %v4602
    %v4795 = vpack.c.b16 %v4615, %v4609
    %v4796 = vpack.c.b16 %v4616, %v4610
    %v4797 = vpack.c.b16 %v4617, %v4611
    %v4798 = vpack.c.b16 %v4618, %v4612
    %v4799 = vpack.c.b16 %v4619, %v4613
    %v4800 = vpack.c.b16 %v4620, %v4614
    %v4801 = vpack.c.b16 %v4627, %v4621
    %v4802 = vpack.c.b16 %v4628, %v4622
    %v4803 = vpack.c.b16 %v4629, %v4623
    %v4804 = vpack.c.b16 %v4630, %v4624
    %v4805 = vpack.c.b16 %v4631, %v4625
    %v4806 = vpack.c.b16 %v4632, %v4626
    %v4807 = vpack.c.b16 %v4639, %v4633
    %v4808 = vpack.c.b16 %v4640, %v4634
    %v4809 = vpack.c.b16 %v4641, %v4635
    %v4810 = vpack.c.b16 %v4642, %v4636
    %v4811 = vpack.c.b16 %v4643, %v4637
    %v4812 = vpack.c.b16 %v4644, %v4638
    %v4813 = vpack.c.b16 %v4651, %v4645
    %v4814 = vpack.c.b16 %v4652, %v4646
    %v4815 = vpack.c.b16 %v4653, %v4647
    %v4816 = vpack.c.b16 %v4654, %v4648
    %v4817 = vpack.c.b16 %v4655, %v4649
    %v4818 = vpack.c.b16 %v4656, %v4650
    %v4819 = vpack.c.b16 %v4663, %v4657
    %v4820 = vpack.c.b16 %v4664, %v4658
    %v4821 = vpack.c.b16 %v4665, %v4659
    %v4822 = vpack.c.b16 %v4666, %v4660
    %v4823 = vpack.c.b16 %v4667, %v4661
    %v4824 = vpack.c.b16 %v4668, %v4662
    %v4825 = vpack.c.b16 %v4675, %v4669
    %v4826 = vpack.c.b16 %v4676, %v4670
    %v4827 = vpack.c.b16 %v4677, %v4671
    %v4828 = vpack.c.b16 %v4678, %v4672
    %v4829 = vpack.c.b16 %v4679, %v4673
    %v4830 = vpack.c.b16 %v4680, %v4674
    %v4831 = vpack.c.b16 %v4687, %v4681
    %v4832 = vpack.c.b16 %v4688, %v4682
    %v4833 = vpack.c.b16 %v4689, %v4683
    %v4834 = vpack.c.b16 %v4690, %v4684
    %v4835 = vpack.c.b16 %v4691, %v4685
    %v4836 = vpack.c.b16 %v4692, %v4686
    %v4837 = vpack.c.b16 %v4699, %v4693
    %v4838 = vpack.c.b16 %v4700, %v4694
    %v4839 = vpack.c.b16 %v4701, %v4695
    %v4840 = vpack.c.b16 %v4702, %v4696
    %v4841 = vpack.c.b16 %v4703, %v4697
    %v4842 = vpack.c.b16 %v4704, %v4698
    %v4843 = vpack.c.b16 %v4711, %v4705
    %v4844 = vpack.c.b16 %v4712, %v4706
    %v4845 = vpack.c.b16 %v4713, %v4707
    %v4846 = vpack.c.b16 %v4714, %v4708
    %v4847 = vpack.c.b16 %v4715, %v4709
    %v4848 = vpack.c.b16 %v4716, %v4710
    %v4849 = vpack.c.b16 %v4723, %v4717
    %v4850 = vpack.c.b16 %v4724, %v4718
    %v4851 = vpack.c.b16 %v4725, %v4719
    %v4852 = vpack.c.b16 %v4726, %v4720
    %v4853 = vpack.c.b16 %v4727, %v4721
    %v4854 = vpack.c.b16 %v4728, %v4722
    %v4855 = vpack.c.b16 %v4735, %v4729
    %v4856 = vpack.c.b16 %v4736, %v4730
    %v4857 = vpack.c.b16 %v4737, %v4731
    %v4858 = vpack.c.b16 %v4738, %v4732
    %v4859 = vpack.c.b16 %v4739, %v4733
    %v4860 = vpack.c.b16 %v4740, %v4734
    %v4861 = vpack.c.b16 %v4747, %v4741
    %v4862 = vpack.c.b16 %v4748, %v4742
    %v4863 = vpack.c.b16 %v4749, %v4743
    %v4864 = vpack.c.b16 %v4750, %v4744
    %v4865 = vpack.c.b16 %v4751, %v4745
    %v4866 = vpack.c.b16 %v4752, %v4746
    %v4867 = vpack.c.b16 %v4759, %v4753
    %v4868 = vpack.c.b16 %v4760, %v4754
    %v4869 = vpack.c.b16 %v4761, %v4755
    %v4870 = vpack.c.b16 %v4762, %v4756
    %v4871 = vpack.c.b16 %v4763, %v4757
    %v4872 = vpack.c.b16 %v4764, %v4758
    %v4873 = vpack.c.b16 %v4771, %v4765
    %v4874 = vpack.c.b16 %v4772, %v4766
    %v4875 = vpack.c.b16 %v4773, %v4767
    %v4876 = vpack.c.b16 %v4774, %v4768
    %v4877 = vpack.c.b16 %v4775, %v4769
    %v4878 = vpack.c.b16 %v4776, %v4770
    %v4879 = vpack.c.b16 %v4783, %v4777
    %v4880 = vpack.c.b16 %v4784, %v4778
    %v4881 = vpack.c.b16 %v4785, %v4779
    %v4882 = vpack.c.b16 %v4786, %v4780
    %v4883 = vpack.c.b16 %v4787, %v4781
    %v4884 = vpack.c.b16 %v4788, %v4782
    %4981 = vmatprep.subr.bf16.mxu0 %v4790
    %4982 = vmatpush1.bf16.msra.mxu0 %v4789
    %4983 = vmatprep.subr.bf16.mxu0 %v4796
    %4984 = vmatpush1.bf16.msra.mxu0 %v4795
    %4985 = vmatprep.subr.bf16.mxu0 %v4802
    %4986 = vmatpush1.bf16.msra.mxu0 %v4801
    %4987 = vmatprep.subr.bf16.mxu0 %v4808
    %4988 = vmatpush1.bf16.msra.mxu0 %v4807
    %4989 = vmatprep.subr.bf16.mxu0 %v4814
    %4990 = vmatpush1.bf16.msra.mxu0 %v4813
    %4991 = vmatprep.subr.bf16.mxu0 %v4820
    %4992 = vmatpush1.bf16.msra.mxu0 %v4819
    %4993 = vmatprep.subr.bf16.mxu0 %v4826
    %4994 = vmatpush1.bf16.msra.mxu0 %v4825
    %4995 = vmatprep.subr.bf16.mxu0 %v4832
    %4996 = vmatpush1.bf16.msra.mxu0 %v4831
    %4997 = vmatprep.subr.bf16.mxu0 %v4838
    %4998 = vmatpush1.bf16.msra.mxu0 %v4837
    %4999 = vmatprep.subr.bf16.mxu0 %v4844
    %5000 = vmatpush1.bf16.msra.mxu0 %v4843
    %5001 = vmatprep.subr.bf16.mxu0 %v4850
    %5002 = vmatpush1.bf16.msra.mxu0 %v4849
    %5003 = vmatprep.subr.bf16.mxu0 %v4856
    %5004 = vmatpush1.bf16.msra.mxu0 %v4855
    %5005 = vmatprep.subr.bf16.mxu0 %v4862
    %5006 = vmatpush1.bf16.msra.mxu0 %v4861
    %5007 = vmatprep.subr.bf16.mxu0 %v4868
    %5008 = vmatpush1.bf16.msra.mxu0 %v4867
    %5009 = vmatprep.subr.bf16.mxu0 %v4874
    %5010 = vmatpush1.bf16.msra.mxu0 %v4873
    %5011 = vmatprep.subr.bf16.mxu0 %v4880
    %5012 = vmatpush1.bf16.msra.mxu0 %v4879
    %5013 = vmatprep.mubr.bf16.mxu0 %v4366
    %5014 = vmatmul.mubr.bf16.gmra.mrb[0].mxu0 %v4365
    %v5015 = vpop.f32.mrb[0].mxu0
    %v5016 = vadd.f32 %v4474, %v5015
    %v5017 = vpop.f32.mrb[0].mxu0
    %v5018 = vadd.f32 %v4478, %v5017
    %v5019 = vpop.f32.mrb[0].mxu0
    %v5020 = vadd.f32 %v4474, %v5019
    %v5021 = vpop.f32.mrb[0].mxu0
    %v5022 = vadd.f32 %v4478, %v5021
    %5023 = vmatprep.mubr.bf16.mxu0 %v4368
    %5024 = vmatmul.mubr.bf16.gmra.mrb[0].mxu0 %v4367
    %v5025 = vpop.f32.mrb[0].mxu0
    %v5026 = vadd.f32 %v4474, %v5025
    %v5027 = vpop.f32.mrb[0].mxu0
    %v5028 = vadd.f32 %v4478, %v5027
    %v5029 = vpop.f32.mrb[0].mxu0
    %v5030 = vadd.f32 %v4474, %v5029
    %v5031 = vpop.f32.mrb[0].mxu0
    %v5032 = vadd.f32 %v4478, %v5031
    %5033 = vmatprep.mubr.bf16.mxu0 %v4370
    %5034 = vmatmul.mubr.bf16.gmra.mrb[0].mxu0 %v4369
    %v5035 = vpop.f32.mrb[0].mxu0
    %v5036 = vadd.f32 %v4474, %v5035
    %v5037 = vpop.f32.mrb[0].mxu0
    %v5038 = vadd.f32 %v4478, %v5037
    %v5039 = vpop.f32.mrb[0].mxu0
    %v5040 = vadd.f32 %v4474, %v5039
    %v5041 = vpop.f32.mrb[0].mxu0
    %v5042 = vadd.f32 %v4478, %v5041
    %5043 = vmatprep.mubr.bf16.mxu0 %v4372
    %5044 = vmatmul.mubr.bf16.gmra.mrb[0].mxu0 %v4371
    %v5045 = vpop.f32.mrb[0].mxu0
    %v5046 = vadd.f32 %v4474, %v5045
    %v5047 = vpop.f32.mrb[0].mxu0
    %v5048 = vadd.f32 %v4478, %v5047
    %v5049 = vpop.f32.mrb[0].mxu0
    %v5050 = vadd.f32 %v4474, %v5049
    %v5051 = vpop.f32.mrb[0].mxu0
    %v5052 = vadd.f32 %v4478, %v5051
    %5053 = vdwg.mxu0
    %5054 = vmatprep.subr.bf16.mxu0 %v4792
    %5055 = vmatpush1.bf16.msra.mxu0 %v4791
    %5056 = vmatprep.subr.bf16.mxu0 %v4798
    %5057 = vmatpush1.bf16.msra.mxu0 %v4797
    %5058 = vmatprep.subr.bf16.mxu0 %v4804
    %5059 = vmatpush1.bf16.msra.mxu0 %v4803
    %5060 = vmatprep.subr.bf16.mxu0 %v4810
    %5061 = vmatpush1.bf16.msra.mxu0 %v4809
    %5062 = vmatprep.subr.bf16.mxu0 %v4816
    %5063 = vmatpush1.bf16.msra.mxu0 %v4815
    %5064 = vmatprep.subr.bf16.mxu0 %v4822
    %5065 = vmatpush1.bf16.msra.mxu0 %v4821
    %5066 = vmatprep.subr.bf16.mxu0 %v4828
    %5067 = vmatpush1.bf16.msra.mxu0 %v4827
    %5068 = vmatprep.subr.bf16.mxu0 %v4834
    %5069 = vmatpush1.bf16.msra.mxu0 %v4833
    %5070 = vmatprep.subr.bf16.mxu0 %v4840
    %5071 = vmatpush1.bf16.msra.mxu0 %v4839
    %5072 = vmatprep.subr.bf16.mxu0 %v4846
    %5073 = vmatpush1.bf16.msra.mxu0 %v4845
    %5074 = vmatprep.subr.bf16.mxu0 %v4852
    %5075 = vmatpush1.bf16.msra.mxu0 %v4851
    %5076 = vmatprep.subr.bf16.mxu0 %v4858
    %5077 = vmatpush1.bf16.msra.mxu0 %v4857
    %5078 = vmatprep.subr.bf16.mxu0 %v4864
    %5079 = vmatpush1.bf16.msra.mxu0 %v4863
    %5080 = vmatprep.subr.bf16.mxu0 %v4870
    %5081 = vmatpush1.bf16.msra.mxu0 %v4869
    %5082 = vmatprep.subr.bf16.mxu0 %v4876
    %5083 = vmatpush1.bf16.msra.mxu0 %v4875
    %5084 = vmatprep.subr.bf16.mxu0 %v4882
    %5085 = vmatpush1.bf16.msra.mxu0 %v4881
    %5086 = vmatprep.mubr.bf16.mxu0 %v4366
    %5087 = vmatmul.mubr.bf16.gmra.mrb[0].mxu0 %v4365
    %v5088 = vpop.f32.mrb[0].mxu0
    %v5089 = vadd.f32 %v4482, %v5088
    %v5090 = vpop.f32.mrb[0].mxu0
    %v5091 = vadd.f32 %v4486, %v5090
    %v5092 = vpop.f32.mrb[0].mxu0
    %v5093 = vadd.f32 %v4482, %v5092
    %v5094 = vpop.f32.mrb[0].mxu0
    %v5095 = vadd.f32 %v4486, %v5094
    %5096 = vmatprep.mubr.bf16.mxu0 %v4368
    %5097 = vmatmul.mubr.bf16.gmra.mrb[0].mxu0 %v4367
    %v5098 = vpop.f32.mrb[0].mxu0
    %v5099 = vadd.f32 %v4482, %v5098
    %v5100 = vpop.f32.mrb[0].mxu0
    %v5101 = vadd.f32 %v4486, %v5100
    %v5102 = vpop.f32.mrb[0].mxu0
    %v5103 = vadd.f32 %v4482, %v5102
    %v5104 = vpop.f32.mrb[0].mxu0
    %v5105 = vadd.f32 %v4486, %v5104
    %5106 = vmatprep.mubr.bf16.mxu0 %v4370
    %5107 = vmatmul.mubr.bf16.gmra.mrb[0].mxu0 %v4369
    %v5108 = vpop.f32.mrb[0].mxu0
    %v5109 = vadd.f32 %v4482, %v5108
    %v5110 = vpop.f32.mrb[0].mxu0
    %v5111 = vadd.f32 %v4486, %v5110
    %v5112 = vpop.f32.mrb[0].mxu0
    %v5113 = vadd.f32 %v4482, %v5112
    %v5114 = vpop.f32.mrb[0].mxu0
    %v5115 = vadd.f32 %v4486, %v5114
    %5116 = vmatprep.mubr.bf16.mxu0 %v4372
    %5117 = vmatmul.mubr.bf16.gmra.mrb[0].mxu0 %v4371
    %v5118 = vpop.f32.mrb[0].mxu0
    %v5119 = vadd.f32 %v4482, %v5118
    %v5120 = vpop.f32.mrb[0].mxu0
    %v5121 = vadd.f32 %v4486, %v5120
    %v5122 = vpop.f32.mrb[0].mxu0
    %v5123 = vadd.f32 %v4482, %v5122
    %v5124 = vpop.f32.mrb[0].mxu0
    %v5125 = vadd.f32 %v4486, %v5124
    %5126 = vdwg.mxu0
    %5127 = vmatprep.subr.bf16.mxu0 %v4794
    %5128 = vmatpush1.bf16.msra.mxu0 %v4793
    %5129 = vmatprep.subr.bf16.mxu0 %v4800
    %5130 = vmatpush1.bf16.msra.mxu0 %v4799
    %5131 = vmatprep.subr.bf16.mxu0 %v4806
    %5132 = vmatpush1.bf16.msra.mxu0 %v4805
    %5133 = vmatprep.subr.bf16.mxu0 %v4812
    %5134 = vmatpush1.bf16.msra.mxu0 %v4811
    %5135 = vmatprep.subr.bf16.mxu0 %v4818
    %5136 = vmatpush1.bf16.msra.mxu0 %v4817
    %5137 = vmatprep.subr.bf16.mxu0 %v4824
    %5138 = vmatpush1.bf16.msra.mxu0 %v4823
    %5139 = vmatprep.subr.bf16.mxu0 %v4830
    %5140 = vmatpush1.bf16.msra.mxu0 %v4829
    %5141 = vmatprep.subr.bf16.mxu0 %v4836
    %5142 = vmatpush1.bf16.msra.mxu0 %v4835
    %5143 = vmatprep.subr.bf16.mxu0 %v4842
    %5144 = vmatpush1.bf16.msra.mxu0 %v4841
    %5145 = vmatprep.subr.bf16.mxu0 %v4848
    %5146 = vmatpush1.bf16.msra.mxu0 %v4847
    %5147 = vmatprep.subr.bf16.mxu0 %v4854
    %5148 = vmatpush1.bf16.msra.mxu0 %v4853
    %5149 = vmatprep.subr.bf16.mxu0 %v4860
    %5150 = vmatpush1.bf16.msra.mxu0 %v4859
    %5151 = vmatprep.subr.bf16.mxu0 %v4866
    %5152 = vmatpush1.bf16.msra.mxu0 %v4865
    %5153 = vmatprep.subr.bf16.mxu0 %v4872
    %5154 = vmatpush1.bf16.msra.mxu0 %v4871
    %5155 = vmatprep.subr.bf16.mxu0 %v4878
    %5156 = vmatpush1.bf16.msra.mxu0 %v4877
    %5157 = vmatprep.subr.bf16.mxu0 %v4884
    %5158 = vmatpush1.bf16.msra.mxu0 %v4883
    %5159 = vmatprep.mubr.bf16.mxu0 %v4366
    %5160 = vmatmul.mubr.bf16.gmra.mrb[0].mxu0 %v4365
    %v5161 = vpop.f32.mrb[0].mxu0
    %v5162 = vadd.f32 %v4490, %v5161
    %v5163 = vpop.f32.mrb[0].mxu0
    %v5164 = vadd.f32 %v4494, %v5163
    %v5165 = vpop.f32.mrb[0].mxu0
    %v5166 = vadd.f32 %v4490, %v5165
    %v5167 = vpop.f32.mrb[0].mxu0
    %v5168 = vadd.f32 %v4494, %v5167
    %5169 = vmatprep.mubr.bf16.mxu0 %v4368
    %5170 = vmatmul.mubr.bf16.gmra.mrb[0].mxu0 %v4367
    %v5171 = vpop.f32.mrb[0].mxu0
    %v5172 = vadd.f32 %v4490, %v5171
    %v5173 = vpop.f32.mrb[0].mxu0
    %v5174 = vadd.f32 %v4494, %v5173
    %v5175 = vpop.f32.mrb[0].mxu0
    %v5176 = vadd.f32 %v4490, %v5175
    %v5177 = vpop.f32.mrb[0].mxu0
    %v5178 = vadd.f32 %v4494, %v5177
    %5179 = vmatprep.mubr.bf16.mxu0 %v4370
    %5180 = vmatmul.mubr.bf16.gmra.mrb[0].mxu0 %v4369
    %v5181 = vpop.f32.mrb[0].mxu0
    %v5182 = vadd.f32 %v4490, %v5181
    %v5183 = vpop.f32.mrb[0].mxu0
    %v5184 = vadd.f32 %v4494, %v5183
    %v5185 = vpop.f32.mrb[0].mxu0
    %v5186 = vadd.f32 %v4490, %v5185
    %v5187 = vpop.f32.mrb[0].mxu0
    %v5188 = vadd.f32 %v4494, %v5187
    %5189 = vmatprep.mubr.bf16.mxu0 %v4372
    %5190 = vmatmul.mubr.bf16.gmra.mrb[0].mxu0 %v4371
    %v5191 = vpop.f32.mrb[0].mxu0
    %v5192 = vadd.f32 %v4490, %v5191
    %v5193 = vpop.f32.mrb[0].mxu0
    %v5194 = vadd.f32 %v4494, %v5193
    %v5195 = vpop.f32.mrb[0].mxu0
    %v5196 = vadd.f32 %v4490, %v5195
    %v5197 = vpop.f32.mrb[0].mxu0
    %v5198 = vadd.f32 %v4494, %v5197
    %5199 = vdwg.mxu0
    %v5200 = vld [vmem:[#allocation29] sm:$0xff]
    %v5201 = vld [vmem:[#allocation29 + $0x8] sm:$0xff]
    %v5202 = vld [vmem:[#allocation29 + $0x10] sm:$0xff]
    %v5203 = vld [vmem:[#allocation29 + $0x18] sm:$0xff]
    %v5204 = vld [vmem:[#allocation29 + $0x20] sm:$0xff]
    %v5205 = vld [vmem:[#allocation29 + $0x28] sm:$0xff]
    %v5206 = vld [vmem:[#allocation29 + $0x30] sm:$0xff]
    %v5207 = vld [vmem:[#allocation29 + $0x38] sm:$0xff]
    %v5208 = vld [vmem:[#allocation29 + $0x40] sm:$0xff]
    %v5209 = vld [vmem:[#allocation29 + $0x48] sm:$0xff]
    %v5210 = vld [vmem:[#allocation29 + $0x50] sm:$0xff]
    %v5211 = vld [vmem:[#allocation29 + $0x58] sm:$0xff]
    %v5212 = vld [vmem:[#allocation29 + $0x60] sm:$0xff]
    %v5213 = vld [vmem:[#allocation29 + $0x68] sm:$0xff]
    %v5214 = vld [vmem:[#allocation29 + $0x70] sm:$0xff]
    %v5215 = vld [vmem:[#allocation29 + $0x78] sm:$0xff]
    %v5216 = vld [vmem:[#allocation29 + $0x80] sm:$0xff]
    %v5217 = vld [vmem:[#allocation29 + $0x88] sm:$0xff]
    %v5218 = vld [vmem:[#allocation29 + $0x90] sm:$0xff]
    %v5219 = vld [vmem:[#allocation29 + $0x98] sm:$0xff]
    %v5220 = vld [vmem:[#allocation29 + $0xa0] sm:$0xff]
    %v5221 = vld [vmem:[#allocation29 + $0xa8] sm:$0xff]
    %v5222 = vld [vmem:[#allocation29 + $0xb0] sm:$0xff]
    %v5223 = vld [vmem:[#allocation29 + $0xb8] sm:$0xff]
    %v5224 = vld [vmem:[#allocation29 + $0xc0] sm:$0xff]
    %v5225 = vld [vmem:[#allocation29 + $0xc8] sm:$0xff]
    %v5226 = vld [vmem:[#allocation29 + $0xd0] sm:$0xff]
    %v5227 = vld [vmem:[#allocation29 + $0xd8] sm:$0xff]
    %v5228 = vld [vmem:[#allocation29 + $0xe0] sm:$0xff]
    %v5229 = vld [vmem:[#allocation29 + $0xe8] sm:$0xff]
    %v5230 = vld [vmem:[#allocation29 + $0xf0] sm:$0xff]
    %v5231 = vld [vmem:[#allocation29 + $0xf8] sm:$0xff]
    %v5232 = vld [vmem:[#allocation29 + $0x100] sm:$0xff]
    %v5233 = vld [vmem:[#allocation29 + $0x108] sm:$0xff]
    %v5234 = vld [vmem:[#allocation29 + $0x110] sm:$0xff]
    %v5235 = vld [vmem:[#allocation29 + $0x118] sm:$0xff]
    %v5236 = vld [vmem:[#allocation29 + $0x120] sm:$0xff]
    %v5237 = vld [vmem:[#allocation29 + $0x128] sm:$0xff]
    %v5238 = vld [vmem:[#allocation29 + $0x130] sm:$0xff]
    %v5239 = vld [vmem:[#allocation29 + $0x138] sm:$0xff]
    %v5240 = vld [vmem:[#allocation29 + $0x140] sm:$0xff]
    %v5241 = vld [vmem:[#allocation29 + $0x148] sm:$0xff]
    %v5242 = vld [vmem:[#allocation29 + $0x150] sm:$0xff]
    %v5243 = vld [vmem:[#allocation29 + $0x158] sm:$0xff]
    %v5244 = vld [vmem:[#allocation29 + $0x160] sm:$0xff]
    %v5245 = vld [vmem:[#allocation29 + $0x168] sm:$0xff]
    %v5246 = vld [vmem:[#allocation29 + $0x170] sm:$0xff]
    %v5247 = vld [vmem:[#allocation29 + $0x178] sm:$0xff]
    %v5248 = vld [vmem:[#allocation29 + $0x180] sm:$0xff]
    %v5249 = vld [vmem:[#allocation29 + $0x188] sm:$0xff]
    %v5250 = vld [vmem:[#allocation29 + $0x190] sm:$0xff]
    %v5251 = vld [vmem:[#allocation29 + $0x198] sm:$0xff]
    %v5252 = vld [vmem:[#allocation29 + $0x1a0] sm:$0xff]
    %v5253 = vld [vmem:[#allocation29 + $0x1a8] sm:$0xff]
    %v5254 = vld [vmem:[#allocation29 + $0x1b0] sm:$0xff]
    %v5255 = vld [vmem:[#allocation29 + $0x1b8] sm:$0xff]
    %v5256 = vld [vmem:[#allocation29 + $0x1c0] sm:$0xff]
    %v5257 = vld [vmem:[#allocation29 + $0x1c8] sm:$0xff]
    %v5258 = vld [vmem:[#allocation29 + $0x1d0] sm:$0xff]
    %v5259 = vld [vmem:[#allocation29 + $0x1d8] sm:$0xff]
    %v5260 = vld [vmem:[#allocation29 + $0x1e0] sm:$0xff]
    %v5261 = vld [vmem:[#allocation29 + $0x1e8] sm:$0xff]
    %v5262 = vld [vmem:[#allocation29 + $0x1f0] sm:$0xff]
    %v5263 = vld [vmem:[#allocation29 + $0x1f8] sm:$0xff]
    %v5264 = vld [vmem:[#allocation29 + $0x200] sm:$0xff]
    %v5265 = vld [vmem:[#allocation29 + $0x208] sm:$0xff]
    %v5266 = vld [vmem:[#allocation29 + $0x210] sm:$0xff]
    %v5267 = vld [vmem:[#allocation29 + $0x218] sm:$0xff]
    %v5268 = vld [vmem:[#allocation29 + $0x220] sm:$0xff]
    %v5269 = vld [vmem:[#allocation29 + $0x228] sm:$0xff]
    %v5270 = vld [vmem:[#allocation29 + $0x230] sm:$0xff]
    %v5271 = vld [vmem:[#allocation29 + $0x238] sm:$0xff]
    %v5272 = vld [vmem:[#allocation29 + $0x240] sm:$0xff]
    %v5273 = vld [vmem:[#allocation29 + $0x248] sm:$0xff]
    %v5274 = vld [vmem:[#allocation29 + $0x250] sm:$0xff]
    %v5275 = vld [vmem:[#allocation29 + $0x258] sm:$0xff]
    %v5276 = vld [vmem:[#allocation29 + $0x260] sm:$0xff]
    %v5277 = vld [vmem:[#allocation29 + $0x268] sm:$0xff]
    %v5278 = vld [vmem:[#allocation29 + $0x270] sm:$0xff]
    %v5279 = vld [vmem:[#allocation29 + $0x278] sm:$0xff]
    %v5280 = vld [vmem:[#allocation29 + $0x280] sm:$0xff]
    %v5281 = vld [vmem:[#allocation29 + $0x288] sm:$0xff]
    %v5282 = vld [vmem:[#allocation29 + $0x290] sm:$0xff]
    %v5283 = vld [vmem:[#allocation29 + $0x298] sm:$0xff]
    %v5284 = vld [vmem:[#allocation29 + $0x2a0] sm:$0xff]
    %v5285 = vld [vmem:[#allocation29 + $0x2a8] sm:$0xff]
    %v5286 = vld [vmem:[#allocation29 + $0x2b0] sm:$0xff]
    %v5287 = vld [vmem:[#allocation29 + $0x2b8] sm:$0xff]
    %v5288 = vld [vmem:[#allocation29 + $0x2c0] sm:$0xff]
    %v5289 = vld [vmem:[#allocation29 + $0x2c8] sm:$0xff]
    %v5290 = vld [vmem:[#allocation29 + $0x2d0] sm:$0xff]
    %v5291 = vld [vmem:[#allocation29 + $0x2d8] sm:$0xff]
    %v5292 = vld [vmem:[#allocation29 + $0x2e0] sm:$0xff]
    %v5293 = vld [vmem:[#allocation29 + $0x2e8] sm:$0xff]
    %v5294 = vld [vmem:[#allocation29 + $0x2f0] sm:$0xff]
    %v5295 = vld [vmem:[#allocation29 + $0x2f8] sm:$0xff]
    %v5296 = vld [vmem:[%s19] sm:$0x3f]
    %v5298 = vlaneseq
    %v5299 = vshrl.u32 %v5298, 7
    %v5300 = vsub.s32 0, %v5299
    %v5301 = vrot.slane %v5296, %v5300
    %v5302 = vlaneseq
    %v5303 = vshrl.u32 %v5302, 7
    %v5304 = vsub.s32 1, %v5303
    %v5305 = vrot.slane %v5296, %v5304
    %v5306 = vlaneseq
    %v5307 = vshrl.u32 %v5306, 7
    %v5308 = vsub.s32 2, %v5307
    %v5309 = vrot.slane %v5296, %v5308
    %v5310 = vlaneseq
    %v5311 = vshrl.u32 %v5310, 7
    %v5312 = vsub.s32 3, %v5311
    %v5313 = vrot.slane %v5296, %v5312
    %v5314 = vlaneseq
    %v5315 = vshrl.u32 %v5314, 7
    %v5316 = vsub.s32 4, %v5315
    %v5317 = vrot.slane %v5296, %v5316
    %v5318 = vlaneseq
    %v5319 = vshrl.u32 %v5318, 7
    %v5320 = vsub.s32 5, %v5319
    %v5321 = vrot.slane %v5296, %v5320
    %v5424 = vunpack.c.l.b16 %v5200
    %v5425 = vunpack.c.h.b16 %v5200
    %v5426 = vunpack.c.l.b16 %v5201
    %v5427 = vunpack.c.h.b16 %v5201
    %v5428 = vunpack.c.l.b16 %v5202
    %v5429 = vunpack.c.h.b16 %v5202
    %v5430 = vunpack.c.l.b16 %v5203
    %v5431 = vunpack.c.h.b16 %v5203
    %v5432 = vunpack.c.l.b16 %v5204
    %v5433 = vunpack.c.h.b16 %v5204
    %v5434 = vunpack.c.l.b16 %v5205
    %v5435 = vunpack.c.h.b16 %v5205
    %v5436 = vunpack.c.l.b16 %v5206
    %v5437 = vunpack.c.h.b16 %v5206
    %v5438 = vunpack.c.l.b16 %v5207
    %v5439 = vunpack.c.h.b16 %v5207
    %v5440 = vunpack.c.l.b16 %v5208
    %v5441 = vunpack.c.h.b16 %v5208
    %v5442 = vunpack.c.l.b16 %v5209
    %v5443 = vunpack.c.h.b16 %v5209
    %v5444 = vunpack.c.l.b16 %v5210
    %v5445 = vunpack.c.h.b16 %v5210
    %v5446 = vunpack.c.l.b16 %v5211
    %v5447 = vunpack.c.h.b16 %v5211
    %v5448 = vunpack.c.l.b16 %v5212
    %v5449 = vunpack.c.h.b16 %v5212
    %v5450 = vunpack.c.l.b16 %v5213
    %v5451 = vunpack.c.h.b16 %v5213
    %v5452 = vunpack.c.l.b16 %v5214
    %v5453 = vunpack.c.h.b16 %v5214
    %v5454 = vunpack.c.l.b16 %v5215
    %v5455 = vunpack.c.h.b16 %v5215
    %v5456 = vunpack.c.l.b16 %v5216
    %v5457 = vunpack.c.h.b16 %v5216
    %v5458 = vunpack.c.l.b16 %v5217
    %v5459 = vunpack.c.h.b16 %v5217
    %v5460 = vunpack.c.l.b16 %v5218
    %v5461 = vunpack.c.h.b16 %v5218
    %v5462 = vunpack.c.l.b16 %v5219
    %v5463 = vunpack.c.h.b16 %v5219
    %v5464 = vunpack.c.l.b16 %v5220
    %v5465 = vunpack.c.h.b16 %v5220
    %v5466 = vunpack.c.l.b16 %v5221
    %v5467 = vunpack.c.h.b16 %v5221
    %v5468 = vunpack.c.l.b16 %v5222
    %v5469 = vunpack.c.h.b16 %v5222
    %v5470 = vunpack.c.l.b16 %v5223
    %v5471 = vunpack.c.h.b16 %v5223
    %v5472 = vunpack.c.l.b16 %v5224
    %v5473 = vunpack.c.h.b16 %v5224
    %v5474 = vunpack.c.l.b16 %v5225
    %v5475 = vunpack.c.h.b16 %v5225
    %v5476 = vunpack.c.l.b16 %v5226
    %v5477 = vunpack.c.h.b16 %v5226
    %v5478 = vunpack.c.l.b16 %v5227
    %v5479 = vunpack.c.h.b16 %v5227
    %v5480 = vunpack.c.l.b16 %v5228
    %v5481 = vunpack.c.h.b16 %v5228
    %v5482 = vunpack.c.l.b16 %v5229
    %v5483 = vunpack.c.h.b16 %v5229
    %v5484 = vunpack.c.l.b16 %v5230
    %v5485 = vunpack.c.h.b16 %v5230
    %v5486 = vunpack.c.l.b16 %v5231
    %v5487 = vunpack.c.h.b16 %v5231
    %v5488 = vunpack.c.l.b16 %v5232
    %v5489 = vunpack.c.h.b16 %v5232
    %v5490 = vunpack.c.l.b16 %v5233
    %v5491 = vunpack.c.h.b16 %v5233
    %v5492 = vunpack.c.l.b16 %v5234
    %v5493 = vunpack.c.h.b16 %v5234
    %v5494 = vunpack.c.l.b16 %v5235
    %v5495 = vunpack.c.h.b16 %v5235
    %v5496 = vunpack.c.l.b16 %v5236
    %v5497 = vunpack.c.h.b16 %v5236
    %v5498 = vunpack.c.l.b16 %v5237
    %v5499 = vunpack.c.h.b16 %v5237
    %v5500 = vunpack.c.l.b16 %v5238
    %v5501 = vunpack.c.h.b16 %v5238
    %v5502 = vunpack.c.l.b16 %v5239
    %v5503 = vunpack.c.h.b16 %v5239
    %v5504 = vunpack.c.l.b16 %v5240
    %v5505 = vunpack.c.h.b16 %v5240
    %v5506 = vunpack.c.l.b16 %v5241
    %v5507 = vunpack.c.h.b16 %v5241
    %v5508 = vunpack.c.l.b16 %v5242
    %v5509 = vunpack.c.h.b16 %v5242
    %v5510 = vunpack.c.l.b16 %v5243
    %v5511 = vunpack.c.h.b16 %v5243
    %v5512 = vunpack.c.l.b16 %v5244
    %v5513 = vunpack.c.h.b16 %v5244
    %v5514 = vunpack.c.l.b16 %v5245
    %v5515 = vunpack.c.h.b16 %v5245
    %v5516 = vunpack.c.l.b16 %v5246
    %v5517 = vunpack.c.h.b16 %v5246
    %v5518 = vunpack.c.l.b16 %v5247
    %v5519 = vunpack.c.h.b16 %v5247
    %v5520 = vunpack.c.l.b16 %v5248
    %v5521 = vunpack.c.h.b16 %v5248
    %v5522 = vunpack.c.l.b16 %v5249
    %v5523 = vunpack.c.h.b16 %v5249
    %v5524 = vunpack.c.l.b16 %v5250
    %v5525 = vunpack.c.h.b16 %v5250
    %v5526 = vunpack.c.l.b16 %v5251
    %v5527 = vunpack.c.h.b16 %v5251
    %v5528 = vunpack.c.l.b16 %v5252
    %v5529 = vunpack.c.h.b16 %v5252
    %v5530 = vunpack.c.l.b16 %v5253
    %v5531 = vunpack.c.h.b16 %v5253
    %v5532 = vunpack.c.l.b16 %v5254
    %v5533 = vunpack.c.h.b16 %v5254
    %v5534 = vunpack.c.l.b16 %v5255
    %v5535 = vunpack.c.h.b16 %v5255
    %v5536 = vunpack.c.l.b16 %v5256
    %v5537 = vunpack.c.h.b16 %v5256
    %v5538 = vunpack.c.l.b16 %v5257
    %v5539 = vunpack.c.h.b16 %v5257
    %v5540 = vunpack.c.l.b16 %v5258
    %v5541 = vunpack.c.h.b16 %v5258
    %v5542 = vunpack.c.l.b16 %v5259
    %v5543 = vunpack.c.h.b16 %v5259
    %v5544 = vunpack.c.l.b16 %v5260
    %v5545 = vunpack.c.h.b16 %v5260
    %v5546 = vunpack.c.l.b16 %v5261
    %v5547 = vunpack.c.h.b16 %v5261
    %v5548 = vunpack.c.l.b16 %v5262
    %v5549 = vunpack.c.h.b16 %v5262
    %v5550 = vunpack.c.l.b16 %v5263
    %v5551 = vunpack.c.h.b16 %v5263
    %v5552 = vunpack.c.l.b16 %v5264
    %v5553 = vunpack.c.h.b16 %v5264
    %v5554 = vunpack.c.l.b16 %v5265
    %v5555 = vunpack.c.h.b16 %v5265
    %v5556 = vunpack.c.l.b16 %v5266
    %v5557 = vunpack.c.h.b16 %v5266
    %v5558 = vunpack.c.l.b16 %v5267
    %v5559 = vunpack.c.h.b16 %v5267
    %v5560 = vunpack.c.l.b16 %v5268
    %v5561 = vunpack.c.h.b16 %v5268
    %v5562 = vunpack.c.l.b16 %v5269
    %v5563 = vunpack.c.h.b16 %v5269
    %v5564 = vunpack.c.l.b16 %v5270
    %v5565 = vunpack.c.h.b16 %v5270
    %v5566 = vunpack.c.l.b16 %v5271
    %v5567 = vunpack.c.h.b16 %v5271
    %v5568 = vunpack.c.l.b16 %v5272
    %v5569 = vunpack.c.h.b16 %v5272
    %v5570 = vunpack.c.l.b16 %v5273
    %v5571 = vunpack.c.h.b16 %v5273
    %v5572 = vunpack.c.l.b16 %v5274
    %v5573 = vunpack.c.h.b16 %v5274
    %v5574 = vunpack.c.l.b16 %v5275
    %v5575 = vunpack.c.h.b16 %v5275
    %v5576 = vunpack.c.l.b16 %v5276
    %v5577 = vunpack.c.h.b16 %v5276
    %v5578 = vunpack.c.l.b16 %v5277
    %v5579 = vunpack.c.h.b16 %v5277
    %v5580 = vunpack.c.l.b16 %v5278
    %v5581 = vunpack.c.h.b16 %v5278
    %v5582 = vunpack.c.l.b16 %v5279
    %v5583 = vunpack.c.h.b16 %v5279
    %v5584 = vunpack.c.l.b16 %v5280
    %v5585 = vunpack.c.h.b16 %v5280
    %v5586 = vunpack.c.l.b16 %v5281
    %v5587 = vunpack.c.h.b16 %v5281
    %v5588 = vunpack.c.l.b16 %v5282
    %v5589 = vunpack.c.h.b16 %v5282
    %v5590 = vunpack.c.l.b16 %v5283
    %v5591 = vunpack.c.h.b16 %v5283
    %v5592 = vunpack.c.l.b16 %v5284
    %v5593 = vunpack.c.h.b16 %v5284
    %v5594 = vunpack.c.l.b16 %v5285
    %v5595 = vunpack.c.h.b16 %v5285
    %v5596 = vunpack.c.l.b16 %v5286
    %v5597 = vunpack.c.h.b16 %v5286
    %v5598 = vunpack.c.l.b16 %v5287
    %v5599 = vunpack.c.h.b16 %v5287
    %v5600 = vunpack.c.l.b16 %v5288
    %v5601 = vunpack.c.h.b16 %v5288
    %v5602 = vunpack.c.l.b16 %v5289
    %v5603 = vunpack.c.h.b16 %v5289
    %v5604 = vunpack.c.l.b16 %v5290
    %v5605 = vunpack.c.h.b16 %v5290
    %v5606 = vunpack.c.l.b16 %v5291
    %v5607 = vunpack.c.h.b16 %v5291
    %v5608 = vunpack.c.l.b16 %v5292
    %v5609 = vunpack.c.h.b16 %v5292
    %v5610 = vunpack.c.l.b16 %v5293
    %v5611 = vunpack.c.h.b16 %v5293
    %v5612 = vunpack.c.l.b16 %v5294
    %v5613 = vunpack.c.h.b16 %v5294
    %v5614 = vunpack.c.l.b16 %v5295
    %v5615 = vunpack.c.h.b16 %v5295
    %v5616 = vpack.c.b16 %v5430, %v5424
    %v5617 = vpack.c.b16 %v5431, %v5425
    %v5618 = vpack.c.b16 %v5432, %v5426
    %v5619 = vpack.c.b16 %v5433, %v5427
    %v5620 = vpack.c.b16 %v5434, %v5428
    %v5621 = vpack.c.b16 %v5435, %v5429
    %v5622 = vpack.c.b16 %v5442, %v5436
    %v5623 = vpack.c.b16 %v5443, %v5437
    %v5624 = vpack.c.b16 %v5444, %v5438
    %v5625 = vpack.c.b16 %v5445, %v5439
    %v5626 = vpack.c.b16 %v5446, %v5440
    %v5627 = vpack.c.b16 %v5447, %v5441
    %v5628 = vpack.c.b16 %v5454, %v5448
    %v5629 = vpack.c.b16 %v5455, %v5449
    %v5630 = vpack.c.b16 %v5456, %v5450
    %v5631 = vpack.c.b16 %v5457, %v5451
    %v5632 = vpack.c.b16 %v5458, %v5452
    %v5633 = vpack.c.b16 %v5459, %v5453
    %v5634 = vpack.c.b16 %v5466, %v5460
    %v5635 = vpack.c.b16 %v5467, %v5461
    %v5636 = vpack.c.b16 %v5468, %v5462
    %v5637 = vpack.c.b16 %v5469, %v5463
    %v5638 = vpack.c.b16 %v5470, %v5464
    %v5639 = vpack.c.b16 %v5471, %v5465
    %v5640 = vpack.c.b16 %v5478, %v5472
    %v5641 = vpack.c.b16 %v5479, %v5473
    %v5642 = vpack.c.b16 %v5480, %v5474
    %v5643 = vpack.c.b16 %v5481, %v5475
    %v5644 = vpack.c.b16 %v5482, %v5476
    %v5645 = vpack.c.b16 %v5483, %v5477
    %v5646 = vpack.c.b16 %v5490, %v5484
    %v5647 = vpack.c.b16 %v5491, %v5485
    %v5648 = vpack.c.b16 %v5492, %v5486
    %v5649 = vpack.c.b16 %v5493, %v5487
    %v5650 = vpack.c.b16 %v5494, %v5488
    %v5651 = vpack.c.b16 %v5495, %v5489
    %v5652 = vpack.c.b16 %v5502, %v5496
    %v5653 = vpack.c.b16 %v5503, %v5497
    %v5654 = vpack.c.b16 %v5504, %v5498
    %v5655 = vpack.c.b16 %v5505, %v5499
    %v5656 = vpack.c.b16 %v5506, %v5500
    %v5657 = vpack.c.b16 %v5507, %v5501
    %v5658 = vpack.c.b16 %v5514, %v5508
    %v5659 = vpack.c.b16 %v5515, %v5509
    %v5660 = vpack.c.b16 %v5516, %v5510
    %v5661 = vpack.c.b16 %v5517, %v5511
    %v5662 = vpack.c.b16 %v5518, %v5512
    %v5663 = vpack.c.b16 %v5519, %v5513
    %v5664 = vpack.c.b16 %v5526, %v5520
    %v5665 = vpack.c.b16 %v5527, %v5521
    %v5666 = vpack.c.b16 %v5528, %v5522
    %v5667 = vpack.c.b16 %v5529, %v5523
    %v5668 = vpack.c.b16 %v5530, %v5524
    %v5669 = vpack.c.b16 %v5531, %v5525
    %v5670 = vpack.c.b16 %v5538, %v5532
    %v5671 = vpack.c.b16 %v5539, %v5533
    %v5672 = vpack.c.b16 %v5540, %v5534
    %v5673 = vpack.c.b16 %v5541, %v5535
    %v5674 = vpack.c.b16 %v5542, %v5536
    %v5675 = vpack.c.b16 %v5543, %v5537
    %v5676 = vpack.c.b16 %v5550, %v5544
    %v5677 = vpack.c.b16 %v5551, %v5545
    %v5678 = vpack.c.b16 %v5552, %v5546
    %v5679 = vpack.c.b16 %v5553, %v5547
    %v5680 = vpack.c.b16 %v5554, %v5548
    %v5681 = vpack.c.b16 %v5555, %v5549
    %v5682 = vpack.c.b16 %v5562, %v5556
    %v5683 = vpack.c.b16 %v5563, %v5557
    %v5684 = vpack.c.b16 %v5564, %v5558
    %v5685 = vpack.c.b16 %v5565, %v5559
    %v5686 = vpack.c.b16 %v5566, %v5560
    %v5687 = vpack.c.b16 %v5567, %v5561
    %v5688 = vpack.c.b16 %v5574, %v5568
    %v5689 = vpack.c.b16 %v5575, %v5569
    %v5690 = vpack.c.b16 %v5576, %v5570
    %v5691 = vpack.c.b16 %v5577, %v5571
    %v5692 = vpack.c.b16 %v5578, %v5572
    %v5693 = vpack.c.b16 %v5579, %v5573
    %v5694 = vpack.c.b16 %v5586, %v5580
    %v5695 = vpack.c.b16 %v5587, %v5581
    %v5696 = vpack.c.b16 %v5588, %v5582
    %v5697 = vpack.c.b16 %v5589, %v5583
    %v5698 = vpack.c.b16 %v5590, %v5584
    %v5699 = vpack.c.b16 %v5591, %v5585
    %v5700 = vpack.c.b16 %v5598, %v5592
    %v5701 = vpack.c.b16 %v5599, %v5593
    %v5702 = vpack.c.b16 %v5600, %v5594
    %v5703 = vpack.c.b16 %v5601, %v5595
    %v5704 = vpack.c.b16 %v5602, %v5596
    %v5705 = vpack.c.b16 %v5603, %v5597
    %v5706 = vpack.c.b16 %v5610, %v5604
    %v5707 = vpack.c.b16 %v5611, %v5605
    %v5708 = vpack.c.b16 %v5612, %v5606
    %v5709 = vpack.c.b16 %v5613, %v5607
    %v5710 = vpack.c.b16 %v5614, %v5608
    %v5711 = vpack.c.b16 %v5615, %v5609
    %5808 = vmatprep.subr.bf16.mxu0 %v5617
    %5809 = vmatpush1.bf16.msra.mxu0 %v5616
    %5810 = vmatprep.subr.bf16.mxu0 %v5623
    %5811 = vmatpush1.bf16.msra.mxu0 %v5622
    %5812 = vmatprep.subr.bf16.mxu0 %v5629
    %5813 = vmatpush1.bf16.msra.mxu0 %v5628
    %5814 = vmatprep.subr.bf16.mxu0 %v5635
    %5815 = vmatpush1.bf16.msra.mxu0 %v5634
    %5816 = vmatprep.subr.bf16.mxu0 %v5641
    %5817 = vmatpush1.bf16.msra.mxu0 %v5640
    %5818 = vmatprep.subr.bf16.mxu0 %v5647
    %5819 = vmatpush1.bf16.msra.mxu0 %v5646
    %5820 = vmatprep.subr.bf16.mxu0 %v5653
    %5821 = vmatpush1.bf16.msra.mxu0 %v5652
    %5822 = vmatprep.subr.bf16.mxu0 %v5659
    %5823 = vmatpush1.bf16.msra.mxu0 %v5658
    %5824 = vmatprep.subr.bf16.mxu0 %v5665
    %5825 = vmatpush1.bf16.msra.mxu0 %v5664
    %5826 = vmatprep.subr.bf16.mxu0 %v5671
    %5827 = vmatpush1.bf16.msra.mxu0 %v5670
    %5828 = vmatprep.subr.bf16.mxu0 %v5677
    %5829 = vmatpush1.bf16.msra.mxu0 %v5676
    %5830 = vmatprep.subr.bf16.mxu0 %v5683
    %5831 = vmatpush1.bf16.msra.mxu0 %v5682
    %5832 = vmatprep.subr.bf16.mxu0 %v5689
    %5833 = vmatpush1.bf16.msra.mxu0 %v5688
    %5834 = vmatprep.subr.bf16.mxu0 %v5695
    %5835 = vmatpush1.bf16.msra.mxu0 %v5694
    %5836 = vmatprep.subr.bf16.mxu0 %v5701
    %5837 = vmatpush1.bf16.msra.mxu0 %v5700
    %5838 = vmatprep.subr.bf16.mxu0 %v5707
    %5839 = vmatpush1.bf16.msra.mxu0 %v5706
    %5840 = vmatprep.mubr.bf16.mxu0 0
    %5841 = vmatmul.mubr.bf16.gmra.mrb[0].mxu0 0
    %v5842 = vpop.f32.mrb[0].mxu0
    %v5843 = vadd.f32 %v5301, %v5842
    %v5844 = vpop.f32.mrb[0].mxu0
    %v5845 = vadd.f32 %v5305, %v5844
    %v5846 = vpop.f32.mrb[0].mxu0
    %v5847 = vpop.f32.mrb[0].mxu0
    %5848 = vdwg.mxu0
    %5849 = vmatprep.subr.bf16.mxu0 %v5619
    %5850 = vmatpush1.bf16.msra.mxu0 %v5618
    %5851 = vmatprep.subr.bf16.mxu0 %v5625
    %5852 = vmatpush1.bf16.msra.mxu0 %v5624
    %5853 = vmatprep.subr.bf16.mxu0 %v5631
    %5854 = vmatpush1.bf16.msra.mxu0 %v5630
    %5855 = vmatprep.subr.bf16.mxu0 %v5637
    %5856 = vmatpush1.bf16.msra.mxu0 %v5636
    %5857 = vmatprep.subr.bf16.mxu0 %v5643
    %5858 = vmatpush1.bf16.msra.mxu0 %v5642
    %5859 = vmatprep.subr.bf16.mxu0 %v5649
    %5860 = vmatpush1.bf16.msra.mxu0 %v5648
    %5861 = vmatprep.subr.bf16.mxu0 %v5655
    %5862 = vmatpush1.bf16.msra.mxu0 %v5654
    %5863 = vmatprep.subr.bf16.mxu0 %v5661
    %5864 = vmatpush1.bf16.msra.mxu0 %v5660
    %5865 = vmatprep.subr.bf16.mxu0 %v5667
    %5866 = vmatpush1.bf16.msra.mxu0 %v5666
    %5867 = vmatprep.subr.bf16.mxu0 %v5673
    %5868 = vmatpush1.bf16.msra.mxu0 %v5672
    %5869 = vmatprep.subr.bf16.mxu0 %v5679
    %5870 = vmatpush1.bf16.msra.mxu0 %v5678
    %5871 = vmatprep.subr.bf16.mxu0 %v5685
    %5872 = vmatpush1.bf16.msra.mxu0 %v5684
    %5873 = vmatprep.subr.bf16.mxu0 %v5691
    %5874 = vmatpush1.bf16.msra.mxu0 %v5690
    %5875 = vmatprep.subr.bf16.mxu0 %v5697
    %5876 = vmatpush1.bf16.msra.mxu0 %v5696
    %5877 = vmatprep.subr.bf16.mxu0 %v5703
    %5878 = vmatpush1.bf16.msra.mxu0 %v5702
    %5879 = vmatprep.subr.bf16.mxu0 %v5709
    %5880 = vmatpush1.bf16.msra.mxu0 %v5708
    %5881 = vmatprep.mubr.bf16.mxu0 0
    %5882 = vmatmul.mubr.bf16.gmra.mrb[0].mxu0 0
    %v5883 = vpop.f32.mrb[0].mxu0
    %v5884 = vadd.f32 %v5309, %v5883
    %v5885 = vpop.f32.mrb[0].mxu0
    %v5886 = vadd.f32 %v5313, %v5885
    %v5887 = vpop.f32.mrb[0].mxu0
    %v5888 = vpop.f32.mrb[0].mxu0
    %5889 = vdwg.mxu0
    %5890 = vmatprep.subr.bf16.mxu0 %v5621
    %5891 = vmatpush1.bf16.msra.mxu0 %v5620
    %5892 = vmatprep.subr.bf16.mxu0 %v5627
    %5893 = vmatpush1.bf16.msra.mxu0 %v5626
    %5894 = vmatprep.subr.bf16.mxu0 %v5633
    %5895 = vmatpush1.bf16.msra.mxu0 %v5632
    %5896 = vmatprep.subr.bf16.mxu0 %v5639
    %5897 = vmatpush1.bf16.msra.mxu0 %v5638
    %5898 = vmatprep.subr.bf16.mxu0 %v5645
    %5899 = vmatpush1.bf16.msra.mxu0 %v5644
    %5900 = vmatprep.subr.bf16.mxu0 %v5651
    %5901 = vmatpush1.bf16.msra.mxu0 %v5650
    %5902 = vmatprep.subr.bf16.mxu0 %v5657
    %5903 = vmatpush1.bf16.msra.mxu0 %v5656
    %5904 = vmatprep.subr.bf16.mxu0 %v5663
    %5905 = vmatpush1.bf16.msra.mxu0 %v5662
    %5906 = vmatprep.subr.bf16.mxu0 %v5669
    %5907 = vmatpush1.bf16.msra.mxu0 %v5668
    %5908 = vmatprep.subr.bf16.mxu0 %v5675
    %5909 = vmatpush1.bf16.msra.mxu0 %v5674
    %5910 = vmatprep.subr.bf16.mxu0 %v5681
    %5911 = vmatpush1.bf16.msra.mxu0 %v5680
    %5912 = vmatprep.subr.bf16.mxu0 %v5687
    %5913 = vmatpush1.bf16.msra.mxu0 %v5686
    %5914 = vmatprep.subr.bf16.mxu0 %v5693
    %5915 = vmatpush1.bf16.msra.mxu0 %v5692
    %5916 = vmatprep.subr.bf16.mxu0 %v5699
    %5917 = vmatpush1.bf16.msra.mxu0 %v5698
    %5918 = vmatprep.subr.bf16.mxu0 %v5705
    %5919 = vmatpush1.bf16.msra.mxu0 %v5704
    %5920 = vmatprep.subr.bf16.mxu0 %v5711
    %5921 = vmatpush1.bf16.msra.mxu0 %v5710
    %5922 = vmatprep.mubr.bf16.mxu0 0
    %5923 = vmatmul.mubr.bf16.gmra.mrb[0].mxu0 0
    %v5924 = vpop.f32.mrb[0].mxu0
    %v5925 = vadd.f32 %v5317, %v5924
    %v5926 = vpop.f32.mrb[0].mxu0
    %v5927 = vadd.f32 %v5321, %v5926
    %v5928 = vpop.f32.mrb[0].mxu0
    %v5929 = vpop.f32.mrb[0].mxu0
    %5930 = vdwg.mxu0
    %v5931 = vadd.f32 %v5016, %v5843
    %v5932 = vadd.f32 %v5018, %v5845
    %v5933 = vxor.u32 %v5931, 2147483648
    %v5934 = vxor.u32 %v5932, 2147483648
    %v5935 = vmul.f32 %v5933, 1.442695
    %v5936 = vpow.pop %v5935
    %v5937 = vmul.f32 %v5934, 1.442695
    %v5938 = vpow.pop %v5937
    %v5939 = vadd.f32 %v5936, 1.0
    %v5940 = vadd.f32 %v5938, 1.0
    %v5941 = vrcp.pop %v5939
    %v5942 = vmul.f32 1.0, %v5941
    %v5943 = vrcp.pop %v5940
    %v5944 = vmul.f32 1.0, %v5943
    %v5945 = vadd.f32 %v5089, %v5884
    %v5946 = vadd.f32 %v5091, %v5886
    %v5947 = vxor.u32 %v5945, 2147483648
    %v5948 = vxor.u32 %v5946, 2147483648
    %v5949 = vmul.f32 %v5947, 1.442695
    %v5950 = vpow.pop %v5949
    %v5951 = vmul.f32 %v5948, 1.442695
    %v5952 = vpow.pop %v5951
    %v5953 = vadd.f32 %v5950, 1.0
    %v5954 = vadd.f32 %v5952, 1.0
    %v5955 = vrcp.pop %v5953
    %v5956 = vmul.f32 1.0, %v5955
    %v5957 = vrcp.pop %v5954
    %v5958 = vmul.f32 1.0, %v5957
    %v5959 = vmul.f32 %v5942, %v5925
    %v5960 = vmul.f32 %v5944, %v5927
    %v5961 = vadd.f32 %v5162, %v5959
    %v5962 = vadd.f32 %v5164, %v5960
    %v5963 = vtanh.pop %v5961
    %v5964 = vtanh.pop %v5962
    %v5965 = vsub.f32 1.0, %v5956
    %v5966 = vsub.f32 1.0, %v5958
    %v5967 = vmul.f32 %v5965, %v5963
    %v5968 = vmul.f32 %v5966, %v5964
    %v5969 = vmul.f32 %v5956, 0.0
    %v5970 = vmul.f32 %v5958, 0.0
    %v5971 = vadd.f32 %v5967, %v5969
    %v5972 = vadd.f32 %v5968, %v5970
    %v5973 = vadd.f32 %v5971, 0.0
    %v5974 = vadd.f32 %v5972, 0.0
    %v5975 = vpack.c.bf16 %v5971, %v5971
    %v5976 = vpack.c.bf16 %v5972, %v5972
    %5977 = vmatprep.subr.bf16.mxu0 %v5617
    %5978 = vmatpush1.bf16.msra.mxu0 %v5616
    %5979 = vmatprep.subr.bf16.mxu0 %v5623
    %5980 = vmatpush1.bf16.msra.mxu0 %v5622
    %5981 = vmatprep.subr.bf16.mxu0 %v5629
    %5982 = vmatpush1.bf16.msra.mxu0 %v5628
    %5983 = vmatprep.subr.bf16.mxu0 %v5635
    %5984 = vmatpush1.bf16.msra.mxu0 %v5634
    %5985 = vmatprep.subr.bf16.mxu0 %v5641
    %5986 = vmatpush1.bf16.msra.mxu0 %v5640
    %5987 = vmatprep.subr.bf16.mxu0 %v5647
    %5988 = vmatpush1.bf16.msra.mxu0 %v5646
    %5989 = vmatprep.subr.bf16.mxu0 %v5653
    %5990 = vmatpush1.bf16.msra.mxu0 %v5652
    %5991 = vmatprep.subr.bf16.mxu0 %v5659
    %5992 = vmatpush1.bf16.msra.mxu0 %v5658
    %5993 = vmatprep.subr.bf16.mxu0 %v5665
    %5994 = vmatpush1.bf16.msra.mxu0 %v5664
    %5995 = vmatprep.subr.bf16.mxu0 %v5671
    %5996 = vmatpush1.bf16.msra.mxu0 %v5670
    %5997 = vmatprep.subr.bf16.mxu0 %v5677
    %5998 = vmatpush1.bf16.msra.mxu0 %v5676
    %5999 = vmatprep.subr.bf16.mxu0 %v5683
    %6000 = vmatpush1.bf16.msra.mxu0 %v5682
    %6001 = vmatprep.subr.bf16.mxu0 %v5689
    %6002 = vmatpush1.bf16.msra.mxu0 %v5688
    %6003 = vmatprep.subr.bf16.mxu0 %v5695
    %6004 = vmatpush1.bf16.msra.mxu0 %v5694
    %6005 = vmatprep.subr.bf16.mxu0 %v5701
    %6006 = vmatpush1.bf16.msra.mxu0 %v5700
    %6007 = vmatprep.subr.bf16.mxu0 %v5707
    %6008 = vmatpush1.bf16.msra.mxu0 %v5706
    %6009 = vmatprep.mubr.bf16.mxu0 %v5976
    %6010 = vmatmul.mubr.bf16.gmra.mrb[0].mxu0 %v5975
    %v6011 = vpop.f32.mrb[0].mxu0
    %v6012 = vadd.f32 %v5301, %v6011
    %v6013 = vpop.f32.mrb[0].mxu0
    %v6014 = vadd.f32 %v5305, %v6013
    %v6015 = vpop.f32.mrb[0].mxu0
    %v6016 = vpop.f32.mrb[0].mxu0
    %6017 = vdwg.mxu0
    %6018 = vmatprep.subr.bf16.mxu0 %v5619
    %6019 = vmatpush1.bf16.msra.mxu0 %v5618
    %6020 = vmatprep.subr.bf16.mxu0 %v5625
    %6021 = vmatpush1.bf16.msra.mxu0 %v5624
    %6022 = vmatprep.subr.bf16.mxu0 %v5631
    %6023 = vmatpush1.bf16.msra.mxu0 %v5630
    %6024 = vmatprep.subr.bf16.mxu0 %v5637
    %6025 = vmatpush1.bf16.msra.mxu0 %v5636
    %6026 = vmatprep.subr.bf16.mxu0 %v5643
    %6027 = vmatpush1.bf16.msra.mxu0 %v5642
    %6028 = vmatprep.subr.bf16.mxu0 %v5649
    %6029 = vmatpush1.bf16.msra.mxu0 %v5648
    %6030 = vmatprep.subr.bf16.mxu0 %v5655
    %6031 = vmatpush1.bf16.msra.mxu0 %v5654
    %6032 = vmatprep.subr.bf16.mxu0 %v5661
    %6033 = vmatpush1.bf16.msra.mxu0 %v5660
    %6034 = vmatprep.subr.bf16.mxu0 %v5667
    %6035 = vmatpush1.bf16.msra.mxu0 %v5666
    %6036 = vmatprep.subr.bf16.mxu0 %v5673
    %6037 = vmatpush1.bf16.msra.mxu0 %v5672
    %6038 = vmatprep.subr.bf16.mxu0 %v5679
    %6039 = vmatpush1.bf16.msra.mxu0 %v5678
    %6040 = vmatprep.subr.bf16.mxu0 %v5685
    %6041 = vmatpush1.bf16.msra.mxu0 %v5684
    %6042 = vmatprep.subr.bf16.mxu0 %v5691
    %6043 = vmatpush1.bf16.msra.mxu0 %v5690
    %6044 = vmatprep.subr.bf16.mxu0 %v5697
    %6045 = vmatpush1.bf16.msra.mxu0 %v5696
    %6046 = vmatprep.subr.bf16.mxu0 %v5703
    %6047 = vmatpush1.bf16.msra.mxu0 %v5702
    %6048 = vmatprep.subr.bf16.mxu0 %v5709
    %6049 = vmatpush1.bf16.msra.mxu0 %v5708
    %6050 = vmatprep.mubr.bf16.mxu0 %v5976
    %6051 = vmatmul.mubr.bf16.gmra.mrb[0].mxu0 %v5975
    %v6052 = vpop.f32.mrb[0].mxu0
    %v6053 = vadd.f32 %v5309, %v6052
    %v6054 = vpop.f32.mrb[0].mxu0
    %v6055 = vadd.f32 %v5313, %v6054
    %v6056 = vpop.f32.mrb[0].mxu0
    %v6057 = vpop.f32.mrb[0].mxu0
    %6058 = vdwg.mxu0
    %6059 = vmatprep.subr.bf16.mxu0 %v5621
    %6060 = vmatpush1.bf16.msra.mxu0 %v5620
    %6061 = vmatprep.subr.bf16.mxu0 %v5627
    %6062 = vmatpush1.bf16.msra.mxu0 %v5626
    %6063 = vmatprep.subr.bf16.mxu0 %v5633
    %6064 = vmatpush1.bf16.msra.mxu0 %v5632
    %6065 = vmatprep.subr.bf16.mxu0 %v5639
    %6066 = vmatpush1.bf16.msra.mxu0 %v5638
    %6067 = vmatprep.subr.bf16.mxu0 %v5645
    %6068 = vmatpush1.bf16.msra.mxu0 %v5644
    %6069 = vmatprep.subr.bf16.mxu0 %v5651
    %6070 = vmatpush1.bf16.msra.mxu0 %v5650
    %6071 = vmatprep.subr.bf16.mxu0 %v5657
    %6072 = vmatpush1.bf16.msra.mxu0 %v5656
    %6073 = vmatprep.subr.bf16.mxu0 %v5663
    %6074 = vmatpush1.bf16.msra.mxu0 %v5662
    %6075 = vmatprep.subr.bf16.mxu0 %v5669
    %6076 = vmatpush1.bf16.msra.mxu0 %v5668
    %6077 = vmatprep.subr.bf16.mxu0 %v5675
    %6078 = vmatpush1.bf16.msra.mxu0 %v5674
    %6079 = vmatprep.subr.bf16.mxu0 %v5681
    %6080 = vmatpush1.bf16.msra.mxu0 %v5680
    %6081 = vmatprep.subr.bf16.mxu0 %v5687
    %6082 = vmatpush1.bf16.msra.mxu0 %v5686
    %6083 = vmatprep.subr.bf16.mxu0 %v5693
    %6084 = vmatpush1.bf16.msra.mxu0 %v5692
    %6085 = vmatprep.subr.bf16.mxu0 %v5699
    %6086 = vmatpush1.bf16.msra.mxu0 %v5698
    %6087 = vmatprep.subr.bf16.mxu0 %v5705
    %6088 = vmatpush1.bf16.msra.mxu0 %v5704
    %6089 = vmatprep.subr.bf16.mxu0 %v5711
    %6090 = vmatpush1.bf16.msra.mxu0 %v5710
    %6091 = vmatprep.mubr.bf16.mxu0 %v5976
    %6092 = vmatmul.mubr.bf16.gmra.mrb[0].mxu0 %v5975
    %v6093 = vpop.f32.mrb[0].mxu0
    %v6094 = vadd.f32 %v5317, %v6093
    %v6095 = vpop.f32.mrb[0].mxu0
    %v6096 = vadd.f32 %v5321, %v6095
    %v6097 = vpop.f32.mrb[0].mxu0
    %v6098 = vpop.f32.mrb[0].mxu0
    %6099 = vdwg.mxu0
    %v6100 = vadd.f32 %v5020, %v6012
    %v6101 = vadd.f32 %v5022, %v6014
    %v6102 = vxor.u32 %v6100, 2147483648
    %v6103 = vxor.u32 %v6101, 2147483648
    %v6104 = vmul.f32 %v6102, 1.442695
    %v6105 = vpow.pop %v6104
    %v6106 = vmul.f32 %v6103, 1.442695
    %v6107 = vpow.pop %v6106
    %v6108 = vadd.f32 %v6105, 1.0
    %v6109 = vadd.f32 %v6107, 1.0
    %v6110 = vrcp.pop %v6108
    %v6111 = vmul.f32 1.0, %v6110
    %v6112 = vrcp.pop %v6109
    %v6113 = vmul.f32 1.0, %v6112
    %v6114 = vadd.f32 %v5093, %v6053
    %v6115 = vadd.f32 %v5095, %v6055
    %v6116 = vxor.u32 %v6114, 2147483648
    %v6117 = vxor.u32 %v6115, 2147483648
    %v6118 = vmul.f32 %v6116, 1.442695
    %v6119 = vpow.pop %v6118
    %v6120 = vmul.f32 %v6117, 1.442695
    %v6121 = vpow.pop %v6120
    %v6122 = vadd.f32 %v6119, 1.0
    %v6123 = vadd.f32 %v6121, 1.0
    %v6124 = vrcp.pop %v6122
    %v6125 = vmul.f32 1.0, %v6124
    %v6126 = vrcp.pop %v6123
    %v6127 = vmul.f32 1.0, %v6126
    %v6128 = vmul.f32 %v6111, %v6094
    %v6129 = vmul.f32 %v6113, %v6096
    %v6130 = vadd.f32 %v5166, %v6128
    %v6131 = vadd.f32 %v5168, %v6129
    %v6132 = vtanh.pop %v6130
    %v6133 = vtanh.pop %v6131
    %v6134 = vsub.f32 1.0, %v6125
    %v6135 = vsub.f32 1.0, %v6127
    %v6136 = vmul.f32 %v6134, %v6132
    %v6137 = vmul.f32 %v6135, %v6133
    %v6138 = vmul.f32 %v6125, %v5971
    %v6139 = vmul.f32 %v6127, %v5972
    %v6140 = vadd.f32 %v6136, %v6138
    %v6141 = vadd.f32 %v6137, %v6139
    %v6142 = vadd.f32 %v5973, %v6140
    %v6143 = vadd.f32 %v5974, %v6141
    %v6144 = vpack.c.bf16 %v6140, %v6140
    %v6145 = vpack.c.bf16 %v6141, %v6141
    %6146 = vmatprep.subr.bf16.mxu0 %v5617
    %6147 = vmatpush1.bf16.msra.mxu0 %v5616
    %6148 = vmatprep.subr.bf16.mxu0 %v5623
    %6149 = vmatpush1.bf16.msra.mxu0 %v5622
    %6150 = vmatprep.subr.bf16.mxu0 %v5629
    %6151 = vmatpush1.bf16.msra.mxu0 %v5628
    %6152 = vmatprep.subr.bf16.mxu0 %v5635
    %6153 = vmatpush1.bf16.msra.mxu0 %v5634
    %6154 = vmatprep.subr.bf16.mxu0 %v5641
    %6155 = vmatpush1.bf16.msra.mxu0 %v5640
    %6156 = vmatprep.subr.bf16.mxu0 %v5647
    %6157 = vmatpush1.bf16.msra.mxu0 %v5646
    %6158 = vmatprep.subr.bf16.mxu0 %v5653
    %6159 = vmatpush1.bf16.msra.mxu0 %v5652
    %6160 = vmatprep.subr.bf16.mxu0 %v5659
    %6161 = vmatpush1.bf16.msra.mxu0 %v5658
    %6162 = vmatprep.subr.bf16.mxu0 %v5665
    %6163 = vmatpush1.bf16.msra.mxu0 %v5664
    %6164 = vmatprep.subr.bf16.mxu0 %v5671
    %6165 = vmatpush1.bf16.msra.mxu0 %v5670
    %6166 = vmatprep.subr.bf16.mxu0 %v5677
    %6167 = vmatpush1.bf16.msra.mxu0 %v5676
    %6168 = vmatprep.subr.bf16.mxu0 %v5683
    %6169 = vmatpush1.bf16.msra.mxu0 %v5682
    %6170 = vmatprep.subr.bf16.mxu0 %v5689
    %6171 = vmatpush1.bf16.msra.mxu0 %v5688
    %6172 = vmatprep.subr.bf16.mxu0 %v5695
    %6173 = vmatpush1.bf16.msra.mxu0 %v5694
    %6174 = vmatprep.subr.bf16.mxu0 %v5701
    %6175 = vmatpush1.bf16.msra.mxu0 %v5700
    %6176 = vmatprep.subr.bf16.mxu0 %v5707
    %6177 = vmatpush1.bf16.msra.mxu0 %v5706
    %6178 = vmatprep.mubr.bf16.mxu0 %v6145
    %6179 = vmatmul.mubr.bf16.gmra.mrb[0].mxu0 %v6144
    %v6180 = vpop.f32.mrb[0].mxu0
    %v6181 = vadd.f32 %v5301, %v6180
    %v6182 = vpop.f32.mrb[0].mxu0
    %v6183 = vadd.f32 %v5305, %v6182
    %v6184 = vpop.f32.mrb[0].mxu0
    %v6185 = vpop.f32.mrb[0].mxu0
    %6186 = vdwg.mxu0
    %6187 = vmatprep.subr.bf16.mxu0 %v5619
    %6188 = vmatpush1.bf16.msra.mxu0 %v5618
    %6189 = vmatprep.subr.bf16.mxu0 %v5625
    %6190 = vmatpush1.bf16.msra.mxu0 %v5624
    %6191 = vmatprep.subr.bf16.mxu0 %v5631
    %6192 = vmatpush1.bf16.msra.mxu0 %v5630
    %6193 = vmatprep.subr.bf16.mxu0 %v5637
    %6194 = vmatpush1.bf16.msra.mxu0 %v5636
    %6195 = vmatprep.subr.bf16.mxu0 %v5643
    %6196 = vmatpush1.bf16.msra.mxu0 %v5642
    %6197 = vmatprep.subr.bf16.mxu0 %v5649
    %6198 = vmatpush1.bf16.msra.mxu0 %v5648
    %6199 = vmatprep.subr.bf16.mxu0 %v5655
    %6200 = vmatpush1.bf16.msra.mxu0 %v5654
    %6201 = vmatprep.subr.bf16.mxu0 %v5661
    %6202 = vmatpush1.bf16.msra.mxu0 %v5660
    %6203 = vmatprep.subr.bf16.mxu0 %v5667
    %6204 = vmatpush1.bf16.msra.mxu0 %v5666
    %6205 = vmatprep.subr.bf16.mxu0 %v5673
    %6206 = vmatpush1.bf16.msra.mxu0 %v5672
    %6207 = vmatprep.subr.bf16.mxu0 %v5679
    %6208 = vmatpush1.bf16.msra.mxu0 %v5678
    %6209 = vmatprep.subr.bf16.mxu0 %v5685
    %6210 = vmatpush1.bf16.msra.mxu0 %v5684
    %6211 = vmatprep.subr.bf16.mxu0 %v5691
    %6212 = vmatpush1.bf16.msra.mxu0 %v5690
    %6213 = vmatprep.subr.bf16.mxu0 %v5697
    %6214 = vmatpush1.bf16.msra.mxu0 %v5696
    %6215 = vmatprep.subr.bf16.mxu0 %v5703
    %6216 = vmatpush1.bf16.msra.mxu0 %v5702
    %6217 = vmatprep.subr.bf16.mxu0 %v5709
    %6218 = vmatpush1.bf16.msra.mxu0 %v5708
    %6219 = vmatprep.mubr.bf16.mxu0 %v6145
    %6220 = vmatmul.mubr.bf16.gmra.mrb[0].mxu0 %v6144
    %v6221 = vpop.f32.mrb[0].mxu0
    %v6222 = vadd.f32 %v5309, %v6221
    %v6223 = vpop.f32.mrb[0].mxu0
    %v6224 = vadd.f32 %v5313, %v6223
    %v6225 = vpop.f32.mrb[0].mxu0
    %v6226 = vpop.f32.mrb[0].mxu0
    %6227 = vdwg.mxu0
    %6228 = vmatprep.subr.bf16.mxu0 %v5621
    %6229 = vmatpush1.bf16.msra.mxu0 %v5620
    %6230 = vmatprep.subr.bf16.mxu0 %v5627
    %6231 = vmatpush1.bf16.msra.mxu0 %v5626
    %6232 = vmatprep.subr.bf16.mxu0 %v5633
    %6233 = vmatpush1.bf16.msra.mxu0 %v5632
    %6234 = vmatprep.subr.bf16.mxu0 %v5639
    %6235 = vmatpush1.bf16.msra.mxu0 %v5638
    %6236 = vmatprep.subr.bf16.mxu0 %v5645
    %6237 = vmatpush1.bf16.msra.mxu0 %v5644
    %6238 = vmatprep.subr.bf16.mxu0 %v5651
    %6239 = vmatpush1.bf16.msra.mxu0 %v5650
    %6240 = vmatprep.subr.bf16.mxu0 %v5657
    %6241 = vmatpush1.bf16.msra.mxu0 %v5656
    %6242 = vmatprep.subr.bf16.mxu0 %v5663
    %6243 = vmatpush1.bf16.msra.mxu0 %v5662
    %6244 = vmatprep.subr.bf16.mxu0 %v5669
    %6245 = vmatpush1.bf16.msra.mxu0 %v5668
    %6246 = vmatprep.subr.bf16.mxu0 %v5675
    %6247 = vmatpush1.bf16.msra.mxu0 %v5674
    %6248 = vmatprep.subr.bf16.mxu0 %v5681
    %6249 = vmatpush1.bf16.msra.mxu0 %v5680
    %6250 = vmatprep.subr.bf16.mxu0 %v5687
    %6251 = vmatpush1.bf16.msra.mxu0 %v5686
    %6252 = vmatprep.subr.bf16.mxu0 %v5693
    %6253 = vmatpush1.bf16.msra.mxu0 %v5692
    %6254 = vmatprep.subr.bf16.mxu0 %v5699
    %6255 = vmatpush1.bf16.msra.mxu0 %v5698
    %6256 = vmatprep.subr.bf16.mxu0 %v5705
    %6257 = vmatpush1.bf16.msra.mxu0 %v5704
    %6258 = vmatprep.subr.bf16.mxu0 %v5711
    %6259 = vmatpush1.bf16.msra.mxu0 %v5710
    %6260 = vmatprep.mubr.bf16.mxu0 %v6145
    %6261 = vmatmul.mubr.bf16.gmra.mrb[0].mxu0 %v6144
    %v6262 = vpop.f32.mrb[0].mxu0
    %v6263 = vadd.f32 %v5317, %v6262
    %v6264 = vpop.f32.mrb[0].mxu0
    %v6265 = vadd.f32 %v5321, %v6264
    %v6266 = vpop.f32.mrb[0].mxu0
    %v6267 = vpop.f32.mrb[0].mxu0
    %6268 = vdwg.mxu0
    %v6269 = vadd.f32 %v5026, %v6181
    %v6270 = vadd.f32 %v5028, %v6183
    %v6271 = vxor.u32 %v6269, 2147483648
    %v6272 = vxor.u32 %v6270, 2147483648
    %v6273 = vmul.f32 %v6271, 1.442695
    %v6274 = vpow.pop %v6273
    %v6275 = vmul.f32 %v6272, 1.442695
    %v6276 = vpow.pop %v6275
    %v6277 = vadd.f32 %v6274, 1.0
    %v6278 = vadd.f32 %v6276, 1.0
    %v6279 = vrcp.pop %v6277
    %v6280 = vmul.f32 1.0, %v6279
    %v6281 = vrcp.pop %v6278
    %v6282 = vmul.f32 1.0, %v6281
    %v6283 = vadd.f32 %v5099, %v6222
    %v6284 = vadd.f32 %v5101, %v6224
    %v6285 = vxor.u32 %v6283, 2147483648
    %v6286 = vxor.u32 %v6284, 2147483648
    %v6287 = vmul.f32 %v6285, 1.442695
    %v6288 = vpow.pop %v6287
    %v6289 = vmul.f32 %v6286, 1.442695
    %v6290 = vpow.pop %v6289
    %v6291 = vadd.f32 %v6288, 1.0
    %v6292 = vadd.f32 %v6290, 1.0
    %v6293 = vrcp.pop %v6291
    %v6294 = vmul.f32 1.0, %v6293
    %v6295 = vrcp.pop %v6292
    %v6296 = vmul.f32 1.0, %v6295
    %v6297 = vmul.f32 %v6280, %v6263
    %v6298 = vmul.f32 %v6282, %v6265
    %v6299 = vadd.f32 %v5172, %v6297
    %v6300 = vadd.f32 %v5174, %v6298
    %v6301 = vtanh.pop %v6299
    %v6302 = vtanh.pop %v6300
    %v6303 = vsub.f32 1.0, %v6294
    %v6304 = vsub.f32 1.0, %v6296
    %v6305 = vmul.f32 %v6303, %v6301
    %v6306 = vmul.f32 %v6304, %v6302
    %v6307 = vmul.f32 %v6294, %v6140
    %v6308 = vmul.f32 %v6296, %v6141
    %v6309 = vadd.f32 %v6305, %v6307
    %v6310 = vadd.f32 %v6306, %v6308
    %v6311 = vadd.f32 %v6142, %v6309
    %v6312 = vadd.f32 %v6143, %v6310
    %v6313 = vpack.c.bf16 %v6309, %v6309
    %v6314 = vpack.c.bf16 %v6310, %v6310
    %6315 = vmatprep.subr.bf16.mxu0 %v5617
    %6316 = vmatpush1.bf16.msra.mxu0 %v5616
    %6317 = vmatprep.subr.bf16.mxu0 %v5623
    %6318 = vmatpush1.bf16.msra.mxu0 %v5622
    %6319 = vmatprep.subr.bf16.mxu0 %v5629
    %6320 = vmatpush1.bf16.msra.mxu0 %v5628
    %6321 = vmatprep.subr.bf16.mxu0 %v5635
    %6322 = vmatpush1.bf16.msra.mxu0 %v5634
    %6323 = vmatprep.subr.bf16.mxu0 %v5641
    %6324 = vmatpush1.bf16.msra.mxu0 %v5640
    %6325 = vmatprep.subr.bf16.mxu0 %v5647
    %6326 = vmatpush1.bf16.msra.mxu0 %v5646
    %6327 = vmatprep.subr.bf16.mxu0 %v5653
    %6328 = vmatpush1.bf16.msra.mxu0 %v5652
    %6329 = vmatprep.subr.bf16.mxu0 %v5659
    %6330 = vmatpush1.bf16.msra.mxu0 %v5658
    %6331 = vmatprep.subr.bf16.mxu0 %v5665
    %6332 = vmatpush1.bf16.msra.mxu0 %v5664
    %6333 = vmatprep.subr.bf16.mxu0 %v5671
    %6334 = vmatpush1.bf16.msra.mxu0 %v5670
    %6335 = vmatprep.subr.bf16.mxu0 %v5677
    %6336 = vmatpush1.bf16.msra.mxu0 %v5676
    %6337 = vmatprep.subr.bf16.mxu0 %v5683
    %6338 = vmatpush1.bf16.msra.mxu0 %v5682
    %6339 = vmatprep.subr.bf16.mxu0 %v5689
    %6340 = vmatpush1.bf16.msra.mxu0 %v5688
    %6341 = vmatprep.subr.bf16.mxu0 %v5695
    %6342 = vmatpush1.bf16.msra.mxu0 %v5694
    %6343 = vmatprep.subr.bf16.mxu0 %v5701
    %6344 = vmatpush1.bf16.msra.mxu0 %v5700
    %6345 = vmatprep.subr.bf16.mxu0 %v5707
    %6346 = vmatpush1.bf16.msra.mxu0 %v5706
    %6347 = vmatprep.mubr.bf16.mxu0 %v6314
    %6348 = vmatmul.mubr.bf16.gmra.mrb[0].mxu0 %v6313
    %v6349 = vpop.f32.mrb[0].mxu0
    %v6350 = vadd.f32 %v5301, %v6349
    %v6351 = vpop.f32.mrb[0].mxu0
    %v6352 = vadd.f32 %v5305, %v6351
    %v6353 = vpop.f32.mrb[0].mxu0
    %v6354 = vpop.f32.mrb[0].mxu0
    %6355 = vdwg.mxu0
    %6356 = vmatprep.subr.bf16.mxu0 %v5619
    %6357 = vmatpush1.bf16.msra.mxu0 %v5618
    %6358 = vmatprep.subr.bf16.mxu0 %v5625
    %6359 = vmatpush1.bf16.msra.mxu0 %v5624
    %6360 = vmatprep.subr.bf16.mxu0 %v5631
    %6361 = vmatpush1.bf16.msra.mxu0 %v5630
    %6362 = vmatprep.subr.bf16.mxu0 %v5637
    %6363 = vmatpush1.bf16.msra.mxu0 %v5636
    %6364 = vmatprep.subr.bf16.mxu0 %v5643
    %6365 = vmatpush1.bf16.msra.mxu0 %v5642
    %6366 = vmatprep.subr.bf16.mxu0 %v5649
    %6367 = vmatpush1.bf16.msra.mxu0 %v5648
    %6368 = vmatprep.subr.bf16.mxu0 %v5655
    %6369 = vmatpush1.bf16.msra.mxu0 %v5654
    %6370 = vmatprep.subr.bf16.mxu0 %v5661
    %6371 = vmatpush1.bf16.msra.mxu0 %v5660
    %6372 = vmatprep.subr.bf16.mxu0 %v5667
    %6373 = vmatpush1.bf16.msra.mxu0 %v5666
    %6374 = vmatprep.subr.bf16.mxu0 %v5673
    %6375 = vmatpush1.bf16.msra.mxu0 %v5672
    %6376 = vmatprep.subr.bf16.mxu0 %v5679
    %6377 = vmatpush1.bf16.msra.mxu0 %v5678
    %6378 = vmatprep.subr.bf16.mxu0 %v5685
    %6379 = vmatpush1.bf16.msra.mxu0 %v5684
    %6380 = vmatprep.subr.bf16.mxu0 %v5691
    %6381 = vmatpush1.bf16.msra.mxu0 %v5690
    %6382 = vmatprep.subr.bf16.mxu0 %v5697
    %6383 = vmatpush1.bf16.msra.mxu0 %v5696
    %6384 = vmatprep.subr.bf16.mxu0 %v5703
    %6385 = vmatpush1.bf16.msra.mxu0 %v5702
    %6386 = vmatprep.subr.bf16.mxu0 %v5709
    %6387 = vmatpush1.bf16.msra.mxu0 %v5708
    %6388 = vmatprep.mubr.bf16.mxu0 %v6314
    %6389 = vmatmul.mubr.bf16.gmra.mrb[0].mxu0 %v6313
    %v6390 = vpop.f32.mrb[0].mxu0
    %v6391 = vadd.f32 %v5309, %v6390
    %v6392 = vpop.f32.mrb[0].mxu0
    %v6393 = vadd.f32 %v5313, %v6392
    %v6394 = vpop.f32.mrb[0].mxu0
    %v6395 = vpop.f32.mrb[0].mxu0
    %6396 = vdwg.mxu0
    %6397 = vmatprep.subr.bf16.mxu0 %v5621
    %6398 = vmatpush1.bf16.msra.mxu0 %v5620
    %6399 = vmatprep.subr.bf16.mxu0 %v5627
    %6400 = vmatpush1.bf16.msra.mxu0 %v5626
    %6401 = vmatprep.subr.bf16.mxu0 %v5633
    %6402 = vmatpush1.bf16.msra.mxu0 %v5632
    %6403 = vmatprep.subr.bf16.mxu0 %v5639
    %6404 = vmatpush1.bf16.msra.mxu0 %v5638
    %6405 = vmatprep.subr.bf16.mxu0 %v5645
    %6406 = vmatpush1.bf16.msra.mxu0 %v5644
    %6407 = vmatprep.subr.bf16.mxu0 %v5651
    %6408 = vmatpush1.bf16.msra.mxu0 %v5650
    %6409 = vmatprep.subr.bf16.mxu0 %v5657
    %6410 = vmatpush1.bf16.msra.mxu0 %v5656
    %6411 = vmatprep.subr.bf16.mxu0 %v5663
    %6412 = vmatpush1.bf16.msra.mxu0 %v5662
    %6413 = vmatprep.subr.bf16.mxu0 %v5669
    %6414 = vmatpush1.bf16.msra.mxu0 %v5668
    %6415 = vmatprep.subr.bf16.mxu0 %v5675
    %6416 = vmatpush1.bf16.msra.mxu0 %v5674
    %6417 = vmatprep.subr.bf16.mxu0 %v5681
    %6418 = vmatpush1.bf16.msra.mxu0 %v5680
    %6419 = vmatprep.subr.bf16.mxu0 %v5687
    %6420 = vmatpush1.bf16.msra.mxu0 %v5686
    %6421 = vmatprep.subr.bf16.mxu0 %v5693
    %6422 = vmatpush1.bf16.msra.mxu0 %v5692
    %6423 = vmatprep.subr.bf16.mxu0 %v5699
    %6424 = vmatpush1.bf16.msra.mxu0 %v5698
    %6425 = vmatprep.subr.bf16.mxu0 %v5705
    %6426 = vmatpush1.bf16.msra.mxu0 %v5704
    %6427 = vmatprep.subr.bf16.mxu0 %v5711
    %6428 = vmatpush1.bf16.msra.mxu0 %v5710
    %6429 = vmatprep.mubr.bf16.mxu0 %v6314
    %6430 = vmatmul.mubr.bf16.gmra.mrb[0].mxu0 %v6313
    %v6431 = vpop.f32.mrb[0].mxu0
    %v6432 = vadd.f32 %v5317, %v6431
    %v6433 = vpop.f32.mrb[0].mxu0
    %v6434 = vadd.f32 %v5321, %v6433
    %v6435 = vpop.f32.mrb[0].mxu0
    %v6436 = vpop.f32.mrb[0].mxu0
    %6437 = vdwg.mxu0
    %v6438 = vadd.f32 %v5030, %v6350
    %v6439 = vadd.f32 %v5032, %v6352
    %v6440 = vxor.u32 %v6438, 2147483648
    %v6441 = vxor.u32 %v6439, 2147483648
    %v6442 = vmul.f32 %v6440, 1.442695
    %v6443 = vpow.pop %v6442
    %v6444 = vmul.f32 %v6441, 1.442695
    %v6445 = vpow.pop %v6444
    %v6446 = vadd.f32 %v6443, 1.0
    %v6447 = vadd.f32 %v6445, 1.0
    %v6448 = vrcp.pop %v6446
    %v6449 = vmul.f32 1.0, %v6448
    %v6450 = vrcp.pop %v6447
    %v6451 = vmul.f32 1.0, %v6450
    %v6452 = vadd.f32 %v5103, %v6391
    %v6453 = vadd.f32 %v5105, %v6393
    %v6454 = vxor.u32 %v6452, 2147483648
    %v6455 = vxor.u32 %v6453, 2147483648
    %v6456 = vmul.f32 %v6454, 1.442695
    %v6457 = vpow.pop %v6456
    %v6458 = vmul.f32 %v6455, 1.442695
    %v6459 = vpow.pop %v6458
    %v6460 = vadd.f32 %v6457, 1.0
    %v6461 = vadd.f32 %v6459, 1.0
    %v6462 = vrcp.pop %v6460
    %v6463 = vmul.f32 1.0, %v6462
    %v6464 = vrcp.pop %v6461
    %v6465 = vmul.f32 1.0, %v6464
    %v6466 = vmul.f32 %v6449, %v6432
    %v6467 = vmul.f32 %v6451, %v6434
    %v6468 = vadd.f32 %v5176, %v6466
    %v6469 = vadd.f32 %v5178, %v6467
    %v6470 = vtanh.pop %v6468
    %v6471 = vtanh.pop %v6469
    %v6472 = vsub.f32 1.0, %v6463
    %v6473 = vsub.f32 1.0, %v6465
    %v6474 = vmul.f32 %v6472, %v6470
    %v6475 = vmul.f32 %v6473, %v6471
    %v6476 = vmul.f32 %v6463, %v6309
    %v6477 = vmul.f32 %v6465, %v6310
    %v6478 = vadd.f32 %v6474, %v6476
    %v6479 = vadd.f32 %v6475, %v6477
    %v6480 = vadd.f32 %v6311, %v6478
    %v6481 = vadd.f32 %v6312, %v6479
    %v6482 = vpack.c.bf16 %v6478, %v6478
    %v6483 = vpack.c.bf16 %v6479, %v6479
    %6484 = vmatprep.subr.bf16.mxu0 %v5617
    %6485 = vmatpush1.bf16.msra.mxu0 %v5616
    %6486 = vmatprep.subr.bf16.mxu0 %v5623
    %6487 = vmatpush1.bf16.msra.mxu0 %v5622
    %6488 = vmatprep.subr.bf16.mxu0 %v5629
    %6489 = vmatpush1.bf16.msra.mxu0 %v5628
    %6490 = vmatprep.subr.bf16.mxu0 %v5635
    %6491 = vmatpush1.bf16.msra.mxu0 %v5634
    %6492 = vmatprep.subr.bf16.mxu0 %v5641
    %6493 = vmatpush1.bf16.msra.mxu0 %v5640
    %6494 = vmatprep.subr.bf16.mxu0 %v5647
    %6495 = vmatpush1.bf16.msra.mxu0 %v5646
    %6496 = vmatprep.subr.bf16.mxu0 %v5653
    %6497 = vmatpush1.bf16.msra.mxu0 %v5652
    %6498 = vmatprep.subr.bf16.mxu0 %v5659
    %6499 = vmatpush1.bf16.msra.mxu0 %v5658
    %6500 = vmatprep.subr.bf16.mxu0 %v5665
    %6501 = vmatpush1.bf16.msra.mxu0 %v5664
    %6502 = vmatprep.subr.bf16.mxu0 %v5671
    %6503 = vmatpush1.bf16.msra.mxu0 %v5670
    %6504 = vmatprep.subr.bf16.mxu0 %v5677
    %6505 = vmatpush1.bf16.msra.mxu0 %v5676
    %6506 = vmatprep.subr.bf16.mxu0 %v5683
    %6507 = vmatpush1.bf16.msra.mxu0 %v5682
    %6508 = vmatprep.subr.bf16.mxu0 %v5689
    %6509 = vmatpush1.bf16.msra.mxu0 %v5688
    %6510 = vmatprep.subr.bf16.mxu0 %v5695
    %6511 = vmatpush1.bf16.msra.mxu0 %v5694
    %6512 = vmatprep.subr.bf16.mxu0 %v5701
    %6513 = vmatpush1.bf16.msra.mxu0 %v5700
    %6514 = vmatprep.subr.bf16.mxu0 %v5707
    %6515 = vmatpush1.bf16.msra.mxu0 %v5706
    %6516 = vmatprep.mubr.bf16.mxu0 %v6483
    %6517 = vmatmul.mubr.bf16.gmra.mrb[0].mxu0 %v6482
    %v6518 = vpop.f32.mrb[0].mxu0
    %v6519 = vadd.f32 %v5301, %v6518
    %v6520 = vpop.f32.mrb[0].mxu0
    %v6521 = vadd.f32 %v5305, %v6520
    %v6522 = vpop.f32.mrb[0].mxu0
    %v6523 = vpop.f32.mrb[0].mxu0
    %6524 = vdwg.mxu0
    %6525 = vmatprep.subr.bf16.mxu0 %v5619
    %6526 = vmatpush1.bf16.msra.mxu0 %v5618
    %6527 = vmatprep.subr.bf16.mxu0 %v5625
    %6528 = vmatpush1.bf16.msra.mxu0 %v5624
    %6529 = vmatprep.subr.bf16.mxu0 %v5631
    %6530 = vmatpush1.bf16.msra.mxu0 %v5630
    %6531 = vmatprep.subr.bf16.mxu0 %v5637
    %6532 = vmatpush1.bf16.msra.mxu0 %v5636
    %6533 = vmatprep.subr.bf16.mxu0 %v5643
    %6534 = vmatpush1.bf16.msra.mxu0 %v5642
    %6535 = vmatprep.subr.bf16.mxu0 %v5649
    %6536 = vmatpush1.bf16.msra.mxu0 %v5648
    %6537 = vmatprep.subr.bf16.mxu0 %v5655
    %6538 = vmatpush1.bf16.msra.mxu0 %v5654
    %6539 = vmatprep.subr.bf16.mxu0 %v5661
    %6540 = vmatpush1.bf16.msra.mxu0 %v5660
    %6541 = vmatprep.subr.bf16.mxu0 %v5667
    %6542 = vmatpush1.bf16.msra.mxu0 %v5666
    %6543 = vmatprep.subr.bf16.mxu0 %v5673
    %6544 = vmatpush1.bf16.msra.mxu0 %v5672
    %6545 = vmatprep.subr.bf16.mxu0 %v5679
    %6546 = vmatpush1.bf16.msra.mxu0 %v5678
    %6547 = vmatprep.subr.bf16.mxu0 %v5685
    %6548 = vmatpush1.bf16.msra.mxu0 %v5684
    %6549 = vmatprep.subr.bf16.mxu0 %v5691
    %6550 = vmatpush1.bf16.msra.mxu0 %v5690
    %6551 = vmatprep.subr.bf16.mxu0 %v5697
    %6552 = vmatpush1.bf16.msra.mxu0 %v5696
    %6553 = vmatprep.subr.bf16.mxu0 %v5703
    %6554 = vmatpush1.bf16.msra.mxu0 %v5702
    %6555 = vmatprep.subr.bf16.mxu0 %v5709
    %6556 = vmatpush1.bf16.msra.mxu0 %v5708
    %6557 = vmatprep.mubr.bf16.mxu0 %v6483
    %6558 = vmatmul.mubr.bf16.gmra.mrb[0].mxu0 %v6482
    %v6559 = vpop.f32.mrb[0].mxu0
    %v6560 = vadd.f32 %v5309, %v6559
    %v6561 = vpop.f32.mrb[0].mxu0
    %v6562 = vadd.f32 %v5313, %v6561
    %v6563 = vpop.f32.mrb[0].mxu0
    %v6564 = vpop.f32.mrb[0].mxu0
    %6565 = vdwg.mxu0
    %6566 = vmatprep.subr.bf16.mxu0 %v5621
    %6567 = vmatpush1.bf16.msra.mxu0 %v5620
    %6568 = vmatprep.subr.bf16.mxu0 %v5627
    %6569 = vmatpush1.bf16.msra.mxu0 %v5626
    %6570 = vmatprep.subr.bf16.mxu0 %v5633
    %6571 = vmatpush1.bf16.msra.mxu0 %v5632
    %6572 = vmatprep.subr.bf16.mxu0 %v5639
    %6573 = vmatpush1.bf16.msra.mxu0 %v5638
    %6574 = vmatprep.subr.bf16.mxu0 %v5645
    %6575 = vmatpush1.bf16.msra.mxu0 %v5644
    %6576 = vmatprep.subr.bf16.mxu0 %v5651
    %6577 = vmatpush1.bf16.msra.mxu0 %v5650
    %6578 = vmatprep.subr.bf16.mxu0 %v5657
    %6579 = vmatpush1.bf16.msra.mxu0 %v5656
    %6580 = vmatprep.subr.bf16.mxu0 %v5663
    %6581 = vmatpush1.bf16.msra.mxu0 %v5662
    %6582 = vmatprep.subr.bf16.mxu0 %v5669
    %6583 = vmatpush1.bf16.msra.mxu0 %v5668
    %6584 = vmatprep.subr.bf16.mxu0 %v5675
    %6585 = vmatpush1.bf16.msra.mxu0 %v5674
    %6586 = vmatprep.subr.bf16.mxu0 %v5681
    %6587 = vmatpush1.bf16.msra.mxu0 %v5680
    %6588 = vmatprep.subr.bf16.mxu0 %v5687
    %6589 = vmatpush1.bf16.msra.mxu0 %v5686
    %6590 = vmatprep.subr.bf16.mxu0 %v5693
    %6591 = vmatpush1.bf16.msra.mxu0 %v5692
    %6592 = vmatprep.subr.bf16.mxu0 %v5699
    %6593 = vmatpush1.bf16.msra.mxu0 %v5698
    %6594 = vmatprep.subr.bf16.mxu0 %v5705
    %6595 = vmatpush1.bf16.msra.mxu0 %v5704
    %6596 = vmatprep.subr.bf16.mxu0 %v5711
    %6597 = vmatpush1.bf16.msra.mxu0 %v5710
    %6598 = vmatprep.mubr.bf16.mxu0 %v6483
    %6599 = vmatmul.mubr.bf16.gmra.mrb[0].mxu0 %v6482
    %v6600 = vpop.f32.mrb[0].mxu0
    %v6601 = vadd.f32 %v5317, %v6600
    %v6602 = vpop.f32.mrb[0].mxu0
    %v6603 = vadd.f32 %v5321, %v6602
    %v6604 = vpop.f32.mrb[0].mxu0
    %v6605 = vpop.f32.mrb[0].mxu0
    %6606 = vdwg.mxu0
    %v6607 = vadd.f32 %v5036, %v6519
    %v6608 = vadd.f32 %v5038, %v6521
    %v6609 = vxor.u32 %v6607, 2147483648
    %v6610 = vxor.u32 %v6608, 2147483648
    %v6611 = vmul.f32 %v6609, 1.442695
    %v6612 = vpow.pop %v6611
    %v6613 = vmul.f32 %v6610, 1.442695
    %v6614 = vpow.pop %v6613
    %v6615 = vadd.f32 %v6612, 1.0
    %v6616 = vadd.f32 %v6614, 1.0
    %v6617 = vrcp.pop %v6615
    %v6618 = vmul.f32 1.0, %v6617
    %v6619 = vrcp.pop %v6616
    %v6620 = vmul.f32 1.0, %v6619
    %v6621 = vadd.f32 %v5109, %v6560
    %v6622 = vadd.f32 %v5111, %v6562
    %v6623 = vxor.u32 %v6621, 2147483648
    %v6624 = vxor.u32 %v6622, 2147483648
    %v6625 = vmul.f32 %v6623, 1.442695
    %v6626 = vpow.pop %v6625
    %v6627 = vmul.f32 %v6624, 1.442695
    %v6628 = vpow.pop %v6627
    %v6629 = vadd.f32 %v6626, 1.0
    %v6630 = vadd.f32 %v6628, 1.0
    %v6631 = vrcp.pop %v6629
    %v6632 = vmul.f32 1.0, %v6631
    %v6633 = vrcp.pop %v6630
    %v6634 = vmul.f32 1.0, %v6633
    %v6635 = vmul.f32 %v6618, %v6601
    %v6636 = vmul.f32 %v6620, %v6603
    %v6637 = vadd.f32 %v5182, %v6635
    %v6638 = vadd.f32 %v5184, %v6636
    %v6639 = vtanh.pop %v6637
    %v6640 = vtanh.pop %v6638
    %v6641 = vsub.f32 1.0, %v6632
    %v6642 = vsub.f32 1.0, %v6634
    %v6643 = vmul.f32 %v6641, %v6639
    %v6644 = vmul.f32 %v6642, %v6640
    %v6645 = vmul.f32 %v6632, %v6478
    %v6646 = vmul.f32 %v6634, %v6479
    %v6647 = vadd.f32 %v6643, %v6645
    %v6648 = vadd.f32 %v6644, %v6646
    %v6649 = vadd.f32 %v6480, %v6647
    %v6650 = vadd.f32 %v6481, %v6648
    %v6651 = vpack.c.bf16 %v6647, %v6647
    %v6652 = vpack.c.bf16 %v6648, %v6648
    %6653 = vmatprep.subr.bf16.mxu0 %v5617
    %6654 = vmatpush1.bf16.msra.mxu0 %v5616
    %6655 = vmatprep.subr.bf16.mxu0 %v5623
    %6656 = vmatpush1.bf16.msra.mxu0 %v5622
    %6657 = vmatprep.subr.bf16.mxu0 %v5629
    %6658 = vmatpush1.bf16.msra.mxu0 %v5628
    %6659 = vmatprep.subr.bf16.mxu0 %v5635
    %6660 = vmatpush1.bf16.msra.mxu0 %v5634
    %6661 = vmatprep.subr.bf16.mxu0 %v5641
    %6662 = vmatpush1.bf16.msra.mxu0 %v5640
    %6663 = vmatprep.subr.bf16.mxu0 %v5647
    %6664 = vmatpush1.bf16.msra.mxu0 %v5646
    %6665 = vmatprep.subr.bf16.mxu0 %v5653
    %6666 = vmatpush1.bf16.msra.mxu0 %v5652
    %6667 = vmatprep.subr.bf16.mxu0 %v5659
    %6668 = vmatpush1.bf16.msra.mxu0 %v5658
    %6669 = vmatprep.subr.bf16.mxu0 %v5665
    %6670 = vmatpush1.bf16.msra.mxu0 %v5664
    %6671 = vmatprep.subr.bf16.mxu0 %v5671
    %6672 = vmatpush1.bf16.msra.mxu0 %v5670
    %6673 = vmatprep.subr.bf16.mxu0 %v5677
    %6674 = vmatpush1.bf16.msra.mxu0 %v5676
    %6675 = vmatprep.subr.bf16.mxu0 %v5683
    %6676 = vmatpush1.bf16.msra.mxu0 %v5682
    %6677 = vmatprep.subr.bf16.mxu0 %v5689
    %6678 = vmatpush1.bf16.msra.mxu0 %v5688
    %6679 = vmatprep.subr.bf16.mxu0 %v5695
    %6680 = vmatpush1.bf16.msra.mxu0 %v5694
    %6681 = vmatprep.subr.bf16.mxu0 %v5701
    %6682 = vmatpush1.bf16.msra.mxu0 %v5700
    %6683 = vmatprep.subr.bf16.mxu0 %v5707
    %6684 = vmatpush1.bf16.msra.mxu0 %v5706
    %6685 = vmatprep.mubr.bf16.mxu0 %v6652
    %6686 = vmatmul.mubr.bf16.gmra.mrb[0].mxu0 %v6651
    %v6687 = vpop.f32.mrb[0].mxu0
    %v6688 = vadd.f32 %v5301, %v6687
    %v6689 = vpop.f32.mrb[0].mxu0
    %v6690 = vadd.f32 %v5305, %v6689
    %v6691 = vpop.f32.mrb[0].mxu0
    %v6692 = vpop.f32.mrb[0].mxu0
    %6693 = vdwg.mxu0
    %6694 = vmatprep.subr.bf16.mxu0 %v5619
    %6695 = vmatpush1.bf16.msra.mxu0 %v5618
    %6696 = vmatprep.subr.bf16.mxu0 %v5625
    %6697 = vmatpush1.bf16.msra.mxu0 %v5624
    %6698 = vmatprep.subr.bf16.mxu0 %v5631
    %6699 = vmatpush1.bf16.msra.mxu0 %v5630
    %6700 = vmatprep.subr.bf16.mxu0 %v5637
    %6701 = vmatpush1.bf16.msra.mxu0 %v5636
    %6702 = vmatprep.subr.bf16.mxu0 %v5643
    %6703 = vmatpush1.bf16.msra.mxu0 %v5642
    %6704 = vmatprep.subr.bf16.mxu0 %v5649
    %6705 = vmatpush1.bf16.msra.mxu0 %v5648
    %6706 = vmatprep.subr.bf16.mxu0 %v5655
    %6707 = vmatpush1.bf16.msra.mxu0 %v5654
    %6708 = vmatprep.subr.bf16.mxu0 %v5661
    %6709 = vmatpush1.bf16.msra.mxu0 %v5660
    %6710 = vmatprep.subr.bf16.mxu0 %v5667
    %6711 = vmatpush1.bf16.msra.mxu0 %v5666
    %6712 = vmatprep.subr.bf16.mxu0 %v5673
    %6713 = vmatpush1.bf16.msra.mxu0 %v5672
    %6714 = vmatprep.subr.bf16.mxu0 %v5679
    %6715 = vmatpush1.bf16.msra.mxu0 %v5678
    %6716 = vmatprep.subr.bf16.mxu0 %v5685
    %6717 = vmatpush1.bf16.msra.mxu0 %v5684
    %6718 = vmatprep.subr.bf16.mxu0 %v5691
    %6719 = vmatpush1.bf16.msra.mxu0 %v5690
    %6720 = vmatprep.subr.bf16.mxu0 %v5697
    %6721 = vmatpush1.bf16.msra.mxu0 %v5696
    %6722 = vmatprep.subr.bf16.mxu0 %v5703
    %6723 = vmatpush1.bf16.msra.mxu0 %v5702
    %6724 = vmatprep.subr.bf16.mxu0 %v5709
    %6725 = vmatpush1.bf16.msra.mxu0 %v5708
    %6726 = vmatprep.mubr.bf16.mxu0 %v6652
    %6727 = vmatmul.mubr.bf16.gmra.mrb[0].mxu0 %v6651
    %v6728 = vpop.f32.mrb[0].mxu0
    %v6729 = vadd.f32 %v5309, %v6728
    %v6730 = vpop.f32.mrb[0].mxu0
    %v6731 = vadd.f32 %v5313, %v6730
    %v6732 = vpop.f32.mrb[0].mxu0
    %v6733 = vpop.f32.mrb[0].mxu0
    %6734 = vdwg.mxu0
    %6735 = vmatprep.subr.bf16.mxu0 %v5621
    %6736 = vmatpush1.bf16.msra.mxu0 %v5620
    %6737 = vmatprep.subr.bf16.mxu0 %v5627
    %6738 = vmatpush1.bf16.msra.mxu0 %v5626
    %6739 = vmatprep.subr.bf16.mxu0 %v5633
    %6740 = vmatpush1.bf16.msra.mxu0 %v5632
    %6741 = vmatprep.subr.bf16.mxu0 %v5639
    %6742 = vmatpush1.bf16.msra.mxu0 %v5638
    %6743 = vmatprep.subr.bf16.mxu0 %v5645
    %6744 = vmatpush1.bf16.msra.mxu0 %v5644
    %6745 = vmatprep.subr.bf16.mxu0 %v5651
    %6746 = vmatpush1.bf16.msra.mxu0 %v5650
    %6747 = vmatprep.subr.bf16.mxu0 %v5657
    %6748 = vmatpush1.bf16.msra.mxu0 %v5656
    %6749 = vmatprep.subr.bf16.mxu0 %v5663
    %6750 = vmatpush1.bf16.msra.mxu0 %v5662
    %6751 = vmatprep.subr.bf16.mxu0 %v5669
    %6752 = vmatpush1.bf16.msra.mxu0 %v5668
    %6753 = vmatprep.subr.bf16.mxu0 %v5675
    %6754 = vmatpush1.bf16.msra.mxu0 %v5674
    %6755 = vmatprep.subr.bf16.mxu0 %v5681
    %6756 = vmatpush1.bf16.msra.mxu0 %v5680
    %6757 = vmatprep.subr.bf16.mxu0 %v5687
    %6758 = vmatpush1.bf16.msra.mxu0 %v5686
    %6759 = vmatprep.subr.bf16.mxu0 %v5693
    %6760 = vmatpush1.bf16.msra.mxu0 %v5692
    %6761 = vmatprep.subr.bf16.mxu0 %v5699
    %6762 = vmatpush1.bf16.msra.mxu0 %v5698
    %6763 = vmatprep.subr.bf16.mxu0 %v5705
    %6764 = vmatpush1.bf16.msra.mxu0 %v5704
    %6765 = vmatprep.subr.bf16.mxu0 %v5711
    %6766 = vmatpush1.bf16.msra.mxu0 %v5710
    %6767 = vmatprep.mubr.bf16.mxu0 %v6652
    %6768 = vmatmul.mubr.bf16.gmra.mrb[0].mxu0 %v6651
    %v6769 = vpop.f32.mrb[0].mxu0
    %v6770 = vadd.f32 %v5317, %v6769
    %v6771 = vpop.f32.mrb[0].mxu0
    %v6772 = vadd.f32 %v5321, %v6771
    %v6773 = vpop.f32.mrb[0].mxu0
    %v6774 = vpop.f32.mrb[0].mxu0
    %6775 = vdwg.mxu0
    %v6776 = vadd.f32 %v5040, %v6688
    %v6777 = vadd.f32 %v5042, %v6690
    %v6778 = vxor.u32 %v6776, 2147483648
    %v6779 = vxor.u32 %v6777, 2147483648
    %v6780 = vmul.f32 %v6778, 1.442695
    %v6781 = vpow.pop %v6780
    %v6782 = vmul.f32 %v6779, 1.442695
    %v6783 = vpow.pop %v6782
    %v6784 = vadd.f32 %v6781, 1.0
    %v6785 = vadd.f32 %v6783, 1.0
    %v6786 = vrcp.pop %v6784
    %v6787 = vmul.f32 1.0, %v6786
    %v6788 = vrcp.pop %v6785
    %v6789 = vmul.f32 1.0, %v6788
    %v6790 = vadd.f32 %v5113, %v6729
    %v6791 = vadd.f32 %v5115, %v6731
    %v6792 = vxor.u32 %v6790, 2147483648
    %v6793 = vxor.u32 %v6791, 2147483648
    %v6794 = vmul.f32 %v6792, 1.442695
    %v6795 = vpow.pop %v6794
    %v6796 = vmul.f32 %v6793, 1.442695
    %v6797 = vpow.pop %v6796
    %v6798 = vadd.f32 %v6795, 1.0
    %v6799 = vadd.f32 %v6797, 1.0
    %v6800 = vrcp.pop %v6798
    %v6801 = vmul.f32 1.0, %v6800
    %v6802 = vrcp.pop %v6799
    %v6803 = vmul.f32 1.0, %v6802
    %v6804 = vmul.f32 %v6787, %v6770
    %v6805 = vmul.f32 %v6789, %v6772
    %v6806 = vadd.f32 %v5186, %v6804
    %v6807 = vadd.f32 %v5188, %v6805
    %v6808 = vtanh.pop %v6806
    %v6809 = vtanh.pop %v6807
    %v6810 = vsub.f32 1.0, %v6801
    %v6811 = vsub.f32 1.0, %v6803
    %v6812 = vmul.f32 %v6810, %v6808
    %v6813 = vmul.f32 %v6811, %v6809
    %v6814 = vmul.f32 %v6801, %v6647
    %v6815 = vmul.f32 %v6803, %v6648
    %v6816 = vadd.f32 %v6812, %v6814
    %v6817 = vadd.f32 %v6813, %v6815
    %v6818 = vadd.f32 %v6649, %v6816
    %v6819 = vadd.f32 %v6650, %v6817
    %v6820 = vpack.c.bf16 %v6816, %v6816
    %v6821 = vpack.c.bf16 %v6817, %v6817
    %6822 = vmatprep.subr.bf16.mxu0 %v5617
    %6823 = vmatpush1.bf16.msra.mxu0 %v5616
    %6824 = vmatprep.subr.bf16.mxu0 %v5623
    %6825 = vmatpush1.bf16.msra.mxu0 %v5622
    %6826 = vmatprep.subr.bf16.mxu0 %v5629
    %6827 = vmatpush1.bf16.msra.mxu0 %v5628
    %6828 = vmatprep.subr.bf16.mxu0 %v5635
    %6829 = vmatpush1.bf16.msra.mxu0 %v5634
    %6830 = vmatprep.subr.bf16.mxu0 %v5641
    %6831 = vmatpush1.bf16.msra.mxu0 %v5640
    %6832 = vmatprep.subr.bf16.mxu0 %v5647
    %6833 = vmatpush1.bf16.msra.mxu0 %v5646
    %6834 = vmatprep.subr.bf16.mxu0 %v5653
    %6835 = vmatpush1.bf16.msra.mxu0 %v5652
    %6836 = vmatprep.subr.bf16.mxu0 %v5659
    %6837 = vmatpush1.bf16.msra.mxu0 %v5658
    %6838 = vmatprep.subr.bf16.mxu0 %v5665
    %6839 = vmatpush1.bf16.msra.mxu0 %v5664
    %6840 = vmatprep.subr.bf16.mxu0 %v5671
    %6841 = vmatpush1.bf16.msra.mxu0 %v5670
    %6842 = vmatprep.subr.bf16.mxu0 %v5677
    %6843 = vmatpush1.bf16.msra.mxu0 %v5676
    %6844 = vmatprep.subr.bf16.mxu0 %v5683
    %6845 = vmatpush1.bf16.msra.mxu0 %v5682
    %6846 = vmatprep.subr.bf16.mxu0 %v5689
    %6847 = vmatpush1.bf16.msra.mxu0 %v5688
    %6848 = vmatprep.subr.bf16.mxu0 %v5695
    %6849 = vmatpush1.bf16.msra.mxu0 %v5694
    %6850 = vmatprep.subr.bf16.mxu0 %v5701
    %6851 = vmatpush1.bf16.msra.mxu0 %v5700
    %6852 = vmatprep.subr.bf16.mxu0 %v5707
    %6853 = vmatpush1.bf16.msra.mxu0 %v5706
    %6854 = vmatprep.mubr.bf16.mxu0 %v6821
    %6855 = vmatmul.mubr.bf16.gmra.mrb[0].mxu0 %v6820
    %v6856 = vpop.f32.mrb[0].mxu0
    %v6857 = vadd.f32 %v5301, %v6856
    %v6858 = vpop.f32.mrb[0].mxu0
    %v6859 = vadd.f32 %v5305, %v6858
    %v6860 = vpop.f32.mrb[0].mxu0
    %v6861 = vpop.f32.mrb[0].mxu0
    %6862 = vdwg.mxu0
    %6863 = vmatprep.subr.bf16.mxu0 %v5619
    %6864 = vmatpush1.bf16.msra.mxu0 %v5618
    %6865 = vmatprep.subr.bf16.mxu0 %v5625
    %6866 = vmatpush1.bf16.msra.mxu0 %v5624
    %6867 = vmatprep.subr.bf16.mxu0 %v5631
    %6868 = vmatpush1.bf16.msra.mxu0 %v5630
    %6869 = vmatprep.subr.bf16.mxu0 %v5637
    %6870 = vmatpush1.bf16.msra.mxu0 %v5636
    %6871 = vmatprep.subr.bf16.mxu0 %v5643
    %6872 = vmatpush1.bf16.msra.mxu0 %v5642
    %6873 = vmatprep.subr.bf16.mxu0 %v5649
    %6874 = vmatpush1.bf16.msra.mxu0 %v5648
    %6875 = vmatprep.subr.bf16.mxu0 %v5655
    %6876 = vmatpush1.bf16.msra.mxu0 %v5654
    %6877 = vmatprep.subr.bf16.mxu0 %v5661
    %6878 = vmatpush1.bf16.msra.mxu0 %v5660
    %6879 = vmatprep.subr.bf16.mxu0 %v5667
    %6880 = vmatpush1.bf16.msra.mxu0 %v5666
    %6881 = vmatprep.subr.bf16.mxu0 %v5673
    %6882 = vmatpush1.bf16.msra.mxu0 %v5672
    %6883 = vmatprep.subr.bf16.mxu0 %v5679
    %6884 = vmatpush1.bf16.msra.mxu0 %v5678
    %6885 = vmatprep.subr.bf16.mxu0 %v5685
    %6886 = vmatpush1.bf16.msra.mxu0 %v5684
    %6887 = vmatprep.subr.bf16.mxu0 %v5691
    %6888 = vmatpush1.bf16.msra.mxu0 %v5690
    %6889 = vmatprep.subr.bf16.mxu0 %v5697
    %6890 = vmatpush1.bf16.msra.mxu0 %v5696
    %6891 = vmatprep.subr.bf16.mxu0 %v5703
    %6892 = vmatpush1.bf16.msra.mxu0 %v5702
    %6893 = vmatprep.subr.bf16.mxu0 %v5709
    %6894 = vmatpush1.bf16.msra.mxu0 %v5708
    %6895 = vmatprep.mubr.bf16.mxu0 %v6821
    %6896 = vmatmul.mubr.bf16.gmra.mrb[0].mxu0 %v6820
    %v6897 = vpop.f32.mrb[0].mxu0
    %v6898 = vadd.f32 %v5309, %v6897
    %v6899 = vpop.f32.mrb[0].mxu0
    %v6900 = vadd.f32 %v5313, %v6899
    %v6901 = vpop.f32.mrb[0].mxu0
    %v6902 = vpop.f32.mrb[0].mxu0
    %6903 = vdwg.mxu0
    %6904 = vmatprep.subr.bf16.mxu0 %v5621
    %6905 = vmatpush1.bf16.msra.mxu0 %v5620
    %6906 = vmatprep.subr.bf16.mxu0 %v5627
    %6907 = vmatpush1.bf16.msra.mxu0 %v5626
    %6908 = vmatprep.subr.bf16.mxu0 %v5633
    %6909 = vmatpush1.bf16.msra.mxu0 %v5632
    %6910 = vmatprep.subr.bf16.mxu0 %v5639
    %6911 = vmatpush1.bf16.msra.mxu0 %v5638
    %6912 = vmatprep.subr.bf16.mxu0 %v5645
    %6913 = vmatpush1.bf16.msra.mxu0 %v5644
    %6914 = vmatprep.subr.bf16.mxu0 %v5651
    %6915 = vmatpush1.bf16.msra.mxu0 %v5650
    %6916 = vmatprep.subr.bf16.mxu0 %v5657
    %6917 = vmatpush1.bf16.msra.mxu0 %v5656
    %6918 = vmatprep.subr.bf16.mxu0 %v5663
    %6919 = vmatpush1.bf16.msra.mxu0 %v5662
    %6920 = vmatprep.subr.bf16.mxu0 %v5669
    %6921 = vmatpush1.bf16.msra.mxu0 %v5668
    %6922 = vmatprep.subr.bf16.mxu0 %v5675
    %6923 = vmatpush1.bf16.msra.mxu0 %v5674
    %6924 = vmatprep.subr.bf16.mxu0 %v5681
    %6925 = vmatpush1.bf16.msra.mxu0 %v5680
    %6926 = vmatprep.subr.bf16.mxu0 %v5687
    %6927 = vmatpush1.bf16.msra.mxu0 %v5686
    %6928 = vmatprep.subr.bf16.mxu0 %v5693
    %6929 = vmatpush1.bf16.msra.mxu0 %v5692
    %6930 = vmatprep.subr.bf16.mxu0 %v5699
    %6931 = vmatpush1.bf16.msra.mxu0 %v5698
    %6932 = vmatprep.subr.bf16.mxu0 %v5705
    %6933 = vmatpush1.bf16.msra.mxu0 %v5704
    %6934 = vmatprep.subr.bf16.mxu0 %v5711
    %6935 = vmatpush1.bf16.msra.mxu0 %v5710
    %6936 = vmatprep.mubr.bf16.mxu0 %v6821
    %6937 = vmatmul.mubr.bf16.gmra.mrb[0].mxu0 %v6820
    %v6938 = vpop.f32.mrb[0].mxu0
    %v6939 = vadd.f32 %v5317, %v6938
    %v6940 = vpop.f32.mrb[0].mxu0
    %v6941 = vadd.f32 %v5321, %v6940
    %v6942 = vpop.f32.mrb[0].mxu0
    %v6943 = vpop.f32.mrb[0].mxu0
    %6944 = vdwg.mxu0
    %v6945 = vadd.f32 %v5046, %v6857
    %v6946 = vadd.f32 %v5048, %v6859
    %v6947 = vxor.u32 %v6945, 2147483648
    %v6948 = vxor.u32 %v6946, 2147483648
    %v6949 = vmul.f32 %v6947, 1.442695
    %v6950 = vpow.pop %v6949
    %v6951 = vmul.f32 %v6948, 1.442695
    %v6952 = vpow.pop %v6951
    %v6953 = vadd.f32 %v6950, 1.0
    %v6954 = vadd.f32 %v6952, 1.0
    %v6955 = vrcp.pop %v6953
    %v6956 = vmul.f32 1.0, %v6955
    %v6957 = vrcp.pop %v6954
    %v6958 = vmul.f32 1.0, %v6957
    %v6959 = vadd.f32 %v5119, %v6898
    %v6960 = vadd.f32 %v5121, %v6900
    %v6961 = vxor.u32 %v6959, 2147483648
    %v6962 = vxor.u32 %v6960, 2147483648
    %v6963 = vmul.f32 %v6961, 1.442695
    %v6964 = vpow.pop %v6963
    %v6965 = vmul.f32 %v6962, 1.442695
    %v6966 = vpow.pop %v6965
    %v6967 = vadd.f32 %v6964, 1.0
    %v6968 = vadd.f32 %v6966, 1.0
    %v6969 = vrcp.pop %v6967
    %v6970 = vmul.f32 1.0, %v6969
    %v6971 = vrcp.pop %v6968
    %v6972 = vmul.f32 1.0, %v6971
    %v6973 = vmul.f32 %v6956, %v6939
    %v6974 = vmul.f32 %v6958, %v6941
    %v6975 = vadd.f32 %v5192, %v6973
    %v6976 = vadd.f32 %v5194, %v6974
    %v6977 = vtanh.pop %v6975
    %v6978 = vtanh.pop %v6976
    %v6979 = vsub.f32 1.0, %v6970
    %v6980 = vsub.f32 1.0, %v6972
    %v6981 = vmul.f32 %v6979, %v6977
    %v6982 = vmul.f32 %v6980, %v6978
    %v6983 = vmul.f32 %v6970, %v6816
    %v6984 = vmul.f32 %v6972, %v6817
    %v6985 = vadd.f32 %v6981, %v6983
    %v6986 = vadd.f32 %v6982, %v6984
    %v6987 = vadd.f32 %v6818, %v6985
    %v6988 = vadd.f32 %v6819, %v6986
    %v6989 = vpack.c.bf16 %v6985, %v6985
    %v6990 = vpack.c.bf16 %v6986, %v6986
    %6991 = vmatprep.subr.bf16.mxu0 %v5617
    %6992 = vmatpush1.bf16.msra.mxu0 %v5616
    %6993 = vmatprep.subr.bf16.mxu0 %v5623
    %6994 = vmatpush1.bf16.msra.mxu0 %v5622
    %6995 = vmatprep.subr.bf16.mxu0 %v5629
    %6996 = vmatpush1.bf16.msra.mxu0 %v5628
    %6997 = vmatprep.subr.bf16.mxu0 %v5635
    %6998 = vmatpush1.bf16.msra.mxu0 %v5634
    %6999 = vmatprep.subr.bf16.mxu0 %v5641
    %7000 = vmatpush1.bf16.msra.mxu0 %v5640
    %7001 = vmatprep.subr.bf16.mxu0 %v5647
    %7002 = vmatpush1.bf16.msra.mxu0 %v5646
    %7003 = vmatprep.subr.bf16.mxu0 %v5653
    %7004 = vmatpush1.bf16.msra.mxu0 %v5652
    %7005 = vmatprep.subr.bf16.mxu0 %v5659
    %7006 = vmatpush1.bf16.msra.mxu0 %v5658
    %7007 = vmatprep.subr.bf16.mxu0 %v5665
    %7008 = vmatpush1.bf16.msra.mxu0 %v5664
    %7009 = vmatprep.subr.bf16.mxu0 %v5671
    %7010 = vmatpush1.bf16.msra.mxu0 %v5670
    %7011 = vmatprep.subr.bf16.mxu0 %v5677
    %7012 = vmatpush1.bf16.msra.mxu0 %v5676
    %7013 = vmatprep.subr.bf16.mxu0 %v5683
    %7014 = vmatpush1.bf16.msra.mxu0 %v5682
    %7015 = vmatprep.subr.bf16.mxu0 %v5689
    %7016 = vmatpush1.bf16.msra.mxu0 %v5688
    %7017 = vmatprep.subr.bf16.mxu0 %v5695
    %7018 = vmatpush1.bf16.msra.mxu0 %v5694
    %7019 = vmatprep.subr.bf16.mxu0 %v5701
    %7020 = vmatpush1.bf16.msra.mxu0 %v5700
    %7021 = vmatprep.subr.bf16.mxu0 %v5707
    %7022 = vmatpush1.bf16.msra.mxu0 %v5706
    %7023 = vmatprep.mubr.bf16.mxu0 %v6990
    %7024 = vmatmul.mubr.bf16.gmra.mrb[0].mxu0 %v6989
    %v7025 = vpop.f32.mrb[0].mxu0
    %v7026 = vadd.f32 %v5301, %v7025
    %v7027 = vpop.f32.mrb[0].mxu0
    %v7028 = vadd.f32 %v5305, %v7027
    %v7029 = vpop.f32.mrb[0].mxu0
    %v7030 = vpop.f32.mrb[0].mxu0
    %7031 = vdwg.mxu0
    %7032 = vmatprep.subr.bf16.mxu0 %v5619
    %7033 = vmatpush1.bf16.msra.mxu0 %v5618
    %7034 = vmatprep.subr.bf16.mxu0 %v5625
    %7035 = vmatpush1.bf16.msra.mxu0 %v5624
    %7036 = vmatprep.subr.bf16.mxu0 %v5631
    %7037 = vmatpush1.bf16.msra.mxu0 %v5630
    %7038 = vmatprep.subr.bf16.mxu0 %v5637
    %7039 = vmatpush1.bf16.msra.mxu0 %v5636
    %7040 = vmatprep.subr.bf16.mxu0 %v5643
    %7041 = vmatpush1.bf16.msra.mxu0 %v5642
    %7042 = vmatprep.subr.bf16.mxu0 %v5649
    %7043 = vmatpush1.bf16.msra.mxu0 %v5648
    %7044 = vmatprep.subr.bf16.mxu0 %v5655
    %7045 = vmatpush1.bf16.msra.mxu0 %v5654
    %7046 = vmatprep.subr.bf16.mxu0 %v5661
    %7047 = vmatpush1.bf16.msra.mxu0 %v5660
    %7048 = vmatprep.subr.bf16.mxu0 %v5667
    %7049 = vmatpush1.bf16.msra.mxu0 %v5666
    %7050 = vmatprep.subr.bf16.mxu0 %v5673
    %7051 = vmatpush1.bf16.msra.mxu0 %v5672
    %7052 = vmatprep.subr.bf16.mxu0 %v5679
    %7053 = vmatpush1.bf16.msra.mxu0 %v5678
    %7054 = vmatprep.subr.bf16.mxu0 %v5685
    %7055 = vmatpush1.bf16.msra.mxu0 %v5684
    %7056 = vmatprep.subr.bf16.mxu0 %v5691
    %7057 = vmatpush1.bf16.msra.mxu0 %v5690
    %7058 = vmatprep.subr.bf16.mxu0 %v5697
    %7059 = vmatpush1.bf16.msra.mxu0 %v5696
    %7060 = vmatprep.subr.bf16.mxu0 %v5703
    %7061 = vmatpush1.bf16.msra.mxu0 %v5702
    %7062 = vmatprep.subr.bf16.mxu0 %v5709
    %7063 = vmatpush1.bf16.msra.mxu0 %v5708
    %7064 = vmatprep.mubr.bf16.mxu0 %v6990
    %7065 = vmatmul.mubr.bf16.gmra.mrb[0].mxu0 %v6989
    %v7066 = vpop.f32.mrb[0].mxu0
    %v7067 = vadd.f32 %v5309, %v7066
    %v7068 = vpop.f32.mrb[0].mxu0
    %v7069 = vadd.f32 %v5313, %v7068
    %v7070 = vpop.f32.mrb[0].mxu0
    %v7071 = vpop.f32.mrb[0].mxu0
    %7072 = vdwg.mxu0
    %7073 = vmatprep.subr.bf16.mxu0 %v5621
    %7074 = vmatpush1.bf16.msra.mxu0 %v5620
    %7075 = vmatprep.subr.bf16.mxu0 %v5627
    %7076 = vmatpush1.bf16.msra.mxu0 %v5626
    %7077 = vmatprep.subr.bf16.mxu0 %v5633
    %7078 = vmatpush1.bf16.msra.mxu0 %v5632
    %7079 = vmatprep.subr.bf16.mxu0 %v5639
    %7080 = vmatpush1.bf16.msra.mxu0 %v5638
    %7081 = vmatprep.subr.bf16.mxu0 %v5645
    %7082 = vmatpush1.bf16.msra.mxu0 %v5644
    %7083 = vmatprep.subr.bf16.mxu0 %v5651
    %7084 = vmatpush1.bf16.msra.mxu0 %v5650
    %7085 = vmatprep.subr.bf16.mxu0 %v5657
    %7086 = vmatpush1.bf16.msra.mxu0 %v5656
    %7087 = vmatprep.subr.bf16.mxu0 %v5663
    %7088 = vmatpush1.bf16.msra.mxu0 %v5662
    %7089 = vmatprep.subr.bf16.mxu0 %v5669
    %7090 = vmatpush1.bf16.msra.mxu0 %v5668
    %7091 = vmatprep.subr.bf16.mxu0 %v5675
    %7092 = vmatpush1.bf16.msra.mxu0 %v5674
    %7093 = vmatprep.subr.bf16.mxu0 %v5681
    %7094 = vmatpush1.bf16.msra.mxu0 %v5680
    %7095 = vmatprep.subr.bf16.mxu0 %v5687
    %7096 = vmatpush1.bf16.msra.mxu0 %v5686
    %7097 = vmatprep.subr.bf16.mxu0 %v5693
    %7098 = vmatpush1.bf16.msra.mxu0 %v5692
    %7099 = vmatprep.subr.bf16.mxu0 %v5699
    %7100 = vmatpush1.bf16.msra.mxu0 %v5698
    %7101 = vmatprep.subr.bf16.mxu0 %v5705
    %7102 = vmatpush1.bf16.msra.mxu0 %v5704
    %7103 = vmatprep.subr.bf16.mxu0 %v5711
    %7104 = vmatpush1.bf16.msra.mxu0 %v5710
    %7105 = vmatprep.mubr.bf16.mxu0 %v6990
    %7106 = vmatmul.mubr.bf16.gmra.mrb[0].mxu0 %v6989
    %v7107 = vpop.f32.mrb[0].mxu0
    %v7108 = vadd.f32 %v5317, %v7107
    %v7109 = vpop.f32.mrb[0].mxu0
    %v7110 = vadd.f32 %v5321, %v7109
    %v7111 = vpop.f32.mrb[0].mxu0
    %v7112 = vpop.f32.mrb[0].mxu0
    %7113 = vdwg.mxu0
    %v7114 = vadd.f32 %v5050, %v7026
    %v7115 = vadd.f32 %v5052, %v7028
    %v7116 = vxor.u32 %v7114, 2147483648
    %v7117 = vxor.u32 %v7115, 2147483648
    %v7118 = vmul.f32 %v7116, 1.442695
    %v7119 = vpow.pop %v7118
    %v7120 = vmul.f32 %v7117, 1.442695
    %v7121 = vpow.pop %v7120
    %v7122 = vadd.f32 %v7119, 1.0
    %v7123 = vadd.f32 %v7121, 1.0
    %v7124 = vrcp.pop %v7122
    %v7125 = vmul.f32 1.0, %v7124
    %v7126 = vrcp.pop %v7123
    %v7127 = vmul.f32 1.0, %v7126
    %v7128 = vadd.f32 %v5123, %v7067
    %v7129 = vadd.f32 %v5125, %v7069
    %v7130 = vxor.u32 %v7128, 2147483648
    %v7131 = vxor.u32 %v7129, 2147483648
    %v7132 = vmul.f32 %v7130, 1.442695
    %v7133 = vpow.pop %v7132
    %v7134 = vmul.f32 %v7131, 1.442695
    %v7135 = vpow.pop %v7134
    %v7136 = vadd.f32 %v7133, 1.0
    %v7137 = vadd.f32 %v7135, 1.0
    %v7138 = vrcp.pop %v7136
    %v7139 = vmul.f32 1.0, %v7138
    %v7140 = vrcp.pop %v7137
    %v7141 = vmul.f32 1.0, %v7140
    %v7142 = vmul.f32 %v7125, %v7108
    %v7143 = vmul.f32 %v7127, %v7110
    %v7144 = vadd.f32 %v5196, %v7142
    %v7145 = vadd.f32 %v5198, %v7143
    %v7146 = vtanh.pop %v7144
    %v7147 = vtanh.pop %v7145
    %v7148 = vsub.f32 1.0, %v7139
    %v7149 = vsub.f32 1.0, %v7141
    %v7150 = vmul.f32 %v7148, %v7146
    %v7151 = vmul.f32 %v7149, %v7147
    %v7152 = vmul.f32 %v7139, %v6985
    %v7153 = vmul.f32 %v7141, %v6986
    %v7154 = vadd.f32 %v7150, %v7152
    %v7155 = vadd.f32 %v7151, %v7153
    %v7156 = vadd.f32 %v6987, %v7154
    %v7157 = vadd.f32 %v6988, %v7155
    %v7158 = vmul.f32 %v7156, 0.125
    %v7159 = vmul.f32 %v7157, 0.125
    %v7160 = vpack.c.bf16 %v7158, %v7158
    %v7161 = vpack.c.bf16 %v7159, %v7159
    %v7162 = vld [vmem:[%s20] sm:$0xf]
    %v7163 = vld [vmem:[%s20 + $0x4] sm:$0xf]
    %v7164 = vld [vmem:[%s20 + $0x8] sm:$0xf]
    %v7165 = vld [vmem:[%s20 + $0xc] sm:$0xf]
    %v7166 = vld [vmem:[%s20 + $0x10] sm:$0xf]
    %v7167 = vld [vmem:[%s20 + $0x14] sm:$0xf]
    %v7168 = vld [vmem:[%s20 + $0x18] sm:$0xf]
    %v7169 = vld [vmem:[%s20 + $0x1c] sm:$0xf]
    %v7170 = vld [vmem:[%s20 + $0x20] sm:$0xf]
    %v7171 = vld [vmem:[%s20 + $0x24] sm:$0xf]
    %v7172 = vld [vmem:[%s20 + $0x28] sm:$0xf]
    %v7173 = vld [vmem:[%s20 + $0x2c] sm:$0xf]
    %v7174 = vld [vmem:[%s20 + $0x30] sm:$0xf]
    %v7175 = vld [vmem:[%s20 + $0x34] sm:$0xf]
    %v7176 = vld [vmem:[%s20 + $0x38] sm:$0xf]
    %v7177 = vld [vmem:[%s20 + $0x3c] sm:$0xf]
    %v7178 = vld [vmem:[%s20 + $0x40] sm:$0xf]
    %v7179 = vld [vmem:[%s20 + $0x44] sm:$0xf]
    %v7180 = vld [vmem:[%s20 + $0x48] sm:$0xf]
    %v7181 = vld [vmem:[%s20 + $0x4c] sm:$0xf]
    %v7182 = vld [vmem:[%s20 + $0x50] sm:$0xf]
    %v7183 = vld [vmem:[%s20 + $0x54] sm:$0xf]
    %v7184 = vld [vmem:[%s20 + $0x58] sm:$0xf]
    %v7185 = vld [vmem:[%s20 + $0x5c] sm:$0xf]
    %v7186 = vld [vmem:[%s20 + $0x60] sm:$0xf]
    %v7187 = vld [vmem:[%s20 + $0x64] sm:$0xf]
    %v7188 = vld [vmem:[%s20 + $0x68] sm:$0xf]
    %v7189 = vld [vmem:[%s20 + $0x6c] sm:$0xf]
    %v7190 = vld [vmem:[%s20 + $0x70] sm:$0xf]
    %v7191 = vld [vmem:[%s20 + $0x74] sm:$0xf]
    %v7192 = vld [vmem:[%s20 + $0x78] sm:$0xf]
    %v7193 = vld [vmem:[%s20 + $0x7c] sm:$0xf]
    %v7194 = vld [vmem:[%s21] sm:$0x1]
    %v7196 = vlaneseq
    %v7197 = vshrl.u32 %v7196, 7
    %v7198 = vsub.s32 0, %v7197
    %v7199 = vrot.slane %v7194, %v7198
    %v7233 = vunpack.c.l.b16 %v7162
    %v7234 = vunpack.c.l.b16 %v7163
    %v7235 = vunpack.c.l.b16 %v7164
    %v7236 = vunpack.c.l.b16 %v7165
    %v7237 = vunpack.c.l.b16 %v7166
    %v7238 = vunpack.c.l.b16 %v7167
    %v7239 = vunpack.c.l.b16 %v7168
    %v7240 = vunpack.c.l.b16 %v7169
    %v7241 = vunpack.c.l.b16 %v7170
    %v7242 = vunpack.c.l.b16 %v7171
    %v7243 = vunpack.c.l.b16 %v7172
    %v7244 = vunpack.c.l.b16 %v7173
    %v7245 = vunpack.c.l.b16 %v7174
    %v7246 = vunpack.c.l.b16 %v7175
    %v7247 = vunpack.c.l.b16 %v7176
    %v7248 = vunpack.c.l.b16 %v7177
    %v7249 = vunpack.c.l.b16 %v7178
    %v7250 = vunpack.c.l.b16 %v7179
    %v7251 = vunpack.c.l.b16 %v7180
    %v7252 = vunpack.c.l.b16 %v7181
    %v7253 = vunpack.c.l.b16 %v7182
    %v7254 = vunpack.c.l.b16 %v7183
    %v7255 = vunpack.c.l.b16 %v7184
    %v7256 = vunpack.c.l.b16 %v7185
    %v7257 = vunpack.c.l.b16 %v7186
    %v7258 = vunpack.c.l.b16 %v7187
    %v7259 = vunpack.c.l.b16 %v7188
    %v7260 = vunpack.c.l.b16 %v7189
    %v7261 = vunpack.c.l.b16 %v7190
    %v7262 = vunpack.c.l.b16 %v7191
    %v7263 = vunpack.c.l.b16 %v7192
    %v7264 = vunpack.c.l.b16 %v7193
    %v7265 = vpack.c.b16 %v7234, %v7233
    %v7266 = vpack.c.b16 %v7236, %v7235
    %v7267 = vpack.c.b16 %v7238, %v7237
    %v7268 = vpack.c.b16 %v7240, %v7239
    %v7269 = vpack.c.b16 %v7242, %v7241
    %v7270 = vpack.c.b16 %v7244, %v7243
    %v7271 = vpack.c.b16 %v7246, %v7245
    %v7272 = vpack.c.b16 %v7248, %v7247
    %v7273 = vpack.c.b16 %v7250, %v7249
    %v7274 = vpack.c.b16 %v7252, %v7251
    %v7275 = vpack.c.b16 %v7254, %v7253
    %v7276 = vpack.c.b16 %v7256, %v7255
    %v7277 = vpack.c.b16 %v7258, %v7257
    %v7278 = vpack.c.b16 %v7260, %v7259
    %v7279 = vpack.c.b16 %v7262, %v7261
    %v7280 = vpack.c.b16 %v7264, %v7263
    %7297 = vmatprep.subr.bf16.mxu0 0
    %7298 = vmatpush1.bf16.msra.mxu0 %v7265
    %7299 = vmatprep.subr.bf16.mxu0 0
    %7300 = vmatpush1.bf16.msra.mxu0 %v7266
    %7301 = vmatprep.subr.bf16.mxu0 0
    %7302 = vmatpush1.bf16.msra.mxu0 %v7267
    %7303 = vmatprep.subr.bf16.mxu0 0
    %7304 = vmatpush1.bf16.msra.mxu0 %v7268
    %7305 = vmatprep.subr.bf16.mxu0 0
    %7306 = vmatpush1.bf16.msra.mxu0 %v7269
    %7307 = vmatprep.subr.bf16.mxu0 0
    %7308 = vmatpush1.bf16.msra.mxu0 %v7270
    %7309 = vmatprep.subr.bf16.mxu0 0
    %7310 = vmatpush1.bf16.msra.mxu0 %v7271
    %7311 = vmatprep.subr.bf16.mxu0 0
    %7312 = vmatpush1.bf16.msra.mxu0 %v7272
    %7313 = vmatprep.subr.bf16.mxu0 0
    %7314 = vmatpush1.bf16.msra.mxu0 %v7273
    %7315 = vmatprep.subr.bf16.mxu0 0
    %7316 = vmatpush1.bf16.msra.mxu0 %v7274
    %7317 = vmatprep.subr.bf16.mxu0 0
    %7318 = vmatpush1.bf16.msra.mxu0 %v7275
    %7319 = vmatprep.subr.bf16.mxu0 0
    %7320 = vmatpush1.bf16.msra.mxu0 %v7276
    %7321 = vmatprep.subr.bf16.mxu0 0
    %7322 = vmatpush1.bf16.msra.mxu0 %v7277
    %7323 = vmatprep.subr.bf16.mxu0 0
    %7324 = vmatpush1.bf16.msra.mxu0 %v7278
    %7325 = vmatprep.subr.bf16.mxu0 0
    %7326 = vmatpush1.bf16.msra.mxu0 %v7279
    %7327 = vmatprep.subr.bf16.mxu0 0
    %7328 = vmatpush1.bf16.msra.mxu0 %v7280
    %7329 = vmatprep.mubr.bf16.mxu0 %v7161
    %7330 = vmatmul.mubr.bf16.gmra.mrb[0].mxu0 %v7160
    %v7331 = vpop.f32.mrb[0].mxu0
    %v7332 = vadd.f32 %v7199, %v7331
    %v7333 = vpop.f32.mrb[0].mxu0
    %v7334 = vpop.f32.mrb[0].mxu0
    %v7335 = vpop.f32.mrb[0].mxu0
    %7336 = vdwg.mxu0
    %7337 = vst [vmem:[#allocation30] sm:$0xff] %v7332
    // Predicated region
    $region158: #{tpu_custom_call.1} parent=1 // pred_check
      _
    $region159: #{tpu_custom_call.1} parent=1 // pred_check_branch
      %7339 = sbr.rel (0) target = $region161
    $region160: #{tpu_custom_call.1} parent=1 // pred_region
      %s7341 = ssub.s32 128, 128
      %7342 = vsyncadd [#allocation5], %s7341
      %s7344 = sshll.u32 [#allocation30], 4
      %s7345 = int_to_ptr.vmem [resolvable:$true] %s7344
      %7347 = dma.vmem_to_hbm [thread:$0]  %s7345, 128, %s22, [#allocation5]
    $region161: #{tpu_custom_call.1} parent=1 // pred_fallthru
      _
    // Predicated region
    $region162: #{tpu_custom_call.1} parent=1 // pred_check
      _
    $region163: #{tpu_custom_call.1} parent=1 // pred_check_branch
      %7349 = sbr.rel (0) target = $region165
    $region164: #{tpu_custom_call.1} parent=1 // pred_region
      %7350 = dma.done [#allocation5], 128
    $region165: #{tpu_custom_call.1} parent=1 // pred_fallthru
      _
    %7351 = vsyncpa [#allocation4], 1
    %7352 = vsyncpa [#allocation7], 1
    %7353 = vsyncpa [#allocation10], 1
    %7354 = vsyncpa [#allocation13], 1
    %7355 = vsyncpa [#allocation16], 1
    %7356 = vsyncpa [#allocation19], 1
    %7357 = vsyncpa [#allocation22], 1
    %7358 = vsyncpa [#allocation25], 1
    %7359 = vsyncpa [#allocation28], 1
    %7360 = vsyncpa [#allocation5], 1

</llo_original>
